<compile_context>
chip_gen: v7x
topology: tpu7x:2x2x1
jax: 0.10.0
libtpu: 0.0.40
codegen_flags: <defaults>
</compile_context>

<pallas_src>
import functools

import jax
import jax.numpy as jnp
from jax.experimental import pallas as pl
from jax.experimental.pallas import tpu as pltpu

C_HID = 64            # TinyBlock channels
N_GROUPS = 32         # GroupNorm(32, 64)
GROUP_SIZE = C_HID // N_GROUPS   # = 2
EPS = 1e-6
FOLD = 2              # images folded onto the lane axis per grid step
CP = FOLD * C_HID     # packed lane width = 128


# --------------------------------------------------------------------------
# Fused TinyBlock Pallas kernel (one grid step == 2 batch elements)
# --------------------------------------------------------------------------

def _tiny_block_kernel(x_ref, gmat_ref, g_ref, bt_ref, w1_ref, b1_ref,
                       w2_ref, b2_ref, o_ref, pad_ref, *, H, W):
    HW = H * W
    x = x_ref[0]                                            # (HW, CP) f32 residual

    # ---------------- GroupNorm(32, 64, eps=1e-6) + SiLU (f32) -------------
    # Reduce over HW first (XLU), then aggregate channel pairs per group with
    # the precomputed block-diagonal group matrix (two tiny MXU dots).
    n = float(HW * GROUP_SIZE)
    gmat = gmat_ref[...]                                    # (CP, CP) f32 0/1
    colsum = jnp.sum(x, axis=0, keepdims=True)              # (1, CP)
    mean = jnp.dot(colsum, gmat, preferred_element_type=jnp.float32) / n
    xc = x - mean
    sqsum = jnp.sum(xc * xc, axis=0, keepdims=True)         # (1, CP)
    var = jnp.dot(sqsum, gmat, preferred_element_type=jnp.float32) / n
    inv = jax.lax.rsqrt(var + EPS)
    h = xc * (inv * g_ref[...]) + bt_ref[...]               # affine
    h = h * jax.nn.sigmoid(h)                               # SiLU

    # ---------------- 3x3 conv (stride 1, zero pad 1) ----------------------
    # pad_ref: (H+2, W+2, CP) bf16 VMEM scratch.  Zero ONLY the border, every
    # step (correct under megacore sharding); the interior is fully overwritten
    # by each conv before it is read.
    zrow = jnp.zeros((1, W + 2, CP), jnp.bfloat16)
    zcol = jnp.zeros((H, 1, CP), jnp.bfloat16)
    pad_ref[pl.ds(0, 1), :, :] = zrow
    pad_ref[pl.ds(H + 1, 1), :, :] = zrow
    pad_ref[pl.ds(1, H), pl.ds(0, 1), :] = zcol
    pad_ref[pl.ds(1, H), pl.ds(W + 1, 1), :] = zcol

    def conv3x3(act, w_ref, b_ref):
        # act: (HW, CP) f32 -> (HW, CP) f32.
        # One bf16 cast+store of the activation, then per ky one K-packed
        # (HW, 3*CP) x (3*CP, CP) bf16 MXU dot with f32 accumulation.
        pad_ref[pl.ds(1, H), pl.ds(1, W), :] = (
            act.astype(jnp.bfloat16).reshape(H, W, CP))
        out = None
        for ky in range(3):
            lhs = jnp.concatenate(
                [pad_ref[pl.ds(ky, H), pl.ds(kx, W), :] for kx in range(3)],
                axis=-1).reshape(HW, 3 * CP)                 # (HW, 384) bf16
            d = jnp.dot(lhs, w_ref[ky], preferred_element_type=jnp.float32)
            out = d if out is None else out + d
        return out + b_ref[...]

    h = conv3x3(h, w1_ref, b1_ref)
    h = h * jax.nn.sigmoid(h)                                # SiLU
    h = conv3x3(h, w2_ref, b2_ref)

    o_ref[0] = (h + x).astype(o_ref.dtype)                   # residual add


# --------------------------------------------------------------------------
# Host wrapper: NCHW <-> lane-packed (B//2, HW, 128), block-diagonal params
# --------------------------------------------------------------------------

def tiny_block_forward(x_nchw, params):
    """TinyBlock.forward for NCHW float32 input, via one fused Pallas kernel."""
    B0, C, H, W = x_nchw.shape
    assert C == C_HID, C
    HW = H * W

    x = jnp.transpose(x_nchw, (0, 2, 3, 1)).reshape(B0, HW, C).astype(jnp.float32)

    # Pad batch to a multiple of FOLD (zero images are harmless; sliced off).
    B = B0 if B0 % FOLD == 0 else B0 + (FOLD - B0 % FOLD)
    if B != B0:
        x = jnp.concatenate(
            [x, jnp.zeros((B - B0, HW, C), jnp.float32)], axis=0)
    # Fold 2 images onto the lane axis: lanes [0:64]=img 2b, [64:128]=img 2b+1.
    xp = x.reshape(B // FOLD, FOLD, HW, C).transpose(0, 2, 1, 3)
    xp = xp.reshape(B // FOLD, HW, CP)

    def pack_w(w):   # torch (Cout, Cin, 3, 3) -> (3, 3*CP, CP) block-diag bf16
        wk = jnp.transpose(w, (2, 3, 1, 0))                  # (ky, kx, Cin, Cout)
        blk = jnp.zeros((3, 3, CP, CP), jnp.float32)
        blk = blk.at[:, :, :C, :C].set(wk)
        blk = blk.at[:, :, C:, C:].set(wk)
        # Row index of the packed weight = kx*CP + ci  (matches the lhs concat).
        return blk.reshape(3, 3 * CP, CP).astype(jnp.bfloat16)

    def pack_vec(v):  # (C,) -> (1, CP) duplicated for both folded images
        return jnp.concatenate([v, v]).reshape(1, CP).astype(jnp.float32)

    w1 = pack_w(params["w1"])
    w2 = pack_w(params["w2"])
    b1 = pack_vec(params["b1"])
    b2 = pack_vec(params["b2"])
    gamma = pack_vec(params["gn_gamma"])
    beta = pack_vec(params["gn_beta"])

    # Block-diagonal 0/1 group-aggregation matrix (per-sample groups of 2 lanes).
    lane = jnp.arange(CP) // GROUP_SIZE
    gmat = (lane[:, None] == lane[None, :]).astype(jnp.float32)   # (CP, CP)

    # -------- VMEM budget (double-buffered blocks + scratch + live temps) ---
    vmem_bytes = (
        2 * HW * CP * 4            # x block (double-buffered)
        + 2 * HW * CP * 4          # out block (double-buffered)
        + 2 * CP * CP * 4          # gmat
        + 2 * 2 * 9 * CP * CP * 2  # w1 + w2 (bf16, double-buffered)
        + (H + 2) * (W + 2) * CP * 2   # bf16 padded scratch
        + 8 * HW * CP * 4          # live f32 intermediates (x, xc, h, acc, ...)
        + 2 * HW * 3 * CP * 2      # K-packed bf16 lhs
    )
    assert vmem_bytes <= 14 * 1024 * 1024, (
        f"fused TinyBlock working set ~{vmem_bytes >> 20} MiB exceeds the "
        "smallest default scoped-VMEM budget; tile spatially for this size")
    # TODO(synk): add a spatial grid axis (with cross-tile GN stats) for large H,W.

    kern = functools.partial(_tiny_block_kernel, H=H, W=W)
    out = pl.pallas_call(
        kern,
        out_shape=jax.ShapeDtypeStruct((B // FOLD, HW, CP), jnp.float32),
        grid=(B // FOLD,),
        in_specs=[
            pl.BlockSpec((1, HW, CP), lambda b: (b, 0, 0)),     # x (lane-packed)
            pl.BlockSpec((CP, CP), lambda b: (0, 0)),           # group matrix
            pl.BlockSpec((1, CP), lambda b: (0, 0)),            # gn gamma
            pl.BlockSpec((1, CP), lambda b: (0, 0)),            # gn beta
            pl.BlockSpec((3, 3 * CP, CP), lambda b: (0, 0, 0)),  # conv1 weight
            pl.BlockSpec((1, CP), lambda b: (0, 0)),            # conv1 bias
            pl.BlockSpec((3, 3 * CP, CP), lambda b: (0, 0, 0)),  # conv2 weight
            pl.BlockSpec((1, CP), lambda b: (0, 0)),            # conv2 bias
        ],
        out_specs=pl.BlockSpec((1, HW, CP), lambda b: (b, 0, 0)),
        scratch_shapes=[pltpu.VMEM((H + 2, W + 2, CP), jnp.bfloat16)],
        compiler_params=pltpu.CompilerParams(
            dimension_semantics=("parallel",)),
    )(xp, gmat, gamma, beta, w1, b1, w2, b2)

    # Unfold lanes back to batch, then NHWC -> NCHW.
    out = out.reshape(B // FOLD, HW, FOLD, C).transpose(0, 2, 1, 3)
    out = out.reshape(B, H, W, C)[:B0]
    return jnp.transpose(out, (0, 3, 1, 2))


# --------------------------------------------------------------------------
# Pure-JAX reference (mirrors the PyTorch module) for a correctness check
# --------------------------------------------------------------------------

def tiny_block_ref(x_nchw, params):
    x = x_nchw.astype(jnp.float32)
    B, C, H, W = x.shape
    xg = x.reshape(B, N_GROUPS, GROUP_SIZE, H, W)
    mean = xg.mean(axis=(2, 3, 4), keepdims=True)
    var = xg.var(axis=(2, 3, 4), keepdims=True)
    xn = ((xg - mean) * jax.lax.rsqrt(var + EPS)).reshape(B, C, H, W)
    xn = xn * params["gn_gamma"][None, :, None, None] + \
        params["gn_beta"][None, :, None, None]
    h = jax.nn.silu(xn)

    def conv(a, w, b):
        a = jnp.transpose(a, (0, 2, 3, 1))
        w_hwio = jnp.transpose(w, (2, 3, 1, 0))
        y = jax.lax.conv_general_dilated(
            a, w_hwio, (1, 1), "SAME",
            dimension_numbers=("NHWC", "HWIO", "NHWC"))
        return jnp.transpose(y + b[None, None, None, :], (0, 3, 1, 2))

    h = jax.nn.silu(conv(h, params["w1"], params["b1"]))
    h = conv(h, params["w2"], params["b2"])
    return h + x


# --------------------------------------------------------------------------
# Deterministic synthetic parameters (mirror the module's init)
# --------------------------------------------------------------------------

def make_params(key):
    k1, k2, k3, k4, k5 = jax.random.split(key, 5)
    fan_in = C_HID * 3 * 3
    bound = 1.0 / (fan_in ** 0.5)
    return dict(
        gn_gamma=1.0 + 0.05 * jax.random.normal(k1, (C_HID,), jnp.float32),
        gn_beta=0.05 * jax.random.normal(k2, (C_HID,), jnp.float32),
        w1=jax.random.uniform(k3, (C_HID, C_HID, 3, 3), jnp.float32, -bound, bound),
        b1=jax.random.uniform(k4, (C_HID,), jnp.float32, -bound, bound),
        # TinyBlock conv2 init: normal(std=0.0001/64), zero bias
        w2=(0.0001 / 64.0) * jax.random.normal(k5, (C_HID, C_HID, 3, 3), jnp.float32),
        b2=jnp.zeros((C_HID,), jnp.float32),
    )


# --------------------------------------------------------------------------

if __name__ == "__main__":
    key = jax.random.PRNGKey(0)
    pkey, xkey = jax.random.split(key)
    params = make_params(pkey)

    # Small input consistent with the module: batch=2, 64 channels, 16x16 spatial.
    x = jax.random.normal(xkey, (2, C_HID, 16, 16), jnp.float32)

    fwd = jax.jit(lambda v: tiny_block_forward(v, params))
    out = jax.block_until_ready(fwd(x))

    assert out.shape == x.shape, out.shape
    assert out.dtype == jnp.float32
    assert bool(jnp.all(jnp.isfinite(out)))

    ref = tiny_block_ref(x, params)
    err = float(jnp.max(jnp.abs(out - ref)))
    assert err < 2e-3, f"max abs err vs reference: {err}"

    print("KERNEL_OK")
</pallas_src>

<mosaic_0001>
module attributes {stable_mosaic.version = 11 : i64} {
  func.func @_tiny_block_kernel(%arg0: i32, %arg1: memref<1x256x128xf32, #tpu.memory_space<vmem>>, %arg2: memref<128x128xf32, #tpu.memory_space<vmem>>, %arg3: memref<1x128xf32, #tpu.memory_space<vmem>>, %arg4: memref<1x128xf32, #tpu.memory_space<vmem>>, %arg5: memref<3x384x128xbf16, #tpu.memory_space<vmem>>, %arg6: memref<1x128xf32, #tpu.memory_space<vmem>>, %arg7: memref<3x384x128xbf16, #tpu.memory_space<vmem>>, %arg8: memref<1x128xf32, #tpu.memory_space<vmem>>, %arg9: memref<1x256x128xf32, #tpu.memory_space<vmem>>, %arg10: memref<18x18x128xbf16, #tpu.memory_space<vmem>>) attributes {dimension_semantics = [#tpu.dimension_semantics<parallel>], iteration_bounds = array<i64: 1>, scalar_prefetch = 0 : i64, scratch_operands = 1 : i64, tpu.core_type = #tpu.core_type<tc>, window_params = [{transform_indices = @transform_0, window_bounds = array<i64: 1, 256, 128>}, {pipeline_mode = #tpu.pipeline_mode<synchronous>, transform_indices = @transform_1, window_bounds = array<i64: 128, 128>}, {pipeline_mode = #tpu.pipeline_mode<synchronous>, transform_indices = @transform_2, window_bounds = array<i64: 1, 128>}, {pipeline_mode = #tpu.pipeline_mode<synchronous>, transform_indices = @transform_3, window_bounds = array<i64: 1, 128>}, {pipeline_mode = #tpu.pipeline_mode<synchronous>, transform_indices = @transform_4, window_bounds = array<i64: 3, 384, 128>}, {pipeline_mode = #tpu.pipeline_mode<synchronous>, transform_indices = @transform_5, window_bounds = array<i64: 1, 128>}, {pipeline_mode = #tpu.pipeline_mode<synchronous>, transform_indices = @transform_6, window_bounds = array<i64: 3, 384, 128>}, {pipeline_mode = #tpu.pipeline_mode<synchronous>, transform_indices = @transform_7, window_bounds = array<i64: 1, 128>}, {transform_indices = @transform_8, window_bounds = array<i64: 1, 256, 128>}]} {
    %c0 = arith.constant 0 : index
    %c0_0 = arith.constant 0 : index
    %c0_1 = arith.constant 0 : index
    %0 = vector.load %arg1[%c0, %c0_0, %c0_1] : memref<1x256x128xf32, #tpu.memory_space<vmem>>, vector<1x256x128xf32>
    %1 = vector.shape_cast %0 : vector<1x256x128xf32> to vector<256x128xf32>
    %c0_2 = arith.constant 0 : index
    %c0_3 = arith.constant 0 : index
    %2 = vector.load %arg2[%c0_2, %c0_3] : memref<128x128xf32, #tpu.memory_space<vmem>>, vector<128x128xf32>
    %cst = arith.constant dense<0.000000e+00> : vector<128xf32>
    %3 = vector.multi_reduction <add>, %1, %cst [0] : vector<256x128xf32> to vector<128xf32>
    %4 = vector.shape_cast %3 : vector<128xf32> to vector<1x128xf32>
    %cst_4 = arith.constant dense<0.000000e+00> : vector<1x128xf32>
    %5 = tpu.matmul %4, %2, %cst_4 {dimension_numbers = #tpu.dot_dimension_numbers<[1], [0], [0], [1], [0, 0, 1, 1], [], []>} : vector<1x128xf32>, vector<128x128xf32>, vector<1x128xf32> -> vector<1x128xf32>
    %cst_5 = arith.constant 5.120000e+02 : f32
    %6 = vector.broadcast %cst_5 : f32 to vector<1x128xf32>
    %7 = arith.divf %5, %6 : vector<1x128xf32>
    %8 = vector.broadcast %7 : vector<1x128xf32> to vector<256x128xf32>
    %9 = arith.subf %1, %8 : vector<256x128xf32>
    %10 = arith.mulf %9, %9 : vector<256x128xf32>
    %cst_6 = arith.constant dense<0.000000e+00> : vector<128xf32>
    %11 = vector.multi_reduction <add>, %10, %cst_6 [0] : vector<256x128xf32> to vector<128xf32>
    %12 = vector.shape_cast %11 : vector<128xf32> to vector<1x128xf32>
    %cst_7 = arith.constant dense<0.000000e+00> : vector<1x128xf32>
    %13 = tpu.matmul %12, %2, %cst_7 {dimension_numbers = #tpu.dot_dimension_numbers<[1], [0], [0], [1], [0, 0, 1, 1], [], []>} : vector<1x128xf32>, vector<128x128xf32>, vector<1x128xf32> -> vector<1x128xf32>
    %cst_8 = arith.constant 5.120000e+02 : f32
    %14 = vector.broadcast %cst_8 : f32 to vector<1x128xf32>
    %15 = arith.divf %13, %14 : vector<1x128xf32>
    %cst_9 = arith.constant 9.99999997E-7 : f32
    %16 = vector.broadcast %cst_9 : f32 to vector<1x128xf32>
    %17 = arith.addf %15, %16 : vector<1x128xf32>
    %18 = math.rsqrt %17 : vector<1x128xf32>
    %c0_10 = arith.constant 0 : index
    %c0_11 = arith.constant 0 : index
    %19 = vector.load %arg3[%c0_10, %c0_11] : memref<1x128xf32, #tpu.memory_space<vmem>>, vector<1x128xf32>
    %20 = arith.mulf %18, %19 : vector<1x128xf32>
    %21 = vector.broadcast %20 : vector<1x128xf32> to vector<256x128xf32>
    %22 = arith.mulf %9, %21 : vector<256x128xf32>
    %c0_12 = arith.constant 0 : index
    %c0_13 = arith.constant 0 : index
    %23 = vector.load %arg4[%c0_12, %c0_13] : memref<1x128xf32, #tpu.memory_space<vmem>>, vector<1x128xf32>
    %24 = vector.broadcast %23 : vector<1x128xf32> to vector<256x128xf32>
    %25 = arith.addf %22, %24 : vector<256x128xf32>
    %26 = arith.negf %25 : vector<256x128xf32>
    %27 = math.exp %26 : vector<256x128xf32>
    %cst_14 = arith.constant 1.000000e+00 : f32
    %28 = vector.broadcast %cst_14 : f32 to vector<256x128xf32>
    %29 = arith.addf %28, %27 : vector<256x128xf32>
    %30 = arith.divf %28, %29 : vector<256x128xf32>
    %31 = arith.mulf %25, %30 : vector<256x128xf32>
    %cst_15 = arith.constant 0.000000e+00 : bf16
    %32 = vector.broadcast %cst_15 : bf16 to vector<1x18x128xbf16>
    %cst_16 = arith.constant 0.000000e+00 : bf16
    %33 = vector.broadcast %cst_16 : bf16 to vector<16x1x128xbf16>
    %c0_17 = arith.constant 0 : index
    %c0_18 = arith.constant 0 : index
    %c0_19 = arith.constant 0 : index
    %34 = vector.load %arg10[%c0_17, %c0_18, %c0_19] : memref<18x18x128xbf16, #tpu.memory_space<vmem>>, vector<1x18x128xbf16>
    tpu.vector_store %arg10[%c0_17, %c0_18, %c0_19], %32 {strides = array<i32>} : memref<18x18x128xbf16, #tpu.memory_space<vmem>>, vector<1x18x128xbf16>,
    %c17 = arith.constant 17 : index
    %c0_20 = arith.constant 0 : index
    %c0_21 = arith.constant 0 : index
    %35 = vector.load %arg10[%c17, %c0_20, %c0_21] : memref<18x18x128xbf16, #tpu.memory_space<vmem>>, vector<1x18x128xbf16>
    tpu.vector_store %arg10[%c17, %c0_20, %c0_21], %32 {strides = array<i32>} : memref<18x18x128xbf16, #tpu.memory_space<vmem>>, vector<1x18x128xbf16>,
    %c1 = arith.constant 1 : index
    %c0_22 = arith.constant 0 : index
    %c0_23 = arith.constant 0 : index
    %36 = vector.load %arg10[%c1, %c0_22, %c0_23] : memref<18x18x128xbf16, #tpu.memory_space<vmem>>, vector<16x1x128xbf16>
    tpu.vector_store %arg10[%c1, %c0_22, %c0_23], %33 {strides = array<i32>} : memref<18x18x128xbf16, #tpu.memory_space<vmem>>, vector<16x1x128xbf16>,
    %c1_24 = arith.constant 1 : index
    %c17_25 = arith.constant 17 : index
    %c0_26 = arith.constant 0 : index
    %37 = vector.load %arg10[%c1_24, %c17_25, %c0_26] : memref<18x18x128xbf16, #tpu.memory_space<vmem>>, vector<16x1x128xbf16>
    tpu.vector_store %arg10[%c1_24, %c17_25, %c0_26], %33 {strides = array<i32>} : memref<18x18x128xbf16, #tpu.memory_space<vmem>>, vector<16x1x128xbf16>,
    %38 = arith.truncf %31 : vector<256x128xf32> to vector<256x128xbf16>
    %39 = vector.shape_cast %38 : vector<256x128xbf16> to vector<16x16x128xbf16>
    %c1_27 = arith.constant 1 : index
    %c1_28 = arith.constant 1 : index
    %c0_29 = arith.constant 0 : index
    %40 = vector.load %arg10[%c1_27, %c1_28, %c0_29] : memref<18x18x128xbf16, #tpu.memory_space<vmem>>, vector<16x16x128xbf16>
    tpu.vector_store %arg10[%c1_27, %c1_28, %c0_29], %39 {strides = array<i32>} : memref<18x18x128xbf16, #tpu.memory_space<vmem>>, vector<16x16x128xbf16>,
    %c0_30 = arith.constant 0 : index
    %c0_31 = arith.constant 0 : index
    %c0_32 = arith.constant 0 : index
    %41 = vector.load %arg10[%c0_30, %c0_31, %c0_32] : memref<18x18x128xbf16, #tpu.memory_space<vmem>>, vector<16x16x128xbf16>
    %c0_33 = arith.constant 0 : index
    %c1_34 = arith.constant 1 : index
    %c0_35 = arith.constant 0 : index
    %42 = vector.load %arg10[%c0_33, %c1_34, %c0_35] : memref<18x18x128xbf16, #tpu.memory_space<vmem>>, vector<16x16x128xbf16>
    %c0_36 = arith.constant 0 : index
    %c2 = arith.constant 2 : index
    %c0_37 = arith.constant 0 : index
    %43 = vector.load %arg10[%c0_36, %c2, %c0_37] : memref<18x18x128xbf16, #tpu.memory_space<vmem>>, vector<16x16x128xbf16>
    %44 = tpu.concatenate %41, %42, %43 in 2 : vector<16x16x128xbf16>, vector<16x16x128xbf16>, vector<16x16x128xbf16> -> vector<16x16x384xbf16>
    %45 = vector.shape_cast %44 : vector<16x16x384xbf16> to vector<256x384xbf16>
    %c0_38 = arith.constant 0 : index
    %c0_39 = arith.constant 0 : index
    %c0_40 = arith.constant 0 : index
    %46 = vector.load %arg5[%c0_38, %c0_39, %c0_40] : memref<3x384x128xbf16, #tpu.memory_space<vmem>>, vector<1x384x128xbf16>
    %47 = vector.shape_cast %46 : vector<1x384x128xbf16> to vector<384x128xbf16>
    %cst_41 = arith.constant dense<0.000000e+00> : vector<256x128xf32>
    %48 = tpu.matmul %45, %47, %cst_41 {dimension_numbers = #tpu.dot_dimension_numbers<[1], [0], [0], [1], [0, 0, 1, 1], [], []>} : vector<256x384xbf16>, vector<384x128xbf16>, vector<256x128xf32> -> vector<256x128xf32>
    %c1_42 = arith.constant 1 : index
    %c0_43 = arith.constant 0 : index
    %c0_44 = arith.constant 0 : index
    %49 = vector.load %arg10[%c1_42, %c0_43, %c0_44] : memref<18x18x128xbf16, #tpu.memory_space<vmem>>, vector<16x16x128xbf16>
    %c1_45 = arith.constant 1 : index
    %c1_46 = arith.constant 1 : index
    %c0_47 = arith.constant 0 : index
    %50 = vector.load %arg10[%c1_45, %c1_46, %c0_47] : memref<18x18x128xbf16, #tpu.memory_space<vmem>>, vector<16x16x128xbf16>
    %c1_48 = arith.constant 1 : index
    %c2_49 = arith.constant 2 : index
    %c0_50 = arith.constant 0 : index
    %51 = vector.load %arg10[%c1_48, %c2_49, %c0_50] : memref<18x18x128xbf16, #tpu.memory_space<vmem>>, vector<16x16x128xbf16>
    %52 = tpu.concatenate %49, %50, %51 in 2 : vector<16x16x128xbf16>, vector<16x16x128xbf16>, vector<16x16x128xbf16> -> vector<16x16x384xbf16>
    %53 = vector.shape_cast %52 : vector<16x16x384xbf16> to vector<256x384xbf16>
    %c1_51 = arith.constant 1 : index
    %c0_52 = arith.constant 0 : index
    %c0_53 = arith.constant 0 : index
    %54 = vector.load %arg5[%c1_51, %c0_52, %c0_53] : memref<3x384x128xbf16, #tpu.memory_space<vmem>>, vector<1x384x128xbf16>
    %55 = vector.shape_cast %54 : vector<1x384x128xbf16> to vector<384x128xbf16>
    %cst_54 = arith.constant dense<0.000000e+00> : vector<256x128xf32>
    %56 = tpu.matmul %53, %55, %cst_54 {dimension_numbers = #tpu.dot_dimension_numbers<[1], [0], [0], [1], [0, 0, 1, 1], [], []>} : vector<256x384xbf16>, vector<384x128xbf16>, vector<256x128xf32> -> vector<256x128xf32>
    %57 = arith.addf %48, %56 : vector<256x128xf32>
    %c2_55 = arith.constant 2 : index
    %c0_56 = arith.constant 0 : index
    %c0_57 = arith.constant 0 : index
    %58 = vector.load %arg10[%c2_55, %c0_56, %c0_57] : memref<18x18x128xbf16, #tpu.memory_space<vmem>>, vector<16x16x128xbf16>
    %c2_58 = arith.constant 2 : index
    %c1_59 = arith.constant 1 : index
    %c0_60 = arith.constant 0 : index
    %59 = vector.load %arg10[%c2_58, %c1_59, %c0_60] : memref<18x18x128xbf16, #tpu.memory_space<vmem>>, vector<16x16x128xbf16>
    %c2_61 = arith.constant 2 : index
    %c2_62 = arith.constant 2 : index
    %c0_63 = arith.constant 0 : index
    %60 = vector.load %arg10[%c2_61, %c2_62, %c0_63] : memref<18x18x128xbf16, #tpu.memory_space<vmem>>, vector<16x16x128xbf16>
    %61 = tpu.concatenate %58, %59, %60 in 2 : vector<16x16x128xbf16>, vector<16x16x128xbf16>, vector<16x16x128xbf16> -> vector<16x16x384xbf16>
    %62 = vector.shape_cast %61 : vector<16x16x384xbf16> to vector<256x384xbf16>
    %c2_64 = arith.constant 2 : index
    %c0_65 = arith.constant 0 : index
    %c0_66 = arith.constant 0 : index
    %63 = vector.load %arg5[%c2_64, %c0_65, %c0_66] : memref<3x384x128xbf16, #tpu.memory_space<vmem>>, vector<1x384x128xbf16>
    %64 = vector.shape_cast %63 : vector<1x384x128xbf16> to vector<384x128xbf16>
    %cst_67 = arith.constant dense<0.000000e+00> : vector<256x128xf32>
    %65 = tpu.matmul %62, %64, %cst_67 {dimension_numbers = #tpu.dot_dimension_numbers<[1], [0], [0], [1], [0, 0, 1, 1], [], []>} : vector<256x384xbf16>, vector<384x128xbf16>, vector<256x128xf32> -> vector<256x128xf32>
    %66 = arith.addf %57, %65 : vector<256x128xf32>
    %c0_68 = arith.constant 0 : index
    %c0_69 = arith.constant 0 : index
    %67 = vector.load %arg6[%c0_68, %c0_69] : memref<1x128xf32, #tpu.memory_space<vmem>>, vector<1x128xf32>
    %68 = vector.broadcast %67 : vector<1x128xf32> to vector<256x128xf32>
    %69 = arith.addf %66, %68 : vector<256x128xf32>
    %70 = arith.negf %69 : vector<256x128xf32>
    %71 = math.exp %70 : vector<256x128xf32>
    %cst_70 = arith.constant 1.000000e+00 : f32
    %72 = vector.broadcast %cst_70 : f32 to vector<256x128xf32>
    %73 = arith.addf %72, %71 : vector<256x128xf32>
    %74 = arith.divf %72, %73 : vector<256x128xf32>
    %75 = arith.mulf %69, %74 : vector<256x128xf32>
    %76 = arith.truncf %75 : vector<256x128xf32> to vector<256x128xbf16>
    %77 = vector.shape_cast %76 : vector<256x128xbf16> to vector<16x16x128xbf16>
    %c1_71 = arith.constant 1 : index
    %c1_72 = arith.constant 1 : index
    %c0_73 = arith.constant 0 : index
    %78 = vector.load %arg10[%c1_71, %c1_72, %c0_73] : memref<18x18x128xbf16, #tpu.memory_space<vmem>>, vector<16x16x128xbf16>
    tpu.vector_store %arg10[%c1_71, %c1_72, %c0_73], %77 {strides = array<i32>} : memref<18x18x128xbf16, #tpu.memory_space<vmem>>, vector<16x16x128xbf16>,
    %c0_74 = arith.constant 0 : index
    %c0_75 = arith.constant 0 : index
    %c0_76 = arith.constant 0 : index
    %79 = vector.load %arg10[%c0_74, %c0_75, %c0_76] : memref<18x18x128xbf16, #tpu.memory_space<vmem>>, vector<16x16x128xbf16>
    %c0_77 = arith.constant 0 : index
    %c1_78 = arith.constant 1 : index
    %c0_79 = arith.constant 0 : index
    %80 = vector.load %arg10[%c0_77, %c1_78, %c0_79] : memref<18x18x128xbf16, #tpu.memory_space<vmem>>, vector<16x16x128xbf16>
    %c0_80 = arith.constant 0 : index
    %c2_81 = arith.constant 2 : index
    %c0_82 = arith.constant 0 : index
    %81 = vector.load %arg10[%c0_80, %c2_81, %c0_82] : memref<18x18x128xbf16, #tpu.memory_space<vmem>>, vector<16x16x128xbf16>
    %82 = tpu.concatenate %79, %80, %81 in 2 : vector<16x16x128xbf16>, vector<16x16x128xbf16>, vector<16x16x128xbf16> -> vector<16x16x384xbf16>
    %83 = vector.shape_cast %82 : vector<16x16x384xbf16> to vector<256x384xbf16>
    %c0_83 = arith.constant 0 : index
    %c0_84 = arith.constant 0 : index
    %c0_85 = arith.constant 0 : index
    %84 = vector.load %arg7[%c0_83, %c0_84, %c0_85] : memref<3x384x128xbf16, #tpu.memory_space<vmem>>, vector<1x384x128xbf16>
    %85 = vector.shape_cast %84 : vector<1x384x128xbf16> to vector<384x128xbf16>
    %cst_86 = arith.constant dense<0.000000e+00> : vector<256x128xf32>
    %86 = tpu.matmul %83, %85, %cst_86 {dimension_numbers = #tpu.dot_dimension_numbers<[1], [0], [0], [1], [0, 0, 1, 1], [], []>} : vector<256x384xbf16>, vector<384x128xbf16>, vector<256x128xf32> -> vector<256x128xf32>
    %c1_87 = arith.constant 1 : index
    %c0_88 = arith.constant 0 : index
    %c0_89 = arith.constant 0 : index
    %87 = vector.load %arg10[%c1_87, %c0_88, %c0_89] : memref<18x18x128xbf16, #tpu.memory_space<vmem>>, vector<16x16x128xbf16>
    %c1_90 = arith.constant 1 : index
    %c1_91 = arith.constant 1 : index
    %c0_92 = arith.constant 0 : index
    %88 = vector.load %arg10[%c1_90, %c1_91, %c0_92] : memref<18x18x128xbf16, #tpu.memory_space<vmem>>, vector<16x16x128xbf16>
    %c1_93 = arith.constant 1 : index
    %c2_94 = arith.constant 2 : index
    %c0_95 = arith.constant 0 : index
    %89 = vector.load %arg10[%c1_93, %c2_94, %c0_95] : memref<18x18x128xbf16, #tpu.memory_space<vmem>>, vector<16x16x128xbf16>
    %90 = tpu.concatenate %87, %88, %89 in 2 : vector<16x16x128xbf16>, vector<16x16x128xbf16>, vector<16x16x128xbf16> -> vector<16x16x384xbf16>
    %91 = vector.shape_cast %90 : vector<16x16x384xbf16> to vector<256x384xbf16>
    %c1_96 = arith.constant 1 : index
    %c0_97 = arith.constant 0 : index
    %c0_98 = arith.constant 0 : index
    %92 = vector.load %arg7[%c1_96, %c0_97, %c0_98] : memref<3x384x128xbf16, #tpu.memory_space<vmem>>, vector<1x384x128xbf16>
    %93 = vector.shape_cast %92 : vector<1x384x128xbf16> to vector<384x128xbf16>
    %cst_99 = arith.constant dense<0.000000e+00> : vector<256x128xf32>
    %94 = tpu.matmul %91, %93, %cst_99 {dimension_numbers = #tpu.dot_dimension_numbers<[1], [0], [0], [1], [0, 0, 1, 1], [], []>} : vector<256x384xbf16>, vector<384x128xbf16>, vector<256x128xf32> -> vector<256x128xf32>
    %95 = arith.addf %86, %94 : vector<256x128xf32>
    %c2_100 = arith.constant 2 : index
    %c0_101 = arith.constant 0 : index
    %c0_102 = arith.constant 0 : index
    %96 = vector.load %arg10[%c2_100, %c0_101, %c0_102] : memref<18x18x128xbf16, #tpu.memory_space<vmem>>, vector<16x16x128xbf16>
    %c2_103 = arith.constant 2 : index
    %c1_104 = arith.constant 1 : index
    %c0_105 = arith.constant 0 : index
    %97 = vector.load %arg10[%c2_103, %c1_104, %c0_105] : memref<18x18x128xbf16, #tpu.memory_space<vmem>>, vector<16x16x128xbf16>
    %c2_106 = arith.constant 2 : index
    %c2_107 = arith.constant 2 : index
    %c0_108 = arith.constant 0 : index
    %98 = vector.load %arg10[%c2_106, %c2_107, %c0_108] : memref<18x18x128xbf16, #tpu.memory_space<vmem>>, vector<16x16x128xbf16>
    %99 = tpu.concatenate %96, %97, %98 in 2 : vector<16x16x128xbf16>, vector<16x16x128xbf16>, vector<16x16x128xbf16> -> vector<16x16x384xbf16>
    %100 = vector.shape_cast %99 : vector<16x16x384xbf16> to vector<256x384xbf16>
    %c2_109 = arith.constant 2 : index
    %c0_110 = arith.constant 0 : index
    %c0_111 = arith.constant 0 : index
    %101 = vector.load %arg7[%c2_109, %c0_110, %c0_111] : memref<3x384x128xbf16, #tpu.memory_space<vmem>>, vector<1x384x128xbf16>
    %102 = vector.shape_cast %101 : vector<1x384x128xbf16> to vector<384x128xbf16>
    %cst_112 = arith.constant dense<0.000000e+00> : vector<256x128xf32>
    %103 = tpu.matmul %100, %102, %cst_112 {dimension_numbers = #tpu.dot_dimension_numbers<[1], [0], [0], [1], [0, 0, 1, 1], [], []>} : vector<256x384xbf16>, vector<384x128xbf16>, vector<256x128xf32> -> vector<256x128xf32>
    %104 = arith.addf %95, %103 : vector<256x128xf32>
    %c0_113 = arith.constant 0 : index
    %c0_114 = arith.constant 0 : index
    %105 = vector.load %arg8[%c0_113, %c0_114] : memref<1x128xf32, #tpu.memory_space<vmem>>, vector<1x128xf32>
    %106 = vector.broadcast %105 : vector<1x128xf32> to vector<256x128xf32>
    %107 = arith.addf %104, %106 : vector<256x128xf32>
    %108 = arith.addf %107, %1 : vector<256x128xf32>
    %c0_115 = arith.constant 0 : index
    %c0_116 = arith.constant 0 : index
    %c0_117 = arith.constant 0 : index
    %109 = vector.load %arg9[%c0_115, %c0_116, %c0_117] : memref<1x256x128xf32, #tpu.memory_space<vmem>>, vector<1x256x128xf32>
    %110 = vector.shape_cast %109 : vector<1x256x128xf32> to vector<256x128xf32>
    %111 = vector.shape_cast %108 : vector<256x128xf32> to vector<1x256x128xf32>
    tpu.vector_store %arg9[%c0_115, %c0_116, %c0_117], %111 {strides = array<i32>} : memref<1x256x128xf32, #tpu.memory_space<vmem>>, vector<1x256x128xf32>,
    return
  }
  func.func @transform_0(%arg0: i32) -> (i32, i32, i32) {
    %c0_i32 = arith.constant 0 : i32
    %c0_i32_0 = arith.constant 0 : i32
    %c0_i32_1 = arith.constant 0 : i32
    return %arg0, %c0_i32, %c0_i32_0 : i32, i32, i32
  }
  func.func @transform_1(%arg0: i32) -> (i32, i32) {
    %c0_i32 = arith.constant 0 : i32
    %c0_i32_0 = arith.constant 0 : i32
    %c0_i32_1 = arith.constant 0 : i32
    return %c0_i32, %c0_i32_0 : i32, i32
  }
  func.func @transform_2(%arg0: i32) -> (i32, i32) {
    %c0_i32 = arith.constant 0 : i32
    %c0_i32_0 = arith.constant 0 : i32
    %c0_i32_1 = arith.constant 0 : i32
    return %c0_i32, %c0_i32_0 : i32, i32
  }
  func.func @transform_3(%arg0: i32) -> (i32, i32) {
    %c0_i32 = arith.constant 0 : i32
    %c0_i32_0 = arith.constant 0 : i32
    %c0_i32_1 = arith.constant 0 : i32
    return %c0_i32, %c0_i32_0 : i32, i32
  }
  func.func @transform_4(%arg0: i32) -> (i32, i32, i32) {
    %c0_i32 = arith.constant 0 : i32
    %c0_i32_0 = arith.constant 0 : i32
    %c0_i32_1 = arith.constant 0 : i32
    %c0_i32_2 = arith.constant 0 : i32
    return %c0_i32, %c0_i32_0, %c0_i32_1 : i32, i32, i32
  }
  func.func @transform_5(%arg0: i32) -> (i32, i32) {
    %c0_i32 = arith.constant 0 : i32
    %c0_i32_0 = arith.constant 0 : i32
    %c0_i32_1 = arith.constant 0 : i32
    return %c0_i32, %c0_i32_0 : i32, i32
  }
  func.func @transform_6(%arg0: i32) -> (i32, i32, i32) {
    %c0_i32 = arith.constant 0 : i32
    %c0_i32_0 = arith.constant 0 : i32
    %c0_i32_1 = arith.constant 0 : i32
    %c0_i32_2 = arith.constant 0 : i32
    return %c0_i32, %c0_i32_0, %c0_i32_1 : i32, i32, i32
  }
  func.func @transform_7(%arg0: i32) -> (i32, i32) {
    %c0_i32 = arith.constant 0 : i32
    %c0_i32_0 = arith.constant 0 : i32
    %c0_i32_1 = arith.constant 0 : i32
    return %c0_i32, %c0_i32_0 : i32, i32
  }
  func.func @transform_8(%arg0: i32) -> (i32, i32, i32) {
    %c0_i32 = arith.constant 0 : i32
    %c0_i32_0 = arith.constant 0 : i32
    %c0_i32_1 = arith.constant 0 : i32
    return %arg0, %c0_i32, %c0_i32_0 : i32, i32, i32
  }
}

</mosaic_0001>

<llo_original>
// kernel: _lambda_.1
$region0: #{_lambda_.1}
  #allocation0 [shape = 'u32[]', space=smem, size = 0x4, offset = 0x4, fixed_abs, tag = 'smem constant byte address 0x4 - core index']
  #allocation1 [shape = 'u32[144,128]{1,0:T(1,128)}', space=vmem, size = 0x12000, scoped, tag = 'internal scratch']
  #allocation2 [shape = 'bf16[18,18,128]{2,1,0:T(8,128)(2,1)}', space=vmem, size = 0x1b000, scoped, tag = 'scratch operand']
  %s0 = inlined_call_operand.vmem [shape: f32[1,256,128], index: 0, kind: input, shape index: {}]
  %s1 = inlined_call_operand.vmem [shape: f32[128,128], index: 1, kind: input, shape index: {}]
  %s2 = inlined_call_operand.vmem [shape: f32[1,128], index: 2, kind: input, shape index: {}]
  %s3 = inlined_call_operand.vmem [shape: f32[1,128], index: 3, kind: input, shape index: {}]
  %s4 = inlined_call_operand.vmem [shape: bf16[3,384,128], index: 4, kind: input, shape index: {}]
  %s5 = inlined_call_operand.vmem [shape: f32[1,128], index: 5, kind: input, shape index: {}]
  %s6 = inlined_call_operand.vmem [shape: bf16[3,384,128], index: 6, kind: input, shape index: {}]
  %s7 = inlined_call_operand.vmem [shape: f32[1,128], index: 7, kind: input, shape index: {}]
  %s8 = inlined_call_operand.vmem [shape: f32[1,256,128], index: 8, kind: output, shape index: {}]
  %s9 = sld [smem:[#allocation0]]
  $region42: #{_lambda_.1} parent=0
    _
  %s11 = ssub.s32 1, %s9
  %s12 = scalar_select 0, %s11, %s9
  // Predicated region
  $region2: #{_lambda_.1} parent=0 // pred_check
    _
  $region3: #{_lambda_.1} parent=0 // pred_check_branch
    %14 = sbr.rel (0) target = $region5
  $region4: #{_lambda_.1} parent=0 // pred_region
    _
  $region5: #{_lambda_.1} parent=0 // pred_fallthru
    _
  // Predicated region
  $region6: #{_lambda_.1} parent=0 // pred_check
    _
  $region7: #{_lambda_.1} parent=0 // pred_check_branch
    %16 = sbr.rel (0) target = $region9
  $region8: #{_lambda_.1} parent=0 // pred_region
    _
  $region9: #{_lambda_.1} parent=0 // pred_fallthru
    _
  // Predicated region
  $region10: #{_lambda_.1} parent=0 // pred_check
    _
  $region11: #{_lambda_.1} parent=0 // pred_check_branch
    %18 = sbr.rel (0) target = $region13
  $region12: #{_lambda_.1} parent=0 // pred_region
    _
  $region13: #{_lambda_.1} parent=0 // pred_fallthru
    _
  // Predicated region
  $region14: #{_lambda_.1} parent=0 // pred_check
    _
  $region15: #{_lambda_.1} parent=0 // pred_check_branch
    %20 = sbr.rel (0) target = $region17
  $region16: #{_lambda_.1} parent=0 // pred_region
    _
  $region17: #{_lambda_.1} parent=0 // pred_fallthru
    _
  // Predicated region
  $region18: #{_lambda_.1} parent=0 // pred_check
    _
  $region19: #{_lambda_.1} parent=0 // pred_check_branch
    %22 = sbr.rel (0) target = $region21
  $region20: #{_lambda_.1} parent=0 // pred_region
    _
  $region21: #{_lambda_.1} parent=0 // pred_fallthru
    _
  // Predicated region
  $region22: #{_lambda_.1} parent=0 // pred_check
    _
  $region23: #{_lambda_.1} parent=0 // pred_check_branch
    %24 = sbr.rel (0) target = $region25
  $region24: #{_lambda_.1} parent=0 // pred_region
    _
  $region25: #{_lambda_.1} parent=0 // pred_fallthru
    _
  // Predicated region
  $region26: #{_lambda_.1} parent=0 // pred_check
    _
  $region27: #{_lambda_.1} parent=0 // pred_check_branch
    %26 = sbr.rel (0) target = $region29
  $region28: #{_lambda_.1} parent=0 // pred_region
    _
  $region29: #{_lambda_.1} parent=0 // pred_fallthru
    _
  // Predicated region
  $region30: #{_lambda_.1} parent=0 // pred_check
    _
  $region31: #{_lambda_.1} parent=0 // pred_check_branch
    %28 = sbr.rel (0) target = $region33
  $region32: #{_lambda_.1} parent=0 // pred_region
    _
  $region33: #{_lambda_.1} parent=0 // pred_fallthru
    _
  %v30 = vld [vmem:[%s0] sm:$0xff]
  %v31 = vld [vmem:[%s0 + $0x8] sm:$0xff]
  %v32 = vld [vmem:[%s0 + $0x10] sm:$0xff]
  %v33 = vld [vmem:[%s0 + $0x18] sm:$0xff]
  %v34 = vld [vmem:[%s0 + $0x20] sm:$0xff]
  %v35 = vld [vmem:[%s0 + $0x28] sm:$0xff]
  %v36 = vld [vmem:[%s0 + $0x30] sm:$0xff]
  %v37 = vld [vmem:[%s0 + $0x38] sm:$0xff]
  %v38 = vld [vmem:[%s0 + $0x40] sm:$0xff]
  %v39 = vld [vmem:[%s0 + $0x48] sm:$0xff]
  %v40 = vld [vmem:[%s0 + $0x50] sm:$0xff]
  %v41 = vld [vmem:[%s0 + $0x58] sm:$0xff]
  %v42 = vld [vmem:[%s0 + $0x60] sm:$0xff]
  %v43 = vld [vmem:[%s0 + $0x68] sm:$0xff]
  %v44 = vld [vmem:[%s0 + $0x70] sm:$0xff]
  %v45 = vld [vmem:[%s0 + $0x78] sm:$0xff]
  %v46 = vld [vmem:[%s0 + $0x80] sm:$0xff]
  %v47 = vld [vmem:[%s0 + $0x88] sm:$0xff]
  %v48 = vld [vmem:[%s0 + $0x90] sm:$0xff]
  %v49 = vld [vmem:[%s0 + $0x98] sm:$0xff]
  %v50 = vld [vmem:[%s0 + $0xa0] sm:$0xff]
  %v51 = vld [vmem:[%s0 + $0xa8] sm:$0xff]
  %v52 = vld [vmem:[%s0 + $0xb0] sm:$0xff]
  %v53 = vld [vmem:[%s0 + $0xb8] sm:$0xff]
  %v54 = vld [vmem:[%s0 + $0xc0] sm:$0xff]
  %v55 = vld [vmem:[%s0 + $0xc8] sm:$0xff]
  %v56 = vld [vmem:[%s0 + $0xd0] sm:$0xff]
  %v57 = vld [vmem:[%s0 + $0xd8] sm:$0xff]
  %v58 = vld [vmem:[%s0 + $0xe0] sm:$0xff]
  %v59 = vld [vmem:[%s0 + $0xe8] sm:$0xff]
  %v60 = vld [vmem:[%s0 + $0xf0] sm:$0xff]
  %v61 = vld [vmem:[%s0 + $0xf8] sm:$0xff]
  %v62 = vld [vmem:[%s1] sm:$0xff]
  %v63 = vld [vmem:[%s1 + $0x8] sm:$0xff]
  %v64 = vld [vmem:[%s1 + $0x10] sm:$0xff]
  %v65 = vld [vmem:[%s1 + $0x18] sm:$0xff]
  %v66 = vld [vmem:[%s1 + $0x20] sm:$0xff]
  %v67 = vld [vmem:[%s1 + $0x28] sm:$0xff]
  %v68 = vld [vmem:[%s1 + $0x30] sm:$0xff]
  %v69 = vld [vmem:[%s1 + $0x38] sm:$0xff]
  %v70 = vld [vmem:[%s1 + $0x40] sm:$0xff]
  %v71 = vld [vmem:[%s1 + $0x48] sm:$0xff]
  %v72 = vld [vmem:[%s1 + $0x50] sm:$0xff]
  %v73 = vld [vmem:[%s1 + $0x58] sm:$0xff]
  %v74 = vld [vmem:[%s1 + $0x60] sm:$0xff]
  %v75 = vld [vmem:[%s1 + $0x68] sm:$0xff]
  %v76 = vld [vmem:[%s1 + $0x70] sm:$0xff]
  %v77 = vld [vmem:[%s1 + $0x78] sm:$0xff]
  %v78 = vadd.f32 %v30, %v31
  %v79 = vadd.f32 %v78, %v32
  %v80 = vadd.f32 %v79, %v33
  %v81 = vadd.f32 %v80, %v34
  %v82 = vadd.f32 %v81, %v35
  %v83 = vadd.f32 %v82, %v36
  %v84 = vadd.f32 %v83, %v37
  %v85 = vadd.f32 %v84, %v38
  %v86 = vadd.f32 %v85, %v39
  %v87 = vadd.f32 %v86, %v40
  %v88 = vadd.f32 %v87, %v41
  %v89 = vadd.f32 %v88, %v42
  %v90 = vadd.f32 %v89, %v43
  %v91 = vadd.f32 %v90, %v44
  %v92 = vadd.f32 %v91, %v45
  %v93 = vadd.f32 %v92, %v46
  %v94 = vadd.f32 %v93, %v47
  %v95 = vadd.f32 %v94, %v48
  %v96 = vadd.f32 %v95, %v49
  %v97 = vadd.f32 %v96, %v50
  %v98 = vadd.f32 %v97, %v51
  %v99 = vadd.f32 %v98, %v52
  %v100 = vadd.f32 %v99, %v53
  %v101 = vadd.f32 %v100, %v54
  %v102 = vadd.f32 %v101, %v55
  %v103 = vadd.f32 %v102, %v56
  %v104 = vadd.f32 %v103, %v57
  %v105 = vadd.f32 %v104, %v58
  %v106 = vadd.f32 %v105, %v59
  %v107 = vadd.f32 %v106, %v60
  %v108 = vadd.f32 %v107, %v61
  %v109 = vrot.slane %v108, 4
  %v110 = vadd.f32 %v108, %v109
  %v111 = vrot.slane %v110, 2
  %v112 = vadd.f32 %v110, %v111
  %v113 = vrot.slane %v112, 1
  %v114 = vadd.f32 %v112, %v113
  %115 = vmatprep.subr.mxu0 0.0
  %116 = vmatpush1.msra.mxu0 %v62
  %117 = vmatprep.subr.mxu0 0.0
  %118 = vmatpush1.msra.mxu0 %v63
  %119 = vmatprep.subr.mxu0 0.0
  %120 = vmatpush1.msra.mxu0 %v64
  %121 = vmatprep.subr.mxu0 0.0
  %122 = vmatpush1.msra.mxu0 %v65
  %123 = vmatprep.subr.mxu0 0.0
  %124 = vmatpush1.msra.mxu0 %v66
  %125 = vmatprep.subr.mxu0 0.0
  %126 = vmatpush1.msra.mxu0 %v67
  %127 = vmatprep.subr.mxu0 0.0
  %128 = vmatpush1.msra.mxu0 %v68
  %129 = vmatprep.subr.mxu0 0.0
  %130 = vmatpush1.msra.mxu0 %v69
  %131 = vmatprep.subr.mxu0 0.0
  %132 = vmatpush1.msra.mxu0 %v70
  %133 = vmatprep.subr.mxu0 0.0
  %134 = vmatpush1.msra.mxu0 %v71
  %135 = vmatprep.subr.mxu0 0.0
  %136 = vmatpush1.msra.mxu0 %v72
  %137 = vmatprep.subr.mxu0 0.0
  %138 = vmatpush1.msra.mxu0 %v73
  %139 = vmatprep.subr.mxu0 0.0
  %140 = vmatpush1.msra.mxu0 %v74
  %141 = vmatprep.subr.mxu0 0.0
  %142 = vmatpush1.msra.mxu0 %v75
  %143 = vmatprep.subr.mxu0 0.0
  %144 = vmatpush1.msra.mxu0 %v76
  %145 = vmatprep.subr.mxu0 0.0
  %146 = vmatpush1.msra.mxu0 %v77
  %147 = vmatprep.subr.mxu0 0.0
  %148 = vmatpush1.msra.mxu0 0.0
  %149 = vmatprep.subr.mxu0 0.0
  %150 = vmatpush1.msra.mxu0 0.0
  %151 = vmatprep.subr.mxu0 0.0
  %152 = vmatpush1.msra.mxu0 0.0
  %153 = vmatprep.subr.mxu0 0.0
  %154 = vmatpush1.msra.mxu0 0.0
  %155 = vmatprep.subr.mxu0 0.0
  %156 = vmatpush1.msra.mxu0 0.0
  %157 = vmatprep.subr.mxu0 0.0
  %158 = vmatpush1.msra.mxu0 0.0
  %159 = vmatprep.subr.mxu0 0.0
  %160 = vmatpush1.msra.mxu0 0.0
  %161 = vmatprep.subr.mxu0 0.0
  %162 = vmatpush1.msra.mxu0 0.0
  %163 = vmatprep.subr.mxu0 0.0
  %164 = vmatpush1.msra.mxu0 0.0
  %165 = vmatprep.subr.mxu0 0.0
  %166 = vmatpush1.msra.mxu0 0.0
  %167 = vmatprep.subr.mxu0 0.0
  %168 = vmatpush1.msra.mxu0 0.0
  %169 = vmatprep.subr.mxu0 0.0
  %170 = vmatpush1.msra.mxu0 0.0
  %171 = vmatprep.subr.mxu0 0.0
  %172 = vmatpush1.msra.mxu0 0.0
  %173 = vmatprep.subr.mxu0 0.0
  %174 = vmatpush1.msra.mxu0 0.0
  %175 = vmatprep.subr.mxu0 0.0
  %176 = vmatpush1.msra.mxu0 0.0
  %177 = vmatprep.subr.mxu0 0.0
  %178 = vmatpush1.msra.mxu0 0.0
  %179 = vmatprep.mubr.f32.mxu0 0.0
  %180 = vmatmul.mubr.f32.gmra.mrb[0].mxu0 %v114
  %v181 = vpop.f32.mrb[0].mxu0
  %v182 = vadd.f32 0.0, %v181
  %v183 = vpop.f32.mrb[0].mxu0
  %184 = vdwg.mxu0
  %v185 = vrcp.pop 512.0
  %v186 = vmul.f32 %v182, %v185
  %v187 = vlaneseq
  %v188 = vshrl.u32 %v187, 7
  %v189 = vsub.s32 0, %v188
  %v190 = vrot.slane %v186, %v189
  %v191 = vsub.f32 %v30, %v190
  %v192 = vsub.f32 %v31, %v190
  %v193 = vsub.f32 %v32, %v190
  %v194 = vsub.f32 %v33, %v190
  %v195 = vsub.f32 %v34, %v190
  %v196 = vsub.f32 %v35, %v190
  %v197 = vsub.f32 %v36, %v190
  %v198 = vsub.f32 %v37, %v190
  %v199 = vsub.f32 %v38, %v190
  %v200 = vsub.f32 %v39, %v190
  %v201 = vsub.f32 %v40, %v190
  %v202 = vsub.f32 %v41, %v190
  %v203 = vsub.f32 %v42, %v190
  %v204 = vsub.f32 %v43, %v190
  %v205 = vsub.f32 %v44, %v190
  %v206 = vsub.f32 %v45, %v190
  %v207 = vsub.f32 %v46, %v190
  %v208 = vsub.f32 %v47, %v190
  %v209 = vsub.f32 %v48, %v190
  %v210 = vsub.f32 %v49, %v190
  %v211 = vsub.f32 %v50, %v190
  %v212 = vsub.f32 %v51, %v190
  %v213 = vsub.f32 %v52, %v190
  %v214 = vsub.f32 %v53, %v190
  %v215 = vsub.f32 %v54, %v190
  %v216 = vsub.f32 %v55, %v190
  %v217 = vsub.f32 %v56, %v190
  %v218 = vsub.f32 %v57, %v190
  %v219 = vsub.f32 %v58, %v190
  %v220 = vsub.f32 %v59, %v190
  %v221 = vsub.f32 %v60, %v190
  %v222 = vsub.f32 %v61, %v190
  %v223 = vmul.f32 %v191, %v191
  %v224 = vmul.f32 %v192, %v192
  %v225 = vmul.f32 %v193, %v193
  %v226 = vmul.f32 %v194, %v194
  %v227 = vmul.f32 %v195, %v195
  %v228 = vmul.f32 %v196, %v196
  %v229 = vmul.f32 %v197, %v197
  %v230 = vmul.f32 %v198, %v198
  %v231 = vmul.f32 %v199, %v199
  %v232 = vmul.f32 %v200, %v200
  %v233 = vmul.f32 %v201, %v201
  %v234 = vmul.f32 %v202, %v202
  %v235 = vmul.f32 %v203, %v203
  %v236 = vmul.f32 %v204, %v204
  %v237 = vmul.f32 %v205, %v205
  %v238 = vmul.f32 %v206, %v206
  %v239 = vmul.f32 %v207, %v207
  %v240 = vmul.f32 %v208, %v208
  %v241 = vmul.f32 %v209, %v209
  %v242 = vmul.f32 %v210, %v210
  %v243 = vmul.f32 %v211, %v211
  %v244 = vmul.f32 %v212, %v212
  %v245 = vmul.f32 %v213, %v213
  %v246 = vmul.f32 %v214, %v214
  %v247 = vmul.f32 %v215, %v215
  %v248 = vmul.f32 %v216, %v216
  %v249 = vmul.f32 %v217, %v217
  %v250 = vmul.f32 %v218, %v218
  %v251 = vmul.f32 %v219, %v219
  %v252 = vmul.f32 %v220, %v220
  %v253 = vmul.f32 %v221, %v221
  %v254 = vmul.f32 %v222, %v222
  %v255 = vadd.f32 %v223, %v224
  %v256 = vadd.f32 %v255, %v225
  %v257 = vadd.f32 %v256, %v226
  %v258 = vadd.f32 %v257, %v227
  %v259 = vadd.f32 %v258, %v228
  %v260 = vadd.f32 %v259, %v229
  %v261 = vadd.f32 %v260, %v230
  %v262 = vadd.f32 %v261, %v231
  %v263 = vadd.f32 %v262, %v232
  %v264 = vadd.f32 %v263, %v233
  %v265 = vadd.f32 %v264, %v234
  %v266 = vadd.f32 %v265, %v235
  %v267 = vadd.f32 %v266, %v236
  %v268 = vadd.f32 %v267, %v237
  %v269 = vadd.f32 %v268, %v238
  %v270 = vadd.f32 %v269, %v239
  %v271 = vadd.f32 %v270, %v240
  %v272 = vadd.f32 %v271, %v241
  %v273 = vadd.f32 %v272, %v242
  %v274 = vadd.f32 %v273, %v243
  %v275 = vadd.f32 %v274, %v244
  %v276 = vadd.f32 %v275, %v245
  %v277 = vadd.f32 %v276, %v246
  %v278 = vadd.f32 %v277, %v247
  %v279 = vadd.f32 %v278, %v248
  %v280 = vadd.f32 %v279, %v249
  %v281 = vadd.f32 %v280, %v250
  %v282 = vadd.f32 %v281, %v251
  %v283 = vadd.f32 %v282, %v252
  %v284 = vadd.f32 %v283, %v253
  %v285 = vadd.f32 %v284, %v254
  %v286 = vrot.slane %v285, 4
  %v287 = vadd.f32 %v285, %v286
  %v288 = vrot.slane %v287, 2
  %v289 = vadd.f32 %v287, %v288
  %v290 = vrot.slane %v289, 1
  %v291 = vadd.f32 %v289, %v290
  %292 = vmatprep.subr.mxu0 0.0
  %293 = vmatpush1.msra.mxu0 %v62
  %294 = vmatprep.subr.mxu0 0.0
  %295 = vmatpush1.msra.mxu0 %v63
  %296 = vmatprep.subr.mxu0 0.0
  %297 = vmatpush1.msra.mxu0 %v64
  %298 = vmatprep.subr.mxu0 0.0
  %299 = vmatpush1.msra.mxu0 %v65
  %300 = vmatprep.subr.mxu0 0.0
  %301 = vmatpush1.msra.mxu0 %v66
  %302 = vmatprep.subr.mxu0 0.0
  %303 = vmatpush1.msra.mxu0 %v67
  %304 = vmatprep.subr.mxu0 0.0
  %305 = vmatpush1.msra.mxu0 %v68
  %306 = vmatprep.subr.mxu0 0.0
  %307 = vmatpush1.msra.mxu0 %v69
  %308 = vmatprep.subr.mxu0 0.0
  %309 = vmatpush1.msra.mxu0 %v70
  %310 = vmatprep.subr.mxu0 0.0
  %311 = vmatpush1.msra.mxu0 %v71
  %312 = vmatprep.subr.mxu0 0.0
  %313 = vmatpush1.msra.mxu0 %v72
  %314 = vmatprep.subr.mxu0 0.0
  %315 = vmatpush1.msra.mxu0 %v73
  %316 = vmatprep.subr.mxu0 0.0
  %317 = vmatpush1.msra.mxu0 %v74
  %318 = vmatprep.subr.mxu0 0.0
  %319 = vmatpush1.msra.mxu0 %v75
  %320 = vmatprep.subr.mxu0 0.0
  %321 = vmatpush1.msra.mxu0 %v76
  %322 = vmatprep.subr.mxu0 0.0
  %323 = vmatpush1.msra.mxu0 %v77
  %324 = vmatprep.subr.mxu0 0.0
  %325 = vmatpush1.msra.mxu0 0.0
  %326 = vmatprep.subr.mxu0 0.0
  %327 = vmatpush1.msra.mxu0 0.0
  %328 = vmatprep.subr.mxu0 0.0
  %329 = vmatpush1.msra.mxu0 0.0
  %330 = vmatprep.subr.mxu0 0.0
  %331 = vmatpush1.msra.mxu0 0.0
  %332 = vmatprep.subr.mxu0 0.0
  %333 = vmatpush1.msra.mxu0 0.0
  %334 = vmatprep.subr.mxu0 0.0
  %335 = vmatpush1.msra.mxu0 0.0
  %336 = vmatprep.subr.mxu0 0.0
  %337 = vmatpush1.msra.mxu0 0.0
  %338 = vmatprep.subr.mxu0 0.0
  %339 = vmatpush1.msra.mxu0 0.0
  %340 = vmatprep.subr.mxu0 0.0
  %341 = vmatpush1.msra.mxu0 0.0
  %342 = vmatprep.subr.mxu0 0.0
  %343 = vmatpush1.msra.mxu0 0.0
  %344 = vmatprep.subr.mxu0 0.0
  %345 = vmatpush1.msra.mxu0 0.0
  %346 = vmatprep.subr.mxu0 0.0
  %347 = vmatpush1.msra.mxu0 0.0
  %348 = vmatprep.subr.mxu0 0.0
  %349 = vmatpush1.msra.mxu0 0.0
  %350 = vmatprep.subr.mxu0 0.0
  %351 = vmatpush1.msra.mxu0 0.0
  %352 = vmatprep.subr.mxu0 0.0
  %353 = vmatpush1.msra.mxu0 0.0
  %354 = vmatprep.subr.mxu0 0.0
  %355 = vmatpush1.msra.mxu0 0.0
  %356 = vmatprep.mubr.f32.mxu0 0.0
  %357 = vmatmul.mubr.f32.gmra.mrb[0].mxu0 %v291
  %v358 = vpop.f32.mrb[0].mxu0
  %v359 = vadd.f32 0.0, %v358
  %v360 = vpop.f32.mrb[0].mxu0
  %361 = vdwg.mxu0
  %v362 = vmul.f32 %v359, %v185
  %v363 = vadd.f32 %v362, 1e-06
  %v364 = vrsqrt.pop %v363
  %v365 = vld [vmem:[%s2] sm:$0x1]
  %v366 = vmul.f32 %v364, %v365
  %v367 = vlaneseq
  %v368 = vshrl.u32 %v367, 7
  %v369 = vsub.s32 0, %v368
  %v370 = vrot.slane %v366, %v369
  %v371 = vmul.f32 %v191, %v370
  %v372 = vmul.f32 %v192, %v370
  %v373 = vmul.f32 %v193, %v370
  %v374 = vmul.f32 %v194, %v370
  %v375 = vmul.f32 %v195, %v370
  %v376 = vmul.f32 %v196, %v370
  %v377 = vmul.f32 %v197, %v370
  %v378 = vmul.f32 %v198, %v370
  %v379 = vmul.f32 %v199, %v370
  %v380 = vmul.f32 %v200, %v370
  %v381 = vmul.f32 %v201, %v370
  %v382 = vmul.f32 %v202, %v370
  %v383 = vmul.f32 %v203, %v370
  %v384 = vmul.f32 %v204, %v370
  %v385 = vmul.f32 %v205, %v370
  %v386 = vmul.f32 %v206, %v370
  %v387 = vmul.f32 %v207, %v370
  %v388 = vmul.f32 %v208, %v370
  %v389 = vmul.f32 %v209, %v370
  %v390 = vmul.f32 %v210, %v370
  %v391 = vmul.f32 %v211, %v370
  %v392 = vmul.f32 %v212, %v370
  %v393 = vmul.f32 %v213, %v370
  %v394 = vmul.f32 %v214, %v370
  %v395 = vmul.f32 %v215, %v370
  %v396 = vmul.f32 %v216, %v370
  %v397 = vmul.f32 %v217, %v370
  %v398 = vmul.f32 %v218, %v370
  %v399 = vmul.f32 %v219, %v370
  %v400 = vmul.f32 %v220, %v370
  %v401 = vmul.f32 %v221, %v370
  %v402 = vmul.f32 %v222, %v370
  %v403 = vld [vmem:[%s3] sm:$0x1]
  %v405 = vlaneseq
  %v406 = vshrl.u32 %v405, 7
  %v407 = vsub.s32 0, %v406
  %v408 = vrot.slane %v403, %v407
  %v410 = vadd.f32 %v371, %v408
  %v411 = vadd.f32 %v372, %v408
  %v412 = vadd.f32 %v373, %v408
  %v413 = vadd.f32 %v374, %v408
  %v414 = vadd.f32 %v375, %v408
  %v415 = vadd.f32 %v376, %v408
  %v416 = vadd.f32 %v377, %v408
  %v417 = vadd.f32 %v378, %v408
  %v418 = vadd.f32 %v379, %v408
  %v419 = vadd.f32 %v380, %v408
  %v420 = vadd.f32 %v381, %v408
  %v421 = vadd.f32 %v382, %v408
  %v422 = vadd.f32 %v383, %v408
  %v423 = vadd.f32 %v384, %v408
  %v424 = vadd.f32 %v385, %v408
  %v425 = vadd.f32 %v386, %v408
  %v426 = vadd.f32 %v387, %v408
  %v427 = vadd.f32 %v388, %v408
  %v428 = vadd.f32 %v389, %v408
  %v429 = vadd.f32 %v390, %v408
  %v430 = vadd.f32 %v391, %v408
  %v431 = vadd.f32 %v392, %v408
  %v432 = vadd.f32 %v393, %v408
  %v433 = vadd.f32 %v394, %v408
  %v434 = vadd.f32 %v395, %v408
  %v435 = vadd.f32 %v396, %v408
  %v436 = vadd.f32 %v397, %v408
  %v437 = vadd.f32 %v398, %v408
  %v438 = vadd.f32 %v399, %v408
  %v439 = vadd.f32 %v400, %v408
  %v440 = vadd.f32 %v401, %v408
  %v441 = vadd.f32 %v402, %v408
  %v442 = vxor.u32 %v410, 2147483648
  %v443 = vxor.u32 %v411, 2147483648
  %v444 = vxor.u32 %v412, 2147483648
  %v445 = vxor.u32 %v413, 2147483648
  %v446 = vxor.u32 %v414, 2147483648
  %v447 = vxor.u32 %v415, 2147483648
  %v448 = vxor.u32 %v416, 2147483648
  %v449 = vxor.u32 %v417, 2147483648
  %v450 = vxor.u32 %v418, 2147483648
  %v451 = vxor.u32 %v419, 2147483648
  %v452 = vxor.u32 %v420, 2147483648
  %v453 = vxor.u32 %v421, 2147483648
  %v454 = vxor.u32 %v422, 2147483648
  %v455 = vxor.u32 %v423, 2147483648
  %v456 = vxor.u32 %v424, 2147483648
  %v457 = vxor.u32 %v425, 2147483648
  %v458 = vxor.u32 %v426, 2147483648
  %v459 = vxor.u32 %v427, 2147483648
  %v460 = vxor.u32 %v428, 2147483648
  %v461 = vxor.u32 %v429, 2147483648
  %v462 = vxor.u32 %v430, 2147483648
  %v463 = vxor.u32 %v431, 2147483648
  %v464 = vxor.u32 %v432, 2147483648
  %v465 = vxor.u32 %v433, 2147483648
  %v466 = vxor.u32 %v434, 2147483648
  %v467 = vxor.u32 %v435, 2147483648
  %v468 = vxor.u32 %v436, 2147483648
  %v469 = vxor.u32 %v437, 2147483648
  %v470 = vxor.u32 %v438, 2147483648
  %v471 = vxor.u32 %v439, 2147483648
  %v472 = vxor.u32 %v440, 2147483648
  %v473 = vxor.u32 %v441, 2147483648
  %v474 = vmul.f32 %v442, 1.442695
  %v475 = vpow.pop %v474
  %v476 = vmul.f32 %v443, 1.442695
  %v477 = vpow.pop %v476
  %v478 = vmul.f32 %v444, 1.442695
  %v479 = vpow.pop %v478
  %v480 = vmul.f32 %v445, 1.442695
  %v481 = vpow.pop %v480
  %v482 = vmul.f32 %v446, 1.442695
  %v483 = vpow.pop %v482
  %v484 = vmul.f32 %v447, 1.442695
  %v485 = vpow.pop %v484
  %v486 = vmul.f32 %v448, 1.442695
  %v487 = vpow.pop %v486
  %v488 = vmul.f32 %v449, 1.442695
  %v489 = vpow.pop %v488
  %v490 = vmul.f32 %v450, 1.442695
  %v491 = vpow.pop %v490
  %v492 = vmul.f32 %v451, 1.442695
  %v493 = vpow.pop %v492
  %v494 = vmul.f32 %v452, 1.442695
  %v495 = vpow.pop %v494
  %v496 = vmul.f32 %v453, 1.442695
  %v497 = vpow.pop %v496
  %v498 = vmul.f32 %v454, 1.442695
  %v499 = vpow.pop %v498
  %v500 = vmul.f32 %v455, 1.442695
  %v501 = vpow.pop %v500
  %v502 = vmul.f32 %v456, 1.442695
  %v503 = vpow.pop %v502
  %v504 = vmul.f32 %v457, 1.442695
  %v505 = vpow.pop %v504
  %v506 = vmul.f32 %v458, 1.442695
  %v507 = vpow.pop %v506
  %v508 = vmul.f32 %v459, 1.442695
  %v509 = vpow.pop %v508
  %v510 = vmul.f32 %v460, 1.442695
  %v511 = vpow.pop %v510
  %v512 = vmul.f32 %v461, 1.442695
  %v513 = vpow.pop %v512
  %v514 = vmul.f32 %v462, 1.442695
  %v515 = vpow.pop %v514
  %v516 = vmul.f32 %v463, 1.442695
  %v517 = vpow.pop %v516
  %v518 = vmul.f32 %v464, 1.442695
  %v519 = vpow.pop %v518
  %v520 = vmul.f32 %v465, 1.442695
  %v521 = vpow.pop %v520
  %v522 = vmul.f32 %v466, 1.442695
  %v523 = vpow.pop %v522
  %v524 = vmul.f32 %v467, 1.442695
  %v525 = vpow.pop %v524
  %v526 = vmul.f32 %v468, 1.442695
  %v527 = vpow.pop %v526
  %v528 = vmul.f32 %v469, 1.442695
  %v529 = vpow.pop %v528
  %v530 = vmul.f32 %v470, 1.442695
  %v531 = vpow.pop %v530
  %v532 = vmul.f32 %v471, 1.442695
  %v533 = vpow.pop %v532
  %v534 = vmul.f32 %v472, 1.442695
  %v535 = vpow.pop %v534
  %v536 = vmul.f32 %v473, 1.442695
  %v537 = vpow.pop %v536
  %v538 = vadd.f32 %v475, 1.0
  %v539 = vadd.f32 %v477, 1.0
  %v540 = vadd.f32 %v479, 1.0
  %v541 = vadd.f32 %v481, 1.0
  %v542 = vadd.f32 %v483, 1.0
  %v543 = vadd.f32 %v485, 1.0
  %v544 = vadd.f32 %v487, 1.0
  %v545 = vadd.f32 %v489, 1.0
  %v546 = vadd.f32 %v491, 1.0
  %v547 = vadd.f32 %v493, 1.0
  %v548 = vadd.f32 %v495, 1.0
  %v549 = vadd.f32 %v497, 1.0
  %v550 = vadd.f32 %v499, 1.0
  %v551 = vadd.f32 %v501, 1.0
  %v552 = vadd.f32 %v503, 1.0
  %v553 = vadd.f32 %v505, 1.0
  %v554 = vadd.f32 %v507, 1.0
  %v555 = vadd.f32 %v509, 1.0
  %v556 = vadd.f32 %v511, 1.0
  %v557 = vadd.f32 %v513, 1.0
  %v558 = vadd.f32 %v515, 1.0
  %v559 = vadd.f32 %v517, 1.0
  %v560 = vadd.f32 %v519, 1.0
  %v561 = vadd.f32 %v521, 1.0
  %v562 = vadd.f32 %v523, 1.0
  %v563 = vadd.f32 %v525, 1.0
  %v564 = vadd.f32 %v527, 1.0
  %v565 = vadd.f32 %v529, 1.0
  %v566 = vadd.f32 %v531, 1.0
  %v567 = vadd.f32 %v533, 1.0
  %v568 = vadd.f32 %v535, 1.0
  %v569 = vadd.f32 %v537, 1.0
  %v570 = vrcp.pop %v538
  %v571 = vmul.f32 1.0, %v570
  %v572 = vrcp.pop %v539
  %v573 = vmul.f32 1.0, %v572
  %v574 = vrcp.pop %v540
  %v575 = vmul.f32 1.0, %v574
  %v576 = vrcp.pop %v541
  %v577 = vmul.f32 1.0, %v576
  %v578 = vrcp.pop %v542
  %v579 = vmul.f32 1.0, %v578
  %v580 = vrcp.pop %v543
  %v581 = vmul.f32 1.0, %v580
  %v582 = vrcp.pop %v544
  %v583 = vmul.f32 1.0, %v582
  %v584 = vrcp.pop %v545
  %v585 = vmul.f32 1.0, %v584
  %v586 = vrcp.pop %v546
  %v587 = vmul.f32 1.0, %v586
  %v588 = vrcp.pop %v547
  %v589 = vmul.f32 1.0, %v588
  %v590 = vrcp.pop %v548
  %v591 = vmul.f32 1.0, %v590
  %v592 = vrcp.pop %v549
  %v593 = vmul.f32 1.0, %v592
  %v594 = vrcp.pop %v550
  %v595 = vmul.f32 1.0, %v594
  %v596 = vrcp.pop %v551
  %v597 = vmul.f32 1.0, %v596
  %v598 = vrcp.pop %v552
  %v599 = vmul.f32 1.0, %v598
  %v600 = vrcp.pop %v553
  %v601 = vmul.f32 1.0, %v600
  %v602 = vrcp.pop %v554
  %v603 = vmul.f32 1.0, %v602
  %v604 = vrcp.pop %v555
  %v605 = vmul.f32 1.0, %v604
  %v606 = vrcp.pop %v556
  %v607 = vmul.f32 1.0, %v606
  %v608 = vrcp.pop %v557
  %v609 = vmul.f32 1.0, %v608
  %v610 = vrcp.pop %v558
  %v611 = vmul.f32 1.0, %v610
  %v612 = vrcp.pop %v559
  %v613 = vmul.f32 1.0, %v612
  %v614 = vrcp.pop %v560
  %v615 = vmul.f32 1.0, %v614
  %v616 = vrcp.pop %v561
  %v617 = vmul.f32 1.0, %v616
  %v618 = vrcp.pop %v562
  %v619 = vmul.f32 1.0, %v618
  %v620 = vrcp.pop %v563
  %v621 = vmul.f32 1.0, %v620
  %v622 = vrcp.pop %v564
  %v623 = vmul.f32 1.0, %v622
  %v624 = vrcp.pop %v565
  %v625 = vmul.f32 1.0, %v624
  %v626 = vrcp.pop %v566
  %v627 = vmul.f32 1.0, %v626
  %v628 = vrcp.pop %v567
  %v629 = vmul.f32 1.0, %v628
  %v630 = vrcp.pop %v568
  %v631 = vmul.f32 1.0, %v630
  %v632 = vrcp.pop %v569
  %v633 = vmul.f32 1.0, %v632
  %v634 = vmul.f32 %v410, %v571
  %v635 = vmul.f32 %v411, %v573
  %v636 = vmul.f32 %v412, %v575
  %v637 = vmul.f32 %v413, %v577
  %v638 = vmul.f32 %v414, %v579
  %v639 = vmul.f32 %v415, %v581
  %v640 = vmul.f32 %v416, %v583
  %v641 = vmul.f32 %v417, %v585
  %v642 = vmul.f32 %v418, %v587
  %v643 = vmul.f32 %v419, %v589
  %v644 = vmul.f32 %v420, %v591
  %v645 = vmul.f32 %v421, %v593
  %v646 = vmul.f32 %v422, %v595
  %v647 = vmul.f32 %v423, %v597
  %v648 = vmul.f32 %v424, %v599
  %v649 = vmul.f32 %v425, %v601
  %v650 = vmul.f32 %v426, %v603
  %v651 = vmul.f32 %v427, %v605
  %v652 = vmul.f32 %v428, %v607
  %v653 = vmul.f32 %v429, %v609
  %v654 = vmul.f32 %v430, %v611
  %v655 = vmul.f32 %v431, %v613
  %v656 = vmul.f32 %v432, %v615
  %v657 = vmul.f32 %v433, %v617
  %v658 = vmul.f32 %v434, %v619
  %v659 = vmul.f32 %v435, %v621
  %v660 = vmul.f32 %v436, %v623
  %v661 = vmul.f32 %v437, %v625
  %v662 = vmul.f32 %v438, %v627
  %v663 = vmul.f32 %v439, %v629
  %v664 = vmul.f32 %v440, %v631
  %v665 = vmul.f32 %v441, %v633
  %666 = vst [vmem:[#allocation2] sm:$0xf] 0
  %667 = vst [vmem:[#allocation2 + $0x4] sm:$0xf] 0
  %668 = vst [vmem:[#allocation2 + $0x8] sm:$0x1] 0
  %s669 = scalar_lea.vmem [#allocation2], 204
  %670 = vst [vmem:[%s669] sm:$0xf] 0
  %671 = vst [vmem:[%s669 + $0x4] sm:$0xf] 0
  %672 = vst [vmem:[%s669 + $0x8] sm:$0x1] 0
  %s673 = scalar_lea.vmem [#allocation2], 12
  %vm674 = vcmask 1040384
  %vm675 = vsmask.f32 256
  %vm676 = vmand %vm674, %vm675
  %v677 = vld [vmem:[%s673] sm:$0x1]
  %v678 = vsel %vm676, 0, %v677
  %679 = vst [vmem:[%s673] sm:$0x1] %v678
  %v680 = vld [vmem:[%s673 + $0xc] sm:$0x1]
  %v681 = vsel %vm676, 0, %v680
  %682 = vst [vmem:[%s673 + $0xc] sm:$0x1] %v681
  %v683 = vld [vmem:[%s673 + $0x18] sm:$0x1]
  %v684 = vsel %vm676, 0, %v683
  %685 = vst [vmem:[%s673 + $0x18] sm:$0x1] %v684
  %v686 = vld [vmem:[%s673 + $0x24] sm:$0x1]
  %v687 = vsel %vm676, 0, %v686
  %688 = vst [vmem:[%s673 + $0x24] sm:$0x1] %v687
  %v689 = vld [vmem:[%s673 + $0x30] sm:$0x1]
  %v690 = vsel %vm676, 0, %v689
  %691 = vst [vmem:[%s673 + $0x30] sm:$0x1] %v690
  %v692 = vld [vmem:[%s673 + $0x3c] sm:$0x1]
  %v693 = vsel %vm676, 0, %v692
  %694 = vst [vmem:[%s673 + $0x3c] sm:$0x1] %v693
  %v695 = vld [vmem:[%s673 + $0x48] sm:$0x1]
  %v696 = vsel %vm676, 0, %v695
  %697 = vst [vmem:[%s673 + $0x48] sm:$0x1] %v696
  %v698 = vld [vmem:[%s673 + $0x54] sm:$0x1]
  %v699 = vsel %vm676, 0, %v698
  %700 = vst [vmem:[%s673 + $0x54] sm:$0x1] %v699
  %v701 = vld [vmem:[%s673 + $0x60] sm:$0x1]
  %v702 = vsel %vm676, 0, %v701
  %703 = vst [vmem:[%s673 + $0x60] sm:$0x1] %v702
  %v704 = vld [vmem:[%s673 + $0x6c] sm:$0x1]
  %v705 = vsel %vm676, 0, %v704
  %706 = vst [vmem:[%s673 + $0x6c] sm:$0x1] %v705
  %v707 = vld [vmem:[%s673 + $0x78] sm:$0x1]
  %v708 = vsel %vm676, 0, %v707
  %709 = vst [vmem:[%s673 + $0x78] sm:$0x1] %v708
  %v710 = vld [vmem:[%s673 + $0x84] sm:$0x1]
  %v711 = vsel %vm676, 0, %v710
  %712 = vst [vmem:[%s673 + $0x84] sm:$0x1] %v711
  %v713 = vld [vmem:[%s673 + $0x90] sm:$0x1]
  %v714 = vsel %vm676, 0, %v713
  %715 = vst [vmem:[%s673 + $0x90] sm:$0x1] %v714
  %v716 = vld [vmem:[%s673 + $0x9c] sm:$0x1]
  %v717 = vsel %vm676, 0, %v716
  %718 = vst [vmem:[%s673 + $0x9c] sm:$0x1] %v717
  %v719 = vld [vmem:[%s673 + $0xa8] sm:$0x1]
  %v720 = vsel %vm676, 0, %v719
  %721 = vst [vmem:[%s673 + $0xa8] sm:$0x1] %v720
  %v722 = vld [vmem:[%s673 + $0xb4] sm:$0x1]
  %v723 = vsel %vm676, 0, %v722
  %724 = vst [vmem:[%s673 + $0xb4] sm:$0x1] %v723
  %vm725 = vsmask.f32 7938
  %vm726 = vmand %vm674, %vm725
  %v727 = vld [vmem:[%s673 + $0x8] sm:$0x1]
  %v728 = vsel %vm726, 0, %v727
  %729 = vst [vmem:[%s673 + $0x8] sm:$0x1] %v728
  %v730 = vld [vmem:[%s673 + $0x14] sm:$0x1]
  %v731 = vsel %vm726, 0, %v730
  %732 = vst [vmem:[%s673 + $0x14] sm:$0x1] %v731
  %v733 = vld [vmem:[%s673 + $0x20] sm:$0x1]
  %v734 = vsel %vm726, 0, %v733
  %735 = vst [vmem:[%s673 + $0x20] sm:$0x1] %v734
  %v736 = vld [vmem:[%s673 + $0x2c] sm:$0x1]
  %v737 = vsel %vm726, 0, %v736
  %738 = vst [vmem:[%s673 + $0x2c] sm:$0x1] %v737
  %v739 = vld [vmem:[%s673 + $0x38] sm:$0x1]
  %v740 = vsel %vm726, 0, %v739
  %741 = vst [vmem:[%s673 + $0x38] sm:$0x1] %v740
  %v742 = vld [vmem:[%s673 + $0x44] sm:$0x1]
  %v743 = vsel %vm726, 0, %v742
  %744 = vst [vmem:[%s673 + $0x44] sm:$0x1] %v743
  %v745 = vld [vmem:[%s673 + $0x50] sm:$0x1]
  %v746 = vsel %vm726, 0, %v745
  %747 = vst [vmem:[%s673 + $0x50] sm:$0x1] %v746
  %v748 = vld [vmem:[%s673 + $0x5c] sm:$0x1]
  %v749 = vsel %vm726, 0, %v748
  %750 = vst [vmem:[%s673 + $0x5c] sm:$0x1] %v749
  %v751 = vld [vmem:[%s673 + $0x68] sm:$0x1]
  %v752 = vsel %vm726, 0, %v751
  %753 = vst [vmem:[%s673 + $0x68] sm:$0x1] %v752
  %v754 = vld [vmem:[%s673 + $0x74] sm:$0x1]
  %v755 = vsel %vm726, 0, %v754
  %756 = vst [vmem:[%s673 + $0x74] sm:$0x1] %v755
  %v757 = vld [vmem:[%s673 + $0x80] sm:$0x1]
  %v758 = vsel %vm726, 0, %v757
  %759 = vst [vmem:[%s673 + $0x80] sm:$0x1] %v758
  %v760 = vld [vmem:[%s673 + $0x8c] sm:$0x1]
  %v761 = vsel %vm726, 0, %v760
  %762 = vst [vmem:[%s673 + $0x8c] sm:$0x1] %v761
  %v763 = vld [vmem:[%s673 + $0x98] sm:$0x1]
  %v764 = vsel %vm726, 0, %v763
  %765 = vst [vmem:[%s673 + $0x98] sm:$0x1] %v764
  %v766 = vld [vmem:[%s673 + $0xa4] sm:$0x1]
  %v767 = vsel %vm726, 0, %v766
  %768 = vst [vmem:[%s673 + $0xa4] sm:$0x1] %v767
  %v769 = vld [vmem:[%s673 + $0xb0] sm:$0x1]
  %v770 = vsel %vm726, 0, %v769
  %771 = vst [vmem:[%s673 + $0xb0] sm:$0x1] %v770
  %v772 = vld [vmem:[%s673 + $0xbc] sm:$0x1]
  %v773 = vsel %vm726, 0, %v772
  %774 = vst [vmem:[%s673 + $0xbc] sm:$0x1] %v773
  %v775 = vpack.c.bf16 %v635, %v634
  %v776 = vpack.c.bf16 %v637, %v636
  %v777 = vpack.c.bf16 %v639, %v638
  %v778 = vpack.c.bf16 %v641, %v640
  %v779 = vpack.c.bf16 %v643, %v642
  %v780 = vpack.c.bf16 %v645, %v644
  %v781 = vpack.c.bf16 %v647, %v646
  %v782 = vpack.c.bf16 %v649, %v648
  %v783 = vpack.c.bf16 %v651, %v650
  %v784 = vpack.c.bf16 %v653, %v652
  %v785 = vpack.c.bf16 %v655, %v654
  %v786 = vpack.c.bf16 %v657, %v656
  %v787 = vpack.c.bf16 %v659, %v658
  %v788 = vpack.c.bf16 %v661, %v660
  %v789 = vpack.c.bf16 %v663, %v662
  %v790 = vpack.c.bf16 %v665, %v664
  %v807 = vunpack.c.l.b16 %v775
  %v808 = vunpack.c.h.b16 %v775
  %v809 = vunpack.c.l.b16 %v776
  %v810 = vunpack.c.h.b16 %v776
  %v811 = vunpack.c.l.b16 %v777
  %v812 = vunpack.c.h.b16 %v777
  %v813 = vunpack.c.l.b16 %v778
  %v814 = vunpack.c.h.b16 %v778
  %v815 = vunpack.c.l.b16 %v779
  %v816 = vunpack.c.h.b16 %v779
  %v817 = vunpack.c.l.b16 %v780
  %v818 = vunpack.c.h.b16 %v780
  %v819 = vunpack.c.l.b16 %v781
  %v820 = vunpack.c.h.b16 %v781
  %v821 = vunpack.c.l.b16 %v782
  %v822 = vunpack.c.h.b16 %v782
  %v823 = vunpack.c.l.b16 %v783
  %v824 = vunpack.c.h.b16 %v783
  %v825 = vunpack.c.l.b16 %v784
  %v826 = vunpack.c.h.b16 %v784
  %v827 = vunpack.c.l.b16 %v785
  %v828 = vunpack.c.h.b16 %v785
  %v829 = vunpack.c.l.b16 %v786
  %v830 = vunpack.c.h.b16 %v786
  %v831 = vunpack.c.l.b16 %v787
  %v832 = vunpack.c.h.b16 %v787
  %v833 = vunpack.c.l.b16 %v788
  %v834 = vunpack.c.h.b16 %v788
  %v835 = vunpack.c.l.b16 %v789
  %v836 = vunpack.c.h.b16 %v789
  %v837 = vunpack.c.l.b16 %v790
  %v838 = vunpack.c.h.b16 %v790
  %v839 = vpack.c.b16 %v807, %v807
  %v840 = vpack.c.b16 %v808, %v808
  %v841 = vpack.c.b16 %v809, %v809
  %v842 = vpack.c.b16 %v810, %v810
  %v843 = vpack.c.b16 %v811, %v811
  %v844 = vpack.c.b16 %v812, %v812
  %v845 = vpack.c.b16 %v813, %v813
  %v846 = vpack.c.b16 %v814, %v814
  %v847 = vpack.c.b16 %v815, %v815
  %v848 = vpack.c.b16 %v816, %v816
  %v849 = vpack.c.b16 %v817, %v817
  %v850 = vpack.c.b16 %v818, %v818
  %v851 = vpack.c.b16 %v819, %v819
  %v852 = vpack.c.b16 %v820, %v820
  %v853 = vpack.c.b16 %v821, %v821
  %v854 = vpack.c.b16 %v822, %v822
  %v855 = vpack.c.b16 %v823, %v823
  %v856 = vpack.c.b16 %v824, %v824
  %v857 = vpack.c.b16 %v825, %v825
  %v858 = vpack.c.b16 %v826, %v826
  %v859 = vpack.c.b16 %v827, %v827
  %v860 = vpack.c.b16 %v828, %v828
  %v861 = vpack.c.b16 %v829, %v829
  %v862 = vpack.c.b16 %v830, %v830
  %v863 = vpack.c.b16 %v831, %v831
  %v864 = vpack.c.b16 %v832, %v832
  %v865 = vpack.c.b16 %v833, %v833
  %v866 = vpack.c.b16 %v834, %v834
  %v867 = vpack.c.b16 %v835, %v835
  %v868 = vpack.c.b16 %v836, %v836
  %v869 = vpack.c.b16 %v837, %v837
  %v870 = vpack.c.b16 %v838, %v838
  %vm871 = vsmask.f32 4368
  %vm872 = vmor %vm675, %vm871
  %v874 = vshrl.u32 %v839, 16
  %v876 = vrot.slane %v874, 7
  %v877 = vshll.u32 %v839, 16
  %v879 = vor.u32 %v876, %v877
  %v880 = vrot.slane %v876, 4
  %v882 = vshrl.u32 %v840, 16
  %v884 = vrot.slane %v882, 7
  %v885 = vshll.u32 %v840, 16
  %v887 = vor.u32 %v884, %v885
  %v888 = vsel %vm872, %v880, %v887
  %v889 = vrot.slane %v884, 4
  %v891 = vshrl.u32 %v841, 16
  %v893 = vrot.slane %v891, 7
  %v894 = vshll.u32 %v841, 16
  %v896 = vor.u32 %v893, %v894
  %v897 = vrot.slane %v893, 4
  %v899 = vshrl.u32 %v842, 16
  %v901 = vrot.slane %v899, 7
  %v902 = vshll.u32 %v842, 16
  %v904 = vor.u32 %v901, %v902
  %v905 = vsel %vm872, %v897, %v904
  %v906 = vrot.slane %v901, 4
  %v908 = vshrl.u32 %v843, 16
  %v910 = vrot.slane %v908, 7
  %v911 = vshll.u32 %v843, 16
  %v913 = vor.u32 %v910, %v911
  %v914 = vrot.slane %v910, 4
  %v916 = vshrl.u32 %v844, 16
  %v918 = vrot.slane %v916, 7
  %v919 = vshll.u32 %v844, 16
  %v921 = vor.u32 %v918, %v919
  %v922 = vsel %vm872, %v914, %v921
  %v923 = vrot.slane %v918, 4
  %v925 = vshrl.u32 %v845, 16
  %v927 = vrot.slane %v925, 7
  %v928 = vshll.u32 %v845, 16
  %v930 = vor.u32 %v927, %v928
  %v931 = vrot.slane %v927, 4
  %v933 = vshrl.u32 %v846, 16
  %v935 = vrot.slane %v933, 7
  %v936 = vshll.u32 %v846, 16
  %v938 = vor.u32 %v935, %v936
  %v939 = vsel %vm872, %v931, %v938
  %v940 = vrot.slane %v935, 4
  %v942 = vshrl.u32 %v847, 16
  %v944 = vrot.slane %v942, 7
  %v945 = vshll.u32 %v847, 16
  %v947 = vor.u32 %v944, %v945
  %v948 = vrot.slane %v944, 4
  %v950 = vshrl.u32 %v848, 16
  %v952 = vrot.slane %v950, 7
  %v953 = vshll.u32 %v848, 16
  %v955 = vor.u32 %v952, %v953
  %v956 = vsel %vm872, %v948, %v955
  %v957 = vrot.slane %v952, 4
  %v959 = vshrl.u32 %v849, 16
  %v961 = vrot.slane %v959, 7
  %v962 = vshll.u32 %v849, 16
  %v964 = vor.u32 %v961, %v962
  %v965 = vrot.slane %v961, 4
  %v967 = vshrl.u32 %v850, 16
  %v969 = vrot.slane %v967, 7
  %v970 = vshll.u32 %v850, 16
  %v972 = vor.u32 %v969, %v970
  %v973 = vsel %vm872, %v965, %v972
  %v974 = vrot.slane %v969, 4
  %v976 = vshrl.u32 %v851, 16
  %v978 = vrot.slane %v976, 7
  %v979 = vshll.u32 %v851, 16
  %v981 = vor.u32 %v978, %v979
  %v982 = vrot.slane %v978, 4
  %v984 = vshrl.u32 %v852, 16
  %v986 = vrot.slane %v984, 7
  %v987 = vshll.u32 %v852, 16
  %v989 = vor.u32 %v986, %v987
  %v990 = vsel %vm872, %v982, %v989
  %v991 = vrot.slane %v986, 4
  %v993 = vshrl.u32 %v853, 16
  %v995 = vrot.slane %v993, 7
  %v996 = vshll.u32 %v853, 16
  %v998 = vor.u32 %v995, %v996
  %v999 = vrot.slane %v995, 4
  %v1001 = vshrl.u32 %v854, 16
  %v1003 = vrot.slane %v1001, 7
  %v1004 = vshll.u32 %v854, 16
  %v1006 = vor.u32 %v1003, %v1004
  %v1007 = vsel %vm872, %v999, %v1006
  %v1008 = vrot.slane %v1003, 4
  %v1010 = vshrl.u32 %v855, 16
  %v1012 = vrot.slane %v1010, 7
  %v1013 = vshll.u32 %v855, 16
  %v1015 = vor.u32 %v1012, %v1013
  %v1016 = vrot.slane %v1012, 4
  %v1018 = vshrl.u32 %v856, 16
  %v1020 = vrot.slane %v1018, 7
  %v1021 = vshll.u32 %v856, 16
  %v1023 = vor.u32 %v1020, %v1021
  %v1024 = vsel %vm872, %v1016, %v1023
  %v1025 = vrot.slane %v1020, 4
  %v1027 = vshrl.u32 %v857, 16
  %v1029 = vrot.slane %v1027, 7
  %v1030 = vshll.u32 %v857, 16
  %v1032 = vor.u32 %v1029, %v1030
  %v1033 = vrot.slane %v1029, 4
  %v1035 = vshrl.u32 %v858, 16
  %v1037 = vrot.slane %v1035, 7
  %v1038 = vshll.u32 %v858, 16
  %v1040 = vor.u32 %v1037, %v1038
  %v1041 = vsel %vm872, %v1033, %v1040
  %v1042 = vrot.slane %v1037, 4
  %v1044 = vshrl.u32 %v859, 16
  %v1046 = vrot.slane %v1044, 7
  %v1047 = vshll.u32 %v859, 16
  %v1049 = vor.u32 %v1046, %v1047
  %v1050 = vrot.slane %v1046, 4
  %v1052 = vshrl.u32 %v860, 16
  %v1054 = vrot.slane %v1052, 7
  %v1055 = vshll.u32 %v860, 16
  %v1057 = vor.u32 %v1054, %v1055
  %v1058 = vsel %vm872, %v1050, %v1057
  %v1059 = vrot.slane %v1054, 4
  %v1061 = vshrl.u32 %v861, 16
  %v1063 = vrot.slane %v1061, 7
  %v1064 = vshll.u32 %v861, 16
  %v1066 = vor.u32 %v1063, %v1064
  %v1067 = vrot.slane %v1063, 4
  %v1069 = vshrl.u32 %v862, 16
  %v1071 = vrot.slane %v1069, 7
  %v1072 = vshll.u32 %v862, 16
  %v1074 = vor.u32 %v1071, %v1072
  %v1075 = vsel %vm872, %v1067, %v1074
  %v1076 = vrot.slane %v1071, 4
  %v1078 = vshrl.u32 %v863, 16
  %v1080 = vrot.slane %v1078, 7
  %v1081 = vshll.u32 %v863, 16
  %v1083 = vor.u32 %v1080, %v1081
  %v1084 = vrot.slane %v1080, 4
  %v1086 = vshrl.u32 %v864, 16
  %v1088 = vrot.slane %v1086, 7
  %v1089 = vshll.u32 %v864, 16
  %v1091 = vor.u32 %v1088, %v1089
  %v1092 = vsel %vm872, %v1084, %v1091
  %v1093 = vrot.slane %v1088, 4
  %v1095 = vshrl.u32 %v865, 16
  %v1097 = vrot.slane %v1095, 7
  %v1098 = vshll.u32 %v865, 16
  %v1100 = vor.u32 %v1097, %v1098
  %v1101 = vrot.slane %v1097, 4
  %v1103 = vshrl.u32 %v866, 16
  %v1105 = vrot.slane %v1103, 7
  %v1106 = vshll.u32 %v866, 16
  %v1108 = vor.u32 %v1105, %v1106
  %v1109 = vsel %vm872, %v1101, %v1108
  %v1110 = vrot.slane %v1105, 4
  %v1112 = vshrl.u32 %v867, 16
  %v1114 = vrot.slane %v1112, 7
  %v1115 = vshll.u32 %v867, 16
  %v1117 = vor.u32 %v1114, %v1115
  %v1118 = vrot.slane %v1114, 4
  %v1120 = vshrl.u32 %v868, 16
  %v1122 = vrot.slane %v1120, 7
  %v1123 = vshll.u32 %v868, 16
  %v1125 = vor.u32 %v1122, %v1123
  %v1126 = vsel %vm872, %v1118, %v1125
  %v1127 = vrot.slane %v1122, 4
  %v1129 = vshrl.u32 %v869, 16
  %v1131 = vrot.slane %v1129, 7
  %v1132 = vshll.u32 %v869, 16
  %v1134 = vor.u32 %v1131, %v1132
  %v1135 = vrot.slane %v1131, 4
  %v1137 = vshrl.u32 %v870, 16
  %v1139 = vrot.slane %v1137, 7
  %v1140 = vshll.u32 %v870, 16
  %v1142 = vor.u32 %v1139, %v1140
  %v1143 = vsel %vm872, %v1135, %v1142
  %v1144 = vrot.slane %v1139, 4
  %vm1193 = vcmask 1043456
  %vm1194 = vmand %vm1193, %vm725
  %v1195 = vld [vmem:[%s673] sm:$0xf]
  %v1196 = vsel %vm1194, %v879, %v1195
  %1197 = vst [vmem:[%s673] sm:$0xf] %v1196
  %1198 = vst [vmem:[%s673 + $0x4] sm:$0xf] %v888
  %v1199 = vld [vmem:[%s673 + $0x8] sm:$0x1]
  %v1200 = vsel %vm676, %v889, %v1199
  %1201 = vst [vmem:[%s673 + $0x8] sm:$0x1] %v1200
  %v1202 = vld [vmem:[%s673 + $0xc] sm:$0xf]
  %v1203 = vsel %vm1194, %v896, %v1202
  %1204 = vst [vmem:[%s673 + $0xc] sm:$0xf] %v1203
  %1205 = vst [vmem:[%s673 + $0x10] sm:$0xf] %v905
  %v1206 = vld [vmem:[%s673 + $0x14] sm:$0x1]
  %v1207 = vsel %vm676, %v906, %v1206
  %1208 = vst [vmem:[%s673 + $0x14] sm:$0x1] %v1207
  %v1209 = vld [vmem:[%s673 + $0x18] sm:$0xf]
  %v1210 = vsel %vm1194, %v913, %v1209
  %1211 = vst [vmem:[%s673 + $0x18] sm:$0xf] %v1210
  %1212 = vst [vmem:[%s673 + $0x1c] sm:$0xf] %v922
  %v1213 = vld [vmem:[%s673 + $0x20] sm:$0x1]
  %v1214 = vsel %vm676, %v923, %v1213
  %1215 = vst [vmem:[%s673 + $0x20] sm:$0x1] %v1214
  %v1216 = vld [vmem:[%s673 + $0x24] sm:$0xf]
  %v1217 = vsel %vm1194, %v930, %v1216
  %1218 = vst [vmem:[%s673 + $0x24] sm:$0xf] %v1217
  %1219 = vst [vmem:[%s673 + $0x28] sm:$0xf] %v939
  %v1220 = vld [vmem:[%s673 + $0x2c] sm:$0x1]
  %v1221 = vsel %vm676, %v940, %v1220
  %1222 = vst [vmem:[%s673 + $0x2c] sm:$0x1] %v1221
  %v1223 = vld [vmem:[%s673 + $0x30] sm:$0xf]
  %v1224 = vsel %vm1194, %v947, %v1223
  %1225 = vst [vmem:[%s673 + $0x30] sm:$0xf] %v1224
  %1226 = vst [vmem:[%s673 + $0x34] sm:$0xf] %v956
  %v1227 = vld [vmem:[%s673 + $0x38] sm:$0x1]
  %v1228 = vsel %vm676, %v957, %v1227
  %1229 = vst [vmem:[%s673 + $0x38] sm:$0x1] %v1228
  %v1230 = vld [vmem:[%s673 + $0x3c] sm:$0xf]
  %v1231 = vsel %vm1194, %v964, %v1230
  %1232 = vst [vmem:[%s673 + $0x3c] sm:$0xf] %v1231
  %1233 = vst [vmem:[%s673 + $0x40] sm:$0xf] %v973
  %v1234 = vld [vmem:[%s673 + $0x44] sm:$0x1]
  %v1235 = vsel %vm676, %v974, %v1234
  %1236 = vst [vmem:[%s673 + $0x44] sm:$0x1] %v1235
  %v1237 = vld [vmem:[%s673 + $0x48] sm:$0xf]
  %v1238 = vsel %vm1194, %v981, %v1237
  %1239 = vst [vmem:[%s673 + $0x48] sm:$0xf] %v1238
  %1240 = vst [vmem:[%s673 + $0x4c] sm:$0xf] %v990
  %v1241 = vld [vmem:[%s673 + $0x50] sm:$0x1]
  %v1242 = vsel %vm676, %v991, %v1241
  %1243 = vst [vmem:[%s673 + $0x50] sm:$0x1] %v1242
  %v1244 = vld [vmem:[%s673 + $0x54] sm:$0xf]
  %v1245 = vsel %vm1194, %v998, %v1244
  %1246 = vst [vmem:[%s673 + $0x54] sm:$0xf] %v1245
  %1247 = vst [vmem:[%s673 + $0x58] sm:$0xf] %v1007
  %v1248 = vld [vmem:[%s673 + $0x5c] sm:$0x1]
  %v1249 = vsel %vm676, %v1008, %v1248
  %1250 = vst [vmem:[%s673 + $0x5c] sm:$0x1] %v1249
  %v1251 = vld [vmem:[%s673 + $0x60] sm:$0xf]
  %v1252 = vsel %vm1194, %v1015, %v1251
  %1253 = vst [vmem:[%s673 + $0x60] sm:$0xf] %v1252
  %1254 = vst [vmem:[%s673 + $0x64] sm:$0xf] %v1024
  %v1255 = vld [vmem:[%s673 + $0x68] sm:$0x1]
  %v1256 = vsel %vm676, %v1025, %v1255
  %1257 = vst [vmem:[%s673 + $0x68] sm:$0x1] %v1256
  %v1258 = vld [vmem:[%s673 + $0x6c] sm:$0xf]
  %v1259 = vsel %vm1194, %v1032, %v1258
  %1260 = vst [vmem:[%s673 + $0x6c] sm:$0xf] %v1259
  %1261 = vst [vmem:[%s673 + $0x70] sm:$0xf] %v1041
  %v1262 = vld [vmem:[%s673 + $0x74] sm:$0x1]
  %v1263 = vsel %vm676, %v1042, %v1262
  %1264 = vst [vmem:[%s673 + $0x74] sm:$0x1] %v1263
  %v1265 = vld [vmem:[%s673 + $0x78] sm:$0xf]
  %v1266 = vsel %vm1194, %v1049, %v1265
  %1267 = vst [vmem:[%s673 + $0x78] sm:$0xf] %v1266
  %1268 = vst [vmem:[%s673 + $0x7c] sm:$0xf] %v1058
  %v1269 = vld [vmem:[%s673 + $0x80] sm:$0x1]
  %v1270 = vsel %vm676, %v1059, %v1269
  %1271 = vst [vmem:[%s673 + $0x80] sm:$0x1] %v1270
  %v1272 = vld [vmem:[%s673 + $0x84] sm:$0xf]
  %v1273 = vsel %vm1194, %v1066, %v1272
  %1274 = vst [vmem:[%s673 + $0x84] sm:$0xf] %v1273
  %1275 = vst [vmem:[%s673 + $0x88] sm:$0xf] %v1075
  %v1276 = vld [vmem:[%s673 + $0x8c] sm:$0x1]
  %v1277 = vsel %vm676, %v1076, %v1276
  %1278 = vst [vmem:[%s673 + $0x8c] sm:$0x1] %v1277
  %v1279 = vld [vmem:[%s673 + $0x90] sm:$0xf]
  %v1280 = vsel %vm1194, %v1083, %v1279
  %1281 = vst [vmem:[%s673 + $0x90] sm:$0xf] %v1280
  %1282 = vst [vmem:[%s673 + $0x94] sm:$0xf] %v1092
  %v1283 = vld [vmem:[%s673 + $0x98] sm:$0x1]
  %v1284 = vsel %vm676, %v1093, %v1283
  %1285 = vst [vmem:[%s673 + $0x98] sm:$0x1] %v1284
  %v1286 = vld [vmem:[%s673 + $0x9c] sm:$0xf]
  %v1287 = vsel %vm1194, %v1100, %v1286
  %1288 = vst [vmem:[%s673 + $0x9c] sm:$0xf] %v1287
  %1289 = vst [vmem:[%s673 + $0xa0] sm:$0xf] %v1109
  %v1290 = vld [vmem:[%s673 + $0xa4] sm:$0x1]
  %v1291 = vsel %vm676, %v1110, %v1290
  %1292 = vst [vmem:[%s673 + $0xa4] sm:$0x1] %v1291
  %v1293 = vld [vmem:[%s673 + $0xa8] sm:$0xf]
  %v1294 = vsel %vm1194, %v1117, %v1293
  %1295 = vst [vmem:[%s673 + $0xa8] sm:$0xf] %v1294
  %1296 = vst [vmem:[%s673 + $0xac] sm:$0xf] %v1126
  %v1297 = vld [vmem:[%s673 + $0xb0] sm:$0x1]
  %v1298 = vsel %vm676, %v1127, %v1297
  %1299 = vst [vmem:[%s673 + $0xb0] sm:$0x1] %v1298
  %v1300 = vld [vmem:[%s673 + $0xb4] sm:$0xf]
  %v1301 = vsel %vm1194, %v1134, %v1300
  %1302 = vst [vmem:[%s673 + $0xb4] sm:$0xf] %v1301
  %1303 = vst [vmem:[%s673 + $0xb8] sm:$0xf] %v1143
  %v1304 = vld [vmem:[%s673 + $0xbc] sm:$0x1]
  %v1305 = vsel %vm676, %v1144, %v1304
  %1306 = vst [vmem:[%s673 + $0xbc] sm:$0x1] %v1305
  %v1307 = vld [vmem:[#allocation2] sm:$0xf]
  %v1308 = vld [vmem:[#allocation2 + $0x4] sm:$0xf]
  %v1309 = vld [vmem:[#allocation2 + $0xc] sm:$0xf]
  %v1310 = vld [vmem:[#allocation2 + $0x10] sm:$0xf]
  %v1311 = vld [vmem:[#allocation2 + $0x18] sm:$0xf]
  %v1312 = vld [vmem:[#allocation2 + $0x1c] sm:$0xf]
  %v1313 = vld [vmem:[#allocation2 + $0x24] sm:$0xf]
  %v1314 = vld [vmem:[#allocation2 + $0x28] sm:$0xf]
  %v1315 = vld [vmem:[#allocation2 + $0x30] sm:$0xf]
  %v1316 = vld [vmem:[#allocation2 + $0x34] sm:$0xf]
  %v1317 = vld [vmem:[#allocation2 + $0x3c] sm:$0xf]
  %v1318 = vld [vmem:[#allocation2 + $0x40] sm:$0xf]
  %v1319 = vld [vmem:[#allocation2 + $0x48] sm:$0xf]
  %v1320 = vld [vmem:[#allocation2 + $0x4c] sm:$0xf]
  %v1321 = vld [vmem:[#allocation2 + $0x54] sm:$0xf]
  %v1322 = vld [vmem:[#allocation2 + $0x58] sm:$0xf]
  %v1323 = vld [vmem:[#allocation2 + $0x60] sm:$0xf]
  %v1324 = vld [vmem:[#allocation2 + $0x64] sm:$0xf]
  %v1325 = vld [vmem:[#allocation2 + $0x6c] sm:$0xf]
  %v1326 = vld [vmem:[#allocation2 + $0x70] sm:$0xf]
  %v1327 = vld [vmem:[#allocation2 + $0x78] sm:$0xf]
  %v1328 = vld [vmem:[#allocation2 + $0x7c] sm:$0xf]
  %v1329 = vld [vmem:[#allocation2 + $0x84] sm:$0xf]
  %v1330 = vld [vmem:[#allocation2 + $0x88] sm:$0xf]
  %v1331 = vld [vmem:[#allocation2 + $0x90] sm:$0xf]
  %v1332 = vld [vmem:[#allocation2 + $0x94] sm:$0xf]
  %v1333 = vld [vmem:[#allocation2 + $0x9c] sm:$0xf]
  %v1334 = vld [vmem:[#allocation2 + $0xa0] sm:$0xf]
  %v1335 = vld [vmem:[#allocation2 + $0xa8] sm:$0xf]
  %v1336 = vld [vmem:[#allocation2 + $0xac] sm:$0xf]
  %v1337 = vld [vmem:[#allocation2 + $0xb4] sm:$0xf]
  %v1338 = vld [vmem:[#allocation2 + $0xb8] sm:$0xf]
  %v1339 = vld [vmem:[#allocation2 + $0x8] sm:$0x1]
  %v1340 = vld [vmem:[#allocation2 + $0x14] sm:$0x1]
  %v1341 = vld [vmem:[#allocation2 + $0x20] sm:$0x1]
  %v1342 = vld [vmem:[#allocation2 + $0x2c] sm:$0x1]
  %v1343 = vld [vmem:[#allocation2 + $0x38] sm:$0x1]
  %v1344 = vld [vmem:[#allocation2 + $0x44] sm:$0x1]
  %v1345 = vld [vmem:[#allocation2 + $0x50] sm:$0x1]
  %v1346 = vld [vmem:[#allocation2 + $0x5c] sm:$0x1]
  %v1347 = vld [vmem:[#allocation2 + $0x68] sm:$0x1]
  %v1348 = vld [vmem:[#allocation2 + $0x74] sm:$0x1]
  %v1349 = vld [vmem:[#allocation2 + $0x80] sm:$0x1]
  %v1350 = vld [vmem:[#allocation2 + $0x8c] sm:$0x1]
  %v1351 = vld [vmem:[#allocation2 + $0x98] sm:$0x1]
  %v1352 = vld [vmem:[#allocation2 + $0xa4] sm:$0x1]
  %v1353 = vld [vmem:[#allocation2 + $0xb0] sm:$0x1]
  %v1354 = vld [vmem:[#allocation2 + $0xbc] sm:$0x1]
  %v1355 = vld [vmem:[#allocation2] sm:$0xe]
  %v1356 = vld [vmem:[#allocation2 + $0xc] sm:$0xe]
  %v1357 = vld [vmem:[#allocation2 + $0x18] sm:$0xe]
  %v1358 = vld [vmem:[#allocation2 + $0x24] sm:$0xe]
  %v1359 = vld [vmem:[#allocation2 + $0x30] sm:$0xe]
  %v1360 = vld [vmem:[#allocation2 + $0x3c] sm:$0xe]
  %v1361 = vld [vmem:[#allocation2 + $0x48] sm:$0xe]
  %v1362 = vld [vmem:[#allocation2 + $0x54] sm:$0xe]
  %v1363 = vld [vmem:[#allocation2 + $0x60] sm:$0xe]
  %v1364 = vld [vmem:[#allocation2 + $0x6c] sm:$0xe]
  %v1365 = vld [vmem:[#allocation2 + $0x78] sm:$0xe]
  %v1366 = vld [vmem:[#allocation2 + $0x84] sm:$0xe]
  %v1367 = vld [vmem:[#allocation2 + $0x90] sm:$0xe]
  %v1368 = vld [vmem:[#allocation2 + $0x9c] sm:$0xe]
  %v1369 = vld [vmem:[#allocation2 + $0xa8] sm:$0xe]
  %v1370 = vld [vmem:[#allocation2 + $0xb4] sm:$0xe]
  %v1403 = vunpack.c.l.b16 %v1307
  %v1404 = vunpack.c.l.b16 %v1308
  %v1405 = vunpack.c.l.b16 %v1309
  %v1406 = vunpack.c.l.b16 %v1310
  %v1407 = vunpack.c.l.b16 %v1311
  %v1408 = vunpack.c.l.b16 %v1312
  %v1409 = vunpack.c.l.b16 %v1313
  %v1410 = vunpack.c.l.b16 %v1314
  %v1411 = vunpack.c.l.b16 %v1315
  %v1412 = vunpack.c.l.b16 %v1316
  %v1413 = vunpack.c.l.b16 %v1317
  %v1414 = vunpack.c.l.b16 %v1318
  %v1415 = vunpack.c.l.b16 %v1319
  %v1416 = vunpack.c.l.b16 %v1320
  %v1417 = vunpack.c.l.b16 %v1321
  %v1418 = vunpack.c.l.b16 %v1322
  %v1419 = vunpack.c.l.b16 %v1323
  %v1420 = vunpack.c.l.b16 %v1324
  %v1421 = vunpack.c.l.b16 %v1325
  %v1422 = vunpack.c.l.b16 %v1326
  %v1423 = vunpack.c.l.b16 %v1327
  %v1424 = vunpack.c.l.b16 %v1328
  %v1425 = vunpack.c.l.b16 %v1329
  %v1426 = vunpack.c.l.b16 %v1330
  %v1427 = vunpack.c.l.b16 %v1331
  %v1428 = vunpack.c.l.b16 %v1332
  %v1429 = vunpack.c.l.b16 %v1333
  %v1430 = vunpack.c.l.b16 %v1334
  %v1431 = vunpack.c.l.b16 %v1335
  %v1432 = vunpack.c.l.b16 %v1336
  %v1433 = vunpack.c.l.b16 %v1337
  %v1434 = vunpack.c.l.b16 %v1338
  %v1435 = vpack.c.b16 %v1404, %v1403
  %v1436 = vpack.c.b16 %v1406, %v1405
  %v1437 = vpack.c.b16 %v1408, %v1407
  %v1438 = vpack.c.b16 %v1410, %v1409
  %v1439 = vpack.c.b16 %v1412, %v1411
  %v1440 = vpack.c.b16 %v1414, %v1413
  %v1441 = vpack.c.b16 %v1416, %v1415
  %v1442 = vpack.c.b16 %v1418, %v1417
  %v1443 = vpack.c.b16 %v1420, %v1419
  %v1444 = vpack.c.b16 %v1422, %v1421
  %v1445 = vpack.c.b16 %v1424, %v1423
  %v1446 = vpack.c.b16 %v1426, %v1425
  %v1447 = vpack.c.b16 %v1428, %v1427
  %v1448 = vpack.c.b16 %v1430, %v1429
  %v1449 = vpack.c.b16 %v1432, %v1431
  %v1450 = vpack.c.b16 %v1434, %v1433
  %v1483 = vunpack.c.l.b16 %v1339
  %v1484 = vunpack.c.l.b16 %v1340
  %v1485 = vunpack.c.l.b16 %v1341
  %v1486 = vunpack.c.l.b16 %v1342
  %v1487 = vunpack.c.l.b16 %v1343
  %v1488 = vunpack.c.l.b16 %v1344
  %v1489 = vunpack.c.l.b16 %v1345
  %v1490 = vunpack.c.l.b16 %v1346
  %v1491 = vunpack.c.l.b16 %v1347
  %v1492 = vunpack.c.l.b16 %v1348
  %v1493 = vunpack.c.l.b16 %v1349
  %v1494 = vunpack.c.l.b16 %v1350
  %v1495 = vunpack.c.l.b16 %v1351
  %v1496 = vunpack.c.l.b16 %v1352
  %v1497 = vunpack.c.l.b16 %v1353
  %v1498 = vunpack.c.l.b16 %v1354
  %v1499 = vpack.c.b16 %v1483, %v1483
  %v1500 = vpack.c.b16 %v1484, %v1484
  %v1501 = vpack.c.b16 %v1485, %v1485
  %v1502 = vpack.c.b16 %v1486, %v1486
  %v1503 = vpack.c.b16 %v1487, %v1487
  %v1504 = vpack.c.b16 %v1488, %v1488
  %v1505 = vpack.c.b16 %v1489, %v1489
  %v1506 = vpack.c.b16 %v1490, %v1490
  %v1507 = vpack.c.b16 %v1491, %v1491
  %v1508 = vpack.c.b16 %v1492, %v1492
  %v1509 = vpack.c.b16 %v1493, %v1493
  %v1510 = vpack.c.b16 %v1494, %v1494
  %v1511 = vpack.c.b16 %v1495, %v1495
  %v1512 = vpack.c.b16 %v1496, %v1496
  %v1513 = vpack.c.b16 %v1497, %v1497
  %v1514 = vpack.c.b16 %v1498, %v1498
  %vm1515 = vsmask.f32 7424
  %v1517 = vshrl.u32 %v1435, 16
  %v1519 = vshll.u32 %v1435, 16
  %v1521 = vrot.slane %v1519, 1
  %v1522 = vor.u32 %v1517, %v1521
  %v1524 = vshll.u32 %v1499, 16
  %v1526 = vrot.slane %v1524, 1
  %v1527 = vsel %vm1515, %v1522, %v1526
  %v1529 = vshrl.u32 %v1436, 16
  %v1531 = vshll.u32 %v1436, 16
  %v1533 = vrot.slane %v1531, 1
  %v1534 = vor.u32 %v1529, %v1533
  %v1536 = vshll.u32 %v1500, 16
  %v1538 = vrot.slane %v1536, 1
  %v1539 = vsel %vm1515, %v1534, %v1538
  %v1541 = vshrl.u32 %v1437, 16
  %v1543 = vshll.u32 %v1437, 16
  %v1545 = vrot.slane %v1543, 1
  %v1546 = vor.u32 %v1541, %v1545
  %v1548 = vshll.u32 %v1501, 16
  %v1550 = vrot.slane %v1548, 1
  %v1551 = vsel %vm1515, %v1546, %v1550
  %v1553 = vshrl.u32 %v1438, 16
  %v1555 = vshll.u32 %v1438, 16
  %v1557 = vrot.slane %v1555, 1
  %v1558 = vor.u32 %v1553, %v1557
  %v1560 = vshll.u32 %v1502, 16
  %v1562 = vrot.slane %v1560, 1
  %v1563 = vsel %vm1515, %v1558, %v1562
  %v1565 = vshrl.u32 %v1439, 16
  %v1567 = vshll.u32 %v1439, 16
  %v1569 = vrot.slane %v1567, 1
  %v1570 = vor.u32 %v1565, %v1569
  %v1572 = vshll.u32 %v1503, 16
  %v1574 = vrot.slane %v1572, 1
  %v1575 = vsel %vm1515, %v1570, %v1574
  %v1577 = vshrl.u32 %v1440, 16
  %v1579 = vshll.u32 %v1440, 16
  %v1581 = vrot.slane %v1579, 1
  %v1582 = vor.u32 %v1577, %v1581
  %v1584 = vshll.u32 %v1504, 16
  %v1586 = vrot.slane %v1584, 1
  %v1587 = vsel %vm1515, %v1582, %v1586
  %v1589 = vshrl.u32 %v1441, 16
  %v1591 = vshll.u32 %v1441, 16
  %v1593 = vrot.slane %v1591, 1
  %v1594 = vor.u32 %v1589, %v1593
  %v1596 = vshll.u32 %v1505, 16
  %v1598 = vrot.slane %v1596, 1
  %v1599 = vsel %vm1515, %v1594, %v1598
  %v1601 = vshrl.u32 %v1442, 16
  %v1603 = vshll.u32 %v1442, 16
  %v1605 = vrot.slane %v1603, 1
  %v1606 = vor.u32 %v1601, %v1605
  %v1608 = vshll.u32 %v1506, 16
  %v1610 = vrot.slane %v1608, 1
  %v1611 = vsel %vm1515, %v1606, %v1610
  %v1613 = vshrl.u32 %v1443, 16
  %v1615 = vshll.u32 %v1443, 16
  %v1617 = vrot.slane %v1615, 1
  %v1618 = vor.u32 %v1613, %v1617
  %v1620 = vshll.u32 %v1507, 16
  %v1622 = vrot.slane %v1620, 1
  %v1623 = vsel %vm1515, %v1618, %v1622
  %v1625 = vshrl.u32 %v1444, 16
  %v1627 = vshll.u32 %v1444, 16
  %v1629 = vrot.slane %v1627, 1
  %v1630 = vor.u32 %v1625, %v1629
  %v1632 = vshll.u32 %v1508, 16
  %v1634 = vrot.slane %v1632, 1
  %v1635 = vsel %vm1515, %v1630, %v1634
  %v1637 = vshrl.u32 %v1445, 16
  %v1639 = vshll.u32 %v1445, 16
  %v1641 = vrot.slane %v1639, 1
  %v1642 = vor.u32 %v1637, %v1641
  %v1644 = vshll.u32 %v1509, 16
  %v1646 = vrot.slane %v1644, 1
  %v1647 = vsel %vm1515, %v1642, %v1646
  %v1649 = vshrl.u32 %v1446, 16
  %v1651 = vshll.u32 %v1446, 16
  %v1653 = vrot.slane %v1651, 1
  %v1654 = vor.u32 %v1649, %v1653
  %v1656 = vshll.u32 %v1510, 16
  %v1658 = vrot.slane %v1656, 1
  %v1659 = vsel %vm1515, %v1654, %v1658
  %v1661 = vshrl.u32 %v1447, 16
  %v1663 = vshll.u32 %v1447, 16
  %v1665 = vrot.slane %v1663, 1
  %v1666 = vor.u32 %v1661, %v1665
  %v1668 = vshll.u32 %v1511, 16
  %v1670 = vrot.slane %v1668, 1
  %v1671 = vsel %vm1515, %v1666, %v1670
  %v1673 = vshrl.u32 %v1448, 16
  %v1675 = vshll.u32 %v1448, 16
  %v1677 = vrot.slane %v1675, 1
  %v1678 = vor.u32 %v1673, %v1677
  %v1680 = vshll.u32 %v1512, 16
  %v1682 = vrot.slane %v1680, 1
  %v1683 = vsel %vm1515, %v1678, %v1682
  %v1685 = vshrl.u32 %v1449, 16
  %v1687 = vshll.u32 %v1449, 16
  %v1689 = vrot.slane %v1687, 1
  %v1690 = vor.u32 %v1685, %v1689
  %v1692 = vshll.u32 %v1513, 16
  %v1694 = vrot.slane %v1692, 1
  %v1695 = vsel %vm1515, %v1690, %v1694
  %v1697 = vshrl.u32 %v1450, 16
  %v1699 = vshll.u32 %v1450, 16
  %v1701 = vrot.slane %v1699, 1
  %v1702 = vor.u32 %v1697, %v1701
  %v1704 = vshll.u32 %v1514, 16
  %v1706 = vrot.slane %v1704, 1
  %v1707 = vsel %vm1515, %v1702, %v1706
  %v1740 = vunpack.c.l.b16 %v1355
  %v1741 = vunpack.c.l.b16 %v1356
  %v1742 = vunpack.c.l.b16 %v1357
  %v1743 = vunpack.c.l.b16 %v1358
  %v1744 = vunpack.c.l.b16 %v1359
  %v1745 = vunpack.c.l.b16 %v1360
  %v1746 = vunpack.c.l.b16 %v1361
  %v1747 = vunpack.c.l.b16 %v1362
  %v1748 = vunpack.c.l.b16 %v1363
  %v1749 = vunpack.c.l.b16 %v1364
  %v1750 = vunpack.c.l.b16 %v1365
  %v1751 = vunpack.c.l.b16 %v1366
  %v1752 = vunpack.c.l.b16 %v1367
  %v1753 = vunpack.c.l.b16 %v1368
  %v1754 = vunpack.c.l.b16 %v1369
  %v1755 = vunpack.c.l.b16 %v1370
  %v1756 = vpack.c.b16 %v1404, %v1740
  %v1757 = vpack.c.b16 %v1406, %v1741
  %v1758 = vpack.c.b16 %v1408, %v1742
  %v1759 = vpack.c.b16 %v1410, %v1743
  %v1760 = vpack.c.b16 %v1412, %v1744
  %v1761 = vpack.c.b16 %v1414, %v1745
  %v1762 = vpack.c.b16 %v1416, %v1746
  %v1763 = vpack.c.b16 %v1418, %v1747
  %v1764 = vpack.c.b16 %v1420, %v1748
  %v1765 = vpack.c.b16 %v1422, %v1749
  %v1766 = vpack.c.b16 %v1424, %v1750
  %v1767 = vpack.c.b16 %v1426, %v1751
  %v1768 = vpack.c.b16 %v1428, %v1752
  %v1769 = vpack.c.b16 %v1430, %v1753
  %v1770 = vpack.c.b16 %v1432, %v1754
  %v1771 = vpack.c.b16 %v1434, %v1755
  %vm1772 = vcmask 1046528
  %v1773 = vrot.slane %v1756, 1
  %v1774 = vrot.slane %v1499, 1
  %v1775 = vsel %vm1772, %v1773, %v1774
  %v1776 = vrot.slane %v1757, 1
  %v1777 = vrot.slane %v1500, 1
  %v1778 = vsel %vm1772, %v1776, %v1777
  %v1779 = vrot.slane %v1758, 1
  %v1780 = vrot.slane %v1501, 1
  %v1781 = vsel %vm1772, %v1779, %v1780
  %v1782 = vrot.slane %v1759, 1
  %v1783 = vrot.slane %v1502, 1
  %v1784 = vsel %vm1772, %v1782, %v1783
  %v1785 = vrot.slane %v1760, 1
  %v1786 = vrot.slane %v1503, 1
  %v1787 = vsel %vm1772, %v1785, %v1786
  %v1788 = vrot.slane %v1761, 1
  %v1789 = vrot.slane %v1504, 1
  %v1790 = vsel %vm1772, %v1788, %v1789
  %v1791 = vrot.slane %v1762, 1
  %v1792 = vrot.slane %v1505, 1
  %v1793 = vsel %vm1772, %v1791, %v1792
  %v1794 = vrot.slane %v1763, 1
  %v1795 = vrot.slane %v1506, 1
  %v1796 = vsel %vm1772, %v1794, %v1795
  %v1797 = vrot.slane %v1764, 1
  %v1798 = vrot.slane %v1507, 1
  %v1799 = vsel %vm1772, %v1797, %v1798
  %v1800 = vrot.slane %v1765, 1
  %v1801 = vrot.slane %v1508, 1
  %v1802 = vsel %vm1772, %v1800, %v1801
  %v1803 = vrot.slane %v1766, 1
  %v1804 = vrot.slane %v1509, 1
  %v1805 = vsel %vm1772, %v1803, %v1804
  %v1806 = vrot.slane %v1767, 1
  %v1807 = vrot.slane %v1510, 1
  %v1808 = vsel %vm1772, %v1806, %v1807
  %v1809 = vrot.slane %v1768, 1
  %v1810 = vrot.slane %v1511, 1
  %v1811 = vsel %vm1772, %v1809, %v1810
  %v1812 = vrot.slane %v1769, 1
  %v1813 = vrot.slane %v1512, 1
  %v1814 = vsel %vm1772, %v1812, %v1813
  %v1815 = vrot.slane %v1770, 1
  %v1816 = vrot.slane %v1513, 1
  %v1817 = vsel %vm1772, %v1815, %v1816
  %v1818 = vrot.slane %v1771, 1
  %v1819 = vrot.slane %v1514, 1
  %v1820 = vsel %vm1772, %v1818, %v1819
  %v1837 = vld [vmem:[%s4] sm:$0xf]
  %v1838 = vld [vmem:[%s4 + $0x4] sm:$0xf]
  %v1839 = vld [vmem:[%s4 + $0x8] sm:$0xf]
  %v1840 = vld [vmem:[%s4 + $0xc] sm:$0xf]
  %v1841 = vld [vmem:[%s4 + $0x10] sm:$0xf]
  %v1842 = vld [vmem:[%s4 + $0x14] sm:$0xf]
  %v1843 = vld [vmem:[%s4 + $0x18] sm:$0xf]
  %v1844 = vld [vmem:[%s4 + $0x1c] sm:$0xf]
  %v1845 = vld [vmem:[%s4 + $0x20] sm:$0xf]
  %v1846 = vld [vmem:[%s4 + $0x24] sm:$0xf]
  %v1847 = vld [vmem:[%s4 + $0x28] sm:$0xf]
  %v1848 = vld [vmem:[%s4 + $0x2c] sm:$0xf]
  %v1849 = vld [vmem:[%s4 + $0x30] sm:$0xf]
  %v1850 = vld [vmem:[%s4 + $0x34] sm:$0xf]
  %v1851 = vld [vmem:[%s4 + $0x38] sm:$0xf]
  %v1852 = vld [vmem:[%s4 + $0x3c] sm:$0xf]
  %v1853 = vld [vmem:[%s4 + $0x40] sm:$0xf]
  %v1854 = vld [vmem:[%s4 + $0x44] sm:$0xf]
  %v1855 = vld [vmem:[%s4 + $0x48] sm:$0xf]
  %v1856 = vld [vmem:[%s4 + $0x4c] sm:$0xf]
  %v1857 = vld [vmem:[%s4 + $0x50] sm:$0xf]
  %v1858 = vld [vmem:[%s4 + $0x54] sm:$0xf]
  %v1859 = vld [vmem:[%s4 + $0x58] sm:$0xf]
  %v1860 = vld [vmem:[%s4 + $0x5c] sm:$0xf]
  %v1861 = vld [vmem:[%s4 + $0x60] sm:$0xf]
  %v1862 = vld [vmem:[%s4 + $0x64] sm:$0xf]
  %v1863 = vld [vmem:[%s4 + $0x68] sm:$0xf]
  %v1864 = vld [vmem:[%s4 + $0x6c] sm:$0xf]
  %v1865 = vld [vmem:[%s4 + $0x70] sm:$0xf]
  %v1866 = vld [vmem:[%s4 + $0x74] sm:$0xf]
  %v1867 = vld [vmem:[%s4 + $0x78] sm:$0xf]
  %v1868 = vld [vmem:[%s4 + $0x7c] sm:$0xf]
  %v1869 = vld [vmem:[%s4 + $0x80] sm:$0xf]
  %v1870 = vld [vmem:[%s4 + $0x84] sm:$0xf]
  %v1871 = vld [vmem:[%s4 + $0x88] sm:$0xf]
  %v1872 = vld [vmem:[%s4 + $0x8c] sm:$0xf]
  %v1873 = vld [vmem:[%s4 + $0x90] sm:$0xf]
  %v1874 = vld [vmem:[%s4 + $0x94] sm:$0xf]
  %v1875 = vld [vmem:[%s4 + $0x98] sm:$0xf]
  %v1876 = vld [vmem:[%s4 + $0x9c] sm:$0xf]
  %v1877 = vld [vmem:[%s4 + $0xa0] sm:$0xf]
  %v1878 = vld [vmem:[%s4 + $0xa4] sm:$0xf]
  %v1879 = vld [vmem:[%s4 + $0xa8] sm:$0xf]
  %v1880 = vld [vmem:[%s4 + $0xac] sm:$0xf]
  %v1881 = vld [vmem:[%s4 + $0xb0] sm:$0xf]
  %v1882 = vld [vmem:[%s4 + $0xb4] sm:$0xf]
  %v1883 = vld [vmem:[%s4 + $0xb8] sm:$0xf]
  %v1884 = vld [vmem:[%s4 + $0xbc] sm:$0xf]
  %v1885 = vld [vmem:[%s673] sm:$0xf]
  %v1886 = vld [vmem:[%s673 + $0x4] sm:$0xf]
  %v1887 = vld [vmem:[%s673 + $0xc] sm:$0xf]
  %v1888 = vld [vmem:[%s673 + $0x10] sm:$0xf]
  %v1889 = vld [vmem:[%s673 + $0x18] sm:$0xf]
  %v1890 = vld [vmem:[%s673 + $0x1c] sm:$0xf]
  %v1891 = vld [vmem:[%s673 + $0x24] sm:$0xf]
  %v1892 = vld [vmem:[%s673 + $0x28] sm:$0xf]
  %v1893 = vld [vmem:[%s673 + $0x30] sm:$0xf]
  %v1894 = vld [vmem:[%s673 + $0x34] sm:$0xf]
  %v1895 = vld [vmem:[%s673 + $0x3c] sm:$0xf]
  %v1896 = vld [vmem:[%s673 + $0x40] sm:$0xf]
  %v1897 = vld [vmem:[%s673 + $0x48] sm:$0xf]
  %v1898 = vld [vmem:[%s673 + $0x4c] sm:$0xf]
  %v1899 = vld [vmem:[%s673 + $0x54] sm:$0xf]
  %v1900 = vld [vmem:[%s673 + $0x58] sm:$0xf]
  %v1901 = vld [vmem:[%s673 + $0x60] sm:$0xf]
  %v1902 = vld [vmem:[%s673 + $0x64] sm:$0xf]
  %v1903 = vld [vmem:[%s673 + $0x6c] sm:$0xf]
  %v1904 = vld [vmem:[%s673 + $0x70] sm:$0xf]
  %v1905 = vld [vmem:[%s673 + $0x78] sm:$0xf]
  %v1906 = vld [vmem:[%s673 + $0x7c] sm:$0xf]
  %v1907 = vld [vmem:[%s673 + $0x84] sm:$0xf]
  %v1908 = vld [vmem:[%s673 + $0x88] sm:$0xf]
  %v1909 = vld [vmem:[%s673 + $0x90] sm:$0xf]
  %v1910 = vld [vmem:[%s673 + $0x94] sm:$0xf]
  %v1911 = vld [vmem:[%s673 + $0x9c] sm:$0xf]
  %v1912 = vld [vmem:[%s673 + $0xa0] sm:$0xf]
  %v1913 = vld [vmem:[%s673 + $0xa8] sm:$0xf]
  %v1914 = vld [vmem:[%s673 + $0xac] sm:$0xf]
  %v1915 = vld [vmem:[%s673 + $0xb4] sm:$0xf]
  %v1916 = vld [vmem:[%s673 + $0xb8] sm:$0xf]
  %v1917 = vld [vmem:[%s673 + $0x8] sm:$0x1]
  %v1918 = vld [vmem:[%s673 + $0x14] sm:$0x1]
  %v1919 = vld [vmem:[%s673 + $0x20] sm:$0x1]
  %v1920 = vld [vmem:[%s673 + $0x2c] sm:$0x1]
  %v1921 = vld [vmem:[%s673 + $0x38] sm:$0x1]
  %v1922 = vld [vmem:[%s673 + $0x44] sm:$0x1]
  %v1923 = vld [vmem:[%s673 + $0x50] sm:$0x1]
  %v1924 = vld [vmem:[%s673 + $0x5c] sm:$0x1]
  %v1925 = vld [vmem:[%s673 + $0x68] sm:$0x1]
  %v1926 = vld [vmem:[%s673 + $0x74] sm:$0x1]
  %v1927 = vld [vmem:[%s673 + $0x80] sm:$0x1]
  %v1928 = vld [vmem:[%s673 + $0x8c] sm:$0x1]
  %v1929 = vld [vmem:[%s673 + $0x98] sm:$0x1]
  %v1930 = vld [vmem:[%s673 + $0xa4] sm:$0x1]
  %v1931 = vld [vmem:[%s673 + $0xb0] sm:$0x1]
  %v1932 = vld [vmem:[%s673 + $0xbc] sm:$0x1]
  %v1933 = vld [vmem:[%s673] sm:$0xe]
  %v1934 = vld [vmem:[%s673 + $0xc] sm:$0xe]
  %v1935 = vld [vmem:[%s673 + $0x18] sm:$0xe]
  %v1936 = vld [vmem:[%s673 + $0x24] sm:$0xe]
  %v1937 = vld [vmem:[%s673 + $0x30] sm:$0xe]
  %v1938 = vld [vmem:[%s673 + $0x3c] sm:$0xe]
  %v1939 = vld [vmem:[%s673 + $0x48] sm:$0xe]
  %v1940 = vld [vmem:[%s673 + $0x54] sm:$0xe]
  %v1941 = vld [vmem:[%s673 + $0x60] sm:$0xe]
  %v1942 = vld [vmem:[%s673 + $0x6c] sm:$0xe]
  %v1943 = vld [vmem:[%s673 + $0x78] sm:$0xe]
  %v1944 = vld [vmem:[%s673 + $0x84] sm:$0xe]
  %v1945 = vld [vmem:[%s673 + $0x90] sm:$0xe]
  %v1946 = vld [vmem:[%s673 + $0x9c] sm:$0xe]
  %v1947 = vld [vmem:[%s673 + $0xa8] sm:$0xe]
  %v1948 = vld [vmem:[%s673 + $0xb4] sm:$0xe]
  %v1981 = vunpack.c.l.b16 %v1885
  %v1982 = vunpack.c.l.b16 %v1886
  %v1983 = vunpack.c.l.b16 %v1887
  %v1984 = vunpack.c.l.b16 %v1888
  %v1985 = vunpack.c.l.b16 %v1889
  %v1986 = vunpack.c.l.b16 %v1890
  %v1987 = vunpack.c.l.b16 %v1891
  %v1988 = vunpack.c.l.b16 %v1892
  %v1989 = vunpack.c.l.b16 %v1893
  %v1990 = vunpack.c.l.b16 %v1894
  %v1991 = vunpack.c.l.b16 %v1895
  %v1992 = vunpack.c.l.b16 %v1896
  %v1993 = vunpack.c.l.b16 %v1897
  %v1994 = vunpack.c.l.b16 %v1898
  %v1995 = vunpack.c.l.b16 %v1899
  %v1996 = vunpack.c.l.b16 %v1900
  %v1997 = vunpack.c.l.b16 %v1901
  %v1998 = vunpack.c.l.b16 %v1902
  %v1999 = vunpack.c.l.b16 %v1903
  %v2000 = vunpack.c.l.b16 %v1904
  %v2001 = vunpack.c.l.b16 %v1905
  %v2002 = vunpack.c.l.b16 %v1906
  %v2003 = vunpack.c.l.b16 %v1907
  %v2004 = vunpack.c.l.b16 %v1908
  %v2005 = vunpack.c.l.b16 %v1909
  %v2006 = vunpack.c.l.b16 %v1910
  %v2007 = vunpack.c.l.b16 %v1911
  %v2008 = vunpack.c.l.b16 %v1912
  %v2009 = vunpack.c.l.b16 %v1913
  %v2010 = vunpack.c.l.b16 %v1914
  %v2011 = vunpack.c.l.b16 %v1915
  %v2012 = vunpack.c.l.b16 %v1916
  %v2013 = vpack.c.b16 %v1982, %v1981
  %v2014 = vpack.c.b16 %v1984, %v1983
  %v2015 = vpack.c.b16 %v1986, %v1985
  %v2016 = vpack.c.b16 %v1988, %v1987
  %v2017 = vpack.c.b16 %v1990, %v1989
  %v2018 = vpack.c.b16 %v1992, %v1991
  %v2019 = vpack.c.b16 %v1994, %v1993
  %v2020 = vpack.c.b16 %v1996, %v1995
  %v2021 = vpack.c.b16 %v1998, %v1997
  %v2022 = vpack.c.b16 %v2000, %v1999
  %v2023 = vpack.c.b16 %v2002, %v2001
  %v2024 = vpack.c.b16 %v2004, %v2003
  %v2025 = vpack.c.b16 %v2006, %v2005
  %v2026 = vpack.c.b16 %v2008, %v2007
  %v2027 = vpack.c.b16 %v2010, %v2009
  %v2028 = vpack.c.b16 %v2012, %v2011
  %v2061 = vunpack.c.l.b16 %v1917
  %v2062 = vunpack.c.l.b16 %v1918
  %v2063 = vunpack.c.l.b16 %v1919
  %v2064 = vunpack.c.l.b16 %v1920
  %v2065 = vunpack.c.l.b16 %v1921
  %v2066 = vunpack.c.l.b16 %v1922
  %v2067 = vunpack.c.l.b16 %v1923
  %v2068 = vunpack.c.l.b16 %v1924
  %v2069 = vunpack.c.l.b16 %v1925
  %v2070 = vunpack.c.l.b16 %v1926
  %v2071 = vunpack.c.l.b16 %v1927
  %v2072 = vunpack.c.l.b16 %v1928
  %v2073 = vunpack.c.l.b16 %v1929
  %v2074 = vunpack.c.l.b16 %v1930
  %v2075 = vunpack.c.l.b16 %v1931
  %v2076 = vunpack.c.l.b16 %v1932
  %v2077 = vpack.c.b16 %v2061, %v2061
  %v2078 = vpack.c.b16 %v2062, %v2062
  %v2079 = vpack.c.b16 %v2063, %v2063
  %v2080 = vpack.c.b16 %v2064, %v2064
  %v2081 = vpack.c.b16 %v2065, %v2065
  %v2082 = vpack.c.b16 %v2066, %v2066
  %v2083 = vpack.c.b16 %v2067, %v2067
  %v2084 = vpack.c.b16 %v2068, %v2068
  %v2085 = vpack.c.b16 %v2069, %v2069
  %v2086 = vpack.c.b16 %v2070, %v2070
  %v2087 = vpack.c.b16 %v2071, %v2071
  %v2088 = vpack.c.b16 %v2072, %v2072
  %v2089 = vpack.c.b16 %v2073, %v2073
  %v2090 = vpack.c.b16 %v2074, %v2074
  %v2091 = vpack.c.b16 %v2075, %v2075
  %v2092 = vpack.c.b16 %v2076, %v2076
  %v2094 = vshrl.u32 %v2013, 16
  %v2096 = vshll.u32 %v2013, 16
  %v2098 = vrot.slane %v2096, 1
  %v2099 = vor.u32 %v2094, %v2098
  %v2101 = vshll.u32 %v2077, 16
  %v2103 = vrot.slane %v2101, 1
  %v2104 = vsel %vm1515, %v2099, %v2103
  %v2106 = vshrl.u32 %v2014, 16
  %v2108 = vshll.u32 %v2014, 16
  %v2110 = vrot.slane %v2108, 1
  %v2111 = vor.u32 %v2106, %v2110
  %v2113 = vshll.u32 %v2078, 16
  %v2115 = vrot.slane %v2113, 1
  %v2116 = vsel %vm1515, %v2111, %v2115
  %v2118 = vshrl.u32 %v2015, 16
  %v2120 = vshll.u32 %v2015, 16
  %v2122 = vrot.slane %v2120, 1
  %v2123 = vor.u32 %v2118, %v2122
  %v2125 = vshll.u32 %v2079, 16
  %v2127 = vrot.slane %v2125, 1
  %v2128 = vsel %vm1515, %v2123, %v2127
  %v2130 = vshrl.u32 %v2016, 16
  %v2132 = vshll.u32 %v2016, 16
  %v2134 = vrot.slane %v2132, 1
  %v2135 = vor.u32 %v2130, %v2134
  %v2137 = vshll.u32 %v2080, 16
  %v2139 = vrot.slane %v2137, 1
  %v2140 = vsel %vm1515, %v2135, %v2139
  %v2142 = vshrl.u32 %v2017, 16
  %v2144 = vshll.u32 %v2017, 16
  %v2146 = vrot.slane %v2144, 1
  %v2147 = vor.u32 %v2142, %v2146
  %v2149 = vshll.u32 %v2081, 16
  %v2151 = vrot.slane %v2149, 1
  %v2152 = vsel %vm1515, %v2147, %v2151
  %v2154 = vshrl.u32 %v2018, 16
  %v2156 = vshll.u32 %v2018, 16
  %v2158 = vrot.slane %v2156, 1
  %v2159 = vor.u32 %v2154, %v2158
  %v2161 = vshll.u32 %v2082, 16
  %v2163 = vrot.slane %v2161, 1
  %v2164 = vsel %vm1515, %v2159, %v2163
  %v2166 = vshrl.u32 %v2019, 16
  %v2168 = vshll.u32 %v2019, 16
  %v2170 = vrot.slane %v2168, 1
  %v2171 = vor.u32 %v2166, %v2170
  %v2173 = vshll.u32 %v2083, 16
  %v2175 = vrot.slane %v2173, 1
  %v2176 = vsel %vm1515, %v2171, %v2175
  %v2178 = vshrl.u32 %v2020, 16
  %v2180 = vshll.u32 %v2020, 16
  %v2182 = vrot.slane %v2180, 1
  %v2183 = vor.u32 %v2178, %v2182
  %v2185 = vshll.u32 %v2084, 16
  %v2187 = vrot.slane %v2185, 1
  %v2188 = vsel %vm1515, %v2183, %v2187
  %v2190 = vshrl.u32 %v2021, 16
  %v2192 = vshll.u32 %v2021, 16
  %v2194 = vrot.slane %v2192, 1
  %v2195 = vor.u32 %v2190, %v2194
  %v2197 = vshll.u32 %v2085, 16
  %v2199 = vrot.slane %v2197, 1
  %v2200 = vsel %vm1515, %v2195, %v2199
  %v2202 = vshrl.u32 %v2022, 16
  %v2204 = vshll.u32 %v2022, 16
  %v2206 = vrot.slane %v2204, 1
  %v2207 = vor.u32 %v2202, %v2206
  %v2209 = vshll.u32 %v2086, 16
  %v2211 = vrot.slane %v2209, 1
  %v2212 = vsel %vm1515, %v2207, %v2211
  %v2214 = vshrl.u32 %v2023, 16
  %v2216 = vshll.u32 %v2023, 16
  %v2218 = vrot.slane %v2216, 1
  %v2219 = vor.u32 %v2214, %v2218
  %v2221 = vshll.u32 %v2087, 16
  %v2223 = vrot.slane %v2221, 1
  %v2224 = vsel %vm1515, %v2219, %v2223
  %v2226 = vshrl.u32 %v2024, 16
  %v2228 = vshll.u32 %v2024, 16
  %v2230 = vrot.slane %v2228, 1
  %v2231 = vor.u32 %v2226, %v2230
  %v2233 = vshll.u32 %v2088, 16
  %v2235 = vrot.slane %v2233, 1
  %v2236 = vsel %vm1515, %v2231, %v2235
  %v2238 = vshrl.u32 %v2025, 16
  %v2240 = vshll.u32 %v2025, 16
  %v2242 = vrot.slane %v2240, 1
  %v2243 = vor.u32 %v2238, %v2242
  %v2245 = vshll.u32 %v2089, 16
  %v2247 = vrot.slane %v2245, 1
  %v2248 = vsel %vm1515, %v2243, %v2247
  %v2250 = vshrl.u32 %v2026, 16
  %v2252 = vshll.u32 %v2026, 16
  %v2254 = vrot.slane %v2252, 1
  %v2255 = vor.u32 %v2250, %v2254
  %v2257 = vshll.u32 %v2090, 16
  %v2259 = vrot.slane %v2257, 1
  %v2260 = vsel %vm1515, %v2255, %v2259
  %v2262 = vshrl.u32 %v2027, 16
  %v2264 = vshll.u32 %v2027, 16
  %v2266 = vrot.slane %v2264, 1
  %v2267 = vor.u32 %v2262, %v2266
  %v2269 = vshll.u32 %v2091, 16
  %v2271 = vrot.slane %v2269, 1
  %v2272 = vsel %vm1515, %v2267, %v2271
  %v2274 = vshrl.u32 %v2028, 16
  %v2276 = vshll.u32 %v2028, 16
  %v2278 = vrot.slane %v2276, 1
  %v2279 = vor.u32 %v2274, %v2278
  %v2281 = vshll.u32 %v2092, 16
  %v2283 = vrot.slane %v2281, 1
  %v2284 = vsel %vm1515, %v2279, %v2283
  %v2317 = vunpack.c.l.b16 %v1933
  %v2318 = vunpack.c.l.b16 %v1934
  %v2319 = vunpack.c.l.b16 %v1935
  %v2320 = vunpack.c.l.b16 %v1936
  %v2321 = vunpack.c.l.b16 %v1937
  %v2322 = vunpack.c.l.b16 %v1938
  %v2323 = vunpack.c.l.b16 %v1939
  %v2324 = vunpack.c.l.b16 %v1940
  %v2325 = vunpack.c.l.b16 %v1941
  %v2326 = vunpack.c.l.b16 %v1942
  %v2327 = vunpack.c.l.b16 %v1943
  %v2328 = vunpack.c.l.b16 %v1944
  %v2329 = vunpack.c.l.b16 %v1945
  %v2330 = vunpack.c.l.b16 %v1946
  %v2331 = vunpack.c.l.b16 %v1947
  %v2332 = vunpack.c.l.b16 %v1948
  %v2333 = vpack.c.b16 %v1982, %v2317
  %v2334 = vpack.c.b16 %v1984, %v2318
  %v2335 = vpack.c.b16 %v1986, %v2319
  %v2336 = vpack.c.b16 %v1988, %v2320
  %v2337 = vpack.c.b16 %v1990, %v2321
  %v2338 = vpack.c.b16 %v1992, %v2322
  %v2339 = vpack.c.b16 %v1994, %v2323
  %v2340 = vpack.c.b16 %v1996, %v2324
  %v2341 = vpack.c.b16 %v1998, %v2325
  %v2342 = vpack.c.b16 %v2000, %v2326
  %v2343 = vpack.c.b16 %v2002, %v2327
  %v2344 = vpack.c.b16 %v2004, %v2328
  %v2345 = vpack.c.b16 %v2006, %v2329
  %v2346 = vpack.c.b16 %v2008, %v2330
  %v2347 = vpack.c.b16 %v2010, %v2331
  %v2348 = vpack.c.b16 %v2012, %v2332
  %v2349 = vrot.slane %v2333, 1
  %v2350 = vrot.slane %v2077, 1
  %v2351 = vsel %vm1772, %v2349, %v2350
  %v2352 = vrot.slane %v2334, 1
  %v2353 = vrot.slane %v2078, 1
  %v2354 = vsel %vm1772, %v2352, %v2353
  %v2355 = vrot.slane %v2335, 1
  %v2356 = vrot.slane %v2079, 1
  %v2357 = vsel %vm1772, %v2355, %v2356
  %v2358 = vrot.slane %v2336, 1
  %v2359 = vrot.slane %v2080, 1
  %v2360 = vsel %vm1772, %v2358, %v2359
  %v2361 = vrot.slane %v2337, 1
  %v2362 = vrot.slane %v2081, 1
  %v2363 = vsel %vm1772, %v2361, %v2362
  %v2364 = vrot.slane %v2338, 1
  %v2365 = vrot.slane %v2082, 1
  %v2366 = vsel %vm1772, %v2364, %v2365
  %v2367 = vrot.slane %v2339, 1
  %v2368 = vrot.slane %v2083, 1
  %v2369 = vsel %vm1772, %v2367, %v2368
  %v2370 = vrot.slane %v2340, 1
  %v2371 = vrot.slane %v2084, 1
  %v2372 = vsel %vm1772, %v2370, %v2371
  %v2373 = vrot.slane %v2341, 1
  %v2374 = vrot.slane %v2085, 1
  %v2375 = vsel %vm1772, %v2373, %v2374
  %v2376 = vrot.slane %v2342, 1
  %v2377 = vrot.slane %v2086, 1
  %v2378 = vsel %vm1772, %v2376, %v2377
  %v2379 = vrot.slane %v2343, 1
  %v2380 = vrot.slane %v2087, 1
  %v2381 = vsel %vm1772, %v2379, %v2380
  %v2382 = vrot.slane %v2344, 1
  %v2383 = vrot.slane %v2088, 1
  %v2384 = vsel %vm1772, %v2382, %v2383
  %v2385 = vrot.slane %v2345, 1
  %v2386 = vrot.slane %v2089, 1
  %v2387 = vsel %vm1772, %v2385, %v2386
  %v2388 = vrot.slane %v2346, 1
  %v2389 = vrot.slane %v2090, 1
  %v2390 = vsel %vm1772, %v2388, %v2389
  %v2391 = vrot.slane %v2347, 1
  %v2392 = vrot.slane %v2091, 1
  %v2393 = vsel %vm1772, %v2391, %v2392
  %v2394 = vrot.slane %v2348, 1
  %v2395 = vrot.slane %v2092, 1
  %v2396 = vsel %vm1772, %v2394, %v2395
  %s2413 = scalar_lea.vmem %s4, 192
  %v2414 = vld [vmem:[%s2413] sm:$0xf]
  %v2415 = vld [vmem:[%s2413 + $0x4] sm:$0xf]
  %v2416 = vld [vmem:[%s2413 + $0x8] sm:$0xf]
  %v2417 = vld [vmem:[%s2413 + $0xc] sm:$0xf]
  %v2418 = vld [vmem:[%s2413 + $0x10] sm:$0xf]
  %v2419 = vld [vmem:[%s2413 + $0x14] sm:$0xf]
  %v2420 = vld [vmem:[%s2413 + $0x18] sm:$0xf]
  %v2421 = vld [vmem:[%s2413 + $0x1c] sm:$0xf]
  %v2422 = vld [vmem:[%s2413 + $0x20] sm:$0xf]
  %v2423 = vld [vmem:[%s2413 + $0x24] sm:$0xf]
  %v2424 = vld [vmem:[%s2413 + $0x28] sm:$0xf]
  %v2425 = vld [vmem:[%s2413 + $0x2c] sm:$0xf]
  %v2426 = vld [vmem:[%s2413 + $0x30] sm:$0xf]
  %v2427 = vld [vmem:[%s2413 + $0x34] sm:$0xf]
  %v2428 = vld [vmem:[%s2413 + $0x38] sm:$0xf]
  %v2429 = vld [vmem:[%s2413 + $0x3c] sm:$0xf]
  %v2430 = vld [vmem:[%s2413 + $0x40] sm:$0xf]
  %v2431 = vld [vmem:[%s2413 + $0x44] sm:$0xf]
  %v2432 = vld [vmem:[%s2413 + $0x48] sm:$0xf]
  %v2433 = vld [vmem:[%s2413 + $0x4c] sm:$0xf]
  %v2434 = vld [vmem:[%s2413 + $0x50] sm:$0xf]
  %v2435 = vld [vmem:[%s2413 + $0x54] sm:$0xf]
  %v2436 = vld [vmem:[%s2413 + $0x58] sm:$0xf]
  %v2437 = vld [vmem:[%s2413 + $0x5c] sm:$0xf]
  %v2438 = vld [vmem:[%s2413 + $0x60] sm:$0xf]
  %v2439 = vld [vmem:[%s2413 + $0x64] sm:$0xf]
  %v2440 = vld [vmem:[%s2413 + $0x68] sm:$0xf]
  %v2441 = vld [vmem:[%s2413 + $0x6c] sm:$0xf]
  %v2442 = vld [vmem:[%s2413 + $0x70] sm:$0xf]
  %v2443 = vld [vmem:[%s2413 + $0x74] sm:$0xf]
  %v2444 = vld [vmem:[%s2413 + $0x78] sm:$0xf]
  %v2445 = vld [vmem:[%s2413 + $0x7c] sm:$0xf]
  %v2446 = vld [vmem:[%s2413 + $0x80] sm:$0xf]
  %v2447 = vld [vmem:[%s2413 + $0x84] sm:$0xf]
  %v2448 = vld [vmem:[%s2413 + $0x88] sm:$0xf]
  %v2449 = vld [vmem:[%s2413 + $0x8c] sm:$0xf]
  %v2450 = vld [vmem:[%s2413 + $0x90] sm:$0xf]
  %v2451 = vld [vmem:[%s2413 + $0x94] sm:$0xf]
  %v2452 = vld [vmem:[%s2413 + $0x98] sm:$0xf]
  %v2453 = vld [vmem:[%s2413 + $0x9c] sm:$0xf]
  %v2454 = vld [vmem:[%s2413 + $0xa0] sm:$0xf]
  %v2455 = vld [vmem:[%s2413 + $0xa4] sm:$0xf]
  %v2456 = vld [vmem:[%s2413 + $0xa8] sm:$0xf]
  %v2457 = vld [vmem:[%s2413 + $0xac] sm:$0xf]
  %v2458 = vld [vmem:[%s2413 + $0xb0] sm:$0xf]
  %v2459 = vld [vmem:[%s2413 + $0xb4] sm:$0xf]
  %v2460 = vld [vmem:[%s2413 + $0xb8] sm:$0xf]
  %v2461 = vld [vmem:[%s2413 + $0xbc] sm:$0xf]
  %v2510 = vunpack.c.l.b16 %v2414
  %v2511 = vunpack.c.l.b16 %v2415
  %v2512 = vunpack.c.l.b16 %v2416
  %v2513 = vunpack.c.l.b16 %v2417
  %v2514 = vunpack.c.l.b16 %v2418
  %v2515 = vunpack.c.l.b16 %v2419
  %v2516 = vunpack.c.l.b16 %v2420
  %v2517 = vunpack.c.l.b16 %v2421
  %v2518 = vunpack.c.l.b16 %v2422
  %v2519 = vunpack.c.l.b16 %v2423
  %v2520 = vunpack.c.l.b16 %v2424
  %v2521 = vunpack.c.l.b16 %v2425
  %v2522 = vunpack.c.l.b16 %v2426
  %v2523 = vunpack.c.l.b16 %v2427
  %v2524 = vunpack.c.l.b16 %v2428
  %v2525 = vunpack.c.l.b16 %v2429
  %v2526 = vunpack.c.l.b16 %v2430
  %v2527 = vunpack.c.l.b16 %v2431
  %v2528 = vunpack.c.l.b16 %v2432
  %v2529 = vunpack.c.l.b16 %v2433
  %v2530 = vunpack.c.l.b16 %v2434
  %v2531 = vunpack.c.l.b16 %v2435
  %v2532 = vunpack.c.l.b16 %v2436
  %v2533 = vunpack.c.l.b16 %v2437
  %v2534 = vunpack.c.l.b16 %v2438
  %v2535 = vunpack.c.l.b16 %v2439
  %v2536 = vunpack.c.l.b16 %v2440
  %v2537 = vunpack.c.l.b16 %v2441
  %v2538 = vunpack.c.l.b16 %v2442
  %v2539 = vunpack.c.l.b16 %v2443
  %v2540 = vunpack.c.l.b16 %v2444
  %v2541 = vunpack.c.l.b16 %v2445
  %v2542 = vunpack.c.l.b16 %v2446
  %v2543 = vunpack.c.l.b16 %v2447
  %v2544 = vunpack.c.l.b16 %v2448
  %v2545 = vunpack.c.l.b16 %v2449
  %v2546 = vunpack.c.l.b16 %v2450
  %v2547 = vunpack.c.l.b16 %v2451
  %v2548 = vunpack.c.l.b16 %v2452
  %v2549 = vunpack.c.l.b16 %v2453
  %v2550 = vunpack.c.l.b16 %v2454
  %v2551 = vunpack.c.l.b16 %v2455
  %v2552 = vunpack.c.l.b16 %v2456
  %v2553 = vunpack.c.l.b16 %v2457
  %v2554 = vunpack.c.l.b16 %v2458
  %v2555 = vunpack.c.l.b16 %v2459
  %v2556 = vunpack.c.l.b16 %v2460
  %v2557 = vunpack.c.l.b16 %v2461
  %v2558 = vpack.c.b16 %v2511, %v2510
  %v2559 = vpack.c.b16 %v2513, %v2512
  %v2560 = vpack.c.b16 %v2515, %v2514
  %v2561 = vpack.c.b16 %v2517, %v2516
  %v2562 = vpack.c.b16 %v2519, %v2518
  %v2563 = vpack.c.b16 %v2521, %v2520
  %v2564 = vpack.c.b16 %v2523, %v2522
  %v2565 = vpack.c.b16 %v2525, %v2524
  %v2566 = vpack.c.b16 %v2527, %v2526
  %v2567 = vpack.c.b16 %v2529, %v2528
  %v2568 = vpack.c.b16 %v2531, %v2530
  %v2569 = vpack.c.b16 %v2533, %v2532
  %v2570 = vpack.c.b16 %v2535, %v2534
  %v2571 = vpack.c.b16 %v2537, %v2536
  %v2572 = vpack.c.b16 %v2539, %v2538
  %v2573 = vpack.c.b16 %v2541, %v2540
  %v2574 = vpack.c.b16 %v2543, %v2542
  %v2575 = vpack.c.b16 %v2545, %v2544
  %v2576 = vpack.c.b16 %v2547, %v2546
  %v2577 = vpack.c.b16 %v2549, %v2548
  %v2578 = vpack.c.b16 %v2551, %v2550
  %v2579 = vpack.c.b16 %v2553, %v2552
  %v2580 = vpack.c.b16 %v2555, %v2554
  %v2581 = vpack.c.b16 %v2557, %v2556
  %2606 = vmatprep.subr.bf16.mxu0 0
  %2607 = vmatpush1.bf16.msra.mxu0 %v2558
  %2608 = vmatprep.subr.bf16.mxu0 0
  %2609 = vmatpush1.bf16.msra.mxu0 %v2559
  %2610 = vmatprep.subr.bf16.mxu0 0
  %2611 = vmatpush1.bf16.msra.mxu0 %v2560
  %2612 = vmatprep.subr.bf16.mxu0 0
  %2613 = vmatpush1.bf16.msra.mxu0 %v2561
  %2614 = vmatprep.subr.bf16.mxu0 0
  %2615 = vmatpush1.bf16.msra.mxu0 %v2562
  %2616 = vmatprep.subr.bf16.mxu0 0
  %2617 = vmatpush1.bf16.msra.mxu0 %v2563
  %2618 = vmatprep.subr.bf16.mxu0 0
  %2619 = vmatpush1.bf16.msra.mxu0 %v2564
  %2620 = vmatprep.subr.bf16.mxu0 0
  %2621 = vmatpush1.bf16.msra.mxu0 %v2565
  %2622 = vmatprep.subr.bf16.mxu0 0
  %2623 = vmatpush1.bf16.msra.mxu0 %v2566
  %2624 = vmatprep.subr.bf16.mxu0 0
  %2625 = vmatpush1.bf16.msra.mxu0 %v2567
  %2626 = vmatprep.subr.bf16.mxu0 0
  %2627 = vmatpush1.bf16.msra.mxu0 %v2568
  %2628 = vmatprep.subr.bf16.mxu0 0
  %2629 = vmatpush1.bf16.msra.mxu0 %v2569
  %2630 = vmatprep.subr.bf16.mxu0 0
  %2631 = vmatpush1.bf16.msra.mxu0 %v2570
  %2632 = vmatprep.subr.bf16.mxu0 0
  %2633 = vmatpush1.bf16.msra.mxu0 %v2571
  %2634 = vmatprep.subr.bf16.mxu0 0
  %2635 = vmatpush1.bf16.msra.mxu0 %v2572
  %2636 = vmatprep.subr.bf16.mxu0 0
  %2637 = vmatpush1.bf16.msra.mxu0 %v2573
  %2638 = vmatprep.mubr.bf16.mxu0 %v2104
  %2639 = vmatmul.mubr.bf16.gmra.mrb[0].mxu0 %v2013
  %v2640 = vpop.f32.mrb[0].mxu0
  %v2641 = vadd.f32 0.0, %v2640
  %v2642 = vpop.f32.mrb[0].mxu0
  %v2643 = vpop.f32.mrb[0].mxu0
  %v2644 = vadd.f32 0.0, %v2643
  %v2645 = vpop.f32.mrb[0].mxu0
  %2646 = vmatprep.mubr.bf16.mxu0 %v2116
  %2647 = vmatmul.mubr.bf16.gmra.mrb[0].mxu0 %v2014
  %v2648 = vpop.f32.mrb[0].mxu0
  %v2649 = vadd.f32 0.0, %v2648
  %v2650 = vpop.f32.mrb[0].mxu0
  %v2651 = vpop.f32.mrb[0].mxu0
  %v2652 = vadd.f32 0.0, %v2651
  %v2653 = vpop.f32.mrb[0].mxu0
  %2654 = vmatprep.mubr.bf16.mxu0 %v2128
  %2655 = vmatmul.mubr.bf16.gmra.mrb[0].mxu0 %v2015
  %v2656 = vpop.f32.mrb[0].mxu0
  %v2657 = vadd.f32 0.0, %v2656
  %v2658 = vpop.f32.mrb[0].mxu0
  %v2659 = vpop.f32.mrb[0].mxu0
  %v2660 = vadd.f32 0.0, %v2659
  %v2661 = vpop.f32.mrb[0].mxu0
  %2662 = vmatprep.mubr.bf16.mxu0 %v2140
  %2663 = vmatmul.mubr.bf16.gmra.mrb[0].mxu0 %v2016
  %v2664 = vpop.f32.mrb[0].mxu0
  %v2665 = vadd.f32 0.0, %v2664
  %v2666 = vpop.f32.mrb[0].mxu0
  %v2667 = vpop.f32.mrb[0].mxu0
  %v2668 = vadd.f32 0.0, %v2667
  %v2669 = vpop.f32.mrb[0].mxu0
  %2670 = vmatprep.mubr.bf16.mxu0 %v2152
  %2671 = vmatmul.mubr.bf16.gmra.mrb[0].mxu0 %v2017
  %v2672 = vpop.f32.mrb[0].mxu0
  %v2673 = vadd.f32 0.0, %v2672
  %v2674 = vpop.f32.mrb[0].mxu0
  %v2675 = vpop.f32.mrb[0].mxu0
  %v2676 = vadd.f32 0.0, %v2675
  %v2677 = vpop.f32.mrb[0].mxu0
  %2678 = vmatprep.mubr.bf16.mxu0 %v2164
  %2679 = vmatmul.mubr.bf16.gmra.mrb[0].mxu0 %v2018
  %v2680 = vpop.f32.mrb[0].mxu0
  %v2681 = vadd.f32 0.0, %v2680
  %v2682 = vpop.f32.mrb[0].mxu0
  %v2683 = vpop.f32.mrb[0].mxu0
  %v2684 = vadd.f32 0.0, %v2683
  %v2685 = vpop.f32.mrb[0].mxu0
  %2686 = vmatprep.mubr.bf16.mxu0 %v2176
  %2687 = vmatmul.mubr.bf16.gmra.mrb[0].mxu0 %v2019
  %v2688 = vpop.f32.mrb[0].mxu0
  %v2689 = vadd.f32 0.0, %v2688
  %v2690 = vpop.f32.mrb[0].mxu0
  %v2691 = vpop.f32.mrb[0].mxu0
  %v2692 = vadd.f32 0.0, %v2691
  %v2693 = vpop.f32.mrb[0].mxu0
  %2694 = vmatprep.mubr.bf16.mxu0 %v2188
  %2695 = vmatmul.mubr.bf16.gmra.mrb[0].mxu0 %v2020
  %v2696 = vpop.f32.mrb[0].mxu0
  %v2697 = vadd.f32 0.0, %v2696
  %v2698 = vpop.f32.mrb[0].mxu0
  %v2699 = vpop.f32.mrb[0].mxu0
  %v2700 = vadd.f32 0.0, %v2699
  %v2701 = vpop.f32.mrb[0].mxu0
  %2702 = vmatprep.mubr.bf16.mxu0 %v2200
  %2703 = vmatmul.mubr.bf16.gmra.mrb[0].mxu0 %v2021
  %v2704 = vpop.f32.mrb[0].mxu0
  %v2705 = vadd.f32 0.0, %v2704
  %v2706 = vpop.f32.mrb[0].mxu0
  %v2707 = vpop.f32.mrb[0].mxu0
  %v2708 = vadd.f32 0.0, %v2707
  %v2709 = vpop.f32.mrb[0].mxu0
  %2710 = vmatprep.mubr.bf16.mxu0 %v2212
  %2711 = vmatmul.mubr.bf16.gmra.mrb[0].mxu0 %v2022
  %v2712 = vpop.f32.mrb[0].mxu0
  %v2713 = vadd.f32 0.0, %v2712
  %v2714 = vpop.f32.mrb[0].mxu0
  %v2715 = vpop.f32.mrb[0].mxu0
  %v2716 = vadd.f32 0.0, %v2715
  %v2717 = vpop.f32.mrb[0].mxu0
  %2718 = vmatprep.mubr.bf16.mxu0 %v2224
  %2719 = vmatmul.mubr.bf16.gmra.mrb[0].mxu0 %v2023
  %v2720 = vpop.f32.mrb[0].mxu0
  %v2721 = vadd.f32 0.0, %v2720
  %v2722 = vpop.f32.mrb[0].mxu0
  %v2723 = vpop.f32.mrb[0].mxu0
  %v2724 = vadd.f32 0.0, %v2723
  %v2725 = vpop.f32.mrb[0].mxu0
  %2726 = vmatprep.mubr.bf16.mxu0 %v2236
  %2727 = vmatmul.mubr.bf16.gmra.mrb[0].mxu0 %v2024
  %v2728 = vpop.f32.mrb[0].mxu0
  %v2729 = vadd.f32 0.0, %v2728
  %v2730 = vpop.f32.mrb[0].mxu0
  %v2731 = vpop.f32.mrb[0].mxu0
  %v2732 = vadd.f32 0.0, %v2731
  %v2733 = vpop.f32.mrb[0].mxu0
  %2734 = vmatprep.mubr.bf16.mxu0 %v2248
  %2735 = vmatmul.mubr.bf16.gmra.mrb[0].mxu0 %v2025
  %v2736 = vpop.f32.mrb[0].mxu0
  %v2737 = vadd.f32 0.0, %v2736
  %v2738 = vpop.f32.mrb[0].mxu0
  %v2739 = vpop.f32.mrb[0].mxu0
  %v2740 = vadd.f32 0.0, %v2739
  %v2741 = vpop.f32.mrb[0].mxu0
  %2742 = vmatprep.mubr.bf16.mxu0 %v2260
  %2743 = vmatmul.mubr.bf16.gmra.mrb[0].mxu0 %v2026
  %v2744 = vpop.f32.mrb[0].mxu0
  %v2745 = vadd.f32 0.0, %v2744
  %v2746 = vpop.f32.mrb[0].mxu0
  %v2747 = vpop.f32.mrb[0].mxu0
  %v2748 = vadd.f32 0.0, %v2747
  %v2749 = vpop.f32.mrb[0].mxu0
  %2750 = vmatprep.mubr.bf16.mxu0 %v2272
  %2751 = vmatmul.mubr.bf16.gmra.mrb[0].mxu0 %v2027
  %v2752 = vpop.f32.mrb[0].mxu0
  %v2753 = vadd.f32 0.0, %v2752
  %v2754 = vpop.f32.mrb[0].mxu0
  %v2755 = vpop.f32.mrb[0].mxu0
  %v2756 = vadd.f32 0.0, %v2755
  %v2757 = vpop.f32.mrb[0].mxu0
  %2758 = vmatprep.mubr.bf16.mxu0 %v2284
  %2759 = vmatmul.mubr.bf16.gmra.mrb[0].mxu0 %v2028
  %v2760 = vpop.f32.mrb[0].mxu0
  %v2761 = vadd.f32 0.0, %v2760
  %v2762 = vpop.f32.mrb[0].mxu0
  %v2763 = vpop.f32.mrb[0].mxu0
  %v2764 = vadd.f32 0.0, %v2763
  %v2765 = vpop.f32.mrb[0].mxu0
  %2766 = vdwg.mxu0
  %2767 = vmatprep.subr.bf16.mxu0 0
  %2768 = vmatpush1.bf16.msra.mxu0 %v2574
  %2769 = vmatprep.subr.bf16.mxu0 0
  %2770 = vmatpush1.bf16.msra.mxu0 %v2575
  %2771 = vmatprep.subr.bf16.mxu0 0
  %2772 = vmatpush1.bf16.msra.mxu0 %v2576
  %2773 = vmatprep.subr.bf16.mxu0 0
  %2774 = vmatpush1.bf16.msra.mxu0 %v2577
  %2775 = vmatprep.subr.bf16.mxu0 0
  %2776 = vmatpush1.bf16.msra.mxu0 %v2578
  %2777 = vmatprep.subr.bf16.mxu0 0
  %2778 = vmatpush1.bf16.msra.mxu0 %v2579
  %2779 = vmatprep.subr.bf16.mxu0 0
  %2780 = vmatpush1.bf16.msra.mxu0 %v2580
  %2781 = vmatprep.subr.bf16.mxu0 0
  %2782 = vmatpush1.bf16.msra.mxu0 %v2581
  %2783 = vmatprep.subr.bf16.mxu0 0
  %2784 = vmatpush1.bf16.msra.mxu0 0
  %2785 = vmatprep.subr.bf16.mxu0 0
  %2786 = vmatpush1.bf16.msra.mxu0 0
  %2787 = vmatprep.subr.bf16.mxu0 0
  %2788 = vmatpush1.bf16.msra.mxu0 0
  %2789 = vmatprep.subr.bf16.mxu0 0
  %2790 = vmatpush1.bf16.msra.mxu0 0
  %2791 = vmatprep.subr.bf16.mxu0 0
  %2792 = vmatpush1.bf16.msra.mxu0 0
  %2793 = vmatprep.subr.bf16.mxu0 0
  %2794 = vmatpush1.bf16.msra.mxu0 0
  %2795 = vmatprep.subr.bf16.mxu0 0
  %2796 = vmatpush1.bf16.msra.mxu0 0
  %2797 = vmatprep.subr.bf16.mxu0 0
  %2798 = vmatpush1.bf16.msra.mxu0 0
  %2799 = vmatprep.mubr.bf16.mxu0 0
  %2800 = vmatmul.mubr.bf16.gmra.mrb[0].mxu0 %v2351
  %v2801 = vpop.f32.mrb[0].mxu0
  %v2802 = vadd.f32 %v2641, %v2801
  %v2803 = vpop.f32.mrb[0].mxu0
  %v2804 = vpop.f32.mrb[0].mxu0
  %v2805 = vadd.f32 %v2644, %v2804
  %v2806 = vpop.f32.mrb[0].mxu0
  %2807 = vmatprep.mubr.bf16.mxu0 0
  %2808 = vmatmul.mubr.bf16.gmra.mrb[0].mxu0 %v2354
  %v2809 = vpop.f32.mrb[0].mxu0
  %v2810 = vadd.f32 %v2649, %v2809
  %v2811 = vpop.f32.mrb[0].mxu0
  %v2812 = vpop.f32.mrb[0].mxu0
  %v2813 = vadd.f32 %v2652, %v2812
  %v2814 = vpop.f32.mrb[0].mxu0
  %2815 = vmatprep.mubr.bf16.mxu0 0
  %2816 = vmatmul.mubr.bf16.gmra.mrb[0].mxu0 %v2357
  %v2817 = vpop.f32.mrb[0].mxu0
  %v2818 = vadd.f32 %v2657, %v2817
  %v2819 = vpop.f32.mrb[0].mxu0
  %v2820 = vpop.f32.mrb[0].mxu0
  %v2821 = vadd.f32 %v2660, %v2820
  %v2822 = vpop.f32.mrb[0].mxu0
  %2823 = vmatprep.mubr.bf16.mxu0 0
  %2824 = vmatmul.mubr.bf16.gmra.mrb[0].mxu0 %v2360
  %v2825 = vpop.f32.mrb[0].mxu0
  %v2826 = vadd.f32 %v2665, %v2825
  %v2827 = vpop.f32.mrb[0].mxu0
  %v2828 = vpop.f32.mrb[0].mxu0
  %v2829 = vadd.f32 %v2668, %v2828
  %v2830 = vpop.f32.mrb[0].mxu0
  %2831 = vmatprep.mubr.bf16.mxu0 0
  %2832 = vmatmul.mubr.bf16.gmra.mrb[0].mxu0 %v2363
  %v2833 = vpop.f32.mrb[0].mxu0
  %v2834 = vadd.f32 %v2673, %v2833
  %v2835 = vpop.f32.mrb[0].mxu0
  %v2836 = vpop.f32.mrb[0].mxu0
  %v2837 = vadd.f32 %v2676, %v2836
  %v2838 = vpop.f32.mrb[0].mxu0
  %2839 = vmatprep.mubr.bf16.mxu0 0
  %2840 = vmatmul.mubr.bf16.gmra.mrb[0].mxu0 %v2366
  %v2841 = vpop.f32.mrb[0].mxu0
  %v2842 = vadd.f32 %v2681, %v2841
  %v2843 = vpop.f32.mrb[0].mxu0
  %v2844 = vpop.f32.mrb[0].mxu0
  %v2845 = vadd.f32 %v2684, %v2844
  %v2846 = vpop.f32.mrb[0].mxu0
  %2847 = vmatprep.mubr.bf16.mxu0 0
  %2848 = vmatmul.mubr.bf16.gmra.mrb[0].mxu0 %v2369
  %v2849 = vpop.f32.mrb[0].mxu0
  %v2850 = vadd.f32 %v2689, %v2849
  %v2851 = vpop.f32.mrb[0].mxu0
  %v2852 = vpop.f32.mrb[0].mxu0
  %v2853 = vadd.f32 %v2692, %v2852
  %v2854 = vpop.f32.mrb[0].mxu0
  %2855 = vmatprep.mubr.bf16.mxu0 0
  %2856 = vmatmul.mubr.bf16.gmra.mrb[0].mxu0 %v2372
  %v2857 = vpop.f32.mrb[0].mxu0
  %v2858 = vadd.f32 %v2697, %v2857
  %v2859 = vpop.f32.mrb[0].mxu0
  %v2860 = vpop.f32.mrb[0].mxu0
  %v2861 = vadd.f32 %v2700, %v2860
  %v2862 = vpop.f32.mrb[0].mxu0
  %2863 = vmatprep.mubr.bf16.mxu0 0
  %2864 = vmatmul.mubr.bf16.gmra.mrb[0].mxu0 %v2375
  %v2865 = vpop.f32.mrb[0].mxu0
  %v2866 = vadd.f32 %v2705, %v2865
  %v2867 = vpop.f32.mrb[0].mxu0
  %v2868 = vpop.f32.mrb[0].mxu0
  %v2869 = vadd.f32 %v2708, %v2868
  %v2870 = vpop.f32.mrb[0].mxu0
  %2871 = vmatprep.mubr.bf16.mxu0 0
  %2872 = vmatmul.mubr.bf16.gmra.mrb[0].mxu0 %v2378
  %v2873 = vpop.f32.mrb[0].mxu0
  %v2874 = vadd.f32 %v2713, %v2873
  %v2875 = vpop.f32.mrb[0].mxu0
  %v2876 = vpop.f32.mrb[0].mxu0
  %v2877 = vadd.f32 %v2716, %v2876
  %v2878 = vpop.f32.mrb[0].mxu0
  %2879 = vmatprep.mubr.bf16.mxu0 0
  %2880 = vmatmul.mubr.bf16.gmra.mrb[0].mxu0 %v2381
  %v2881 = vpop.f32.mrb[0].mxu0
  %v2882 = vadd.f32 %v2721, %v2881
  %v2883 = vpop.f32.mrb[0].mxu0
  %v2884 = vpop.f32.mrb[0].mxu0
  %v2885 = vadd.f32 %v2724, %v2884
  %v2886 = vpop.f32.mrb[0].mxu0
  %2887 = vmatprep.mubr.bf16.mxu0 0
  %2888 = vmatmul.mubr.bf16.gmra.mrb[0].mxu0 %v2384
  %v2889 = vpop.f32.mrb[0].mxu0
  %v2890 = vadd.f32 %v2729, %v2889
  %v2891 = vpop.f32.mrb[0].mxu0
  %v2892 = vpop.f32.mrb[0].mxu0
  %v2893 = vadd.f32 %v2732, %v2892
  %v2894 = vpop.f32.mrb[0].mxu0
  %2895 = vmatprep.mubr.bf16.mxu0 0
  %2896 = vmatmul.mubr.bf16.gmra.mrb[0].mxu0 %v2387
  %v2897 = vpop.f32.mrb[0].mxu0
  %v2898 = vadd.f32 %v2737, %v2897
  %v2899 = vpop.f32.mrb[0].mxu0
  %v2900 = vpop.f32.mrb[0].mxu0
  %v2901 = vadd.f32 %v2740, %v2900
  %v2902 = vpop.f32.mrb[0].mxu0
  %2903 = vmatprep.mubr.bf16.mxu0 0
  %2904 = vmatmul.mubr.bf16.gmra.mrb[0].mxu0 %v2390
  %v2905 = vpop.f32.mrb[0].mxu0
  %v2906 = vadd.f32 %v2745, %v2905
  %v2907 = vpop.f32.mrb[0].mxu0
  %v2908 = vpop.f32.mrb[0].mxu0
  %v2909 = vadd.f32 %v2748, %v2908
  %v2910 = vpop.f32.mrb[0].mxu0
  %2911 = vmatprep.mubr.bf16.mxu0 0
  %2912 = vmatmul.mubr.bf16.gmra.mrb[0].mxu0 %v2393
  %v2913 = vpop.f32.mrb[0].mxu0
  %v2914 = vadd.f32 %v2753, %v2913
  %v2915 = vpop.f32.mrb[0].mxu0
  %v2916 = vpop.f32.mrb[0].mxu0
  %v2917 = vadd.f32 %v2756, %v2916
  %v2918 = vpop.f32.mrb[0].mxu0
  %2919 = vmatprep.mubr.bf16.mxu0 0
  %2920 = vmatmul.mubr.bf16.gmra.mrb[0].mxu0 %v2396
  %v2921 = vpop.f32.mrb[0].mxu0
  %v2922 = vadd.f32 %v2761, %v2921
  %v2923 = vpop.f32.mrb[0].mxu0
  %v2924 = vpop.f32.mrb[0].mxu0
  %v2925 = vadd.f32 %v2764, %v2924
  %v2926 = vpop.f32.mrb[0].mxu0
  %2927 = vdwg.mxu0
  %v2976 = vunpack.c.l.b16 %v1837
  %v2977 = vunpack.c.l.b16 %v1838
  %v2978 = vunpack.c.l.b16 %v1839
  %v2979 = vunpack.c.l.b16 %v1840
  %v2980 = vunpack.c.l.b16 %v1841
  %v2981 = vunpack.c.l.b16 %v1842
  %v2982 = vunpack.c.l.b16 %v1843
  %v2983 = vunpack.c.l.b16 %v1844
  %v2984 = vunpack.c.l.b16 %v1845
  %v2985 = vunpack.c.l.b16 %v1846
  %v2986 = vunpack.c.l.b16 %v1847
  %v2987 = vunpack.c.l.b16 %v1848
  %v2988 = vunpack.c.l.b16 %v1849
  %v2989 = vunpack.c.l.b16 %v1850
  %v2990 = vunpack.c.l.b16 %v1851
  %v2991 = vunpack.c.l.b16 %v1852
  %v2992 = vunpack.c.l.b16 %v1853
  %v2993 = vunpack.c.l.b16 %v1854
  %v2994 = vunpack.c.l.b16 %v1855
  %v2995 = vunpack.c.l.b16 %v1856
  %v2996 = vunpack.c.l.b16 %v1857
  %v2997 = vunpack.c.l.b16 %v1858
  %v2998 = vunpack.c.l.b16 %v1859
  %v2999 = vunpack.c.l.b16 %v1860
  %v3000 = vunpack.c.l.b16 %v1861
  %v3001 = vunpack.c.l.b16 %v1862
  %v3002 = vunpack.c.l.b16 %v1863
  %v3003 = vunpack.c.l.b16 %v1864
  %v3004 = vunpack.c.l.b16 %v1865
  %v3005 = vunpack.c.l.b16 %v1866
  %v3006 = vunpack.c.l.b16 %v1867
  %v3007 = vunpack.c.l.b16 %v1868
  %v3008 = vunpack.c.l.b16 %v1869
  %v3009 = vunpack.c.l.b16 %v1870
  %v3010 = vunpack.c.l.b16 %v1871
  %v3011 = vunpack.c.l.b16 %v1872
  %v3012 = vunpack.c.l.b16 %v1873
  %v3013 = vunpack.c.l.b16 %v1874
  %v3014 = vunpack.c.l.b16 %v1875
  %v3015 = vunpack.c.l.b16 %v1876
  %v3016 = vunpack.c.l.b16 %v1877
  %v3017 = vunpack.c.l.b16 %v1878
  %v3018 = vunpack.c.l.b16 %v1879
  %v3019 = vunpack.c.l.b16 %v1880
  %v3020 = vunpack.c.l.b16 %v1881
  %v3021 = vunpack.c.l.b16 %v1882
  %v3022 = vunpack.c.l.b16 %v1883
  %v3023 = vunpack.c.l.b16 %v1884
  %v3024 = vpack.c.b16 %v2977, %v2976
  %v3025 = vpack.c.b16 %v2979, %v2978
  %v3026 = vpack.c.b16 %v2981, %v2980
  %v3027 = vpack.c.b16 %v2983, %v2982
  %v3028 = vpack.c.b16 %v2985, %v2984
  %v3029 = vpack.c.b16 %v2987, %v2986
  %v3030 = vpack.c.b16 %v2989, %v2988
  %v3031 = vpack.c.b16 %v2991, %v2990
  %v3032 = vpack.c.b16 %v2993, %v2992
  %v3033 = vpack.c.b16 %v2995, %v2994
  %v3034 = vpack.c.b16 %v2997, %v2996
  %v3035 = vpack.c.b16 %v2999, %v2998
  %v3036 = vpack.c.b16 %v3001, %v3000
  %v3037 = vpack.c.b16 %v3003, %v3002
  %v3038 = vpack.c.b16 %v3005, %v3004
  %v3039 = vpack.c.b16 %v3007, %v3006
  %v3040 = vpack.c.b16 %v3009, %v3008
  %v3041 = vpack.c.b16 %v3011, %v3010
  %v3042 = vpack.c.b16 %v3013, %v3012
  %v3043 = vpack.c.b16 %v3015, %v3014
  %v3044 = vpack.c.b16 %v3017, %v3016
  %v3045 = vpack.c.b16 %v3019, %v3018
  %v3046 = vpack.c.b16 %v3021, %v3020
  %v3047 = vpack.c.b16 %v3023, %v3022
  %3072 = vmatprep.subr.bf16.mxu0 0
  %3073 = vmatpush1.bf16.msra.mxu0 %v3024
  %3074 = vmatprep.subr.bf16.mxu0 0
  %3075 = vmatpush1.bf16.msra.mxu0 %v3025
  %3076 = vmatprep.subr.bf16.mxu0 0
  %3077 = vmatpush1.bf16.msra.mxu0 %v3026
  %3078 = vmatprep.subr.bf16.mxu0 0
  %3079 = vmatpush1.bf16.msra.mxu0 %v3027
  %3080 = vmatprep.subr.bf16.mxu0 0
  %3081 = vmatpush1.bf16.msra.mxu0 %v3028
  %3082 = vmatprep.subr.bf16.mxu0 0
  %3083 = vmatpush1.bf16.msra.mxu0 %v3029
  %3084 = vmatprep.subr.bf16.mxu0 0
  %3085 = vmatpush1.bf16.msra.mxu0 %v3030
  %3086 = vmatprep.subr.bf16.mxu0 0
  %3087 = vmatpush1.bf16.msra.mxu0 %v3031
  %3088 = vmatprep.subr.bf16.mxu0 0
  %3089 = vmatpush1.bf16.msra.mxu0 %v3032
  %3090 = vmatprep.subr.bf16.mxu0 0
  %3091 = vmatpush1.bf16.msra.mxu0 %v3033
  %3092 = vmatprep.subr.bf16.mxu0 0
  %3093 = vmatpush1.bf16.msra.mxu0 %v3034
  %3094 = vmatprep.subr.bf16.mxu0 0
  %3095 = vmatpush1.bf16.msra.mxu0 %v3035
  %3096 = vmatprep.subr.bf16.mxu0 0
  %3097 = vmatpush1.bf16.msra.mxu0 %v3036
  %3098 = vmatprep.subr.bf16.mxu0 0
  %3099 = vmatpush1.bf16.msra.mxu0 %v3037
  %3100 = vmatprep.subr.bf16.mxu0 0
  %3101 = vmatpush1.bf16.msra.mxu0 %v3038
  %3102 = vmatprep.subr.bf16.mxu0 0
  %3103 = vmatpush1.bf16.msra.mxu0 %v3039
  %3104 = vmatprep.mubr.bf16.mxu0 %v1527
  %3105 = vmatmul.mubr.bf16.gmra.mrb[0].mxu0 %v1435
  %v3106 = vpop.f32.mrb[0].mxu0
  %v3107 = vadd.f32 %v2802, %v3106
  %v3108 = vpop.f32.mrb[0].mxu0
  %v3109 = vpop.f32.mrb[0].mxu0
  %v3110 = vadd.f32 %v2805, %v3109
  %v3111 = vpop.f32.mrb[0].mxu0
  %3112 = vmatprep.mubr.bf16.mxu0 %v1539
  %3113 = vmatmul.mubr.bf16.gmra.mrb[0].mxu0 %v1436
  %v3114 = vpop.f32.mrb[0].mxu0
  %v3115 = vadd.f32 %v2810, %v3114
  %v3116 = vpop.f32.mrb[0].mxu0
  %v3117 = vpop.f32.mrb[0].mxu0
  %v3118 = vadd.f32 %v2813, %v3117
  %v3119 = vpop.f32.mrb[0].mxu0
  %3120 = vmatprep.mubr.bf16.mxu0 %v1551
  %3121 = vmatmul.mubr.bf16.gmra.mrb[0].mxu0 %v1437
  %v3122 = vpop.f32.mrb[0].mxu0
  %v3123 = vadd.f32 %v2818, %v3122
  %v3124 = vpop.f32.mrb[0].mxu0
  %v3125 = vpop.f32.mrb[0].mxu0
  %v3126 = vadd.f32 %v2821, %v3125
  %v3127 = vpop.f32.mrb[0].mxu0
  %3128 = vmatprep.mubr.bf16.mxu0 %v1563
  %3129 = vmatmul.mubr.bf16.gmra.mrb[0].mxu0 %v1438
  %v3130 = vpop.f32.mrb[0].mxu0
  %v3131 = vadd.f32 %v2826, %v3130
  %v3132 = vpop.f32.mrb[0].mxu0
  %v3133 = vpop.f32.mrb[0].mxu0
  %v3134 = vadd.f32 %v2829, %v3133
  %v3135 = vpop.f32.mrb[0].mxu0
  %3136 = vmatprep.mubr.bf16.mxu0 %v1575
  %3137 = vmatmul.mubr.bf16.gmra.mrb[0].mxu0 %v1439
  %v3138 = vpop.f32.mrb[0].mxu0
  %v3139 = vadd.f32 %v2834, %v3138
  %v3140 = vpop.f32.mrb[0].mxu0
  %v3141 = vpop.f32.mrb[0].mxu0
  %v3142 = vadd.f32 %v2837, %v3141
  %v3143 = vpop.f32.mrb[0].mxu0
  %3144 = vmatprep.mubr.bf16.mxu0 %v1587
  %3145 = vmatmul.mubr.bf16.gmra.mrb[0].mxu0 %v1440
  %v3146 = vpop.f32.mrb[0].mxu0
  %v3147 = vadd.f32 %v2842, %v3146
  %v3148 = vpop.f32.mrb[0].mxu0
  %v3149 = vpop.f32.mrb[0].mxu0
  %v3150 = vadd.f32 %v2845, %v3149
  %v3151 = vpop.f32.mrb[0].mxu0
  %3152 = vmatprep.mubr.bf16.mxu0 %v1599
  %3153 = vmatmul.mubr.bf16.gmra.mrb[0].mxu0 %v1441
  %v3154 = vpop.f32.mrb[0].mxu0
  %v3155 = vadd.f32 %v2850, %v3154
  %v3156 = vpop.f32.mrb[0].mxu0
  %v3157 = vpop.f32.mrb[0].mxu0
  %v3158 = vadd.f32 %v2853, %v3157
  %v3159 = vpop.f32.mrb[0].mxu0
  %3160 = vmatprep.mubr.bf16.mxu0 %v1611
  %3161 = vmatmul.mubr.bf16.gmra.mrb[0].mxu0 %v1442
  %v3162 = vpop.f32.mrb[0].mxu0
  %v3163 = vadd.f32 %v2858, %v3162
  %v3164 = vpop.f32.mrb[0].mxu0
  %v3165 = vpop.f32.mrb[0].mxu0
  %v3166 = vadd.f32 %v2861, %v3165
  %v3167 = vpop.f32.mrb[0].mxu0
  %3168 = vmatprep.mubr.bf16.mxu0 %v1623
  %3169 = vmatmul.mubr.bf16.gmra.mrb[0].mxu0 %v1443
  %v3170 = vpop.f32.mrb[0].mxu0
  %v3171 = vadd.f32 %v2866, %v3170
  %v3172 = vpop.f32.mrb[0].mxu0
  %v3173 = vpop.f32.mrb[0].mxu0
  %v3174 = vadd.f32 %v2869, %v3173
  %v3175 = vpop.f32.mrb[0].mxu0
  %3176 = vmatprep.mubr.bf16.mxu0 %v1635
  %3177 = vmatmul.mubr.bf16.gmra.mrb[0].mxu0 %v1444
  %v3178 = vpop.f32.mrb[0].mxu0
  %v3179 = vadd.f32 %v2874, %v3178
  %v3180 = vpop.f32.mrb[0].mxu0
  %v3181 = vpop.f32.mrb[0].mxu0
  %v3182 = vadd.f32 %v2877, %v3181
  %v3183 = vpop.f32.mrb[0].mxu0
  %3184 = vmatprep.mubr.bf16.mxu0 %v1647
  %3185 = vmatmul.mubr.bf16.gmra.mrb[0].mxu0 %v1445
  %v3186 = vpop.f32.mrb[0].mxu0
  %v3187 = vadd.f32 %v2882, %v3186
  %v3188 = vpop.f32.mrb[0].mxu0
  %v3189 = vpop.f32.mrb[0].mxu0
  %v3190 = vadd.f32 %v2885, %v3189
  %v3191 = vpop.f32.mrb[0].mxu0
  %3192 = vmatprep.mubr.bf16.mxu0 %v1659
  %3193 = vmatmul.mubr.bf16.gmra.mrb[0].mxu0 %v1446
  %v3194 = vpop.f32.mrb[0].mxu0
  %v3195 = vadd.f32 %v2890, %v3194
  %v3196 = vpop.f32.mrb[0].mxu0
  %v3197 = vpop.f32.mrb[0].mxu0
  %v3198 = vadd.f32 %v2893, %v3197
  %v3199 = vpop.f32.mrb[0].mxu0
  %3200 = vmatprep.mubr.bf16.mxu0 %v1671
  %3201 = vmatmul.mubr.bf16.gmra.mrb[0].mxu0 %v1447
  %v3202 = vpop.f32.mrb[0].mxu0
  %v3203 = vadd.f32 %v2898, %v3202
  %v3204 = vpop.f32.mrb[0].mxu0
  %v3205 = vpop.f32.mrb[0].mxu0
  %v3206 = vadd.f32 %v2901, %v3205
  %v3207 = vpop.f32.mrb[0].mxu0
  %3208 = vmatprep.mubr.bf16.mxu0 %v1683
  %3209 = vmatmul.mubr.bf16.gmra.mrb[0].mxu0 %v1448
  %v3210 = vpop.f32.mrb[0].mxu0
  %v3211 = vadd.f32 %v2906, %v3210
  %v3212 = vpop.f32.mrb[0].mxu0
  %v3213 = vpop.f32.mrb[0].mxu0
  %v3214 = vadd.f32 %v2909, %v3213
  %v3215 = vpop.f32.mrb[0].mxu0
  %3216 = vmatprep.mubr.bf16.mxu0 %v1695
  %3217 = vmatmul.mubr.bf16.gmra.mrb[0].mxu0 %v1449
  %v3218 = vpop.f32.mrb[0].mxu0
  %v3219 = vadd.f32 %v2914, %v3218
  %v3220 = vpop.f32.mrb[0].mxu0
  %v3221 = vpop.f32.mrb[0].mxu0
  %v3222 = vadd.f32 %v2917, %v3221
  %v3223 = vpop.f32.mrb[0].mxu0
  %3224 = vmatprep.mubr.bf16.mxu0 %v1707
  %3225 = vmatmul.mubr.bf16.gmra.mrb[0].mxu0 %v1450
  %v3226 = vpop.f32.mrb[0].mxu0
  %v3227 = vadd.f32 %v2922, %v3226
  %v3228 = vpop.f32.mrb[0].mxu0
  %v3229 = vpop.f32.mrb[0].mxu0
  %v3230 = vadd.f32 %v2925, %v3229
  %v3231 = vpop.f32.mrb[0].mxu0
  %3232 = vdwg.mxu0
  %3233 = vmatprep.subr.bf16.mxu0 0
  %3234 = vmatpush1.bf16.msra.mxu0 %v3040
  %3235 = vmatprep.subr.bf16.mxu0 0
  %3236 = vmatpush1.bf16.msra.mxu0 %v3041
  %3237 = vmatprep.subr.bf16.mxu0 0
  %3238 = vmatpush1.bf16.msra.mxu0 %v3042
  %3239 = vmatprep.subr.bf16.mxu0 0
  %3240 = vmatpush1.bf16.msra.mxu0 %v3043
  %3241 = vmatprep.subr.bf16.mxu0 0
  %3242 = vmatpush1.bf16.msra.mxu0 %v3044
  %3243 = vmatprep.subr.bf16.mxu0 0
  %3244 = vmatpush1.bf16.msra.mxu0 %v3045
  %3245 = vmatprep.subr.bf16.mxu0 0
  %3246 = vmatpush1.bf16.msra.mxu0 %v3046
  %3247 = vmatprep.subr.bf16.mxu0 0
  %3248 = vmatpush1.bf16.msra.mxu0 %v3047
  %3249 = vmatprep.subr.bf16.mxu0 0
  %3250 = vmatpush1.bf16.msra.mxu0 0
  %3251 = vmatprep.subr.bf16.mxu0 0
  %3252 = vmatpush1.bf16.msra.mxu0 0
  %3253 = vmatprep.subr.bf16.mxu0 0
  %3254 = vmatpush1.bf16.msra.mxu0 0
  %3255 = vmatprep.subr.bf16.mxu0 0
  %3256 = vmatpush1.bf16.msra.mxu0 0
  %3257 = vmatprep.subr.bf16.mxu0 0
  %3258 = vmatpush1.bf16.msra.mxu0 0
  %3259 = vmatprep.subr.bf16.mxu0 0
  %3260 = vmatpush1.bf16.msra.mxu0 0
  %3261 = vmatprep.subr.bf16.mxu0 0
  %3262 = vmatpush1.bf16.msra.mxu0 0
  %3263 = vmatprep.subr.bf16.mxu0 0
  %3264 = vmatpush1.bf16.msra.mxu0 0
  %3265 = vmatprep.mubr.bf16.mxu0 0
  %3266 = vmatmul.mubr.bf16.gmra.mrb[0].mxu0 %v1775
  %v3267 = vpop.f32.mrb[0].mxu0
  %v3268 = vadd.f32 %v3107, %v3267
  %v3269 = vpop.f32.mrb[0].mxu0
  %v3270 = vpop.f32.mrb[0].mxu0
  %v3271 = vadd.f32 %v3110, %v3270
  %v3272 = vpop.f32.mrb[0].mxu0
  %3273 = vmatprep.mubr.bf16.mxu0 0
  %3274 = vmatmul.mubr.bf16.gmra.mrb[0].mxu0 %v1778
  %v3275 = vpop.f32.mrb[0].mxu0
  %v3276 = vadd.f32 %v3115, %v3275
  %v3277 = vpop.f32.mrb[0].mxu0
  %v3278 = vpop.f32.mrb[0].mxu0
  %v3279 = vadd.f32 %v3118, %v3278
  %v3280 = vpop.f32.mrb[0].mxu0
  %3281 = vmatprep.mubr.bf16.mxu0 0
  %3282 = vmatmul.mubr.bf16.gmra.mrb[0].mxu0 %v1781
  %v3283 = vpop.f32.mrb[0].mxu0
  %v3284 = vadd.f32 %v3123, %v3283
  %v3285 = vpop.f32.mrb[0].mxu0
  %v3286 = vpop.f32.mrb[0].mxu0
  %v3287 = vadd.f32 %v3126, %v3286
  %v3288 = vpop.f32.mrb[0].mxu0
  %3289 = vmatprep.mubr.bf16.mxu0 0
  %3290 = vmatmul.mubr.bf16.gmra.mrb[0].mxu0 %v1784
  %v3291 = vpop.f32.mrb[0].mxu0
  %v3292 = vadd.f32 %v3131, %v3291
  %v3293 = vpop.f32.mrb[0].mxu0
  %v3294 = vpop.f32.mrb[0].mxu0
  %v3295 = vadd.f32 %v3134, %v3294
  %v3296 = vpop.f32.mrb[0].mxu0
  %3297 = vmatprep.mubr.bf16.mxu0 0
  %3298 = vmatmul.mubr.bf16.gmra.mrb[0].mxu0 %v1787
  %v3299 = vpop.f32.mrb[0].mxu0
  %v3300 = vadd.f32 %v3139, %v3299
  %v3301 = vpop.f32.mrb[0].mxu0
  %v3302 = vpop.f32.mrb[0].mxu0
  %v3303 = vadd.f32 %v3142, %v3302
  %v3304 = vpop.f32.mrb[0].mxu0
  %3305 = vmatprep.mubr.bf16.mxu0 0
  %3306 = vmatmul.mubr.bf16.gmra.mrb[0].mxu0 %v1790
  %v3307 = vpop.f32.mrb[0].mxu0
  %v3308 = vadd.f32 %v3147, %v3307
  %v3309 = vpop.f32.mrb[0].mxu0
  %v3310 = vpop.f32.mrb[0].mxu0
  %v3311 = vadd.f32 %v3150, %v3310
  %v3312 = vpop.f32.mrb[0].mxu0
  %3313 = vmatprep.mubr.bf16.mxu0 0
  %3314 = vmatmul.mubr.bf16.gmra.mrb[0].mxu0 %v1793
  %v3315 = vpop.f32.mrb[0].mxu0
  %v3316 = vadd.f32 %v3155, %v3315
  %v3317 = vpop.f32.mrb[0].mxu0
  %v3318 = vpop.f32.mrb[0].mxu0
  %v3319 = vadd.f32 %v3158, %v3318
  %v3320 = vpop.f32.mrb[0].mxu0
  %3321 = vmatprep.mubr.bf16.mxu0 0
  %3322 = vmatmul.mubr.bf16.gmra.mrb[0].mxu0 %v1796
  %v3323 = vpop.f32.mrb[0].mxu0
  %v3324 = vadd.f32 %v3163, %v3323
  %v3325 = vpop.f32.mrb[0].mxu0
  %v3326 = vpop.f32.mrb[0].mxu0
  %v3327 = vadd.f32 %v3166, %v3326
  %v3328 = vpop.f32.mrb[0].mxu0
  %3329 = vmatprep.mubr.bf16.mxu0 0
  %3330 = vmatmul.mubr.bf16.gmra.mrb[0].mxu0 %v1799
  %v3331 = vpop.f32.mrb[0].mxu0
  %v3332 = vadd.f32 %v3171, %v3331
  %v3333 = vpop.f32.mrb[0].mxu0
  %v3334 = vpop.f32.mrb[0].mxu0
  %v3335 = vadd.f32 %v3174, %v3334
  %v3336 = vpop.f32.mrb[0].mxu0
  %3337 = vmatprep.mubr.bf16.mxu0 0
  %3338 = vmatmul.mubr.bf16.gmra.mrb[0].mxu0 %v1802
  %v3339 = vpop.f32.mrb[0].mxu0
  %v3340 = vadd.f32 %v3179, %v3339
  %v3341 = vpop.f32.mrb[0].mxu0
  %v3342 = vpop.f32.mrb[0].mxu0
  %v3343 = vadd.f32 %v3182, %v3342
  %v3344 = vpop.f32.mrb[0].mxu0
  %3345 = vmatprep.mubr.bf16.mxu0 0
  %3346 = vmatmul.mubr.bf16.gmra.mrb[0].mxu0 %v1805
  %v3347 = vpop.f32.mrb[0].mxu0
  %v3348 = vadd.f32 %v3187, %v3347
  %v3349 = vpop.f32.mrb[0].mxu0
  %v3350 = vpop.f32.mrb[0].mxu0
  %v3351 = vadd.f32 %v3190, %v3350
  %v3352 = vpop.f32.mrb[0].mxu0
  %3353 = vmatprep.mubr.bf16.mxu0 0
  %3354 = vmatmul.mubr.bf16.gmra.mrb[0].mxu0 %v1808
  %v3355 = vpop.f32.mrb[0].mxu0
  %v3356 = vadd.f32 %v3195, %v3355
  %v3357 = vpop.f32.mrb[0].mxu0
  %v3358 = vpop.f32.mrb[0].mxu0
  %v3359 = vadd.f32 %v3198, %v3358
  %v3360 = vpop.f32.mrb[0].mxu0
  %3361 = vmatprep.mubr.bf16.mxu0 0
  %3362 = vmatmul.mubr.bf16.gmra.mrb[0].mxu0 %v1811
  %v3363 = vpop.f32.mrb[0].mxu0
  %v3364 = vadd.f32 %v3203, %v3363
  %v3365 = vpop.f32.mrb[0].mxu0
  %v3366 = vpop.f32.mrb[0].mxu0
  %v3367 = vadd.f32 %v3206, %v3366
  %v3368 = vpop.f32.mrb[0].mxu0
  %3369 = vmatprep.mubr.bf16.mxu0 0
  %3370 = vmatmul.mubr.bf16.gmra.mrb[0].mxu0 %v1814
  %v3371 = vpop.f32.mrb[0].mxu0
  %v3372 = vadd.f32 %v3211, %v3371
  %v3373 = vpop.f32.mrb[0].mxu0
  %v3374 = vpop.f32.mrb[0].mxu0
  %v3375 = vadd.f32 %v3214, %v3374
  %v3376 = vpop.f32.mrb[0].mxu0
  %3377 = vmatprep.mubr.bf16.mxu0 0
  %3378 = vmatmul.mubr.bf16.gmra.mrb[0].mxu0 %v1817
  %v3379 = vpop.f32.mrb[0].mxu0
  %v3380 = vadd.f32 %v3219, %v3379
  %v3381 = vpop.f32.mrb[0].mxu0
  %v3382 = vpop.f32.mrb[0].mxu0
  %v3383 = vadd.f32 %v3222, %v3382
  %v3384 = vpop.f32.mrb[0].mxu0
  %3385 = vmatprep.mubr.bf16.mxu0 0
  %3386 = vmatmul.mubr.bf16.gmra.mrb[0].mxu0 %v1820
  %v3387 = vpop.f32.mrb[0].mxu0
  %v3388 = vadd.f32 %v3227, %v3387
  %v3389 = vpop.f32.mrb[0].mxu0
  %v3390 = vpop.f32.mrb[0].mxu0
  %v3391 = vadd.f32 %v3230, %v3390
  %v3392 = vpop.f32.mrb[0].mxu0
  %3393 = vdwg.mxu0
  %s3394 = scalar_lea.vmem [#allocation2], 24
  %v3395 = vld [vmem:[%s3394] sm:$0xf]
  %v3396 = vld [vmem:[%s3394 + $0x4] sm:$0xf]
  %v3397 = vld [vmem:[%s3394 + $0xc] sm:$0xf]
  %v3398 = vld [vmem:[%s3394 + $0x10] sm:$0xf]
  %v3399 = vld [vmem:[%s3394 + $0x18] sm:$0xf]
  %v3400 = vld [vmem:[%s3394 + $0x1c] sm:$0xf]
  %v3401 = vld [vmem:[%s3394 + $0x24] sm:$0xf]
  %v3402 = vld [vmem:[%s3394 + $0x28] sm:$0xf]
  %v3403 = vld [vmem:[%s3394 + $0x30] sm:$0xf]
  %v3404 = vld [vmem:[%s3394 + $0x34] sm:$0xf]
  %v3405 = vld [vmem:[%s3394 + $0x3c] sm:$0xf]
  %v3406 = vld [vmem:[%s3394 + $0x40] sm:$0xf]
  %v3407 = vld [vmem:[%s3394 + $0x48] sm:$0xf]
  %v3408 = vld [vmem:[%s3394 + $0x4c] sm:$0xf]
  %v3409 = vld [vmem:[%s3394 + $0x54] sm:$0xf]
  %v3410 = vld [vmem:[%s3394 + $0x58] sm:$0xf]
  %v3411 = vld [vmem:[%s3394 + $0x60] sm:$0xf]
  %v3412 = vld [vmem:[%s3394 + $0x64] sm:$0xf]
  %v3413 = vld [vmem:[%s3394 + $0x6c] sm:$0xf]
  %v3414 = vld [vmem:[%s3394 + $0x70] sm:$0xf]
  %v3415 = vld [vmem:[%s3394 + $0x78] sm:$0xf]
  %v3416 = vld [vmem:[%s3394 + $0x7c] sm:$0xf]
  %v3417 = vld [vmem:[%s3394 + $0x84] sm:$0xf]
  %v3418 = vld [vmem:[%s3394 + $0x88] sm:$0xf]
  %v3419 = vld [vmem:[%s3394 + $0x90] sm:$0xf]
  %v3420 = vld [vmem:[%s3394 + $0x94] sm:$0xf]
  %v3421 = vld [vmem:[%s3394 + $0x9c] sm:$0xf]
  %v3422 = vld [vmem:[%s3394 + $0xa0] sm:$0xf]
  %v3423 = vld [vmem:[%s3394 + $0xa8] sm:$0xf]
  %v3424 = vld [vmem:[%s3394 + $0xac] sm:$0xf]
  %v3425 = vld [vmem:[%s3394 + $0xb4] sm:$0xf]
  %v3426 = vld [vmem:[%s3394 + $0xb8] sm:$0xf]
  %v3427 = vld [vmem:[%s3394 + $0x8] sm:$0x1]
  %v3428 = vld [vmem:[%s3394 + $0x14] sm:$0x1]
  %v3429 = vld [vmem:[%s3394 + $0x20] sm:$0x1]
  %v3430 = vld [vmem:[%s3394 + $0x2c] sm:$0x1]
  %v3431 = vld [vmem:[%s3394 + $0x38] sm:$0x1]
  %v3432 = vld [vmem:[%s3394 + $0x44] sm:$0x1]
  %v3433 = vld [vmem:[%s3394 + $0x50] sm:$0x1]
  %v3434 = vld [vmem:[%s3394 + $0x5c] sm:$0x1]
  %v3435 = vld [vmem:[%s3394 + $0x68] sm:$0x1]
  %v3436 = vld [vmem:[%s3394 + $0x74] sm:$0x1]
  %v3437 = vld [vmem:[%s3394 + $0x80] sm:$0x1]
  %v3438 = vld [vmem:[%s3394 + $0x8c] sm:$0x1]
  %v3439 = vld [vmem:[%s3394 + $0x98] sm:$0x1]
  %v3440 = vld [vmem:[%s3394 + $0xa4] sm:$0x1]
  %v3441 = vld [vmem:[%s3394 + $0xb0] sm:$0x1]
  %v3442 = vld [vmem:[%s3394 + $0xbc] sm:$0x1]
  %v3443 = vld [vmem:[%s3394] sm:$0xe]
  %v3444 = vld [vmem:[%s3394 + $0xc] sm:$0xe]
  %v3445 = vld [vmem:[%s3394 + $0x18] sm:$0xe]
  %v3446 = vld [vmem:[%s3394 + $0x24] sm:$0xe]
  %v3447 = vld [vmem:[%s3394 + $0x30] sm:$0xe]
  %v3448 = vld [vmem:[%s3394 + $0x3c] sm:$0xe]
  %v3449 = vld [vmem:[%s3394 + $0x48] sm:$0xe]
  %v3450 = vld [vmem:[%s3394 + $0x54] sm:$0xe]
  %v3451 = vld [vmem:[%s3394 + $0x60] sm:$0xe]
  %v3452 = vld [vmem:[%s3394 + $0x6c] sm:$0xe]
  %v3453 = vld [vmem:[%s3394 + $0x78] sm:$0xe]
  %v3454 = vld [vmem:[%s3394 + $0x84] sm:$0xe]
  %v3455 = vld [vmem:[%s3394 + $0x90] sm:$0xe]
  %v3456 = vld [vmem:[%s3394 + $0x9c] sm:$0xe]
  %v3457 = vld [vmem:[%s3394 + $0xa8] sm:$0xe]
  %v3458 = vld [vmem:[%s3394 + $0xb4] sm:$0xe]
  %v3491 = vunpack.c.l.b16 %v3395
  %v3492 = vunpack.c.l.b16 %v3396
  %v3493 = vunpack.c.l.b16 %v3397
  %v3494 = vunpack.c.l.b16 %v3398
  %v3495 = vunpack.c.l.b16 %v3399
  %v3496 = vunpack.c.l.b16 %v3400
  %v3497 = vunpack.c.l.b16 %v3401
  %v3498 = vunpack.c.l.b16 %v3402
  %v3499 = vunpack.c.l.b16 %v3403
  %v3500 = vunpack.c.l.b16 %v3404
  %v3501 = vunpack.c.l.b16 %v3405
  %v3502 = vunpack.c.l.b16 %v3406
  %v3503 = vunpack.c.l.b16 %v3407
  %v3504 = vunpack.c.l.b16 %v3408
  %v3505 = vunpack.c.l.b16 %v3409
  %v3506 = vunpack.c.l.b16 %v3410
  %v3507 = vunpack.c.l.b16 %v3411
  %v3508 = vunpack.c.l.b16 %v3412
  %v3509 = vunpack.c.l.b16 %v3413
  %v3510 = vunpack.c.l.b16 %v3414
  %v3511 = vunpack.c.l.b16 %v3415
  %v3512 = vunpack.c.l.b16 %v3416
  %v3513 = vunpack.c.l.b16 %v3417
  %v3514 = vunpack.c.l.b16 %v3418
  %v3515 = vunpack.c.l.b16 %v3419
  %v3516 = vunpack.c.l.b16 %v3420
  %v3517 = vunpack.c.l.b16 %v3421
  %v3518 = vunpack.c.l.b16 %v3422
  %v3519 = vunpack.c.l.b16 %v3423
  %v3520 = vunpack.c.l.b16 %v3424
  %v3521 = vunpack.c.l.b16 %v3425
  %v3522 = vunpack.c.l.b16 %v3426
  %v3523 = vpack.c.b16 %v3492, %v3491
  %v3524 = vpack.c.b16 %v3494, %v3493
  %v3525 = vpack.c.b16 %v3496, %v3495
  %v3526 = vpack.c.b16 %v3498, %v3497
  %v3527 = vpack.c.b16 %v3500, %v3499
  %v3528 = vpack.c.b16 %v3502, %v3501
  %v3529 = vpack.c.b16 %v3504, %v3503
  %v3530 = vpack.c.b16 %v3506, %v3505
  %v3531 = vpack.c.b16 %v3508, %v3507
  %v3532 = vpack.c.b16 %v3510, %v3509
  %v3533 = vpack.c.b16 %v3512, %v3511
  %v3534 = vpack.c.b16 %v3514, %v3513
  %v3535 = vpack.c.b16 %v3516, %v3515
  %v3536 = vpack.c.b16 %v3518, %v3517
  %v3537 = vpack.c.b16 %v3520, %v3519
  %v3538 = vpack.c.b16 %v3522, %v3521
  %v3571 = vunpack.c.l.b16 %v3427
  %v3572 = vunpack.c.l.b16 %v3428
  %v3573 = vunpack.c.l.b16 %v3429
  %v3574 = vunpack.c.l.b16 %v3430
  %v3575 = vunpack.c.l.b16 %v3431
  %v3576 = vunpack.c.l.b16 %v3432
  %v3577 = vunpack.c.l.b16 %v3433
  %v3578 = vunpack.c.l.b16 %v3434
  %v3579 = vunpack.c.l.b16 %v3435
  %v3580 = vunpack.c.l.b16 %v3436
  %v3581 = vunpack.c.l.b16 %v3437
  %v3582 = vunpack.c.l.b16 %v3438
  %v3583 = vunpack.c.l.b16 %v3439
  %v3584 = vunpack.c.l.b16 %v3440
  %v3585 = vunpack.c.l.b16 %v3441
  %v3586 = vunpack.c.l.b16 %v3442
  %v3587 = vpack.c.b16 %v3571, %v3571
  %v3588 = vpack.c.b16 %v3572, %v3572
  %v3589 = vpack.c.b16 %v3573, %v3573
  %v3590 = vpack.c.b16 %v3574, %v3574
  %v3591 = vpack.c.b16 %v3575, %v3575
  %v3592 = vpack.c.b16 %v3576, %v3576
  %v3593 = vpack.c.b16 %v3577, %v3577
  %v3594 = vpack.c.b16 %v3578, %v3578
  %v3595 = vpack.c.b16 %v3579, %v3579
  %v3596 = vpack.c.b16 %v3580, %v3580
  %v3597 = vpack.c.b16 %v3581, %v3581
  %v3598 = vpack.c.b16 %v3582, %v3582
  %v3599 = vpack.c.b16 %v3583, %v3583
  %v3600 = vpack.c.b16 %v3584, %v3584
  %v3601 = vpack.c.b16 %v3585, %v3585
  %v3602 = vpack.c.b16 %v3586, %v3586
  %v3604 = vshrl.u32 %v3523, 16
  %v3606 = vshll.u32 %v3523, 16
  %v3608 = vrot.slane %v3606, 1
  %v3609 = vor.u32 %v3604, %v3608
  %v3611 = vshll.u32 %v3587, 16
  %v3613 = vrot.slane %v3611, 1
  %v3614 = vsel %vm1515, %v3609, %v3613
  %v3616 = vshrl.u32 %v3524, 16
  %v3618 = vshll.u32 %v3524, 16
  %v3620 = vrot.slane %v3618, 1
  %v3621 = vor.u32 %v3616, %v3620
  %v3623 = vshll.u32 %v3588, 16
  %v3625 = vrot.slane %v3623, 1
  %v3626 = vsel %vm1515, %v3621, %v3625
  %v3628 = vshrl.u32 %v3525, 16
  %v3630 = vshll.u32 %v3525, 16
  %v3632 = vrot.slane %v3630, 1
  %v3633 = vor.u32 %v3628, %v3632
  %v3635 = vshll.u32 %v3589, 16
  %v3637 = vrot.slane %v3635, 1
  %v3638 = vsel %vm1515, %v3633, %v3637
  %v3640 = vshrl.u32 %v3526, 16
  %v3642 = vshll.u32 %v3526, 16
  %v3644 = vrot.slane %v3642, 1
  %v3645 = vor.u32 %v3640, %v3644
  %v3647 = vshll.u32 %v3590, 16
  %v3649 = vrot.slane %v3647, 1
  %v3650 = vsel %vm1515, %v3645, %v3649
  %v3652 = vshrl.u32 %v3527, 16
  %v3654 = vshll.u32 %v3527, 16
  %v3656 = vrot.slane %v3654, 1
  %v3657 = vor.u32 %v3652, %v3656
  %v3659 = vshll.u32 %v3591, 16
  %v3661 = vrot.slane %v3659, 1
  %v3662 = vsel %vm1515, %v3657, %v3661
  %v3664 = vshrl.u32 %v3528, 16
  %v3666 = vshll.u32 %v3528, 16
  %v3668 = vrot.slane %v3666, 1
  %v3669 = vor.u32 %v3664, %v3668
  %v3671 = vshll.u32 %v3592, 16
  %v3673 = vrot.slane %v3671, 1
  %v3674 = vsel %vm1515, %v3669, %v3673
  %v3676 = vshrl.u32 %v3529, 16
  %v3678 = vshll.u32 %v3529, 16
  %v3680 = vrot.slane %v3678, 1
  %v3681 = vor.u32 %v3676, %v3680
  %v3683 = vshll.u32 %v3593, 16
  %v3685 = vrot.slane %v3683, 1
  %v3686 = vsel %vm1515, %v3681, %v3685
  %v3688 = vshrl.u32 %v3530, 16
  %v3690 = vshll.u32 %v3530, 16
  %v3692 = vrot.slane %v3690, 1
  %v3693 = vor.u32 %v3688, %v3692
  %v3695 = vshll.u32 %v3594, 16
  %v3697 = vrot.slane %v3695, 1
  %v3698 = vsel %vm1515, %v3693, %v3697
  %v3700 = vshrl.u32 %v3531, 16
  %v3702 = vshll.u32 %v3531, 16
  %v3704 = vrot.slane %v3702, 1
  %v3705 = vor.u32 %v3700, %v3704
  %v3707 = vshll.u32 %v3595, 16
  %v3709 = vrot.slane %v3707, 1
  %v3710 = vsel %vm1515, %v3705, %v3709
  %v3712 = vshrl.u32 %v3532, 16
  %v3714 = vshll.u32 %v3532, 16
  %v3716 = vrot.slane %v3714, 1
  %v3717 = vor.u32 %v3712, %v3716
  %v3719 = vshll.u32 %v3596, 16
  %v3721 = vrot.slane %v3719, 1
  %v3722 = vsel %vm1515, %v3717, %v3721
  %v3724 = vshrl.u32 %v3533, 16
  %v3726 = vshll.u32 %v3533, 16
  %v3728 = vrot.slane %v3726, 1
  %v3729 = vor.u32 %v3724, %v3728
  %v3731 = vshll.u32 %v3597, 16
  %v3733 = vrot.slane %v3731, 1
  %v3734 = vsel %vm1515, %v3729, %v3733
  %v3736 = vshrl.u32 %v3534, 16
  %v3738 = vshll.u32 %v3534, 16
  %v3740 = vrot.slane %v3738, 1
  %v3741 = vor.u32 %v3736, %v3740
  %v3743 = vshll.u32 %v3598, 16
  %v3745 = vrot.slane %v3743, 1
  %v3746 = vsel %vm1515, %v3741, %v3745
  %v3748 = vshrl.u32 %v3535, 16
  %v3750 = vshll.u32 %v3535, 16
  %v3752 = vrot.slane %v3750, 1
  %v3753 = vor.u32 %v3748, %v3752
  %v3755 = vshll.u32 %v3599, 16
  %v3757 = vrot.slane %v3755, 1
  %v3758 = vsel %vm1515, %v3753, %v3757
  %v3760 = vshrl.u32 %v3536, 16
  %v3762 = vshll.u32 %v3536, 16
  %v3764 = vrot.slane %v3762, 1
  %v3765 = vor.u32 %v3760, %v3764
  %v3767 = vshll.u32 %v3600, 16
  %v3769 = vrot.slane %v3767, 1
  %v3770 = vsel %vm1515, %v3765, %v3769
  %v3772 = vshrl.u32 %v3537, 16
  %v3774 = vshll.u32 %v3537, 16
  %v3776 = vrot.slane %v3774, 1
  %v3777 = vor.u32 %v3772, %v3776
  %v3779 = vshll.u32 %v3601, 16
  %v3781 = vrot.slane %v3779, 1
  %v3782 = vsel %vm1515, %v3777, %v3781
  %v3784 = vshrl.u32 %v3538, 16
  %v3786 = vshll.u32 %v3538, 16
  %v3788 = vrot.slane %v3786, 1
  %v3789 = vor.u32 %v3784, %v3788
  %v3791 = vshll.u32 %v3602, 16
  %v3793 = vrot.slane %v3791, 1
  %v3794 = vsel %vm1515, %v3789, %v3793
  %v3827 = vunpack.c.l.b16 %v3443
  %v3828 = vunpack.c.l.b16 %v3444
  %v3829 = vunpack.c.l.b16 %v3445
  %v3830 = vunpack.c.l.b16 %v3446
  %v3831 = vunpack.c.l.b16 %v3447
  %v3832 = vunpack.c.l.b16 %v3448
  %v3833 = vunpack.c.l.b16 %v3449
  %v3834 = vunpack.c.l.b16 %v3450
  %v3835 = vunpack.c.l.b16 %v3451
  %v3836 = vunpack.c.l.b16 %v3452
  %v3837 = vunpack.c.l.b16 %v3453
  %v3838 = vunpack.c.l.b16 %v3454
  %v3839 = vunpack.c.l.b16 %v3455
  %v3840 = vunpack.c.l.b16 %v3456
  %v3841 = vunpack.c.l.b16 %v3457
  %v3842 = vunpack.c.l.b16 %v3458
  %v3843 = vpack.c.b16 %v3492, %v3827
  %v3844 = vpack.c.b16 %v3494, %v3828
  %v3845 = vpack.c.b16 %v3496, %v3829
  %v3846 = vpack.c.b16 %v3498, %v3830
  %v3847 = vpack.c.b16 %v3500, %v3831
  %v3848 = vpack.c.b16 %v3502, %v3832
  %v3849 = vpack.c.b16 %v3504, %v3833
  %v3850 = vpack.c.b16 %v3506, %v3834
  %v3851 = vpack.c.b16 %v3508, %v3835
  %v3852 = vpack.c.b16 %v3510, %v3836
  %v3853 = vpack.c.b16 %v3512, %v3837
  %v3854 = vpack.c.b16 %v3514, %v3838
  %v3855 = vpack.c.b16 %v3516, %v3839
  %v3856 = vpack.c.b16 %v3518, %v3840
  %v3857 = vpack.c.b16 %v3520, %v3841
  %v3858 = vpack.c.b16 %v3522, %v3842
  %v3859 = vrot.slane %v3843, 1
  %v3860 = vrot.slane %v3587, 1
  %v3861 = vsel %vm1772, %v3859, %v3860
  %v3862 = vrot.slane %v3844, 1
  %v3863 = vrot.slane %v3588, 1
  %v3864 = vsel %vm1772, %v3862, %v3863
  %v3865 = vrot.slane %v3845, 1
  %v3866 = vrot.slane %v3589, 1
  %v3867 = vsel %vm1772, %v3865, %v3866
  %v3868 = vrot.slane %v3846, 1
  %v3869 = vrot.slane %v3590, 1
  %v3870 = vsel %vm1772, %v3868, %v3869
  %v3871 = vrot.slane %v3847, 1
  %v3872 = vrot.slane %v3591, 1
  %v3873 = vsel %vm1772, %v3871, %v3872
  %v3874 = vrot.slane %v3848, 1
  %v3875 = vrot.slane %v3592, 1
  %v3876 = vsel %vm1772, %v3874, %v3875
  %v3877 = vrot.slane %v3849, 1
  %v3878 = vrot.slane %v3593, 1
  %v3879 = vsel %vm1772, %v3877, %v3878
  %v3880 = vrot.slane %v3850, 1
  %v3881 = vrot.slane %v3594, 1
  %v3882 = vsel %vm1772, %v3880, %v3881
  %v3883 = vrot.slane %v3851, 1
  %v3884 = vrot.slane %v3595, 1
  %v3885 = vsel %vm1772, %v3883, %v3884
  %v3886 = vrot.slane %v3852, 1
  %v3887 = vrot.slane %v3596, 1
  %v3888 = vsel %vm1772, %v3886, %v3887
  %v3889 = vrot.slane %v3853, 1
  %v3890 = vrot.slane %v3597, 1
  %v3891 = vsel %vm1772, %v3889, %v3890
  %v3892 = vrot.slane %v3854, 1
  %v3893 = vrot.slane %v3598, 1
  %v3894 = vsel %vm1772, %v3892, %v3893
  %v3895 = vrot.slane %v3855, 1
  %v3896 = vrot.slane %v3599, 1
  %v3897 = vsel %vm1772, %v3895, %v3896
  %v3898 = vrot.slane %v3856, 1
  %v3899 = vrot.slane %v3600, 1
  %v3900 = vsel %vm1772, %v3898, %v3899
  %v3901 = vrot.slane %v3857, 1
  %v3902 = vrot.slane %v3601, 1
  %v3903 = vsel %vm1772, %v3901, %v3902
  %v3904 = vrot.slane %v3858, 1
  %v3905 = vrot.slane %v3602, 1
  %v3906 = vsel %vm1772, %v3904, %v3905
  %s3923 = scalar_lea.vmem %s4, 384
  %v3924 = vld [vmem:[%s3923] sm:$0xf]
  %v3925 = vld [vmem:[%s3923 + $0x4] sm:$0xf]
  %v3926 = vld [vmem:[%s3923 + $0x8] sm:$0xf]
  %v3927 = vld [vmem:[%s3923 + $0xc] sm:$0xf]
  %v3928 = vld [vmem:[%s3923 + $0x10] sm:$0xf]
  %v3929 = vld [vmem:[%s3923 + $0x14] sm:$0xf]
  %v3930 = vld [vmem:[%s3923 + $0x18] sm:$0xf]
  %v3931 = vld [vmem:[%s3923 + $0x1c] sm:$0xf]
  %v3932 = vld [vmem:[%s3923 + $0x20] sm:$0xf]
  %v3933 = vld [vmem:[%s3923 + $0x24] sm:$0xf]
  %v3934 = vld [vmem:[%s3923 + $0x28] sm:$0xf]
  %v3935 = vld [vmem:[%s3923 + $0x2c] sm:$0xf]
  %v3936 = vld [vmem:[%s3923 + $0x30] sm:$0xf]
  %v3937 = vld [vmem:[%s3923 + $0x34] sm:$0xf]
  %v3938 = vld [vmem:[%s3923 + $0x38] sm:$0xf]
  %v3939 = vld [vmem:[%s3923 + $0x3c] sm:$0xf]
  %v3940 = vld [vmem:[%s3923 + $0x40] sm:$0xf]
  %v3941 = vld [vmem:[%s3923 + $0x44] sm:$0xf]
  %v3942 = vld [vmem:[%s3923 + $0x48] sm:$0xf]
  %v3943 = vld [vmem:[%s3923 + $0x4c] sm:$0xf]
  %v3944 = vld [vmem:[%s3923 + $0x50] sm:$0xf]
  %v3945 = vld [vmem:[%s3923 + $0x54] sm:$0xf]
  %v3946 = vld [vmem:[%s3923 + $0x58] sm:$0xf]
  %v3947 = vld [vmem:[%s3923 + $0x5c] sm:$0xf]
  %v3948 = vld [vmem:[%s3923 + $0x60] sm:$0xf]
  %v3949 = vld [vmem:[%s3923 + $0x64] sm:$0xf]
  %v3950 = vld [vmem:[%s3923 + $0x68] sm:$0xf]
  %v3951 = vld [vmem:[%s3923 + $0x6c] sm:$0xf]
  %v3952 = vld [vmem:[%s3923 + $0x70] sm:$0xf]
  %v3953 = vld [vmem:[%s3923 + $0x74] sm:$0xf]
  %v3954 = vld [vmem:[%s3923 + $0x78] sm:$0xf]
  %v3955 = vld [vmem:[%s3923 + $0x7c] sm:$0xf]
  %v3956 = vld [vmem:[%s3923 + $0x80] sm:$0xf]
  %v3957 = vld [vmem:[%s3923 + $0x84] sm:$0xf]
  %v3958 = vld [vmem:[%s3923 + $0x88] sm:$0xf]
  %v3959 = vld [vmem:[%s3923 + $0x8c] sm:$0xf]
  %v3960 = vld [vmem:[%s3923 + $0x90] sm:$0xf]
  %v3961 = vld [vmem:[%s3923 + $0x94] sm:$0xf]
  %v3962 = vld [vmem:[%s3923 + $0x98] sm:$0xf]
  %v3963 = vld [vmem:[%s3923 + $0x9c] sm:$0xf]
  %v3964 = vld [vmem:[%s3923 + $0xa0] sm:$0xf]
  %v3965 = vld [vmem:[%s3923 + $0xa4] sm:$0xf]
  %v3966 = vld [vmem:[%s3923 + $0xa8] sm:$0xf]
  %v3967 = vld [vmem:[%s3923 + $0xac] sm:$0xf]
  %v3968 = vld [vmem:[%s3923 + $0xb0] sm:$0xf]
  %v3969 = vld [vmem:[%s3923 + $0xb4] sm:$0xf]
  %v3970 = vld [vmem:[%s3923 + $0xb8] sm:$0xf]
  %v3971 = vld [vmem:[%s3923 + $0xbc] sm:$0xf]
  %v4020 = vunpack.c.l.b16 %v3924
  %v4021 = vunpack.c.l.b16 %v3925
  %v4022 = vunpack.c.l.b16 %v3926
  %v4023 = vunpack.c.l.b16 %v3927
  %v4024 = vunpack.c.l.b16 %v3928
  %v4025 = vunpack.c.l.b16 %v3929
  %v4026 = vunpack.c.l.b16 %v3930
  %v4027 = vunpack.c.l.b16 %v3931
  %v4028 = vunpack.c.l.b16 %v3932
  %v4029 = vunpack.c.l.b16 %v3933
  %v4030 = vunpack.c.l.b16 %v3934
  %v4031 = vunpack.c.l.b16 %v3935
  %v4032 = vunpack.c.l.b16 %v3936
  %v4033 = vunpack.c.l.b16 %v3937
  %v4034 = vunpack.c.l.b16 %v3938
  %v4035 = vunpack.c.l.b16 %v3939
  %v4036 = vunpack.c.l.b16 %v3940
  %v4037 = vunpack.c.l.b16 %v3941
  %v4038 = vunpack.c.l.b16 %v3942
  %v4039 = vunpack.c.l.b16 %v3943
  %v4040 = vunpack.c.l.b16 %v3944
  %v4041 = vunpack.c.l.b16 %v3945
  %v4042 = vunpack.c.l.b16 %v3946
  %v4043 = vunpack.c.l.b16 %v3947
  %v4044 = vunpack.c.l.b16 %v3948
  %v4045 = vunpack.c.l.b16 %v3949
  %v4046 = vunpack.c.l.b16 %v3950
  %v4047 = vunpack.c.l.b16 %v3951
  %v4048 = vunpack.c.l.b16 %v3952
  %v4049 = vunpack.c.l.b16 %v3953
  %v4050 = vunpack.c.l.b16 %v3954
  %v4051 = vunpack.c.l.b16 %v3955
  %v4052 = vunpack.c.l.b16 %v3956
  %v4053 = vunpack.c.l.b16 %v3957
  %v4054 = vunpack.c.l.b16 %v3958
  %v4055 = vunpack.c.l.b16 %v3959
  %v4056 = vunpack.c.l.b16 %v3960
  %v4057 = vunpack.c.l.b16 %v3961
  %v4058 = vunpack.c.l.b16 %v3962
  %v4059 = vunpack.c.l.b16 %v3963
  %v4060 = vunpack.c.l.b16 %v3964
  %v4061 = vunpack.c.l.b16 %v3965
  %v4062 = vunpack.c.l.b16 %v3966
  %v4063 = vunpack.c.l.b16 %v3967
  %v4064 = vunpack.c.l.b16 %v3968
  %v4065 = vunpack.c.l.b16 %v3969
  %v4066 = vunpack.c.l.b16 %v3970
  %v4067 = vunpack.c.l.b16 %v3971
  %v4068 = vpack.c.b16 %v4021, %v4020
  %v4069 = vpack.c.b16 %v4023, %v4022
  %v4070 = vpack.c.b16 %v4025, %v4024
  %v4071 = vpack.c.b16 %v4027, %v4026
  %v4072 = vpack.c.b16 %v4029, %v4028
  %v4073 = vpack.c.b16 %v4031, %v4030
  %v4074 = vpack.c.b16 %v4033, %v4032
  %v4075 = vpack.c.b16 %v4035, %v4034
  %v4076 = vpack.c.b16 %v4037, %v4036
  %v4077 = vpack.c.b16 %v4039, %v4038
  %v4078 = vpack.c.b16 %v4041, %v4040
  %v4079 = vpack.c.b16 %v4043, %v4042
  %v4080 = vpack.c.b16 %v4045, %v4044
  %v4081 = vpack.c.b16 %v4047, %v4046
  %v4082 = vpack.c.b16 %v4049, %v4048
  %v4083 = vpack.c.b16 %v4051, %v4050
  %v4084 = vpack.c.b16 %v4053, %v4052
  %v4085 = vpack.c.b16 %v4055, %v4054
  %v4086 = vpack.c.b16 %v4057, %v4056
  %v4087 = vpack.c.b16 %v4059, %v4058
  %v4088 = vpack.c.b16 %v4061, %v4060
  %v4089 = vpack.c.b16 %v4063, %v4062
  %v4090 = vpack.c.b16 %v4065, %v4064
  %v4091 = vpack.c.b16 %v4067, %v4066
  %4116 = vmatprep.subr.bf16.mxu0 0
  %4117 = vmatpush1.bf16.msra.mxu0 %v4068
  %4118 = vmatprep.subr.bf16.mxu0 0
  %4119 = vmatpush1.bf16.msra.mxu0 %v4069
  %4120 = vmatprep.subr.bf16.mxu0 0
  %4121 = vmatpush1.bf16.msra.mxu0 %v4070
  %4122 = vmatprep.subr.bf16.mxu0 0
  %4123 = vmatpush1.bf16.msra.mxu0 %v4071
  %4124 = vmatprep.subr.bf16.mxu0 0
  %4125 = vmatpush1.bf16.msra.mxu0 %v4072
  %4126 = vmatprep.subr.bf16.mxu0 0
  %4127 = vmatpush1.bf16.msra.mxu0 %v4073
  %4128 = vmatprep.subr.bf16.mxu0 0
  %4129 = vmatpush1.bf16.msra.mxu0 %v4074
  %4130 = vmatprep.subr.bf16.mxu0 0
  %4131 = vmatpush1.bf16.msra.mxu0 %v4075
  %4132 = vmatprep.subr.bf16.mxu0 0
  %4133 = vmatpush1.bf16.msra.mxu0 %v4076
  %4134 = vmatprep.subr.bf16.mxu0 0
  %4135 = vmatpush1.bf16.msra.mxu0 %v4077
  %4136 = vmatprep.subr.bf16.mxu0 0
  %4137 = vmatpush1.bf16.msra.mxu0 %v4078
  %4138 = vmatprep.subr.bf16.mxu0 0
  %4139 = vmatpush1.bf16.msra.mxu0 %v4079
  %4140 = vmatprep.subr.bf16.mxu0 0
  %4141 = vmatpush1.bf16.msra.mxu0 %v4080
  %4142 = vmatprep.subr.bf16.mxu0 0
  %4143 = vmatpush1.bf16.msra.mxu0 %v4081
  %4144 = vmatprep.subr.bf16.mxu0 0
  %4145 = vmatpush1.bf16.msra.mxu0 %v4082
  %4146 = vmatprep.subr.bf16.mxu0 0
  %4147 = vmatpush1.bf16.msra.mxu0 %v4083
  %4148 = vmatprep.mubr.bf16.mxu0 %v3614
  %4149 = vmatmul.mubr.bf16.gmra.mrb[0].mxu0 %v3523
  %v4150 = vpop.f32.mrb[0].mxu0
  %v4151 = vadd.f32 0.0, %v4150
  %v4152 = vpop.f32.mrb[0].mxu0
  %v4153 = vpop.f32.mrb[0].mxu0
  %v4154 = vadd.f32 0.0, %v4153
  %v4155 = vpop.f32.mrb[0].mxu0
  %4156 = vmatprep.mubr.bf16.mxu0 %v3626
  %4157 = vmatmul.mubr.bf16.gmra.mrb[0].mxu0 %v3524
  %v4158 = vpop.f32.mrb[0].mxu0
  %v4159 = vadd.f32 0.0, %v4158
  %v4160 = vpop.f32.mrb[0].mxu0
  %v4161 = vpop.f32.mrb[0].mxu0
  %v4162 = vadd.f32 0.0, %v4161
  %v4163 = vpop.f32.mrb[0].mxu0
  %4164 = vmatprep.mubr.bf16.mxu0 %v3638
  %4165 = vmatmul.mubr.bf16.gmra.mrb[0].mxu0 %v3525
  %v4166 = vpop.f32.mrb[0].mxu0
  %v4167 = vadd.f32 0.0, %v4166
  %v4168 = vpop.f32.mrb[0].mxu0
  %v4169 = vpop.f32.mrb[0].mxu0
  %v4170 = vadd.f32 0.0, %v4169
  %v4171 = vpop.f32.mrb[0].mxu0
  %4172 = vmatprep.mubr.bf16.mxu0 %v3650
  %4173 = vmatmul.mubr.bf16.gmra.mrb[0].mxu0 %v3526
  %v4174 = vpop.f32.mrb[0].mxu0
  %v4175 = vadd.f32 0.0, %v4174
  %v4176 = vpop.f32.mrb[0].mxu0
  %v4177 = vpop.f32.mrb[0].mxu0
  %v4178 = vadd.f32 0.0, %v4177
  %v4179 = vpop.f32.mrb[0].mxu0
  %4180 = vmatprep.mubr.bf16.mxu0 %v3662
  %4181 = vmatmul.mubr.bf16.gmra.mrb[0].mxu0 %v3527
  %v4182 = vpop.f32.mrb[0].mxu0
  %v4183 = vadd.f32 0.0, %v4182
  %v4184 = vpop.f32.mrb[0].mxu0
  %v4185 = vpop.f32.mrb[0].mxu0
  %v4186 = vadd.f32 0.0, %v4185
  %v4187 = vpop.f32.mrb[0].mxu0
  %4188 = vmatprep.mubr.bf16.mxu0 %v3674
  %4189 = vmatmul.mubr.bf16.gmra.mrb[0].mxu0 %v3528
  %v4190 = vpop.f32.mrb[0].mxu0
  %v4191 = vadd.f32 0.0, %v4190
  %v4192 = vpop.f32.mrb[0].mxu0
  %v4193 = vpop.f32.mrb[0].mxu0
  %v4194 = vadd.f32 0.0, %v4193
  %v4195 = vpop.f32.mrb[0].mxu0
  %4196 = vmatprep.mubr.bf16.mxu0 %v3686
  %4197 = vmatmul.mubr.bf16.gmra.mrb[0].mxu0 %v3529
  %v4198 = vpop.f32.mrb[0].mxu0
  %v4199 = vadd.f32 0.0, %v4198
  %v4200 = vpop.f32.mrb[0].mxu0
  %v4201 = vpop.f32.mrb[0].mxu0
  %v4202 = vadd.f32 0.0, %v4201
  %v4203 = vpop.f32.mrb[0].mxu0
  %4204 = vmatprep.mubr.bf16.mxu0 %v3698
  %4205 = vmatmul.mubr.bf16.gmra.mrb[0].mxu0 %v3530
  %v4206 = vpop.f32.mrb[0].mxu0
  %v4207 = vadd.f32 0.0, %v4206
  %v4208 = vpop.f32.mrb[0].mxu0
  %v4209 = vpop.f32.mrb[0].mxu0
  %v4210 = vadd.f32 0.0, %v4209
  %v4211 = vpop.f32.mrb[0].mxu0
  %4212 = vmatprep.mubr.bf16.mxu0 %v3710
  %4213 = vmatmul.mubr.bf16.gmra.mrb[0].mxu0 %v3531
  %v4214 = vpop.f32.mrb[0].mxu0
  %v4215 = vadd.f32 0.0, %v4214
  %v4216 = vpop.f32.mrb[0].mxu0
  %v4217 = vpop.f32.mrb[0].mxu0
  %v4218 = vadd.f32 0.0, %v4217
  %v4219 = vpop.f32.mrb[0].mxu0
  %4220 = vmatprep.mubr.bf16.mxu0 %v3722
  %4221 = vmatmul.mubr.bf16.gmra.mrb[0].mxu0 %v3532
  %v4222 = vpop.f32.mrb[0].mxu0
  %v4223 = vadd.f32 0.0, %v4222
  %v4224 = vpop.f32.mrb[0].mxu0
  %v4225 = vpop.f32.mrb[0].mxu0
  %v4226 = vadd.f32 0.0, %v4225
  %v4227 = vpop.f32.mrb[0].mxu0
  %4228 = vmatprep.mubr.bf16.mxu0 %v3734
  %4229 = vmatmul.mubr.bf16.gmra.mrb[0].mxu0 %v3533
  %v4230 = vpop.f32.mrb[0].mxu0
  %v4231 = vadd.f32 0.0, %v4230
  %v4232 = vpop.f32.mrb[0].mxu0
  %v4233 = vpop.f32.mrb[0].mxu0
  %v4234 = vadd.f32 0.0, %v4233
  %v4235 = vpop.f32.mrb[0].mxu0
  %4236 = vmatprep.mubr.bf16.mxu0 %v3746
  %4237 = vmatmul.mubr.bf16.gmra.mrb[0].mxu0 %v3534
  %v4238 = vpop.f32.mrb[0].mxu0
  %v4239 = vadd.f32 0.0, %v4238
  %v4240 = vpop.f32.mrb[0].mxu0
  %v4241 = vpop.f32.mrb[0].mxu0
  %v4242 = vadd.f32 0.0, %v4241
  %v4243 = vpop.f32.mrb[0].mxu0
  %4244 = vmatprep.mubr.bf16.mxu0 %v3758
  %4245 = vmatmul.mubr.bf16.gmra.mrb[0].mxu0 %v3535
  %v4246 = vpop.f32.mrb[0].mxu0
  %v4247 = vadd.f32 0.0, %v4246
  %v4248 = vpop.f32.mrb[0].mxu0
  %v4249 = vpop.f32.mrb[0].mxu0
  %v4250 = vadd.f32 0.0, %v4249
  %v4251 = vpop.f32.mrb[0].mxu0
  %4252 = vmatprep.mubr.bf16.mxu0 %v3770
  %4253 = vmatmul.mubr.bf16.gmra.mrb[0].mxu0 %v3536
  %v4254 = vpop.f32.mrb[0].mxu0
  %v4255 = vadd.f32 0.0, %v4254
  %v4256 = vpop.f32.mrb[0].mxu0
  %v4257 = vpop.f32.mrb[0].mxu0
  %v4258 = vadd.f32 0.0, %v4257
  %v4259 = vpop.f32.mrb[0].mxu0
  %4260 = vmatprep.mubr.bf16.mxu0 %v3782
  %4261 = vmatmul.mubr.bf16.gmra.mrb[0].mxu0 %v3537
  %v4262 = vpop.f32.mrb[0].mxu0
  %v4263 = vadd.f32 0.0, %v4262
  %v4264 = vpop.f32.mrb[0].mxu0
  %v4265 = vpop.f32.mrb[0].mxu0
  %v4266 = vadd.f32 0.0, %v4265
  %v4267 = vpop.f32.mrb[0].mxu0
  %4268 = vmatprep.mubr.bf16.mxu0 %v3794
  %4269 = vmatmul.mubr.bf16.gmra.mrb[0].mxu0 %v3538
  %v4270 = vpop.f32.mrb[0].mxu0
  %v4271 = vadd.f32 0.0, %v4270
  %v4272 = vpop.f32.mrb[0].mxu0
  %v4273 = vpop.f32.mrb[0].mxu0
  %v4274 = vadd.f32 0.0, %v4273
  %v4275 = vpop.f32.mrb[0].mxu0
  %4276 = vdwg.mxu0
  %4277 = vmatprep.subr.bf16.mxu0 0
  %4278 = vmatpush1.bf16.msra.mxu0 %v4084
  %4279 = vmatprep.subr.bf16.mxu0 0
  %4280 = vmatpush1.bf16.msra.mxu0 %v4085
  %4281 = vmatprep.subr.bf16.mxu0 0
  %4282 = vmatpush1.bf16.msra.mxu0 %v4086
  %4283 = vmatprep.subr.bf16.mxu0 0
  %4284 = vmatpush1.bf16.msra.mxu0 %v4087
  %4285 = vmatprep.subr.bf16.mxu0 0
  %4286 = vmatpush1.bf16.msra.mxu0 %v4088
  %4287 = vmatprep.subr.bf16.mxu0 0
  %4288 = vmatpush1.bf16.msra.mxu0 %v4089
  %4289 = vmatprep.subr.bf16.mxu0 0
  %4290 = vmatpush1.bf16.msra.mxu0 %v4090
  %4291 = vmatprep.subr.bf16.mxu0 0
  %4292 = vmatpush1.bf16.msra.mxu0 %v4091
  %4293 = vmatprep.subr.bf16.mxu0 0
  %4294 = vmatpush1.bf16.msra.mxu0 0
  %4295 = vmatprep.subr.bf16.mxu0 0
  %4296 = vmatpush1.bf16.msra.mxu0 0
  %4297 = vmatprep.subr.bf16.mxu0 0
  %4298 = vmatpush1.bf16.msra.mxu0 0
  %4299 = vmatprep.subr.bf16.mxu0 0
  %4300 = vmatpush1.bf16.msra.mxu0 0
  %4301 = vmatprep.subr.bf16.mxu0 0
  %4302 = vmatpush1.bf16.msra.mxu0 0
  %4303 = vmatprep.subr.bf16.mxu0 0
  %4304 = vmatpush1.bf16.msra.mxu0 0
  %4305 = vmatprep.subr.bf16.mxu0 0
  %4306 = vmatpush1.bf16.msra.mxu0 0
  %4307 = vmatprep.subr.bf16.mxu0 0
  %4308 = vmatpush1.bf16.msra.mxu0 0
  %4309 = vmatprep.mubr.bf16.mxu0 0
  %4310 = vmatmul.mubr.bf16.gmra.mrb[0].mxu0 %v3861
  %v4311 = vpop.f32.mrb[0].mxu0
  %v4312 = vadd.f32 %v4151, %v4311
  %v4313 = vpop.f32.mrb[0].mxu0
  %v4314 = vpop.f32.mrb[0].mxu0
  %v4315 = vadd.f32 %v4154, %v4314
  %v4316 = vpop.f32.mrb[0].mxu0
  %4317 = vmatprep.mubr.bf16.mxu0 0
  %4318 = vmatmul.mubr.bf16.gmra.mrb[0].mxu0 %v3864
  %v4319 = vpop.f32.mrb[0].mxu0
  %v4320 = vadd.f32 %v4159, %v4319
  %v4321 = vpop.f32.mrb[0].mxu0
  %v4322 = vpop.f32.mrb[0].mxu0
  %v4323 = vadd.f32 %v4162, %v4322
  %v4324 = vpop.f32.mrb[0].mxu0
  %4325 = vmatprep.mubr.bf16.mxu0 0
  %4326 = vmatmul.mubr.bf16.gmra.mrb[0].mxu0 %v3867
  %v4327 = vpop.f32.mrb[0].mxu0
  %v4328 = vadd.f32 %v4167, %v4327
  %v4329 = vpop.f32.mrb[0].mxu0
  %v4330 = vpop.f32.mrb[0].mxu0
  %v4331 = vadd.f32 %v4170, %v4330
  %v4332 = vpop.f32.mrb[0].mxu0
  %4333 = vmatprep.mubr.bf16.mxu0 0
  %4334 = vmatmul.mubr.bf16.gmra.mrb[0].mxu0 %v3870
  %v4335 = vpop.f32.mrb[0].mxu0
  %v4336 = vadd.f32 %v4175, %v4335
  %v4337 = vpop.f32.mrb[0].mxu0
  %v4338 = vpop.f32.mrb[0].mxu0
  %v4339 = vadd.f32 %v4178, %v4338
  %v4340 = vpop.f32.mrb[0].mxu0
  %4341 = vmatprep.mubr.bf16.mxu0 0
  %4342 = vmatmul.mubr.bf16.gmra.mrb[0].mxu0 %v3873
  %v4343 = vpop.f32.mrb[0].mxu0
  %v4344 = vadd.f32 %v4183, %v4343
  %v4345 = vpop.f32.mrb[0].mxu0
  %v4346 = vpop.f32.mrb[0].mxu0
  %v4347 = vadd.f32 %v4186, %v4346
  %v4348 = vpop.f32.mrb[0].mxu0
  %4349 = vmatprep.mubr.bf16.mxu0 0
  %4350 = vmatmul.mubr.bf16.gmra.mrb[0].mxu0 %v3876
  %v4351 = vpop.f32.mrb[0].mxu0
  %v4352 = vadd.f32 %v4191, %v4351
  %v4353 = vpop.f32.mrb[0].mxu0
  %v4354 = vpop.f32.mrb[0].mxu0
  %v4355 = vadd.f32 %v4194, %v4354
  %v4356 = vpop.f32.mrb[0].mxu0
  %4357 = vmatprep.mubr.bf16.mxu0 0
  %4358 = vmatmul.mubr.bf16.gmra.mrb[0].mxu0 %v3879
  %v4359 = vpop.f32.mrb[0].mxu0
  %v4360 = vadd.f32 %v4199, %v4359
  %v4361 = vpop.f32.mrb[0].mxu0
  %v4362 = vpop.f32.mrb[0].mxu0
  %v4363 = vadd.f32 %v4202, %v4362
  %v4364 = vpop.f32.mrb[0].mxu0
  %4365 = vmatprep.mubr.bf16.mxu0 0
  %4366 = vmatmul.mubr.bf16.gmra.mrb[0].mxu0 %v3882
  %v4367 = vpop.f32.mrb[0].mxu0
  %v4368 = vadd.f32 %v4207, %v4367
  %v4369 = vpop.f32.mrb[0].mxu0
  %v4370 = vpop.f32.mrb[0].mxu0
  %v4371 = vadd.f32 %v4210, %v4370
  %v4372 = vpop.f32.mrb[0].mxu0
  %4373 = vmatprep.mubr.bf16.mxu0 0
  %4374 = vmatmul.mubr.bf16.gmra.mrb[0].mxu0 %v3885
  %v4375 = vpop.f32.mrb[0].mxu0
  %v4376 = vadd.f32 %v4215, %v4375
  %v4377 = vpop.f32.mrb[0].mxu0
  %v4378 = vpop.f32.mrb[0].mxu0
  %v4379 = vadd.f32 %v4218, %v4378
  %v4380 = vpop.f32.mrb[0].mxu0
  %4381 = vmatprep.mubr.bf16.mxu0 0
  %4382 = vmatmul.mubr.bf16.gmra.mrb[0].mxu0 %v3888
  %v4383 = vpop.f32.mrb[0].mxu0
  %v4384 = vadd.f32 %v4223, %v4383
  %v4385 = vpop.f32.mrb[0].mxu0
  %v4386 = vpop.f32.mrb[0].mxu0
  %v4387 = vadd.f32 %v4226, %v4386
  %v4388 = vpop.f32.mrb[0].mxu0
  %4389 = vmatprep.mubr.bf16.mxu0 0
  %4390 = vmatmul.mubr.bf16.gmra.mrb[0].mxu0 %v3891
  %v4391 = vpop.f32.mrb[0].mxu0
  %v4392 = vadd.f32 %v4231, %v4391
  %v4393 = vpop.f32.mrb[0].mxu0
  %v4394 = vpop.f32.mrb[0].mxu0
  %v4395 = vadd.f32 %v4234, %v4394
  %v4396 = vpop.f32.mrb[0].mxu0
  %4397 = vmatprep.mubr.bf16.mxu0 0
  %4398 = vmatmul.mubr.bf16.gmra.mrb[0].mxu0 %v3894
  %v4399 = vpop.f32.mrb[0].mxu0
  %v4400 = vadd.f32 %v4239, %v4399
  %v4401 = vpop.f32.mrb[0].mxu0
  %v4402 = vpop.f32.mrb[0].mxu0
  %v4403 = vadd.f32 %v4242, %v4402
  %v4404 = vpop.f32.mrb[0].mxu0
  %4405 = vmatprep.mubr.bf16.mxu0 0
  %4406 = vmatmul.mubr.bf16.gmra.mrb[0].mxu0 %v3897
  %v4407 = vpop.f32.mrb[0].mxu0
  %v4408 = vadd.f32 %v4247, %v4407
  %v4409 = vpop.f32.mrb[0].mxu0
  %v4410 = vpop.f32.mrb[0].mxu0
  %v4411 = vadd.f32 %v4250, %v4410
  %v4412 = vpop.f32.mrb[0].mxu0
  %4413 = vmatprep.mubr.bf16.mxu0 0
  %4414 = vmatmul.mubr.bf16.gmra.mrb[0].mxu0 %v3900
  %v4415 = vpop.f32.mrb[0].mxu0
  %v4416 = vadd.f32 %v4255, %v4415
  %v4417 = vpop.f32.mrb[0].mxu0
  %v4418 = vpop.f32.mrb[0].mxu0
  %v4419 = vadd.f32 %v4258, %v4418
  %v4420 = vpop.f32.mrb[0].mxu0
  %4421 = vmatprep.mubr.bf16.mxu0 0
  %4422 = vmatmul.mubr.bf16.gmra.mrb[0].mxu0 %v3903
  %v4423 = vpop.f32.mrb[0].mxu0
  %v4424 = vadd.f32 %v4263, %v4423
  %v4425 = vpop.f32.mrb[0].mxu0
  %v4426 = vpop.f32.mrb[0].mxu0
  %v4427 = vadd.f32 %v4266, %v4426
  %v4428 = vpop.f32.mrb[0].mxu0
  %4429 = vmatprep.mubr.bf16.mxu0 0
  %4430 = vmatmul.mubr.bf16.gmra.mrb[0].mxu0 %v3906
  %v4431 = vpop.f32.mrb[0].mxu0
  %v4432 = vadd.f32 %v4271, %v4431
  %v4433 = vpop.f32.mrb[0].mxu0
  %v4434 = vpop.f32.mrb[0].mxu0
  %v4435 = vadd.f32 %v4274, %v4434
  %v4436 = vpop.f32.mrb[0].mxu0
  %4437 = vdwg.mxu0
  %v4438 = vadd.f32 %v3268, %v4312
  %v4439 = vadd.f32 %v3271, %v4315
  %v4440 = vadd.f32 %v3276, %v4320
  %v4441 = vadd.f32 %v3279, %v4323
  %v4442 = vadd.f32 %v3284, %v4328
  %v4443 = vadd.f32 %v3287, %v4331
  %v4444 = vadd.f32 %v3292, %v4336
  %v4445 = vadd.f32 %v3295, %v4339
  %v4446 = vadd.f32 %v3300, %v4344
  %v4447 = vadd.f32 %v3303, %v4347
  %v4448 = vadd.f32 %v3308, %v4352
  %v4449 = vadd.f32 %v3311, %v4355
  %v4450 = vadd.f32 %v3316, %v4360
  %v4451 = vadd.f32 %v3319, %v4363
  %v4452 = vadd.f32 %v3324, %v4368
  %v4453 = vadd.f32 %v3327, %v4371
  %v4454 = vadd.f32 %v3332, %v4376
  %v4455 = vadd.f32 %v3335, %v4379
  %v4456 = vadd.f32 %v3340, %v4384
  %v4457 = vadd.f32 %v3343, %v4387
  %v4458 = vadd.f32 %v3348, %v4392
  %v4459 = vadd.f32 %v3351, %v4395
  %v4460 = vadd.f32 %v3356, %v4400
  %v4461 = vadd.f32 %v3359, %v4403
  %v4462 = vadd.f32 %v3364, %v4408
  %v4463 = vadd.f32 %v3367, %v4411
  %v4464 = vadd.f32 %v3372, %v4416
  %v4465 = vadd.f32 %v3375, %v4419
  %v4466 = vadd.f32 %v3380, %v4424
  %v4467 = vadd.f32 %v3383, %v4427
  %v4468 = vadd.f32 %v3388, %v4432
  %v4469 = vadd.f32 %v3391, %v4435
  %v4470 = vld [vmem:[%s5] sm:$0x1]
  %v4472 = vlaneseq
  %v4473 = vshrl.u32 %v4472, 7
  %v4474 = vsub.s32 0, %v4473
  %v4475 = vrot.slane %v4470, %v4474
  %v4477 = vadd.f32 %v4438, %v4475
  %v4478 = vadd.f32 %v4439, %v4475
  %v4479 = vadd.f32 %v4440, %v4475
  %v4480 = vadd.f32 %v4441, %v4475
  %v4481 = vadd.f32 %v4442, %v4475
  %v4482 = vadd.f32 %v4443, %v4475
  %v4483 = vadd.f32 %v4444, %v4475
  %v4484 = vadd.f32 %v4445, %v4475
  %v4485 = vadd.f32 %v4446, %v4475
  %v4486 = vadd.f32 %v4447, %v4475
  %v4487 = vadd.f32 %v4448, %v4475
  %v4488 = vadd.f32 %v4449, %v4475
  %v4489 = vadd.f32 %v4450, %v4475
  %v4490 = vadd.f32 %v4451, %v4475
  %v4491 = vadd.f32 %v4452, %v4475
  %v4492 = vadd.f32 %v4453, %v4475
  %v4493 = vadd.f32 %v4454, %v4475
  %v4494 = vadd.f32 %v4455, %v4475
  %v4495 = vadd.f32 %v4456, %v4475
  %v4496 = vadd.f32 %v4457, %v4475
  %v4497 = vadd.f32 %v4458, %v4475
  %v4498 = vadd.f32 %v4459, %v4475
  %v4499 = vadd.f32 %v4460, %v4475
  %v4500 = vadd.f32 %v4461, %v4475
  %v4501 = vadd.f32 %v4462, %v4475
  %v4502 = vadd.f32 %v4463, %v4475
  %v4503 = vadd.f32 %v4464, %v4475
  %v4504 = vadd.f32 %v4465, %v4475
  %v4505 = vadd.f32 %v4466, %v4475
  %v4506 = vadd.f32 %v4467, %v4475
  %v4507 = vadd.f32 %v4468, %v4475
  %v4508 = vadd.f32 %v4469, %v4475
  %v4509 = vxor.u32 %v4477, 2147483648
  %v4510 = vxor.u32 %v4478, 2147483648
  %v4511 = vxor.u32 %v4479, 2147483648
  %v4512 = vxor.u32 %v4480, 2147483648
  %v4513 = vxor.u32 %v4481, 2147483648
  %v4514 = vxor.u32 %v4482, 2147483648
  %v4515 = vxor.u32 %v4483, 2147483648
  %v4516 = vxor.u32 %v4484, 2147483648
  %v4517 = vxor.u32 %v4485, 2147483648
  %v4518 = vxor.u32 %v4486, 2147483648
  %v4519 = vxor.u32 %v4487, 2147483648
  %v4520 = vxor.u32 %v4488, 2147483648
  %v4521 = vxor.u32 %v4489, 2147483648
  %v4522 = vxor.u32 %v4490, 2147483648
  %v4523 = vxor.u32 %v4491, 2147483648
  %v4524 = vxor.u32 %v4492, 2147483648
  %v4525 = vxor.u32 %v4493, 2147483648
  %v4526 = vxor.u32 %v4494, 2147483648
  %v4527 = vxor.u32 %v4495, 2147483648
  %v4528 = vxor.u32 %v4496, 2147483648
  %v4529 = vxor.u32 %v4497, 2147483648
  %v4530 = vxor.u32 %v4498, 2147483648
  %v4531 = vxor.u32 %v4499, 2147483648
  %v4532 = vxor.u32 %v4500, 2147483648
  %v4533 = vxor.u32 %v4501, 2147483648
  %v4534 = vxor.u32 %v4502, 2147483648
  %v4535 = vxor.u32 %v4503, 2147483648
  %v4536 = vxor.u32 %v4504, 2147483648
  %v4537 = vxor.u32 %v4505, 2147483648
  %v4538 = vxor.u32 %v4506, 2147483648
  %v4539 = vxor.u32 %v4507, 2147483648
  %v4540 = vxor.u32 %v4508, 2147483648
  %v4541 = vmul.f32 %v4509, 1.442695
  %v4542 = vpow.pop %v4541
  %v4543 = vmul.f32 %v4510, 1.442695
  %v4544 = vpow.pop %v4543
  %v4545 = vmul.f32 %v4511, 1.442695
  %v4546 = vpow.pop %v4545
  %v4547 = vmul.f32 %v4512, 1.442695
  %v4548 = vpow.pop %v4547
  %v4549 = vmul.f32 %v4513, 1.442695
  %v4550 = vpow.pop %v4549
  %v4551 = vmul.f32 %v4514, 1.442695
  %v4552 = vpow.pop %v4551
  %v4553 = vmul.f32 %v4515, 1.442695
  %v4554 = vpow.pop %v4553
  %v4555 = vmul.f32 %v4516, 1.442695
  %v4556 = vpow.pop %v4555
  %v4557 = vmul.f32 %v4517, 1.442695
  %v4558 = vpow.pop %v4557
  %v4559 = vmul.f32 %v4518, 1.442695
  %v4560 = vpow.pop %v4559
  %v4561 = vmul.f32 %v4519, 1.442695
  %v4562 = vpow.pop %v4561
  %v4563 = vmul.f32 %v4520, 1.442695
  %v4564 = vpow.pop %v4563
  %v4565 = vmul.f32 %v4521, 1.442695
  %v4566 = vpow.pop %v4565
  %v4567 = vmul.f32 %v4522, 1.442695
  %v4568 = vpow.pop %v4567
  %v4569 = vmul.f32 %v4523, 1.442695
  %v4570 = vpow.pop %v4569
  %v4571 = vmul.f32 %v4524, 1.442695
  %v4572 = vpow.pop %v4571
  %v4573 = vmul.f32 %v4525, 1.442695
  %v4574 = vpow.pop %v4573
  %v4575 = vmul.f32 %v4526, 1.442695
  %v4576 = vpow.pop %v4575
  %v4577 = vmul.f32 %v4527, 1.442695
  %v4578 = vpow.pop %v4577
  %v4579 = vmul.f32 %v4528, 1.442695
  %v4580 = vpow.pop %v4579
  %v4581 = vmul.f32 %v4529, 1.442695
  %v4582 = vpow.pop %v4581
  %v4583 = vmul.f32 %v4530, 1.442695
  %v4584 = vpow.pop %v4583
  %v4585 = vmul.f32 %v4531, 1.442695
  %v4586 = vpow.pop %v4585
  %v4587 = vmul.f32 %v4532, 1.442695
  %v4588 = vpow.pop %v4587
  %v4589 = vmul.f32 %v4533, 1.442695
  %v4590 = vpow.pop %v4589
  %v4591 = vmul.f32 %v4534, 1.442695
  %v4592 = vpow.pop %v4591
  %v4593 = vmul.f32 %v4535, 1.442695
  %v4594 = vpow.pop %v4593
  %v4595 = vmul.f32 %v4536, 1.442695
  %v4596 = vpow.pop %v4595
  %v4597 = vmul.f32 %v4537, 1.442695
  %v4598 = vpow.pop %v4597
  %v4599 = vmul.f32 %v4538, 1.442695
  %v4600 = vpow.pop %v4599
  %v4601 = vmul.f32 %v4539, 1.442695
  %v4602 = vpow.pop %v4601
  %v4603 = vmul.f32 %v4540, 1.442695
  %v4604 = vpow.pop %v4603
  %v4605 = vadd.f32 %v4542, 1.0
  %v4606 = vadd.f32 %v4544, 1.0
  %v4607 = vadd.f32 %v4546, 1.0
  %v4608 = vadd.f32 %v4548, 1.0
  %v4609 = vadd.f32 %v4550, 1.0
  %v4610 = vadd.f32 %v4552, 1.0
  %v4611 = vadd.f32 %v4554, 1.0
  %v4612 = vadd.f32 %v4556, 1.0
  %v4613 = vadd.f32 %v4558, 1.0
  %v4614 = vadd.f32 %v4560, 1.0
  %v4615 = vadd.f32 %v4562, 1.0
  %v4616 = vadd.f32 %v4564, 1.0
  %v4617 = vadd.f32 %v4566, 1.0
  %v4618 = vadd.f32 %v4568, 1.0
  %v4619 = vadd.f32 %v4570, 1.0
  %v4620 = vadd.f32 %v4572, 1.0
  %v4621 = vadd.f32 %v4574, 1.0
  %v4622 = vadd.f32 %v4576, 1.0
  %v4623 = vadd.f32 %v4578, 1.0
  %v4624 = vadd.f32 %v4580, 1.0
  %v4625 = vadd.f32 %v4582, 1.0
  %v4626 = vadd.f32 %v4584, 1.0
  %v4627 = vadd.f32 %v4586, 1.0
  %v4628 = vadd.f32 %v4588, 1.0
  %v4629 = vadd.f32 %v4590, 1.0
  %v4630 = vadd.f32 %v4592, 1.0
  %v4631 = vadd.f32 %v4594, 1.0
  %v4632 = vadd.f32 %v4596, 1.0
  %v4633 = vadd.f32 %v4598, 1.0
  %v4634 = vadd.f32 %v4600, 1.0
  %v4635 = vadd.f32 %v4602, 1.0
  %v4636 = vadd.f32 %v4604, 1.0
  %v4637 = vrcp.pop %v4605
  %v4638 = vmul.f32 1.0, %v4637
  %v4639 = vrcp.pop %v4606
  %v4640 = vmul.f32 1.0, %v4639
  %v4641 = vrcp.pop %v4607
  %v4642 = vmul.f32 1.0, %v4641
  %v4643 = vrcp.pop %v4608
  %v4644 = vmul.f32 1.0, %v4643
  %v4645 = vrcp.pop %v4609
  %v4646 = vmul.f32 1.0, %v4645
  %v4647 = vrcp.pop %v4610
  %v4648 = vmul.f32 1.0, %v4647
  %v4649 = vrcp.pop %v4611
  %v4650 = vmul.f32 1.0, %v4649
  %v4651 = vrcp.pop %v4612
  %v4652 = vmul.f32 1.0, %v4651
  %v4653 = vrcp.pop %v4613
  %v4654 = vmul.f32 1.0, %v4653
  %v4655 = vrcp.pop %v4614
  %v4656 = vmul.f32 1.0, %v4655
  %v4657 = vrcp.pop %v4615
  %v4658 = vmul.f32 1.0, %v4657
  %v4659 = vrcp.pop %v4616
  %v4660 = vmul.f32 1.0, %v4659
  %v4661 = vrcp.pop %v4617
  %v4662 = vmul.f32 1.0, %v4661
  %v4663 = vrcp.pop %v4618
  %v4664 = vmul.f32 1.0, %v4663
  %v4665 = vrcp.pop %v4619
  %v4666 = vmul.f32 1.0, %v4665
  %v4667 = vrcp.pop %v4620
  %v4668 = vmul.f32 1.0, %v4667
  %v4669 = vrcp.pop %v4621
  %v4670 = vmul.f32 1.0, %v4669
  %v4671 = vrcp.pop %v4622
  %v4672 = vmul.f32 1.0, %v4671
  %v4673 = vrcp.pop %v4623
  %v4674 = vmul.f32 1.0, %v4673
  %v4675 = vrcp.pop %v4624
  %v4676 = vmul.f32 1.0, %v4675
  %v4677 = vrcp.pop %v4625
  %v4678 = vmul.f32 1.0, %v4677
  %v4679 = vrcp.pop %v4626
  %v4680 = vmul.f32 1.0, %v4679
  %v4681 = vrcp.pop %v4627
  %v4682 = vmul.f32 1.0, %v4681
  %v4683 = vrcp.pop %v4628
  %v4684 = vmul.f32 1.0, %v4683
  %v4685 = vrcp.pop %v4629
  %v4686 = vmul.f32 1.0, %v4685
  %v4687 = vrcp.pop %v4630
  %v4688 = vmul.f32 1.0, %v4687
  %v4689 = vrcp.pop %v4631
  %v4690 = vmul.f32 1.0, %v4689
  %v4691 = vrcp.pop %v4632
  %v4692 = vmul.f32 1.0, %v4691
  %v4693 = vrcp.pop %v4633
  %v4694 = vmul.f32 1.0, %v4693
  %v4695 = vrcp.pop %v4634
  %v4696 = vmul.f32 1.0, %v4695
  %v4697 = vrcp.pop %v4635
  %v4698 = vmul.f32 1.0, %v4697
  %v4699 = vrcp.pop %v4636
  %v4700 = vmul.f32 1.0, %v4699
  %v4701 = vmul.f32 %v4477, %v4638
  %v4702 = vmul.f32 %v4478, %v4640
  %v4703 = vmul.f32 %v4479, %v4642
  %v4704 = vmul.f32 %v4480, %v4644
  %v4705 = vmul.f32 %v4481, %v4646
  %v4706 = vmul.f32 %v4482, %v4648
  %v4707 = vmul.f32 %v4483, %v4650
  %v4708 = vmul.f32 %v4484, %v4652
  %v4709 = vmul.f32 %v4485, %v4654
  %v4710 = vmul.f32 %v4486, %v4656
  %v4711 = vmul.f32 %v4487, %v4658
  %v4712 = vmul.f32 %v4488, %v4660
  %v4713 = vmul.f32 %v4489, %v4662
  %v4714 = vmul.f32 %v4490, %v4664
  %v4715 = vmul.f32 %v4491, %v4666
  %v4716 = vmul.f32 %v4492, %v4668
  %v4717 = vmul.f32 %v4493, %v4670
  %v4718 = vmul.f32 %v4494, %v4672
  %v4719 = vmul.f32 %v4495, %v4674
  %v4720 = vmul.f32 %v4496, %v4676
  %v4721 = vmul.f32 %v4497, %v4678
  %v4722 = vmul.f32 %v4498, %v4680
  %v4723 = vmul.f32 %v4499, %v4682
  %v4724 = vmul.f32 %v4500, %v4684
  %v4725 = vmul.f32 %v4501, %v4686
  %v4726 = vmul.f32 %v4502, %v4688
  %v4727 = vmul.f32 %v4503, %v4690
  %v4728 = vmul.f32 %v4504, %v4692
  %v4729 = vmul.f32 %v4505, %v4694
  %v4730 = vmul.f32 %v4506, %v4696
  %v4731 = vmul.f32 %v4507, %v4698
  %v4732 = vmul.f32 %v4508, %v4700
  %v4733 = vpack.c.bf16 %v4702, %v4701
  %v4734 = vpack.c.bf16 %v4704, %v4703
  %v4735 = vpack.c.bf16 %v4706, %v4705
  %v4736 = vpack.c.bf16 %v4708, %v4707
  %v4737 = vpack.c.bf16 %v4710, %v4709
  %v4738 = vpack.c.bf16 %v4712, %v4711
  %v4739 = vpack.c.bf16 %v4714, %v4713
  %v4740 = vpack.c.bf16 %v4716, %v4715
  %v4741 = vpack.c.bf16 %v4718, %v4717
  %v4742 = vpack.c.bf16 %v4720, %v4719
  %v4743 = vpack.c.bf16 %v4722, %v4721
  %v4744 = vpack.c.bf16 %v4724, %v4723
  %v4745 = vpack.c.bf16 %v4726, %v4725
  %v4746 = vpack.c.bf16 %v4728, %v4727
  %v4747 = vpack.c.bf16 %v4730, %v4729
  %v4748 = vpack.c.bf16 %v4732, %v4731
  %v4765 = vunpack.c.l.b16 %v4733
  %v4766 = vunpack.c.h.b16 %v4733
  %v4767 = vunpack.c.l.b16 %v4734
  %v4768 = vunpack.c.h.b16 %v4734
  %v4769 = vunpack.c.l.b16 %v4735
  %v4770 = vunpack.c.h.b16 %v4735
  %v4771 = vunpack.c.l.b16 %v4736
  %v4772 = vunpack.c.h.b16 %v4736
  %v4773 = vunpack.c.l.b16 %v4737
  %v4774 = vunpack.c.h.b16 %v4737
  %v4775 = vunpack.c.l.b16 %v4738
  %v4776 = vunpack.c.h.b16 %v4738
  %v4777 = vunpack.c.l.b16 %v4739
  %v4778 = vunpack.c.h.b16 %v4739
  %v4779 = vunpack.c.l.b16 %v4740
  %v4780 = vunpack.c.h.b16 %v4740
  %v4781 = vunpack.c.l.b16 %v4741
  %v4782 = vunpack.c.h.b16 %v4741
  %v4783 = vunpack.c.l.b16 %v4742
  %v4784 = vunpack.c.h.b16 %v4742
  %v4785 = vunpack.c.l.b16 %v4743
  %v4786 = vunpack.c.h.b16 %v4743
  %v4787 = vunpack.c.l.b16 %v4744
  %v4788 = vunpack.c.h.b16 %v4744
  %v4789 = vunpack.c.l.b16 %v4745
  %v4790 = vunpack.c.h.b16 %v4745
  %v4791 = vunpack.c.l.b16 %v4746
  %v4792 = vunpack.c.h.b16 %v4746
  %v4793 = vunpack.c.l.b16 %v4747
  %v4794 = vunpack.c.h.b16 %v4747
  %v4795 = vunpack.c.l.b16 %v4748
  %v4796 = vunpack.c.h.b16 %v4748
  %v4797 = vpack.c.b16 %v4765, %v4765
  %v4798 = vpack.c.b16 %v4766, %v4766
  %v4799 = vpack.c.b16 %v4767, %v4767
  %v4800 = vpack.c.b16 %v4768, %v4768
  %v4801 = vpack.c.b16 %v4769, %v4769
  %v4802 = vpack.c.b16 %v4770, %v4770
  %v4803 = vpack.c.b16 %v4771, %v4771
  %v4804 = vpack.c.b16 %v4772, %v4772
  %v4805 = vpack.c.b16 %v4773, %v4773
  %v4806 = vpack.c.b16 %v4774, %v4774
  %v4807 = vpack.c.b16 %v4775, %v4775
  %v4808 = vpack.c.b16 %v4776, %v4776
  %v4809 = vpack.c.b16 %v4777, %v4777
  %v4810 = vpack.c.b16 %v4778, %v4778
  %v4811 = vpack.c.b16 %v4779, %v4779
  %v4812 = vpack.c.b16 %v4780, %v4780
  %v4813 = vpack.c.b16 %v4781, %v4781
  %v4814 = vpack.c.b16 %v4782, %v4782
  %v4815 = vpack.c.b16 %v4783, %v4783
  %v4816 = vpack.c.b16 %v4784, %v4784
  %v4817 = vpack.c.b16 %v4785, %v4785
  %v4818 = vpack.c.b16 %v4786, %v4786
  %v4819 = vpack.c.b16 %v4787, %v4787
  %v4820 = vpack.c.b16 %v4788, %v4788
  %v4821 = vpack.c.b16 %v4789, %v4789
  %v4822 = vpack.c.b16 %v4790, %v4790
  %v4823 = vpack.c.b16 %v4791, %v4791
  %v4824 = vpack.c.b16 %v4792, %v4792
  %v4825 = vpack.c.b16 %v4793, %v4793
  %v4826 = vpack.c.b16 %v4794, %v4794
  %v4827 = vpack.c.b16 %v4795, %v4795
  %v4828 = vpack.c.b16 %v4796, %v4796
  %v4830 = vshrl.u32 %v4797, 16
  %v4832 = vrot.slane %v4830, 7
  %v4833 = vshll.u32 %v4797, 16
  %v4835 = vor.u32 %v4832, %v4833
  %v4836 = vrot.slane %v4832, 4
  %v4838 = vshrl.u32 %v4798, 16
  %v4840 = vrot.slane %v4838, 7
  %v4841 = vshll.u32 %v4798, 16
  %v4843 = vor.u32 %v4840, %v4841
  %v4844 = vsel %vm872, %v4836, %v4843
  %v4845 = vrot.slane %v4840, 4
  %v4847 = vshrl.u32 %v4799, 16
  %v4849 = vrot.slane %v4847, 7
  %v4850 = vshll.u32 %v4799, 16
  %v4852 = vor.u32 %v4849, %v4850
  %v4853 = vrot.slane %v4849, 4
  %v4855 = vshrl.u32 %v4800, 16
  %v4857 = vrot.slane %v4855, 7
  %v4858 = vshll.u32 %v4800, 16
  %v4860 = vor.u32 %v4857, %v4858
  %v4861 = vsel %vm872, %v4853, %v4860
  %v4862 = vrot.slane %v4857, 4
  %v4864 = vshrl.u32 %v4801, 16
  %v4866 = vrot.slane %v4864, 7
  %v4867 = vshll.u32 %v4801, 16
  %v4869 = vor.u32 %v4866, %v4867
  %v4870 = vrot.slane %v4866, 4
  %v4872 = vshrl.u32 %v4802, 16
  %v4874 = vrot.slane %v4872, 7
  %v4875 = vshll.u32 %v4802, 16
  %v4877 = vor.u32 %v4874, %v4875
  %v4878 = vsel %vm872, %v4870, %v4877
  %v4879 = vrot.slane %v4874, 4
  %v4881 = vshrl.u32 %v4803, 16
  %v4883 = vrot.slane %v4881, 7
  %v4884 = vshll.u32 %v4803, 16
  %v4886 = vor.u32 %v4883, %v4884
  %v4887 = vrot.slane %v4883, 4
  %v4889 = vshrl.u32 %v4804, 16
  %v4891 = vrot.slane %v4889, 7
  %v4892 = vshll.u32 %v4804, 16
  %v4894 = vor.u32 %v4891, %v4892
  %v4895 = vsel %vm872, %v4887, %v4894
  %v4896 = vrot.slane %v4891, 4
  %v4898 = vshrl.u32 %v4805, 16
  %v4900 = vrot.slane %v4898, 7
  %v4901 = vshll.u32 %v4805, 16
  %v4903 = vor.u32 %v4900, %v4901
  %v4904 = vrot.slane %v4900, 4
  %v4906 = vshrl.u32 %v4806, 16
  %v4908 = vrot.slane %v4906, 7
  %v4909 = vshll.u32 %v4806, 16
  %v4911 = vor.u32 %v4908, %v4909
  %v4912 = vsel %vm872, %v4904, %v4911
  %v4913 = vrot.slane %v4908, 4
  %v4915 = vshrl.u32 %v4807, 16
  %v4917 = vrot.slane %v4915, 7
  %v4918 = vshll.u32 %v4807, 16
  %v4920 = vor.u32 %v4917, %v4918
  %v4921 = vrot.slane %v4917, 4
  %v4923 = vshrl.u32 %v4808, 16
  %v4925 = vrot.slane %v4923, 7
  %v4926 = vshll.u32 %v4808, 16
  %v4928 = vor.u32 %v4925, %v4926
  %v4929 = vsel %vm872, %v4921, %v4928
  %v4930 = vrot.slane %v4925, 4
  %v4932 = vshrl.u32 %v4809, 16
  %v4934 = vrot.slane %v4932, 7
  %v4935 = vshll.u32 %v4809, 16
  %v4937 = vor.u32 %v4934, %v4935
  %v4938 = vrot.slane %v4934, 4
  %v4940 = vshrl.u32 %v4810, 16
  %v4942 = vrot.slane %v4940, 7
  %v4943 = vshll.u32 %v4810, 16
  %v4945 = vor.u32 %v4942, %v4943
  %v4946 = vsel %vm872, %v4938, %v4945
  %v4947 = vrot.slane %v4942, 4
  %v4949 = vshrl.u32 %v4811, 16
  %v4951 = vrot.slane %v4949, 7
  %v4952 = vshll.u32 %v4811, 16
  %v4954 = vor.u32 %v4951, %v4952
  %v4955 = vrot.slane %v4951, 4
  %v4957 = vshrl.u32 %v4812, 16
  %v4959 = vrot.slane %v4957, 7
  %v4960 = vshll.u32 %v4812, 16
  %v4962 = vor.u32 %v4959, %v4960
  %v4963 = vsel %vm872, %v4955, %v4962
  %v4964 = vrot.slane %v4959, 4
  %v4966 = vshrl.u32 %v4813, 16
  %v4968 = vrot.slane %v4966, 7
  %v4969 = vshll.u32 %v4813, 16
  %v4971 = vor.u32 %v4968, %v4969
  %v4972 = vrot.slane %v4968, 4
  %v4974 = vshrl.u32 %v4814, 16
  %v4976 = vrot.slane %v4974, 7
  %v4977 = vshll.u32 %v4814, 16
  %v4979 = vor.u32 %v4976, %v4977
  %v4980 = vsel %vm872, %v4972, %v4979
  %v4981 = vrot.slane %v4976, 4
  %v4983 = vshrl.u32 %v4815, 16
  %v4985 = vrot.slane %v4983, 7
  %v4986 = vshll.u32 %v4815, 16
  %v4988 = vor.u32 %v4985, %v4986
  %v4989 = vrot.slane %v4985, 4
  %v4991 = vshrl.u32 %v4816, 16
  %v4993 = vrot.slane %v4991, 7
  %v4994 = vshll.u32 %v4816, 16
  %v4996 = vor.u32 %v4993, %v4994
  %v4997 = vsel %vm872, %v4989, %v4996
  %v4998 = vrot.slane %v4993, 4
  %v5000 = vshrl.u32 %v4817, 16
  %v5002 = vrot.slane %v5000, 7
  %v5003 = vshll.u32 %v4817, 16
  %v5005 = vor.u32 %v5002, %v5003
  %v5006 = vrot.slane %v5002, 4
  %v5008 = vshrl.u32 %v4818, 16
  %v5010 = vrot.slane %v5008, 7
  %v5011 = vshll.u32 %v4818, 16
  %v5013 = vor.u32 %v5010, %v5011
  %v5014 = vsel %vm872, %v5006, %v5013
  %v5015 = vrot.slane %v5010, 4
  %v5017 = vshrl.u32 %v4819, 16
  %v5019 = vrot.slane %v5017, 7
  %v5020 = vshll.u32 %v4819, 16
  %v5022 = vor.u32 %v5019, %v5020
  %v5023 = vrot.slane %v5019, 4
  %v5025 = vshrl.u32 %v4820, 16
  %v5027 = vrot.slane %v5025, 7
  %v5028 = vshll.u32 %v4820, 16
  %v5030 = vor.u32 %v5027, %v5028
  %v5031 = vsel %vm872, %v5023, %v5030
  %v5032 = vrot.slane %v5027, 4
  %v5034 = vshrl.u32 %v4821, 16
  %v5036 = vrot.slane %v5034, 7
  %v5037 = vshll.u32 %v4821, 16
  %v5039 = vor.u32 %v5036, %v5037
  %v5040 = vrot.slane %v5036, 4
  %v5042 = vshrl.u32 %v4822, 16
  %v5044 = vrot.slane %v5042, 7
  %v5045 = vshll.u32 %v4822, 16
  %v5047 = vor.u32 %v5044, %v5045
  %v5048 = vsel %vm872, %v5040, %v5047
  %v5049 = vrot.slane %v5044, 4
  %v5051 = vshrl.u32 %v4823, 16
  %v5053 = vrot.slane %v5051, 7
  %v5054 = vshll.u32 %v4823, 16
  %v5056 = vor.u32 %v5053, %v5054
  %v5057 = vrot.slane %v5053, 4
  %v5059 = vshrl.u32 %v4824, 16
  %v5061 = vrot.slane %v5059, 7
  %v5062 = vshll.u32 %v4824, 16
  %v5064 = vor.u32 %v5061, %v5062
  %v5065 = vsel %vm872, %v5057, %v5064
  %v5066 = vrot.slane %v5061, 4
  %v5068 = vshrl.u32 %v4825, 16
  %v5070 = vrot.slane %v5068, 7
  %v5071 = vshll.u32 %v4825, 16
  %v5073 = vor.u32 %v5070, %v5071
  %v5074 = vrot.slane %v5070, 4
  %v5076 = vshrl.u32 %v4826, 16
  %v5078 = vrot.slane %v5076, 7
  %v5079 = vshll.u32 %v4826, 16
  %v5081 = vor.u32 %v5078, %v5079
  %v5082 = vsel %vm872, %v5074, %v5081
  %v5083 = vrot.slane %v5078, 4
  %v5085 = vshrl.u32 %v4827, 16
  %v5087 = vrot.slane %v5085, 7
  %v5088 = vshll.u32 %v4827, 16
  %v5090 = vor.u32 %v5087, %v5088
  %v5091 = vrot.slane %v5087, 4
  %v5093 = vshrl.u32 %v4828, 16
  %v5095 = vrot.slane %v5093, 7
  %v5096 = vshll.u32 %v4828, 16
  %v5098 = vor.u32 %v5095, %v5096
  %v5099 = vsel %vm872, %v5091, %v5098
  %v5100 = vrot.slane %v5095, 4
  %v5149 = vsel %vm1194, %v4835, %v1885
  %5150 = vst [vmem:[%s673] sm:$0xf] %v5149
  %5151 = vst [vmem:[%s673 + $0x4] sm:$0xf] %v4844
  %v5152 = vld [vmem:[%s673 + $0x8] sm:$0x1]
  %v5153 = vsel %vm676, %v4845, %v5152
  %5154 = vst [vmem:[%s673 + $0x8] sm:$0x1] %v5153
  %v5155 = vld [vmem:[%s673 + $0xc] sm:$0xf]
  %v5156 = vsel %vm1194, %v4852, %v5155
  %5157 = vst [vmem:[%s673 + $0xc] sm:$0xf] %v5156
  %5158 = vst [vmem:[%s673 + $0x10] sm:$0xf] %v4861
  %v5159 = vld [vmem:[%s673 + $0x14] sm:$0x1]
  %v5160 = vsel %vm676, %v4862, %v5159
  %5161 = vst [vmem:[%s673 + $0x14] sm:$0x1] %v5160
  %v5162 = vld [vmem:[%s673 + $0x18] sm:$0xf]
  %v5163 = vsel %vm1194, %v4869, %v5162
  %5164 = vst [vmem:[%s673 + $0x18] sm:$0xf] %v5163
  %5165 = vst [vmem:[%s673 + $0x1c] sm:$0xf] %v4878
  %v5166 = vld [vmem:[%s673 + $0x20] sm:$0x1]
  %v5167 = vsel %vm676, %v4879, %v5166
  %5168 = vst [vmem:[%s673 + $0x20] sm:$0x1] %v5167
  %v5169 = vld [vmem:[%s673 + $0x24] sm:$0xf]
  %v5170 = vsel %vm1194, %v4886, %v5169
  %5171 = vst [vmem:[%s673 + $0x24] sm:$0xf] %v5170
  %5172 = vst [vmem:[%s673 + $0x28] sm:$0xf] %v4895
  %v5173 = vld [vmem:[%s673 + $0x2c] sm:$0x1]
  %v5174 = vsel %vm676, %v4896, %v5173
  %5175 = vst [vmem:[%s673 + $0x2c] sm:$0x1] %v5174
  %v5176 = vld [vmem:[%s673 + $0x30] sm:$0xf]
  %v5177 = vsel %vm1194, %v4903, %v5176
  %5178 = vst [vmem:[%s673 + $0x30] sm:$0xf] %v5177
  %5179 = vst [vmem:[%s673 + $0x34] sm:$0xf] %v4912
  %v5180 = vld [vmem:[%s673 + $0x38] sm:$0x1]
  %v5181 = vsel %vm676, %v4913, %v5180
  %5182 = vst [vmem:[%s673 + $0x38] sm:$0x1] %v5181
  %v5183 = vld [vmem:[%s673 + $0x3c] sm:$0xf]
  %v5184 = vsel %vm1194, %v4920, %v5183
  %5185 = vst [vmem:[%s673 + $0x3c] sm:$0xf] %v5184
  %5186 = vst [vmem:[%s673 + $0x40] sm:$0xf] %v4929
  %v5187 = vld [vmem:[%s673 + $0x44] sm:$0x1]
  %v5188 = vsel %vm676, %v4930, %v5187
  %5189 = vst [vmem:[%s673 + $0x44] sm:$0x1] %v5188
  %v5190 = vld [vmem:[%s673 + $0x48] sm:$0xf]
  %v5191 = vsel %vm1194, %v4937, %v5190
  %5192 = vst [vmem:[%s673 + $0x48] sm:$0xf] %v5191
  %5193 = vst [vmem:[%s673 + $0x4c] sm:$0xf] %v4946
  %v5194 = vld [vmem:[%s673 + $0x50] sm:$0x1]
  %v5195 = vsel %vm676, %v4947, %v5194
  %5196 = vst [vmem:[%s673 + $0x50] sm:$0x1] %v5195
  %v5197 = vld [vmem:[%s673 + $0x54] sm:$0xf]
  %v5198 = vsel %vm1194, %v4954, %v5197
  %5199 = vst [vmem:[%s673 + $0x54] sm:$0xf] %v5198
  %5200 = vst [vmem:[%s673 + $0x58] sm:$0xf] %v4963
  %v5201 = vld [vmem:[%s673 + $0x5c] sm:$0x1]
  %v5202 = vsel %vm676, %v4964, %v5201
  %5203 = vst [vmem:[%s673 + $0x5c] sm:$0x1] %v5202
  %v5204 = vld [vmem:[%s673 + $0x60] sm:$0xf]
  %v5205 = vsel %vm1194, %v4971, %v5204
  %5206 = vst [vmem:[%s673 + $0x60] sm:$0xf] %v5205
  %5207 = vst [vmem:[%s673 + $0x64] sm:$0xf] %v4980
  %v5208 = vld [vmem:[%s673 + $0x68] sm:$0x1]
  %v5209 = vsel %vm676, %v4981, %v5208
  %5210 = vst [vmem:[%s673 + $0x68] sm:$0x1] %v5209
  %v5211 = vld [vmem:[%s673 + $0x6c] sm:$0xf]
  %v5212 = vsel %vm1194, %v4988, %v5211
  %5213 = vst [vmem:[%s673 + $0x6c] sm:$0xf] %v5212
  %5214 = vst [vmem:[%s673 + $0x70] sm:$0xf] %v4997
  %v5215 = vld [vmem:[%s673 + $0x74] sm:$0x1]
  %v5216 = vsel %vm676, %v4998, %v5215
  %5217 = vst [vmem:[%s673 + $0x74] sm:$0x1] %v5216
  %v5218 = vld [vmem:[%s673 + $0x78] sm:$0xf]
  %v5219 = vsel %vm1194, %v5005, %v5218
  %5220 = vst [vmem:[%s673 + $0x78] sm:$0xf] %v5219
  %5221 = vst [vmem:[%s673 + $0x7c] sm:$0xf] %v5014
  %v5222 = vld [vmem:[%s673 + $0x80] sm:$0x1]
  %v5223 = vsel %vm676, %v5015, %v5222
  %5224 = vst [vmem:[%s673 + $0x80] sm:$0x1] %v5223
  %v5225 = vld [vmem:[%s673 + $0x84] sm:$0xf]
  %v5226 = vsel %vm1194, %v5022, %v5225
  %5227 = vst [vmem:[%s673 + $0x84] sm:$0xf] %v5226
  %5228 = vst [vmem:[%s673 + $0x88] sm:$0xf] %v5031
  %v5229 = vld [vmem:[%s673 + $0x8c] sm:$0x1]
  %v5230 = vsel %vm676, %v5032, %v5229
  %5231 = vst [vmem:[%s673 + $0x8c] sm:$0x1] %v5230
  %v5232 = vld [vmem:[%s673 + $0x90] sm:$0xf]
  %v5233 = vsel %vm1194, %v5039, %v5232
  %5234 = vst [vmem:[%s673 + $0x90] sm:$0xf] %v5233
  %5235 = vst [vmem:[%s673 + $0x94] sm:$0xf] %v5048
  %v5236 = vld [vmem:[%s673 + $0x98] sm:$0x1]
  %v5237 = vsel %vm676, %v5049, %v5236
  %5238 = vst [vmem:[%s673 + $0x98] sm:$0x1] %v5237
  %v5239 = vld [vmem:[%s673 + $0x9c] sm:$0xf]
  %v5240 = vsel %vm1194, %v5056, %v5239
  %5241 = vst [vmem:[%s673 + $0x9c] sm:$0xf] %v5240
  %5242 = vst [vmem:[%s673 + $0xa0] sm:$0xf] %v5065
  %v5243 = vld [vmem:[%s673 + $0xa4] sm:$0x1]
  %v5244 = vsel %vm676, %v5066, %v5243
  %5245 = vst [vmem:[%s673 + $0xa4] sm:$0x1] %v5244
  %v5246 = vld [vmem:[%s673 + $0xa8] sm:$0xf]
  %v5247 = vsel %vm1194, %v5073, %v5246
  %5248 = vst [vmem:[%s673 + $0xa8] sm:$0xf] %v5247
  %5249 = vst [vmem:[%s673 + $0xac] sm:$0xf] %v5082
  %v5250 = vld [vmem:[%s673 + $0xb0] sm:$0x1]
  %v5251 = vsel %vm676, %v5083, %v5250
  %5252 = vst [vmem:[%s673 + $0xb0] sm:$0x1] %v5251
  %v5253 = vld [vmem:[%s673 + $0xb4] sm:$0xf]
  %v5254 = vsel %vm1194, %v5090, %v5253
  %5255 = vst [vmem:[%s673 + $0xb4] sm:$0xf] %v5254
  %5256 = vst [vmem:[%s673 + $0xb8] sm:$0xf] %v5099
  %v5257 = vld [vmem:[%s673 + $0xbc] sm:$0x1]
  %v5258 = vsel %vm676, %v5100, %v5257
  %5259 = vst [vmem:[%s673 + $0xbc] sm:$0x1] %v5258
  %v5260 = vld [vmem:[#allocation2] sm:$0xf]
  %v5261 = vld [vmem:[#allocation2 + $0x4] sm:$0xf]
  %v5262 = vld [vmem:[#allocation2 + $0xc] sm:$0xf]
  %v5263 = vld [vmem:[#allocation2 + $0x10] sm:$0xf]
  %v5264 = vld [vmem:[#allocation2 + $0x18] sm:$0xf]
  %v5265 = vld [vmem:[#allocation2 + $0x1c] sm:$0xf]
  %v5266 = vld [vmem:[#allocation2 + $0x24] sm:$0xf]
  %v5267 = vld [vmem:[#allocation2 + $0x28] sm:$0xf]
  %v5268 = vld [vmem:[#allocation2 + $0x30] sm:$0xf]
  %v5269 = vld [vmem:[#allocation2 + $0x34] sm:$0xf]
  %v5270 = vld [vmem:[#allocation2 + $0x3c] sm:$0xf]
  %v5271 = vld [vmem:[#allocation2 + $0x40] sm:$0xf]
  %v5272 = vld [vmem:[#allocation2 + $0x48] sm:$0xf]
  %v5273 = vld [vmem:[#allocation2 + $0x4c] sm:$0xf]
  %v5274 = vld [vmem:[#allocation2 + $0x54] sm:$0xf]
  %v5275 = vld [vmem:[#allocation2 + $0x58] sm:$0xf]
  %v5276 = vld [vmem:[#allocation2 + $0x60] sm:$0xf]
  %v5277 = vld [vmem:[#allocation2 + $0x64] sm:$0xf]
  %v5278 = vld [vmem:[#allocation2 + $0x6c] sm:$0xf]
  %v5279 = vld [vmem:[#allocation2 + $0x70] sm:$0xf]
  %v5280 = vld [vmem:[#allocation2 + $0x78] sm:$0xf]
  %v5281 = vld [vmem:[#allocation2 + $0x7c] sm:$0xf]
  %v5282 = vld [vmem:[#allocation2 + $0x84] sm:$0xf]
  %v5283 = vld [vmem:[#allocation2 + $0x88] sm:$0xf]
  %v5284 = vld [vmem:[#allocation2 + $0x90] sm:$0xf]
  %v5285 = vld [vmem:[#allocation2 + $0x94] sm:$0xf]
  %v5286 = vld [vmem:[#allocation2 + $0x9c] sm:$0xf]
  %v5287 = vld [vmem:[#allocation2 + $0xa0] sm:$0xf]
  %v5288 = vld [vmem:[#allocation2 + $0xa8] sm:$0xf]
  %v5289 = vld [vmem:[#allocation2 + $0xac] sm:$0xf]
  %v5290 = vld [vmem:[#allocation2 + $0xb4] sm:$0xf]
  %v5291 = vld [vmem:[#allocation2 + $0xb8] sm:$0xf]
  %v5292 = vld [vmem:[#allocation2 + $0x8] sm:$0x1]
  %v5293 = vld [vmem:[#allocation2 + $0x14] sm:$0x1]
  %v5294 = vld [vmem:[#allocation2 + $0x20] sm:$0x1]
  %v5295 = vld [vmem:[#allocation2 + $0x2c] sm:$0x1]
  %v5296 = vld [vmem:[#allocation2 + $0x38] sm:$0x1]
  %v5297 = vld [vmem:[#allocation2 + $0x44] sm:$0x1]
  %v5298 = vld [vmem:[#allocation2 + $0x50] sm:$0x1]
  %v5299 = vld [vmem:[#allocation2 + $0x5c] sm:$0x1]
  %v5300 = vld [vmem:[#allocation2 + $0x68] sm:$0x1]
  %v5301 = vld [vmem:[#allocation2 + $0x74] sm:$0x1]
  %v5302 = vld [vmem:[#allocation2 + $0x80] sm:$0x1]
  %v5303 = vld [vmem:[#allocation2 + $0x8c] sm:$0x1]
  %v5304 = vld [vmem:[#allocation2 + $0x98] sm:$0x1]
  %v5305 = vld [vmem:[#allocation2 + $0xa4] sm:$0x1]
  %v5306 = vld [vmem:[#allocation2 + $0xb0] sm:$0x1]
  %v5307 = vld [vmem:[#allocation2 + $0xbc] sm:$0x1]
  %v5308 = vld [vmem:[#allocation2] sm:$0xe]
  %v5309 = vld [vmem:[#allocation2 + $0xc] sm:$0xe]
  %v5310 = vld [vmem:[#allocation2 + $0x18] sm:$0xe]
  %v5311 = vld [vmem:[#allocation2 + $0x24] sm:$0xe]
  %v5312 = vld [vmem:[#allocation2 + $0x30] sm:$0xe]
  %v5313 = vld [vmem:[#allocation2 + $0x3c] sm:$0xe]
  %v5314 = vld [vmem:[#allocation2 + $0x48] sm:$0xe]
  %v5315 = vld [vmem:[#allocation2 + $0x54] sm:$0xe]
  %v5316 = vld [vmem:[#allocation2 + $0x60] sm:$0xe]
  %v5317 = vld [vmem:[#allocation2 + $0x6c] sm:$0xe]
  %v5318 = vld [vmem:[#allocation2 + $0x78] sm:$0xe]
  %v5319 = vld [vmem:[#allocation2 + $0x84] sm:$0xe]
  %v5320 = vld [vmem:[#allocation2 + $0x90] sm:$0xe]
  %v5321 = vld [vmem:[#allocation2 + $0x9c] sm:$0xe]
  %v5322 = vld [vmem:[#allocation2 + $0xa8] sm:$0xe]
  %v5323 = vld [vmem:[#allocation2 + $0xb4] sm:$0xe]
  %v5356 = vunpack.c.l.b16 %v5260
  %v5357 = vunpack.c.l.b16 %v5261
  %v5358 = vunpack.c.l.b16 %v5262
  %v5359 = vunpack.c.l.b16 %v5263
  %v5360 = vunpack.c.l.b16 %v5264
  %v5361 = vunpack.c.l.b16 %v5265
  %v5362 = vunpack.c.l.b16 %v5266
  %v5363 = vunpack.c.l.b16 %v5267
  %v5364 = vunpack.c.l.b16 %v5268
  %v5365 = vunpack.c.l.b16 %v5269
  %v5366 = vunpack.c.l.b16 %v5270
  %v5367 = vunpack.c.l.b16 %v5271
  %v5368 = vunpack.c.l.b16 %v5272
  %v5369 = vunpack.c.l.b16 %v5273
  %v5370 = vunpack.c.l.b16 %v5274
  %v5371 = vunpack.c.l.b16 %v5275
  %v5372 = vunpack.c.l.b16 %v5276
  %v5373 = vunpack.c.l.b16 %v5277
  %v5374 = vunpack.c.l.b16 %v5278
  %v5375 = vunpack.c.l.b16 %v5279
  %v5376 = vunpack.c.l.b16 %v5280
  %v5377 = vunpack.c.l.b16 %v5281
  %v5378 = vunpack.c.l.b16 %v5282
  %v5379 = vunpack.c.l.b16 %v5283
  %v5380 = vunpack.c.l.b16 %v5284
  %v5381 = vunpack.c.l.b16 %v5285
  %v5382 = vunpack.c.l.b16 %v5286
  %v5383 = vunpack.c.l.b16 %v5287
  %v5384 = vunpack.c.l.b16 %v5288
  %v5385 = vunpack.c.l.b16 %v5289
  %v5386 = vunpack.c.l.b16 %v5290
  %v5387 = vunpack.c.l.b16 %v5291
  %v5388 = vpack.c.b16 %v5357, %v5356
  %v5389 = vpack.c.b16 %v5359, %v5358
  %v5390 = vpack.c.b16 %v5361, %v5360
  %v5391 = vpack.c.b16 %v5363, %v5362
  %v5392 = vpack.c.b16 %v5365, %v5364
  %v5393 = vpack.c.b16 %v5367, %v5366
  %v5394 = vpack.c.b16 %v5369, %v5368
  %v5395 = vpack.c.b16 %v5371, %v5370
  %v5396 = vpack.c.b16 %v5373, %v5372
  %v5397 = vpack.c.b16 %v5375, %v5374
  %v5398 = vpack.c.b16 %v5377, %v5376
  %v5399 = vpack.c.b16 %v5379, %v5378
  %v5400 = vpack.c.b16 %v5381, %v5380
  %v5401 = vpack.c.b16 %v5383, %v5382
  %v5402 = vpack.c.b16 %v5385, %v5384
  %v5403 = vpack.c.b16 %v5387, %v5386
  %v5436 = vunpack.c.l.b16 %v5292
  %v5437 = vunpack.c.l.b16 %v5293
  %v5438 = vunpack.c.l.b16 %v5294
  %v5439 = vunpack.c.l.b16 %v5295
  %v5440 = vunpack.c.l.b16 %v5296
  %v5441 = vunpack.c.l.b16 %v5297
  %v5442 = vunpack.c.l.b16 %v5298
  %v5443 = vunpack.c.l.b16 %v5299
  %v5444 = vunpack.c.l.b16 %v5300
  %v5445 = vunpack.c.l.b16 %v5301
  %v5446 = vunpack.c.l.b16 %v5302
  %v5447 = vunpack.c.l.b16 %v5303
  %v5448 = vunpack.c.l.b16 %v5304
  %v5449 = vunpack.c.l.b16 %v5305
  %v5450 = vunpack.c.l.b16 %v5306
  %v5451 = vunpack.c.l.b16 %v5307
  %v5452 = vpack.c.b16 %v5436, %v5436
  %v5453 = vpack.c.b16 %v5437, %v5437
  %v5454 = vpack.c.b16 %v5438, %v5438
  %v5455 = vpack.c.b16 %v5439, %v5439
  %v5456 = vpack.c.b16 %v5440, %v5440
  %v5457 = vpack.c.b16 %v5441, %v5441
  %v5458 = vpack.c.b16 %v5442, %v5442
  %v5459 = vpack.c.b16 %v5443, %v5443
  %v5460 = vpack.c.b16 %v5444, %v5444
  %v5461 = vpack.c.b16 %v5445, %v5445
  %v5462 = vpack.c.b16 %v5446, %v5446
  %v5463 = vpack.c.b16 %v5447, %v5447
  %v5464 = vpack.c.b16 %v5448, %v5448
  %v5465 = vpack.c.b16 %v5449, %v5449
  %v5466 = vpack.c.b16 %v5450, %v5450
  %v5467 = vpack.c.b16 %v5451, %v5451
  %v5469 = vshrl.u32 %v5388, 16
  %v5471 = vshll.u32 %v5388, 16
  %v5473 = vrot.slane %v5471, 1
  %v5474 = vor.u32 %v5469, %v5473
  %v5476 = vshll.u32 %v5452, 16
  %v5478 = vrot.slane %v5476, 1
  %v5479 = vsel %vm1515, %v5474, %v5478
  %v5481 = vshrl.u32 %v5389, 16
  %v5483 = vshll.u32 %v5389, 16
  %v5485 = vrot.slane %v5483, 1
  %v5486 = vor.u32 %v5481, %v5485
  %v5488 = vshll.u32 %v5453, 16
  %v5490 = vrot.slane %v5488, 1
  %v5491 = vsel %vm1515, %v5486, %v5490
  %v5493 = vshrl.u32 %v5390, 16
  %v5495 = vshll.u32 %v5390, 16
  %v5497 = vrot.slane %v5495, 1
  %v5498 = vor.u32 %v5493, %v5497
  %v5500 = vshll.u32 %v5454, 16
  %v5502 = vrot.slane %v5500, 1
  %v5503 = vsel %vm1515, %v5498, %v5502
  %v5505 = vshrl.u32 %v5391, 16
  %v5507 = vshll.u32 %v5391, 16
  %v5509 = vrot.slane %v5507, 1
  %v5510 = vor.u32 %v5505, %v5509
  %v5512 = vshll.u32 %v5455, 16
  %v5514 = vrot.slane %v5512, 1
  %v5515 = vsel %vm1515, %v5510, %v5514
  %v5517 = vshrl.u32 %v5392, 16
  %v5519 = vshll.u32 %v5392, 16
  %v5521 = vrot.slane %v5519, 1
  %v5522 = vor.u32 %v5517, %v5521
  %v5524 = vshll.u32 %v5456, 16
  %v5526 = vrot.slane %v5524, 1
  %v5527 = vsel %vm1515, %v5522, %v5526
  %v5529 = vshrl.u32 %v5393, 16
  %v5531 = vshll.u32 %v5393, 16
  %v5533 = vrot.slane %v5531, 1
  %v5534 = vor.u32 %v5529, %v5533
  %v5536 = vshll.u32 %v5457, 16
  %v5538 = vrot.slane %v5536, 1
  %v5539 = vsel %vm1515, %v5534, %v5538
  %v5541 = vshrl.u32 %v5394, 16
  %v5543 = vshll.u32 %v5394, 16
  %v5545 = vrot.slane %v5543, 1
  %v5546 = vor.u32 %v5541, %v5545
  %v5548 = vshll.u32 %v5458, 16
  %v5550 = vrot.slane %v5548, 1
  %v5551 = vsel %vm1515, %v5546, %v5550
  %v5553 = vshrl.u32 %v5395, 16
  %v5555 = vshll.u32 %v5395, 16
  %v5557 = vrot.slane %v5555, 1
  %v5558 = vor.u32 %v5553, %v5557
  %v5560 = vshll.u32 %v5459, 16
  %v5562 = vrot.slane %v5560, 1
  %v5563 = vsel %vm1515, %v5558, %v5562
  %v5565 = vshrl.u32 %v5396, 16
  %v5567 = vshll.u32 %v5396, 16
  %v5569 = vrot.slane %v5567, 1
  %v5570 = vor.u32 %v5565, %v5569
  %v5572 = vshll.u32 %v5460, 16
  %v5574 = vrot.slane %v5572, 1
  %v5575 = vsel %vm1515, %v5570, %v5574
  %v5577 = vshrl.u32 %v5397, 16
  %v5579 = vshll.u32 %v5397, 16
  %v5581 = vrot.slane %v5579, 1
  %v5582 = vor.u32 %v5577, %v5581
  %v5584 = vshll.u32 %v5461, 16
  %v5586 = vrot.slane %v5584, 1
  %v5587 = vsel %vm1515, %v5582, %v5586
  %v5589 = vshrl.u32 %v5398, 16
  %v5591 = vshll.u32 %v5398, 16
  %v5593 = vrot.slane %v5591, 1
  %v5594 = vor.u32 %v5589, %v5593
  %v5596 = vshll.u32 %v5462, 16
  %v5598 = vrot.slane %v5596, 1
  %v5599 = vsel %vm1515, %v5594, %v5598
  %v5601 = vshrl.u32 %v5399, 16
  %v5603 = vshll.u32 %v5399, 16
  %v5605 = vrot.slane %v5603, 1
  %v5606 = vor.u32 %v5601, %v5605
  %v5608 = vshll.u32 %v5463, 16
  %v5610 = vrot.slane %v5608, 1
  %v5611 = vsel %vm1515, %v5606, %v5610
  %v5613 = vshrl.u32 %v5400, 16
  %v5615 = vshll.u32 %v5400, 16
  %v5617 = vrot.slane %v5615, 1
  %v5618 = vor.u32 %v5613, %v5617
  %v5620 = vshll.u32 %v5464, 16
  %v5622 = vrot.slane %v5620, 1
  %v5623 = vsel %vm1515, %v5618, %v5622
  %v5625 = vshrl.u32 %v5401, 16
  %v5627 = vshll.u32 %v5401, 16
  %v5629 = vrot.slane %v5627, 1
  %v5630 = vor.u32 %v5625, %v5629
  %v5632 = vshll.u32 %v5465, 16
  %v5634 = vrot.slane %v5632, 1
  %v5635 = vsel %vm1515, %v5630, %v5634
  %v5637 = vshrl.u32 %v5402, 16
  %v5639 = vshll.u32 %v5402, 16
  %v5641 = vrot.slane %v5639, 1
  %v5642 = vor.u32 %v5637, %v5641
  %v5644 = vshll.u32 %v5466, 16
  %v5646 = vrot.slane %v5644, 1
  %v5647 = vsel %vm1515, %v5642, %v5646
  %v5649 = vshrl.u32 %v5403, 16
  %v5651 = vshll.u32 %v5403, 16
  %v5653 = vrot.slane %v5651, 1
  %v5654 = vor.u32 %v5649, %v5653
  %v5656 = vshll.u32 %v5467, 16
  %v5658 = vrot.slane %v5656, 1
  %v5659 = vsel %vm1515, %v5654, %v5658
  %v5692 = vunpack.c.l.b16 %v5308
  %v5693 = vunpack.c.l.b16 %v5309
  %v5694 = vunpack.c.l.b16 %v5310
  %v5695 = vunpack.c.l.b16 %v5311
  %v5696 = vunpack.c.l.b16 %v5312
  %v5697 = vunpack.c.l.b16 %v5313
  %v5698 = vunpack.c.l.b16 %v5314
  %v5699 = vunpack.c.l.b16 %v5315
  %v5700 = vunpack.c.l.b16 %v5316
  %v5701 = vunpack.c.l.b16 %v5317
  %v5702 = vunpack.c.l.b16 %v5318
  %v5703 = vunpack.c.l.b16 %v5319
  %v5704 = vunpack.c.l.b16 %v5320
  %v5705 = vunpack.c.l.b16 %v5321
  %v5706 = vunpack.c.l.b16 %v5322
  %v5707 = vunpack.c.l.b16 %v5323
  %v5708 = vpack.c.b16 %v5357, %v5692
  %v5709 = vpack.c.b16 %v5359, %v5693
  %v5710 = vpack.c.b16 %v5361, %v5694
  %v5711 = vpack.c.b16 %v5363, %v5695
  %v5712 = vpack.c.b16 %v5365, %v5696
  %v5713 = vpack.c.b16 %v5367, %v5697
  %v5714 = vpack.c.b16 %v5369, %v5698
  %v5715 = vpack.c.b16 %v5371, %v5699
  %v5716 = vpack.c.b16 %v5373, %v5700
  %v5717 = vpack.c.b16 %v5375, %v5701
  %v5718 = vpack.c.b16 %v5377, %v5702
  %v5719 = vpack.c.b16 %v5379, %v5703
  %v5720 = vpack.c.b16 %v5381, %v5704
  %v5721 = vpack.c.b16 %v5383, %v5705
  %v5722 = vpack.c.b16 %v5385, %v5706
  %v5723 = vpack.c.b16 %v5387, %v5707
  %v5724 = vrot.slane %v5708, 1
  %v5725 = vrot.slane %v5452, 1
  %v5726 = vsel %vm1772, %v5724, %v5725
  %v5727 = vrot.slane %v5709, 1
  %v5728 = vrot.slane %v5453, 1
  %v5729 = vsel %vm1772, %v5727, %v5728
  %v5730 = vrot.slane %v5710, 1
  %v5731 = vrot.slane %v5454, 1
  %v5732 = vsel %vm1772, %v5730, %v5731
  %v5733 = vrot.slane %v5711, 1
  %v5734 = vrot.slane %v5455, 1
  %v5735 = vsel %vm1772, %v5733, %v5734
  %v5736 = vrot.slane %v5712, 1
  %v5737 = vrot.slane %v5456, 1
  %v5738 = vsel %vm1772, %v5736, %v5737
  %v5739 = vrot.slane %v5713, 1
  %v5740 = vrot.slane %v5457, 1
  %v5741 = vsel %vm1772, %v5739, %v5740
  %v5742 = vrot.slane %v5714, 1
  %v5743 = vrot.slane %v5458, 1
  %v5744 = vsel %vm1772, %v5742, %v5743
  %v5745 = vrot.slane %v5715, 1
  %v5746 = vrot.slane %v5459, 1
  %v5747 = vsel %vm1772, %v5745, %v5746
  %v5748 = vrot.slane %v5716, 1
  %v5749 = vrot.slane %v5460, 1
  %v5750 = vsel %vm1772, %v5748, %v5749
  %v5751 = vrot.slane %v5717, 1
  %v5752 = vrot.slane %v5461, 1
  %v5753 = vsel %vm1772, %v5751, %v5752
  %v5754 = vrot.slane %v5718, 1
  %v5755 = vrot.slane %v5462, 1
  %v5756 = vsel %vm1772, %v5754, %v5755
  %v5757 = vrot.slane %v5719, 1
  %v5758 = vrot.slane %v5463, 1
  %v5759 = vsel %vm1772, %v5757, %v5758
  %v5760 = vrot.slane %v5720, 1
  %v5761 = vrot.slane %v5464, 1
  %v5762 = vsel %vm1772, %v5760, %v5761
  %v5763 = vrot.slane %v5721, 1
  %v5764 = vrot.slane %v5465, 1
  %v5765 = vsel %vm1772, %v5763, %v5764
  %v5766 = vrot.slane %v5722, 1
  %v5767 = vrot.slane %v5466, 1
  %v5768 = vsel %vm1772, %v5766, %v5767
  %v5769 = vrot.slane %v5723, 1
  %v5770 = vrot.slane %v5467, 1
  %v5771 = vsel %vm1772, %v5769, %v5770
  %v5788 = vld [vmem:[%s6] sm:$0xf]
  %v5789 = vld [vmem:[%s6 + $0x4] sm:$0xf]
  %v5790 = vld [vmem:[%s6 + $0x8] sm:$0xf]
  %v5791 = vld [vmem:[%s6 + $0xc] sm:$0xf]
  %v5792 = vld [vmem:[%s6 + $0x10] sm:$0xf]
  %v5793 = vld [vmem:[%s6 + $0x14] sm:$0xf]
  %v5794 = vld [vmem:[%s6 + $0x18] sm:$0xf]
  %v5795 = vld [vmem:[%s6 + $0x1c] sm:$0xf]
  %v5796 = vld [vmem:[%s6 + $0x20] sm:$0xf]
  %v5797 = vld [vmem:[%s6 + $0x24] sm:$0xf]
  %v5798 = vld [vmem:[%s6 + $0x28] sm:$0xf]
  %v5799 = vld [vmem:[%s6 + $0x2c] sm:$0xf]
  %v5800 = vld [vmem:[%s6 + $0x30] sm:$0xf]
  %v5801 = vld [vmem:[%s6 + $0x34] sm:$0xf]
  %v5802 = vld [vmem:[%s6 + $0x38] sm:$0xf]
  %v5803 = vld [vmem:[%s6 + $0x3c] sm:$0xf]
  %v5804 = vld [vmem:[%s6 + $0x40] sm:$0xf]
  %v5805 = vld [vmem:[%s6 + $0x44] sm:$0xf]
  %v5806 = vld [vmem:[%s6 + $0x48] sm:$0xf]
  %v5807 = vld [vmem:[%s6 + $0x4c] sm:$0xf]
  %v5808 = vld [vmem:[%s6 + $0x50] sm:$0xf]
  %v5809 = vld [vmem:[%s6 + $0x54] sm:$0xf]
  %v5810 = vld [vmem:[%s6 + $0x58] sm:$0xf]
  %v5811 = vld [vmem:[%s6 + $0x5c] sm:$0xf]
  %v5812 = vld [vmem:[%s6 + $0x60] sm:$0xf]
  %v5813 = vld [vmem:[%s6 + $0x64] sm:$0xf]
  %v5814 = vld [vmem:[%s6 + $0x68] sm:$0xf]
  %v5815 = vld [vmem:[%s6 + $0x6c] sm:$0xf]
  %v5816 = vld [vmem:[%s6 + $0x70] sm:$0xf]
  %v5817 = vld [vmem:[%s6 + $0x74] sm:$0xf]
  %v5818 = vld [vmem:[%s6 + $0x78] sm:$0xf]
  %v5819 = vld [vmem:[%s6 + $0x7c] sm:$0xf]
  %v5820 = vld [vmem:[%s6 + $0x80] sm:$0xf]
  %v5821 = vld [vmem:[%s6 + $0x84] sm:$0xf]
  %v5822 = vld [vmem:[%s6 + $0x88] sm:$0xf]
  %v5823 = vld [vmem:[%s6 + $0x8c] sm:$0xf]
  %v5824 = vld [vmem:[%s6 + $0x90] sm:$0xf]
  %v5825 = vld [vmem:[%s6 + $0x94] sm:$0xf]
  %v5826 = vld [vmem:[%s6 + $0x98] sm:$0xf]
  %v5827 = vld [vmem:[%s6 + $0x9c] sm:$0xf]
  %v5828 = vld [vmem:[%s6 + $0xa0] sm:$0xf]
  %v5829 = vld [vmem:[%s6 + $0xa4] sm:$0xf]
  %v5830 = vld [vmem:[%s6 + $0xa8] sm:$0xf]
  %v5831 = vld [vmem:[%s6 + $0xac] sm:$0xf]
  %v5832 = vld [vmem:[%s6 + $0xb0] sm:$0xf]
  %v5833 = vld [vmem:[%s6 + $0xb4] sm:$0xf]
  %v5834 = vld [vmem:[%s6 + $0xb8] sm:$0xf]
  %v5835 = vld [vmem:[%s6 + $0xbc] sm:$0xf]
  %v5836 = vld [vmem:[%s673] sm:$0xf]
  %v5837 = vld [vmem:[%s673 + $0x4] sm:$0xf]
  %v5838 = vld [vmem:[%s673 + $0xc] sm:$0xf]
  %v5839 = vld [vmem:[%s673 + $0x10] sm:$0xf]
  %v5840 = vld [vmem:[%s673 + $0x18] sm:$0xf]
  %v5841 = vld [vmem:[%s673 + $0x1c] sm:$0xf]
  %v5842 = vld [vmem:[%s673 + $0x24] sm:$0xf]
  %v5843 = vld [vmem:[%s673 + $0x28] sm:$0xf]
  %v5844 = vld [vmem:[%s673 + $0x30] sm:$0xf]
  %v5845 = vld [vmem:[%s673 + $0x34] sm:$0xf]
  %v5846 = vld [vmem:[%s673 + $0x3c] sm:$0xf]
  %v5847 = vld [vmem:[%s673 + $0x40] sm:$0xf]
  %v5848 = vld [vmem:[%s673 + $0x48] sm:$0xf]
  %v5849 = vld [vmem:[%s673 + $0x4c] sm:$0xf]
  %v5850 = vld [vmem:[%s673 + $0x54] sm:$0xf]
  %v5851 = vld [vmem:[%s673 + $0x58] sm:$0xf]
  %v5852 = vld [vmem:[%s673 + $0x60] sm:$0xf]
  %v5853 = vld [vmem:[%s673 + $0x64] sm:$0xf]
  %v5854 = vld [vmem:[%s673 + $0x6c] sm:$0xf]
  %v5855 = vld [vmem:[%s673 + $0x70] sm:$0xf]
  %v5856 = vld [vmem:[%s673 + $0x78] sm:$0xf]
  %v5857 = vld [vmem:[%s673 + $0x7c] sm:$0xf]
  %v5858 = vld [vmem:[%s673 + $0x84] sm:$0xf]
  %v5859 = vld [vmem:[%s673 + $0x88] sm:$0xf]
  %v5860 = vld [vmem:[%s673 + $0x90] sm:$0xf]
  %v5861 = vld [vmem:[%s673 + $0x94] sm:$0xf]
  %v5862 = vld [vmem:[%s673 + $0x9c] sm:$0xf]
  %v5863 = vld [vmem:[%s673 + $0xa0] sm:$0xf]
  %v5864 = vld [vmem:[%s673 + $0xa8] sm:$0xf]
  %v5865 = vld [vmem:[%s673 + $0xac] sm:$0xf]
  %v5866 = vld [vmem:[%s673 + $0xb4] sm:$0xf]
  %v5867 = vld [vmem:[%s673 + $0xb8] sm:$0xf]
  %v5868 = vld [vmem:[%s673 + $0x8] sm:$0x1]
  %v5869 = vld [vmem:[%s673 + $0x14] sm:$0x1]
  %v5870 = vld [vmem:[%s673 + $0x20] sm:$0x1]
  %v5871 = vld [vmem:[%s673 + $0x2c] sm:$0x1]
  %v5872 = vld [vmem:[%s673 + $0x38] sm:$0x1]
  %v5873 = vld [vmem:[%s673 + $0x44] sm:$0x1]
  %v5874 = vld [vmem:[%s673 + $0x50] sm:$0x1]
  %v5875 = vld [vmem:[%s673 + $0x5c] sm:$0x1]
  %v5876 = vld [vmem:[%s673 + $0x68] sm:$0x1]
  %v5877 = vld [vmem:[%s673 + $0x74] sm:$0x1]
  %v5878 = vld [vmem:[%s673 + $0x80] sm:$0x1]
  %v5879 = vld [vmem:[%s673 + $0x8c] sm:$0x1]
  %v5880 = vld [vmem:[%s673 + $0x98] sm:$0x1]
  %v5881 = vld [vmem:[%s673 + $0xa4] sm:$0x1]
  %v5882 = vld [vmem:[%s673 + $0xb0] sm:$0x1]
  %v5883 = vld [vmem:[%s673 + $0xbc] sm:$0x1]
  %v5884 = vld [vmem:[%s673] sm:$0xe]
  %v5885 = vld [vmem:[%s673 + $0xc] sm:$0xe]
  %v5886 = vld [vmem:[%s673 + $0x18] sm:$0xe]
  %v5887 = vld [vmem:[%s673 + $0x24] sm:$0xe]
  %v5888 = vld [vmem:[%s673 + $0x30] sm:$0xe]
  %v5889 = vld [vmem:[%s673 + $0x3c] sm:$0xe]
  %v5890 = vld [vmem:[%s673 + $0x48] sm:$0xe]
  %v5891 = vld [vmem:[%s673 + $0x54] sm:$0xe]
  %v5892 = vld [vmem:[%s673 + $0x60] sm:$0xe]
  %v5893 = vld [vmem:[%s673 + $0x6c] sm:$0xe]
  %v5894 = vld [vmem:[%s673 + $0x78] sm:$0xe]
  %v5895 = vld [vmem:[%s673 + $0x84] sm:$0xe]
  %v5896 = vld [vmem:[%s673 + $0x90] sm:$0xe]
  %v5897 = vld [vmem:[%s673 + $0x9c] sm:$0xe]
  %v5898 = vld [vmem:[%s673 + $0xa8] sm:$0xe]
  %v5899 = vld [vmem:[%s673 + $0xb4] sm:$0xe]
  %v5932 = vunpack.c.l.b16 %v5836
  %v5933 = vunpack.c.l.b16 %v5837
  %v5934 = vunpack.c.l.b16 %v5838
  %v5935 = vunpack.c.l.b16 %v5839
  %v5936 = vunpack.c.l.b16 %v5840
  %v5937 = vunpack.c.l.b16 %v5841
  %v5938 = vunpack.c.l.b16 %v5842
  %v5939 = vunpack.c.l.b16 %v5843
  %v5940 = vunpack.c.l.b16 %v5844
  %v5941 = vunpack.c.l.b16 %v5845
  %v5942 = vunpack.c.l.b16 %v5846
  %v5943 = vunpack.c.l.b16 %v5847
  %v5944 = vunpack.c.l.b16 %v5848
  %v5945 = vunpack.c.l.b16 %v5849
  %v5946 = vunpack.c.l.b16 %v5850
  %v5947 = vunpack.c.l.b16 %v5851
  %v5948 = vunpack.c.l.b16 %v5852
  %v5949 = vunpack.c.l.b16 %v5853
  %v5950 = vunpack.c.l.b16 %v5854
  %v5951 = vunpack.c.l.b16 %v5855
  %v5952 = vunpack.c.l.b16 %v5856
  %v5953 = vunpack.c.l.b16 %v5857
  %v5954 = vunpack.c.l.b16 %v5858
  %v5955 = vunpack.c.l.b16 %v5859
  %v5956 = vunpack.c.l.b16 %v5860
  %v5957 = vunpack.c.l.b16 %v5861
  %v5958 = vunpack.c.l.b16 %v5862
  %v5959 = vunpack.c.l.b16 %v5863
  %v5960 = vunpack.c.l.b16 %v5864
  %v5961 = vunpack.c.l.b16 %v5865
  %v5962 = vunpack.c.l.b16 %v5866
  %v5963 = vunpack.c.l.b16 %v5867
  %v5964 = vpack.c.b16 %v5933, %v5932
  %v5965 = vpack.c.b16 %v5935, %v5934
  %v5966 = vpack.c.b16 %v5937, %v5936
  %v5967 = vpack.c.b16 %v5939, %v5938
  %v5968 = vpack.c.b16 %v5941, %v5940
  %v5969 = vpack.c.b16 %v5943, %v5942
  %v5970 = vpack.c.b16 %v5945, %v5944
  %v5971 = vpack.c.b16 %v5947, %v5946
  %v5972 = vpack.c.b16 %v5949, %v5948
  %v5973 = vpack.c.b16 %v5951, %v5950
  %v5974 = vpack.c.b16 %v5953, %v5952
  %v5975 = vpack.c.b16 %v5955, %v5954
  %v5976 = vpack.c.b16 %v5957, %v5956
  %v5977 = vpack.c.b16 %v5959, %v5958
  %v5978 = vpack.c.b16 %v5961, %v5960
  %v5979 = vpack.c.b16 %v5963, %v5962
  %v6012 = vunpack.c.l.b16 %v5868
  %v6013 = vunpack.c.l.b16 %v5869
  %v6014 = vunpack.c.l.b16 %v5870
  %v6015 = vunpack.c.l.b16 %v5871
  %v6016 = vunpack.c.l.b16 %v5872
  %v6017 = vunpack.c.l.b16 %v5873
  %v6018 = vunpack.c.l.b16 %v5874
  %v6019 = vunpack.c.l.b16 %v5875
  %v6020 = vunpack.c.l.b16 %v5876
  %v6021 = vunpack.c.l.b16 %v5877
  %v6022 = vunpack.c.l.b16 %v5878
  %v6023 = vunpack.c.l.b16 %v5879
  %v6024 = vunpack.c.l.b16 %v5880
  %v6025 = vunpack.c.l.b16 %v5881
  %v6026 = vunpack.c.l.b16 %v5882
  %v6027 = vunpack.c.l.b16 %v5883
  %v6028 = vpack.c.b16 %v6012, %v6012
  %v6029 = vpack.c.b16 %v6013, %v6013
  %v6030 = vpack.c.b16 %v6014, %v6014
  %v6031 = vpack.c.b16 %v6015, %v6015
  %v6032 = vpack.c.b16 %v6016, %v6016
  %v6033 = vpack.c.b16 %v6017, %v6017
  %v6034 = vpack.c.b16 %v6018, %v6018
  %v6035 = vpack.c.b16 %v6019, %v6019
  %v6036 = vpack.c.b16 %v6020, %v6020
  %v6037 = vpack.c.b16 %v6021, %v6021
  %v6038 = vpack.c.b16 %v6022, %v6022
  %v6039 = vpack.c.b16 %v6023, %v6023
  %v6040 = vpack.c.b16 %v6024, %v6024
  %v6041 = vpack.c.b16 %v6025, %v6025
  %v6042 = vpack.c.b16 %v6026, %v6026
  %v6043 = vpack.c.b16 %v6027, %v6027
  %v6045 = vshrl.u32 %v5964, 16
  %v6047 = vshll.u32 %v5964, 16
  %v6049 = vrot.slane %v6047, 1
  %v6050 = vor.u32 %v6045, %v6049
  %v6052 = vshll.u32 %v6028, 16
  %v6054 = vrot.slane %v6052, 1
  %v6055 = vsel %vm1515, %v6050, %v6054
  %v6057 = vshrl.u32 %v5965, 16
  %v6059 = vshll.u32 %v5965, 16
  %v6061 = vrot.slane %v6059, 1
  %v6062 = vor.u32 %v6057, %v6061
  %v6064 = vshll.u32 %v6029, 16
  %v6066 = vrot.slane %v6064, 1
  %v6067 = vsel %vm1515, %v6062, %v6066
  %v6069 = vshrl.u32 %v5966, 16
  %v6071 = vshll.u32 %v5966, 16
  %v6073 = vrot.slane %v6071, 1
  %v6074 = vor.u32 %v6069, %v6073
  %v6076 = vshll.u32 %v6030, 16
  %v6078 = vrot.slane %v6076, 1
  %v6079 = vsel %vm1515, %v6074, %v6078
  %v6081 = vshrl.u32 %v5967, 16
  %v6083 = vshll.u32 %v5967, 16
  %v6085 = vrot.slane %v6083, 1
  %v6086 = vor.u32 %v6081, %v6085
  %v6088 = vshll.u32 %v6031, 16
  %v6090 = vrot.slane %v6088, 1
  %v6091 = vsel %vm1515, %v6086, %v6090
  %v6093 = vshrl.u32 %v5968, 16
  %v6095 = vshll.u32 %v5968, 16
  %v6097 = vrot.slane %v6095, 1
  %v6098 = vor.u32 %v6093, %v6097
  %v6100 = vshll.u32 %v6032, 16
  %v6102 = vrot.slane %v6100, 1
  %v6103 = vsel %vm1515, %v6098, %v6102
  %v6105 = vshrl.u32 %v5969, 16
  %v6107 = vshll.u32 %v5969, 16
  %v6109 = vrot.slane %v6107, 1
  %v6110 = vor.u32 %v6105, %v6109
  %v6112 = vshll.u32 %v6033, 16
  %v6114 = vrot.slane %v6112, 1
  %v6115 = vsel %vm1515, %v6110, %v6114
  %v6117 = vshrl.u32 %v5970, 16
  %v6119 = vshll.u32 %v5970, 16
  %v6121 = vrot.slane %v6119, 1
  %v6122 = vor.u32 %v6117, %v6121
  %v6124 = vshll.u32 %v6034, 16
  %v6126 = vrot.slane %v6124, 1
  %v6127 = vsel %vm1515, %v6122, %v6126
  %v6129 = vshrl.u32 %v5971, 16
  %v6131 = vshll.u32 %v5971, 16
  %v6133 = vrot.slane %v6131, 1
  %v6134 = vor.u32 %v6129, %v6133
  %v6136 = vshll.u32 %v6035, 16
  %v6138 = vrot.slane %v6136, 1
  %v6139 = vsel %vm1515, %v6134, %v6138
  %v6141 = vshrl.u32 %v5972, 16
  %v6143 = vshll.u32 %v5972, 16
  %v6145 = vrot.slane %v6143, 1
  %v6146 = vor.u32 %v6141, %v6145
  %v6148 = vshll.u32 %v6036, 16
  %v6150 = vrot.slane %v6148, 1
  %v6151 = vsel %vm1515, %v6146, %v6150
  %v6153 = vshrl.u32 %v5973, 16
  %v6155 = vshll.u32 %v5973, 16
  %v6157 = vrot.slane %v6155, 1
  %v6158 = vor.u32 %v6153, %v6157
  %v6160 = vshll.u32 %v6037, 16
  %v6162 = vrot.slane %v6160, 1
  %v6163 = vsel %vm1515, %v6158, %v6162
  %v6165 = vshrl.u32 %v5974, 16
  %v6167 = vshll.u32 %v5974, 16
  %v6169 = vrot.slane %v6167, 1
  %v6170 = vor.u32 %v6165, %v6169
  %v6172 = vshll.u32 %v6038, 16
  %v6174 = vrot.slane %v6172, 1
  %v6175 = vsel %vm1515, %v6170, %v6174
  %v6177 = vshrl.u32 %v5975, 16
  %v6179 = vshll.u32 %v5975, 16
  %v6181 = vrot.slane %v6179, 1
  %v6182 = vor.u32 %v6177, %v6181
  %v6184 = vshll.u32 %v6039, 16
  %v6186 = vrot.slane %v6184, 1
  %v6187 = vsel %vm1515, %v6182, %v6186
  %v6189 = vshrl.u32 %v5976, 16
  %v6191 = vshll.u32 %v5976, 16
  %v6193 = vrot.slane %v6191, 1
  %v6194 = vor.u32 %v6189, %v6193
  %v6196 = vshll.u32 %v6040, 16
  %v6198 = vrot.slane %v6196, 1
  %v6199 = vsel %vm1515, %v6194, %v6198
  %v6201 = vshrl.u32 %v5977, 16
  %v6203 = vshll.u32 %v5977, 16
  %v6205 = vrot.slane %v6203, 1
  %v6206 = vor.u32 %v6201, %v6205
  %v6208 = vshll.u32 %v6041, 16
  %v6210 = vrot.slane %v6208, 1
  %v6211 = vsel %vm1515, %v6206, %v6210
  %v6213 = vshrl.u32 %v5978, 16
  %v6215 = vshll.u32 %v5978, 16
  %v6217 = vrot.slane %v6215, 1
  %v6218 = vor.u32 %v6213, %v6217
  %v6220 = vshll.u32 %v6042, 16
  %v6222 = vrot.slane %v6220, 1
  %v6223 = vsel %vm1515, %v6218, %v6222
  %v6225 = vshrl.u32 %v5979, 16
  %v6227 = vshll.u32 %v5979, 16
  %v6229 = vrot.slane %v6227, 1
  %v6230 = vor.u32 %v6225, %v6229
  %v6232 = vshll.u32 %v6043, 16
  %v6234 = vrot.slane %v6232, 1
  %v6235 = vsel %vm1515, %v6230, %v6234
  %v6268 = vunpack.c.l.b16 %v5884
  %v6269 = vunpack.c.l.b16 %v5885
  %v6270 = vunpack.c.l.b16 %v5886
  %v6271 = vunpack.c.l.b16 %v5887
  %v6272 = vunpack.c.l.b16 %v5888
  %v6273 = vunpack.c.l.b16 %v5889
  %v6274 = vunpack.c.l.b16 %v5890
  %v6275 = vunpack.c.l.b16 %v5891
  %v6276 = vunpack.c.l.b16 %v5892
  %v6277 = vunpack.c.l.b16 %v5893
  %v6278 = vunpack.c.l.b16 %v5894
  %v6279 = vunpack.c.l.b16 %v5895
  %v6280 = vunpack.c.l.b16 %v5896
  %v6281 = vunpack.c.l.b16 %v5897
  %v6282 = vunpack.c.l.b16 %v5898
  %v6283 = vunpack.c.l.b16 %v5899
  %v6284 = vpack.c.b16 %v5933, %v6268
  %v6285 = vpack.c.b16 %v5935, %v6269
  %v6286 = vpack.c.b16 %v5937, %v6270
  %v6287 = vpack.c.b16 %v5939, %v6271
  %v6288 = vpack.c.b16 %v5941, %v6272
  %v6289 = vpack.c.b16 %v5943, %v6273
  %v6290 = vpack.c.b16 %v5945, %v6274
  %v6291 = vpack.c.b16 %v5947, %v6275
  %v6292 = vpack.c.b16 %v5949, %v6276
  %v6293 = vpack.c.b16 %v5951, %v6277
  %v6294 = vpack.c.b16 %v5953, %v6278
  %v6295 = vpack.c.b16 %v5955, %v6279
  %v6296 = vpack.c.b16 %v5957, %v6280
  %v6297 = vpack.c.b16 %v5959, %v6281
  %v6298 = vpack.c.b16 %v5961, %v6282
  %v6299 = vpack.c.b16 %v5963, %v6283
  %v6300 = vrot.slane %v6284, 1
  %v6301 = vrot.slane %v6028, 1
  %v6302 = vsel %vm1772, %v6300, %v6301
  %v6303 = vrot.slane %v6285, 1
  %v6304 = vrot.slane %v6029, 1
  %v6305 = vsel %vm1772, %v6303, %v6304
  %v6306 = vrot.slane %v6286, 1
  %v6307 = vrot.slane %v6030, 1
  %v6308 = vsel %vm1772, %v6306, %v6307
  %v6309 = vrot.slane %v6287, 1
  %v6310 = vrot.slane %v6031, 1
  %v6311 = vsel %vm1772, %v6309, %v6310
  %v6312 = vrot.slane %v6288, 1
  %v6313 = vrot.slane %v6032, 1
  %v6314 = vsel %vm1772, %v6312, %v6313
  %v6315 = vrot.slane %v6289, 1
  %v6316 = vrot.slane %v6033, 1
  %v6317 = vsel %vm1772, %v6315, %v6316
  %v6318 = vrot.slane %v6290, 1
  %v6319 = vrot.slane %v6034, 1
  %v6320 = vsel %vm1772, %v6318, %v6319
  %v6321 = vrot.slane %v6291, 1
  %v6322 = vrot.slane %v6035, 1
  %v6323 = vsel %vm1772, %v6321, %v6322
  %v6324 = vrot.slane %v6292, 1
  %v6325 = vrot.slane %v6036, 1
  %v6326 = vsel %vm1772, %v6324, %v6325
  %v6327 = vrot.slane %v6293, 1
  %v6328 = vrot.slane %v6037, 1
  %v6329 = vsel %vm1772, %v6327, %v6328
  %v6330 = vrot.slane %v6294, 1
  %v6331 = vrot.slane %v6038, 1
  %v6332 = vsel %vm1772, %v6330, %v6331
  %v6333 = vrot.slane %v6295, 1
  %v6334 = vrot.slane %v6039, 1
  %v6335 = vsel %vm1772, %v6333, %v6334
  %v6336 = vrot.slane %v6296, 1
  %v6337 = vrot.slane %v6040, 1
  %v6338 = vsel %vm1772, %v6336, %v6337
  %v6339 = vrot.slane %v6297, 1
  %v6340 = vrot.slane %v6041, 1
  %v6341 = vsel %vm1772, %v6339, %v6340
  %v6342 = vrot.slane %v6298, 1
  %v6343 = vrot.slane %v6042, 1
  %v6344 = vsel %vm1772, %v6342, %v6343
  %v6345 = vrot.slane %v6299, 1
  %v6346 = vrot.slane %v6043, 1
  %v6347 = vsel %vm1772, %v6345, %v6346
  %s6364 = scalar_lea.vmem %s6, 192
  %v6365 = vld [vmem:[%s6364] sm:$0xf]
  %v6366 = vld [vmem:[%s6364 + $0x4] sm:$0xf]
  %v6367 = vld [vmem:[%s6364 + $0x8] sm:$0xf]
  %v6368 = vld [vmem:[%s6364 + $0xc] sm:$0xf]
  %v6369 = vld [vmem:[%s6364 + $0x10] sm:$0xf]
  %v6370 = vld [vmem:[%s6364 + $0x14] sm:$0xf]
  %v6371 = vld [vmem:[%s6364 + $0x18] sm:$0xf]
  %v6372 = vld [vmem:[%s6364 + $0x1c] sm:$0xf]
  %v6373 = vld [vmem:[%s6364 + $0x20] sm:$0xf]
  %v6374 = vld [vmem:[%s6364 + $0x24] sm:$0xf]
  %v6375 = vld [vmem:[%s6364 + $0x28] sm:$0xf]
  %v6376 = vld [vmem:[%s6364 + $0x2c] sm:$0xf]
  %v6377 = vld [vmem:[%s6364 + $0x30] sm:$0xf]
  %v6378 = vld [vmem:[%s6364 + $0x34] sm:$0xf]
  %v6379 = vld [vmem:[%s6364 + $0x38] sm:$0xf]
  %v6380 = vld [vmem:[%s6364 + $0x3c] sm:$0xf]
  %v6381 = vld [vmem:[%s6364 + $0x40] sm:$0xf]
  %v6382 = vld [vmem:[%s6364 + $0x44] sm:$0xf]
  %v6383 = vld [vmem:[%s6364 + $0x48] sm:$0xf]
  %v6384 = vld [vmem:[%s6364 + $0x4c] sm:$0xf]
  %v6385 = vld [vmem:[%s6364 + $0x50] sm:$0xf]
  %v6386 = vld [vmem:[%s6364 + $0x54] sm:$0xf]
  %v6387 = vld [vmem:[%s6364 + $0x58] sm:$0xf]
  %v6388 = vld [vmem:[%s6364 + $0x5c] sm:$0xf]
  %v6389 = vld [vmem:[%s6364 + $0x60] sm:$0xf]
  %v6390 = vld [vmem:[%s6364 + $0x64] sm:$0xf]
  %v6391 = vld [vmem:[%s6364 + $0x68] sm:$0xf]
  %v6392 = vld [vmem:[%s6364 + $0x6c] sm:$0xf]
  %v6393 = vld [vmem:[%s6364 + $0x70] sm:$0xf]
  %v6394 = vld [vmem:[%s6364 + $0x74] sm:$0xf]
  %v6395 = vld [vmem:[%s6364 + $0x78] sm:$0xf]
  %v6396 = vld [vmem:[%s6364 + $0x7c] sm:$0xf]
  %v6397 = vld [vmem:[%s6364 + $0x80] sm:$0xf]
  %v6398 = vld [vmem:[%s6364 + $0x84] sm:$0xf]
  %v6399 = vld [vmem:[%s6364 + $0x88] sm:$0xf]
  %v6400 = vld [vmem:[%s6364 + $0x8c] sm:$0xf]
  %v6401 = vld [vmem:[%s6364 + $0x90] sm:$0xf]
  %v6402 = vld [vmem:[%s6364 + $0x94] sm:$0xf]
  %v6403 = vld [vmem:[%s6364 + $0x98] sm:$0xf]
  %v6404 = vld [vmem:[%s6364 + $0x9c] sm:$0xf]
  %v6405 = vld [vmem:[%s6364 + $0xa0] sm:$0xf]
  %v6406 = vld [vmem:[%s6364 + $0xa4] sm:$0xf]
  %v6407 = vld [vmem:[%s6364 + $0xa8] sm:$0xf]
  %v6408 = vld [vmem:[%s6364 + $0xac] sm:$0xf]
  %v6409 = vld [vmem:[%s6364 + $0xb0] sm:$0xf]
  %v6410 = vld [vmem:[%s6364 + $0xb4] sm:$0xf]
  %v6411 = vld [vmem:[%s6364 + $0xb8] sm:$0xf]
  %v6412 = vld [vmem:[%s6364 + $0xbc] sm:$0xf]
  %v6461 = vunpack.c.l.b16 %v6365
  %v6462 = vunpack.c.l.b16 %v6366
  %v6463 = vunpack.c.l.b16 %v6367
  %v6464 = vunpack.c.l.b16 %v6368
  %v6465 = vunpack.c.l.b16 %v6369
  %v6466 = vunpack.c.l.b16 %v6370
  %v6467 = vunpack.c.l.b16 %v6371
  %v6468 = vunpack.c.l.b16 %v6372
  %v6469 = vunpack.c.l.b16 %v6373
  %v6470 = vunpack.c.l.b16 %v6374
  %v6471 = vunpack.c.l.b16 %v6375
  %v6472 = vunpack.c.l.b16 %v6376
  %v6473 = vunpack.c.l.b16 %v6377
  %v6474 = vunpack.c.l.b16 %v6378
  %v6475 = vunpack.c.l.b16 %v6379
  %v6476 = vunpack.c.l.b16 %v6380
  %v6477 = vunpack.c.l.b16 %v6381
  %v6478 = vunpack.c.l.b16 %v6382
  %v6479 = vunpack.c.l.b16 %v6383
  %v6480 = vunpack.c.l.b16 %v6384
  %v6481 = vunpack.c.l.b16 %v6385
  %v6482 = vunpack.c.l.b16 %v6386
  %v6483 = vunpack.c.l.b16 %v6387
  %v6484 = vunpack.c.l.b16 %v6388
  %v6485 = vunpack.c.l.b16 %v6389
  %v6486 = vunpack.c.l.b16 %v6390
  %v6487 = vunpack.c.l.b16 %v6391
  %v6488 = vunpack.c.l.b16 %v6392
  %v6489 = vunpack.c.l.b16 %v6393
  %v6490 = vunpack.c.l.b16 %v6394
  %v6491 = vunpack.c.l.b16 %v6395
  %v6492 = vunpack.c.l.b16 %v6396
  %v6493 = vunpack.c.l.b16 %v6397
  %v6494 = vunpack.c.l.b16 %v6398
  %v6495 = vunpack.c.l.b16 %v6399
  %v6496 = vunpack.c.l.b16 %v6400
  %v6497 = vunpack.c.l.b16 %v6401
  %v6498 = vunpack.c.l.b16 %v6402
  %v6499 = vunpack.c.l.b16 %v6403
  %v6500 = vunpack.c.l.b16 %v6404
  %v6501 = vunpack.c.l.b16 %v6405
  %v6502 = vunpack.c.l.b16 %v6406
  %v6503 = vunpack.c.l.b16 %v6407
  %v6504 = vunpack.c.l.b16 %v6408
  %v6505 = vunpack.c.l.b16 %v6409
  %v6506 = vunpack.c.l.b16 %v6410
  %v6507 = vunpack.c.l.b16 %v6411
  %v6508 = vunpack.c.l.b16 %v6412
  %v6509 = vpack.c.b16 %v6462, %v6461
  %v6510 = vpack.c.b16 %v6464, %v6463
  %v6511 = vpack.c.b16 %v6466, %v6465
  %v6512 = vpack.c.b16 %v6468, %v6467
  %v6513 = vpack.c.b16 %v6470, %v6469
  %v6514 = vpack.c.b16 %v6472, %v6471
  %v6515 = vpack.c.b16 %v6474, %v6473
  %v6516 = vpack.c.b16 %v6476, %v6475
  %v6517 = vpack.c.b16 %v6478, %v6477
  %v6518 = vpack.c.b16 %v6480, %v6479
  %v6519 = vpack.c.b16 %v6482, %v6481
  %v6520 = vpack.c.b16 %v6484, %v6483
  %v6521 = vpack.c.b16 %v6486, %v6485
  %v6522 = vpack.c.b16 %v6488, %v6487
  %v6523 = vpack.c.b16 %v6490, %v6489
  %v6524 = vpack.c.b16 %v6492, %v6491
  %v6525 = vpack.c.b16 %v6494, %v6493
  %v6526 = vpack.c.b16 %v6496, %v6495
  %v6527 = vpack.c.b16 %v6498, %v6497
  %v6528 = vpack.c.b16 %v6500, %v6499
  %v6529 = vpack.c.b16 %v6502, %v6501
  %v6530 = vpack.c.b16 %v6504, %v6503
  %v6531 = vpack.c.b16 %v6506, %v6505
  %v6532 = vpack.c.b16 %v6508, %v6507
  %6557 = vmatprep.subr.bf16.mxu0 0
  %6558 = vmatpush1.bf16.msra.mxu0 %v6509
  %6559 = vmatprep.subr.bf16.mxu0 0
  %6560 = vmatpush1.bf16.msra.mxu0 %v6510
  %6561 = vmatprep.subr.bf16.mxu0 0
  %6562 = vmatpush1.bf16.msra.mxu0 %v6511
  %6563 = vmatprep.subr.bf16.mxu0 0
  %6564 = vmatpush1.bf16.msra.mxu0 %v6512
  %6565 = vmatprep.subr.bf16.mxu0 0
  %6566 = vmatpush1.bf16.msra.mxu0 %v6513
  %6567 = vmatprep.subr.bf16.mxu0 0
  %6568 = vmatpush1.bf16.msra.mxu0 %v6514
  %6569 = vmatprep.subr.bf16.mxu0 0
  %6570 = vmatpush1.bf16.msra.mxu0 %v6515
  %6571 = vmatprep.subr.bf16.mxu0 0
  %6572 = vmatpush1.bf16.msra.mxu0 %v6516
  %6573 = vmatprep.subr.bf16.mxu0 0
  %6574 = vmatpush1.bf16.msra.mxu0 %v6517
  %6575 = vmatprep.subr.bf16.mxu0 0
  %6576 = vmatpush1.bf16.msra.mxu0 %v6518
  %6577 = vmatprep.subr.bf16.mxu0 0
  %6578 = vmatpush1.bf16.msra.mxu0 %v6519
  %6579 = vmatprep.subr.bf16.mxu0 0
  %6580 = vmatpush1.bf16.msra.mxu0 %v6520
  %6581 = vmatprep.subr.bf16.mxu0 0
  %6582 = vmatpush1.bf16.msra.mxu0 %v6521
  %6583 = vmatprep.subr.bf16.mxu0 0
  %6584 = vmatpush1.bf16.msra.mxu0 %v6522
  %6585 = vmatprep.subr.bf16.mxu0 0
  %6586 = vmatpush1.bf16.msra.mxu0 %v6523
  %6587 = vmatprep.subr.bf16.mxu0 0
  %6588 = vmatpush1.bf16.msra.mxu0 %v6524
  %6589 = vmatprep.mubr.bf16.mxu0 %v6055
  %6590 = vmatmul.mubr.bf16.gmra.mrb[0].mxu0 %v5964
  %v6591 = vpop.f32.mrb[0].mxu0
  %v6592 = vadd.f32 0.0, %v6591
  %v6593 = vpop.f32.mrb[0].mxu0
  %v6594 = vpop.f32.mrb[0].mxu0
  %v6595 = vadd.f32 0.0, %v6594
  %v6596 = vpop.f32.mrb[0].mxu0
  %6597 = vmatprep.mubr.bf16.mxu0 %v6067
  %6598 = vmatmul.mubr.bf16.gmra.mrb[0].mxu0 %v5965
  %v6599 = vpop.f32.mrb[0].mxu0
  %v6600 = vadd.f32 0.0, %v6599
  %v6601 = vpop.f32.mrb[0].mxu0
  %v6602 = vpop.f32.mrb[0].mxu0
  %v6603 = vadd.f32 0.0, %v6602
  %v6604 = vpop.f32.mrb[0].mxu0
  %6605 = vmatprep.mubr.bf16.mxu0 %v6079
  %6606 = vmatmul.mubr.bf16.gmra.mrb[0].mxu0 %v5966
  %v6607 = vpop.f32.mrb[0].mxu0
  %v6608 = vadd.f32 0.0, %v6607
  %v6609 = vpop.f32.mrb[0].mxu0
  %v6610 = vpop.f32.mrb[0].mxu0
  %v6611 = vadd.f32 0.0, %v6610
  %v6612 = vpop.f32.mrb[0].mxu0
  %6613 = vmatprep.mubr.bf16.mxu0 %v6091
  %6614 = vmatmul.mubr.bf16.gmra.mrb[0].mxu0 %v5967
  %v6615 = vpop.f32.mrb[0].mxu0
  %v6616 = vadd.f32 0.0, %v6615
  %v6617 = vpop.f32.mrb[0].mxu0
  %v6618 = vpop.f32.mrb[0].mxu0
  %v6619 = vadd.f32 0.0, %v6618
  %v6620 = vpop.f32.mrb[0].mxu0
  %6621 = vmatprep.mubr.bf16.mxu0 %v6103
  %6622 = vmatmul.mubr.bf16.gmra.mrb[0].mxu0 %v5968
  %v6623 = vpop.f32.mrb[0].mxu0
  %v6624 = vadd.f32 0.0, %v6623
  %v6625 = vpop.f32.mrb[0].mxu0
  %v6626 = vpop.f32.mrb[0].mxu0
  %v6627 = vadd.f32 0.0, %v6626
  %v6628 = vpop.f32.mrb[0].mxu0
  %6629 = vmatprep.mubr.bf16.mxu0 %v6115
  %6630 = vmatmul.mubr.bf16.gmra.mrb[0].mxu0 %v5969
  %v6631 = vpop.f32.mrb[0].mxu0
  %v6632 = vadd.f32 0.0, %v6631
  %v6633 = vpop.f32.mrb[0].mxu0
  %v6634 = vpop.f32.mrb[0].mxu0
  %v6635 = vadd.f32 0.0, %v6634
  %v6636 = vpop.f32.mrb[0].mxu0
  %6637 = vmatprep.mubr.bf16.mxu0 %v6127
  %6638 = vmatmul.mubr.bf16.gmra.mrb[0].mxu0 %v5970
  %v6639 = vpop.f32.mrb[0].mxu0
  %v6640 = vadd.f32 0.0, %v6639
  %v6641 = vpop.f32.mrb[0].mxu0
  %v6642 = vpop.f32.mrb[0].mxu0
  %v6643 = vadd.f32 0.0, %v6642
  %v6644 = vpop.f32.mrb[0].mxu0
  %6645 = vmatprep.mubr.bf16.mxu0 %v6139
  %6646 = vmatmul.mubr.bf16.gmra.mrb[0].mxu0 %v5971
  %v6647 = vpop.f32.mrb[0].mxu0
  %v6648 = vadd.f32 0.0, %v6647
  %v6649 = vpop.f32.mrb[0].mxu0
  %v6650 = vpop.f32.mrb[0].mxu0
  %v6651 = vadd.f32 0.0, %v6650
  %v6652 = vpop.f32.mrb[0].mxu0
  %6653 = vmatprep.mubr.bf16.mxu0 %v6151
  %6654 = vmatmul.mubr.bf16.gmra.mrb[0].mxu0 %v5972
  %v6655 = vpop.f32.mrb[0].mxu0
  %v6656 = vadd.f32 0.0, %v6655
  %v6657 = vpop.f32.mrb[0].mxu0
  %v6658 = vpop.f32.mrb[0].mxu0
  %v6659 = vadd.f32 0.0, %v6658
  %v6660 = vpop.f32.mrb[0].mxu0
  %6661 = vmatprep.mubr.bf16.mxu0 %v6163
  %6662 = vmatmul.mubr.bf16.gmra.mrb[0].mxu0 %v5973
  %v6663 = vpop.f32.mrb[0].mxu0
  %v6664 = vadd.f32 0.0, %v6663
  %v6665 = vpop.f32.mrb[0].mxu0
  %v6666 = vpop.f32.mrb[0].mxu0
  %v6667 = vadd.f32 0.0, %v6666
  %v6668 = vpop.f32.mrb[0].mxu0
  %6669 = vmatprep.mubr.bf16.mxu0 %v6175
  %6670 = vmatmul.mubr.bf16.gmra.mrb[0].mxu0 %v5974
  %v6671 = vpop.f32.mrb[0].mxu0
  %v6672 = vadd.f32 0.0, %v6671
  %v6673 = vpop.f32.mrb[0].mxu0
  %v6674 = vpop.f32.mrb[0].mxu0
  %v6675 = vadd.f32 0.0, %v6674
  %v6676 = vpop.f32.mrb[0].mxu0
  %6677 = vmatprep.mubr.bf16.mxu0 %v6187
  %6678 = vmatmul.mubr.bf16.gmra.mrb[0].mxu0 %v5975
  %v6679 = vpop.f32.mrb[0].mxu0
  %v6680 = vadd.f32 0.0, %v6679
  %v6681 = vpop.f32.mrb[0].mxu0
  %v6682 = vpop.f32.mrb[0].mxu0
  %v6683 = vadd.f32 0.0, %v6682
  %v6684 = vpop.f32.mrb[0].mxu0
  %6685 = vmatprep.mubr.bf16.mxu0 %v6199
  %6686 = vmatmul.mubr.bf16.gmra.mrb[0].mxu0 %v5976
  %v6687 = vpop.f32.mrb[0].mxu0
  %v6688 = vadd.f32 0.0, %v6687
  %v6689 = vpop.f32.mrb[0].mxu0
  %v6690 = vpop.f32.mrb[0].mxu0
  %v6691 = vadd.f32 0.0, %v6690
  %v6692 = vpop.f32.mrb[0].mxu0
  %6693 = vmatprep.mubr.bf16.mxu0 %v6211
  %6694 = vmatmul.mubr.bf16.gmra.mrb[0].mxu0 %v5977
  %v6695 = vpop.f32.mrb[0].mxu0
  %v6696 = vadd.f32 0.0, %v6695
  %v6697 = vpop.f32.mrb[0].mxu0
  %v6698 = vpop.f32.mrb[0].mxu0
  %v6699 = vadd.f32 0.0, %v6698
  %v6700 = vpop.f32.mrb[0].mxu0
  %6701 = vmatprep.mubr.bf16.mxu0 %v6223
  %6702 = vmatmul.mubr.bf16.gmra.mrb[0].mxu0 %v5978
  %v6703 = vpop.f32.mrb[0].mxu0
  %v6704 = vadd.f32 0.0, %v6703
  %v6705 = vpop.f32.mrb[0].mxu0
  %v6706 = vpop.f32.mrb[0].mxu0
  %v6707 = vadd.f32 0.0, %v6706
  %v6708 = vpop.f32.mrb[0].mxu0
  %6709 = vmatprep.mubr.bf16.mxu0 %v6235
  %6710 = vmatmul.mubr.bf16.gmra.mrb[0].mxu0 %v5979
  %v6711 = vpop.f32.mrb[0].mxu0
  %v6712 = vadd.f32 0.0, %v6711
  %v6713 = vpop.f32.mrb[0].mxu0
  %v6714 = vpop.f32.mrb[0].mxu0
  %v6715 = vadd.f32 0.0, %v6714
  %v6716 = vpop.f32.mrb[0].mxu0
  %6717 = vdwg.mxu0
  %6718 = vmatprep.subr.bf16.mxu0 0
  %6719 = vmatpush1.bf16.msra.mxu0 %v6525
  %6720 = vmatprep.subr.bf16.mxu0 0
  %6721 = vmatpush1.bf16.msra.mxu0 %v6526
  %6722 = vmatprep.subr.bf16.mxu0 0
  %6723 = vmatpush1.bf16.msra.mxu0 %v6527
  %6724 = vmatprep.subr.bf16.mxu0 0
  %6725 = vmatpush1.bf16.msra.mxu0 %v6528
  %6726 = vmatprep.subr.bf16.mxu0 0
  %6727 = vmatpush1.bf16.msra.mxu0 %v6529
  %6728 = vmatprep.subr.bf16.mxu0 0
  %6729 = vmatpush1.bf16.msra.mxu0 %v6530
  %6730 = vmatprep.subr.bf16.mxu0 0
  %6731 = vmatpush1.bf16.msra.mxu0 %v6531
  %6732 = vmatprep.subr.bf16.mxu0 0
  %6733 = vmatpush1.bf16.msra.mxu0 %v6532
  %6734 = vmatprep.subr.bf16.mxu0 0
  %6735 = vmatpush1.bf16.msra.mxu0 0
  %6736 = vmatprep.subr.bf16.mxu0 0
  %6737 = vmatpush1.bf16.msra.mxu0 0
  %6738 = vmatprep.subr.bf16.mxu0 0
  %6739 = vmatpush1.bf16.msra.mxu0 0
  %6740 = vmatprep.subr.bf16.mxu0 0
  %6741 = vmatpush1.bf16.msra.mxu0 0
  %6742 = vmatprep.subr.bf16.mxu0 0
  %6743 = vmatpush1.bf16.msra.mxu0 0
  %6744 = vmatprep.subr.bf16.mxu0 0
  %6745 = vmatpush1.bf16.msra.mxu0 0
  %6746 = vmatprep.subr.bf16.mxu0 0
  %6747 = vmatpush1.bf16.msra.mxu0 0
  %6748 = vmatprep.subr.bf16.mxu0 0
  %6749 = vmatpush1.bf16.msra.mxu0 0
  %6750 = vmatprep.mubr.bf16.mxu0 0
  %6751 = vmatmul.mubr.bf16.gmra.mrb[0].mxu0 %v6302
  %v6752 = vpop.f32.mrb[0].mxu0
  %v6753 = vadd.f32 %v6592, %v6752
  %v6754 = vpop.f32.mrb[0].mxu0
  %v6755 = vpop.f32.mrb[0].mxu0
  %v6756 = vadd.f32 %v6595, %v6755
  %v6757 = vpop.f32.mrb[0].mxu0
  %6758 = vmatprep.mubr.bf16.mxu0 0
  %6759 = vmatmul.mubr.bf16.gmra.mrb[0].mxu0 %v6305
  %v6760 = vpop.f32.mrb[0].mxu0
  %v6761 = vadd.f32 %v6600, %v6760
  %v6762 = vpop.f32.mrb[0].mxu0
  %v6763 = vpop.f32.mrb[0].mxu0
  %v6764 = vadd.f32 %v6603, %v6763
  %v6765 = vpop.f32.mrb[0].mxu0
  %6766 = vmatprep.mubr.bf16.mxu0 0
  %6767 = vmatmul.mubr.bf16.gmra.mrb[0].mxu0 %v6308
  %v6768 = vpop.f32.mrb[0].mxu0
  %v6769 = vadd.f32 %v6608, %v6768
  %v6770 = vpop.f32.mrb[0].mxu0
  %v6771 = vpop.f32.mrb[0].mxu0
  %v6772 = vadd.f32 %v6611, %v6771
  %v6773 = vpop.f32.mrb[0].mxu0
  %6774 = vmatprep.mubr.bf16.mxu0 0
  %6775 = vmatmul.mubr.bf16.gmra.mrb[0].mxu0 %v6311
  %v6776 = vpop.f32.mrb[0].mxu0
  %v6777 = vadd.f32 %v6616, %v6776
  %v6778 = vpop.f32.mrb[0].mxu0
  %v6779 = vpop.f32.mrb[0].mxu0
  %v6780 = vadd.f32 %v6619, %v6779
  %v6781 = vpop.f32.mrb[0].mxu0
  %6782 = vmatprep.mubr.bf16.mxu0 0
  %6783 = vmatmul.mubr.bf16.gmra.mrb[0].mxu0 %v6314
  %v6784 = vpop.f32.mrb[0].mxu0
  %v6785 = vadd.f32 %v6624, %v6784
  %v6786 = vpop.f32.mrb[0].mxu0
  %v6787 = vpop.f32.mrb[0].mxu0
  %v6788 = vadd.f32 %v6627, %v6787
  %v6789 = vpop.f32.mrb[0].mxu0
  %6790 = vmatprep.mubr.bf16.mxu0 0
  %6791 = vmatmul.mubr.bf16.gmra.mrb[0].mxu0 %v6317
  %v6792 = vpop.f32.mrb[0].mxu0
  %v6793 = vadd.f32 %v6632, %v6792
  %v6794 = vpop.f32.mrb[0].mxu0
  %v6795 = vpop.f32.mrb[0].mxu0
  %v6796 = vadd.f32 %v6635, %v6795
  %v6797 = vpop.f32.mrb[0].mxu0
  %6798 = vmatprep.mubr.bf16.mxu0 0
  %6799 = vmatmul.mubr.bf16.gmra.mrb[0].mxu0 %v6320
  %v6800 = vpop.f32.mrb[0].mxu0
  %v6801 = vadd.f32 %v6640, %v6800
  %v6802 = vpop.f32.mrb[0].mxu0
  %v6803 = vpop.f32.mrb[0].mxu0
  %v6804 = vadd.f32 %v6643, %v6803
  %v6805 = vpop.f32.mrb[0].mxu0
  %6806 = vmatprep.mubr.bf16.mxu0 0
  %6807 = vmatmul.mubr.bf16.gmra.mrb[0].mxu0 %v6323
  %v6808 = vpop.f32.mrb[0].mxu0
  %v6809 = vadd.f32 %v6648, %v6808
  %v6810 = vpop.f32.mrb[0].mxu0
  %v6811 = vpop.f32.mrb[0].mxu0
  %v6812 = vadd.f32 %v6651, %v6811
  %v6813 = vpop.f32.mrb[0].mxu0
  %6814 = vmatprep.mubr.bf16.mxu0 0
  %6815 = vmatmul.mubr.bf16.gmra.mrb[0].mxu0 %v6326
  %v6816 = vpop.f32.mrb[0].mxu0
  %v6817 = vadd.f32 %v6656, %v6816
  %v6818 = vpop.f32.mrb[0].mxu0
  %v6819 = vpop.f32.mrb[0].mxu0
  %v6820 = vadd.f32 %v6659, %v6819
  %v6821 = vpop.f32.mrb[0].mxu0
  %6822 = vmatprep.mubr.bf16.mxu0 0
  %6823 = vmatmul.mubr.bf16.gmra.mrb[0].mxu0 %v6329
  %v6824 = vpop.f32.mrb[0].mxu0
  %v6825 = vadd.f32 %v6664, %v6824
  %v6826 = vpop.f32.mrb[0].mxu0
  %v6827 = vpop.f32.mrb[0].mxu0
  %v6828 = vadd.f32 %v6667, %v6827
  %v6829 = vpop.f32.mrb[0].mxu0
  %6830 = vmatprep.mubr.bf16.mxu0 0
  %6831 = vmatmul.mubr.bf16.gmra.mrb[0].mxu0 %v6332
  %v6832 = vpop.f32.mrb[0].mxu0
  %v6833 = vadd.f32 %v6672, %v6832
  %v6834 = vpop.f32.mrb[0].mxu0
  %v6835 = vpop.f32.mrb[0].mxu0
  %v6836 = vadd.f32 %v6675, %v6835
  %v6837 = vpop.f32.mrb[0].mxu0
  %6838 = vmatprep.mubr.bf16.mxu0 0
  %6839 = vmatmul.mubr.bf16.gmra.mrb[0].mxu0 %v6335
  %v6840 = vpop.f32.mrb[0].mxu0
  %v6841 = vadd.f32 %v6680, %v6840
  %v6842 = vpop.f32.mrb[0].mxu0
  %v6843 = vpop.f32.mrb[0].mxu0
  %v6844 = vadd.f32 %v6683, %v6843
  %v6845 = vpop.f32.mrb[0].mxu0
  %6846 = vmatprep.mubr.bf16.mxu0 0
  %6847 = vmatmul.mubr.bf16.gmra.mrb[0].mxu0 %v6338
  %v6848 = vpop.f32.mrb[0].mxu0
  %v6849 = vadd.f32 %v6688, %v6848
  %v6850 = vpop.f32.mrb[0].mxu0
  %v6851 = vpop.f32.mrb[0].mxu0
  %v6852 = vadd.f32 %v6691, %v6851
  %v6853 = vpop.f32.mrb[0].mxu0
  %6854 = vmatprep.mubr.bf16.mxu0 0
  %6855 = vmatmul.mubr.bf16.gmra.mrb[0].mxu0 %v6341
  %v6856 = vpop.f32.mrb[0].mxu0
  %v6857 = vadd.f32 %v6696, %v6856
  %v6858 = vpop.f32.mrb[0].mxu0
  %v6859 = vpop.f32.mrb[0].mxu0
  %v6860 = vadd.f32 %v6699, %v6859
  %v6861 = vpop.f32.mrb[0].mxu0
  %6862 = vmatprep.mubr.bf16.mxu0 0
  %6863 = vmatmul.mubr.bf16.gmra.mrb[0].mxu0 %v6344
  %v6864 = vpop.f32.mrb[0].mxu0
  %v6865 = vadd.f32 %v6704, %v6864
  %v6866 = vpop.f32.mrb[0].mxu0
  %v6867 = vpop.f32.mrb[0].mxu0
  %v6868 = vadd.f32 %v6707, %v6867
  %v6869 = vpop.f32.mrb[0].mxu0
  %6870 = vmatprep.mubr.bf16.mxu0 0
  %6871 = vmatmul.mubr.bf16.gmra.mrb[0].mxu0 %v6347
  %v6872 = vpop.f32.mrb[0].mxu0
  %v6873 = vadd.f32 %v6712, %v6872
  %v6874 = vpop.f32.mrb[0].mxu0
  %v6875 = vpop.f32.mrb[0].mxu0
  %v6876 = vadd.f32 %v6715, %v6875
  %v6877 = vpop.f32.mrb[0].mxu0
  %6878 = vdwg.mxu0
  %v6927 = vunpack.c.l.b16 %v5788
  %v6928 = vunpack.c.l.b16 %v5789
  %v6929 = vunpack.c.l.b16 %v5790
  %v6930 = vunpack.c.l.b16 %v5791
  %v6931 = vunpack.c.l.b16 %v5792
  %v6932 = vunpack.c.l.b16 %v5793
  %v6933 = vunpack.c.l.b16 %v5794
  %v6934 = vunpack.c.l.b16 %v5795
  %v6935 = vunpack.c.l.b16 %v5796
  %v6936 = vunpack.c.l.b16 %v5797
  %v6937 = vunpack.c.l.b16 %v5798
  %v6938 = vunpack.c.l.b16 %v5799
  %v6939 = vunpack.c.l.b16 %v5800
  %v6940 = vunpack.c.l.b16 %v5801
  %v6941 = vunpack.c.l.b16 %v5802
  %v6942 = vunpack.c.l.b16 %v5803
  %v6943 = vunpack.c.l.b16 %v5804
  %v6944 = vunpack.c.l.b16 %v5805
  %v6945 = vunpack.c.l.b16 %v5806
  %v6946 = vunpack.c.l.b16 %v5807
  %v6947 = vunpack.c.l.b16 %v5808
  %v6948 = vunpack.c.l.b16 %v5809
  %v6949 = vunpack.c.l.b16 %v5810
  %v6950 = vunpack.c.l.b16 %v5811
  %v6951 = vunpack.c.l.b16 %v5812
  %v6952 = vunpack.c.l.b16 %v5813
  %v6953 = vunpack.c.l.b16 %v5814
  %v6954 = vunpack.c.l.b16 %v5815
  %v6955 = vunpack.c.l.b16 %v5816
  %v6956 = vunpack.c.l.b16 %v5817
  %v6957 = vunpack.c.l.b16 %v5818
  %v6958 = vunpack.c.l.b16 %v5819
  %v6959 = vunpack.c.l.b16 %v5820
  %v6960 = vunpack.c.l.b16 %v5821
  %v6961 = vunpack.c.l.b16 %v5822
  %v6962 = vunpack.c.l.b16 %v5823
  %v6963 = vunpack.c.l.b16 %v5824
  %v6964 = vunpack.c.l.b16 %v5825
  %v6965 = vunpack.c.l.b16 %v5826
  %v6966 = vunpack.c.l.b16 %v5827
  %v6967 = vunpack.c.l.b16 %v5828
  %v6968 = vunpack.c.l.b16 %v5829
  %v6969 = vunpack.c.l.b16 %v5830
  %v6970 = vunpack.c.l.b16 %v5831
  %v6971 = vunpack.c.l.b16 %v5832
  %v6972 = vunpack.c.l.b16 %v5833
  %v6973 = vunpack.c.l.b16 %v5834
  %v6974 = vunpack.c.l.b16 %v5835
  %v6975 = vpack.c.b16 %v6928, %v6927
  %v6976 = vpack.c.b16 %v6930, %v6929
  %v6977 = vpack.c.b16 %v6932, %v6931
  %v6978 = vpack.c.b16 %v6934, %v6933
  %v6979 = vpack.c.b16 %v6936, %v6935
  %v6980 = vpack.c.b16 %v6938, %v6937
  %v6981 = vpack.c.b16 %v6940, %v6939
  %v6982 = vpack.c.b16 %v6942, %v6941
  %v6983 = vpack.c.b16 %v6944, %v6943
  %v6984 = vpack.c.b16 %v6946, %v6945
  %v6985 = vpack.c.b16 %v6948, %v6947
  %v6986 = vpack.c.b16 %v6950, %v6949
  %v6987 = vpack.c.b16 %v6952, %v6951
  %v6988 = vpack.c.b16 %v6954, %v6953
  %v6989 = vpack.c.b16 %v6956, %v6955
  %v6990 = vpack.c.b16 %v6958, %v6957
  %v6991 = vpack.c.b16 %v6960, %v6959
  %v6992 = vpack.c.b16 %v6962, %v6961
  %v6993 = vpack.c.b16 %v6964, %v6963
  %v6994 = vpack.c.b16 %v6966, %v6965
  %v6995 = vpack.c.b16 %v6968, %v6967
  %v6996 = vpack.c.b16 %v6970, %v6969
  %v6997 = vpack.c.b16 %v6972, %v6971
  %v6998 = vpack.c.b16 %v6974, %v6973
  %7023 = vmatprep.subr.bf16.mxu0 0
  %7024 = vmatpush1.bf16.msra.mxu0 %v6975
  %7025 = vmatprep.subr.bf16.mxu0 0
  %7026 = vmatpush1.bf16.msra.mxu0 %v6976
  %7027 = vmatprep.subr.bf16.mxu0 0
  %7028 = vmatpush1.bf16.msra.mxu0 %v6977
  %7029 = vmatprep.subr.bf16.mxu0 0
  %7030 = vmatpush1.bf16.msra.mxu0 %v6978
  %7031 = vmatprep.subr.bf16.mxu0 0
  %7032 = vmatpush1.bf16.msra.mxu0 %v6979
  %7033 = vmatprep.subr.bf16.mxu0 0
  %7034 = vmatpush1.bf16.msra.mxu0 %v6980
  %7035 = vmatprep.subr.bf16.mxu0 0
  %7036 = vmatpush1.bf16.msra.mxu0 %v6981
  %7037 = vmatprep.subr.bf16.mxu0 0
  %7038 = vmatpush1.bf16.msra.mxu0 %v6982
  %7039 = vmatprep.subr.bf16.mxu0 0
  %7040 = vmatpush1.bf16.msra.mxu0 %v6983
  %7041 = vmatprep.subr.bf16.mxu0 0
  %7042 = vmatpush1.bf16.msra.mxu0 %v6984
  %7043 = vmatprep.subr.bf16.mxu0 0
  %7044 = vmatpush1.bf16.msra.mxu0 %v6985
  %7045 = vmatprep.subr.bf16.mxu0 0
  %7046 = vmatpush1.bf16.msra.mxu0 %v6986
  %7047 = vmatprep.subr.bf16.mxu0 0
  %7048 = vmatpush1.bf16.msra.mxu0 %v6987
  %7049 = vmatprep.subr.bf16.mxu0 0
  %7050 = vmatpush1.bf16.msra.mxu0 %v6988
  %7051 = vmatprep.subr.bf16.mxu0 0
  %7052 = vmatpush1.bf16.msra.mxu0 %v6989
  %7053 = vmatprep.subr.bf16.mxu0 0
  %7054 = vmatpush1.bf16.msra.mxu0 %v6990
  %7055 = vmatprep.mubr.bf16.mxu0 %v5479
  %7056 = vmatmul.mubr.bf16.gmra.mrb[0].mxu0 %v5388
  %v7057 = vpop.f32.mrb[0].mxu0
  %v7058 = vadd.f32 %v6753, %v7057
  %v7059 = vpop.f32.mrb[0].mxu0
  %v7060 = vpop.f32.mrb[0].mxu0
  %v7061 = vadd.f32 %v6756, %v7060
  %v7062 = vpop.f32.mrb[0].mxu0
  %7063 = vmatprep.mubr.bf16.mxu0 %v5491
  %7064 = vmatmul.mubr.bf16.gmra.mrb[0].mxu0 %v5389
  %v7065 = vpop.f32.mrb[0].mxu0
  %v7066 = vadd.f32 %v6761, %v7065
  %v7067 = vpop.f32.mrb[0].mxu0
  %v7068 = vpop.f32.mrb[0].mxu0
  %v7069 = vadd.f32 %v6764, %v7068
  %v7070 = vpop.f32.mrb[0].mxu0
  %7071 = vmatprep.mubr.bf16.mxu0 %v5503
  %7072 = vmatmul.mubr.bf16.gmra.mrb[0].mxu0 %v5390
  %v7073 = vpop.f32.mrb[0].mxu0
  %v7074 = vadd.f32 %v6769, %v7073
  %v7075 = vpop.f32.mrb[0].mxu0
  %v7076 = vpop.f32.mrb[0].mxu0
  %v7077 = vadd.f32 %v6772, %v7076
  %v7078 = vpop.f32.mrb[0].mxu0
  %7079 = vmatprep.mubr.bf16.mxu0 %v5515
  %7080 = vmatmul.mubr.bf16.gmra.mrb[0].mxu0 %v5391
  %v7081 = vpop.f32.mrb[0].mxu0
  %v7082 = vadd.f32 %v6777, %v7081
  %v7083 = vpop.f32.mrb[0].mxu0
  %v7084 = vpop.f32.mrb[0].mxu0
  %v7085 = vadd.f32 %v6780, %v7084
  %v7086 = vpop.f32.mrb[0].mxu0
  %7087 = vmatprep.mubr.bf16.mxu0 %v5527
  %7088 = vmatmul.mubr.bf16.gmra.mrb[0].mxu0 %v5392
  %v7089 = vpop.f32.mrb[0].mxu0
  %v7090 = vadd.f32 %v6785, %v7089
  %v7091 = vpop.f32.mrb[0].mxu0
  %v7092 = vpop.f32.mrb[0].mxu0
  %v7093 = vadd.f32 %v6788, %v7092
  %v7094 = vpop.f32.mrb[0].mxu0
  %7095 = vmatprep.mubr.bf16.mxu0 %v5539
  %7096 = vmatmul.mubr.bf16.gmra.mrb[0].mxu0 %v5393
  %v7097 = vpop.f32.mrb[0].mxu0
  %v7098 = vadd.f32 %v6793, %v7097
  %v7099 = vpop.f32.mrb[0].mxu0
  %v7100 = vpop.f32.mrb[0].mxu0
  %v7101 = vadd.f32 %v6796, %v7100
  %v7102 = vpop.f32.mrb[0].mxu0
  %7103 = vmatprep.mubr.bf16.mxu0 %v5551
  %7104 = vmatmul.mubr.bf16.gmra.mrb[0].mxu0 %v5394
  %v7105 = vpop.f32.mrb[0].mxu0
  %v7106 = vadd.f32 %v6801, %v7105
  %v7107 = vpop.f32.mrb[0].mxu0
  %v7108 = vpop.f32.mrb[0].mxu0
  %v7109 = vadd.f32 %v6804, %v7108
  %v7110 = vpop.f32.mrb[0].mxu0
  %7111 = vmatprep.mubr.bf16.mxu0 %v5563
  %7112 = vmatmul.mubr.bf16.gmra.mrb[0].mxu0 %v5395
  %v7113 = vpop.f32.mrb[0].mxu0
  %v7114 = vadd.f32 %v6809, %v7113
  %v7115 = vpop.f32.mrb[0].mxu0
  %v7116 = vpop.f32.mrb[0].mxu0
  %v7117 = vadd.f32 %v6812, %v7116
  %v7118 = vpop.f32.mrb[0].mxu0
  %7119 = vmatprep.mubr.bf16.mxu0 %v5575
  %7120 = vmatmul.mubr.bf16.gmra.mrb[0].mxu0 %v5396
  %v7121 = vpop.f32.mrb[0].mxu0
  %v7122 = vadd.f32 %v6817, %v7121
  %v7123 = vpop.f32.mrb[0].mxu0
  %v7124 = vpop.f32.mrb[0].mxu0
  %v7125 = vadd.f32 %v6820, %v7124
  %v7126 = vpop.f32.mrb[0].mxu0
  %7127 = vmatprep.mubr.bf16.mxu0 %v5587
  %7128 = vmatmul.mubr.bf16.gmra.mrb[0].mxu0 %v5397
  %v7129 = vpop.f32.mrb[0].mxu0
  %v7130 = vadd.f32 %v6825, %v7129
  %v7131 = vpop.f32.mrb[0].mxu0
  %v7132 = vpop.f32.mrb[0].mxu0
  %v7133 = vadd.f32 %v6828, %v7132
  %v7134 = vpop.f32.mrb[0].mxu0
  %7135 = vmatprep.mubr.bf16.mxu0 %v5599
  %7136 = vmatmul.mubr.bf16.gmra.mrb[0].mxu0 %v5398
  %v7137 = vpop.f32.mrb[0].mxu0
  %v7138 = vadd.f32 %v6833, %v7137
  %v7139 = vpop.f32.mrb[0].mxu0
  %v7140 = vpop.f32.mrb[0].mxu0
  %v7141 = vadd.f32 %v6836, %v7140
  %v7142 = vpop.f32.mrb[0].mxu0
  %7143 = vmatprep.mubr.bf16.mxu0 %v5611
  %7144 = vmatmul.mubr.bf16.gmra.mrb[0].mxu0 %v5399
  %v7145 = vpop.f32.mrb[0].mxu0
  %v7146 = vadd.f32 %v6841, %v7145
  %v7147 = vpop.f32.mrb[0].mxu0
  %v7148 = vpop.f32.mrb[0].mxu0
  %v7149 = vadd.f32 %v6844, %v7148
  %v7150 = vpop.f32.mrb[0].mxu0
  %7151 = vmatprep.mubr.bf16.mxu0 %v5623
  %7152 = vmatmul.mubr.bf16.gmra.mrb[0].mxu0 %v5400
  %v7153 = vpop.f32.mrb[0].mxu0
  %v7154 = vadd.f32 %v6849, %v7153
  %v7155 = vpop.f32.mrb[0].mxu0
  %v7156 = vpop.f32.mrb[0].mxu0
  %v7157 = vadd.f32 %v6852, %v7156
  %v7158 = vpop.f32.mrb[0].mxu0
  %7159 = vmatprep.mubr.bf16.mxu0 %v5635
  %7160 = vmatmul.mubr.bf16.gmra.mrb[0].mxu0 %v5401
  %v7161 = vpop.f32.mrb[0].mxu0
  %v7162 = vadd.f32 %v6857, %v7161
  %v7163 = vpop.f32.mrb[0].mxu0
  %v7164 = vpop.f32.mrb[0].mxu0
  %v7165 = vadd.f32 %v6860, %v7164
  %v7166 = vpop.f32.mrb[0].mxu0
  %7167 = vmatprep.mubr.bf16.mxu0 %v5647
  %7168 = vmatmul.mubr.bf16.gmra.mrb[0].mxu0 %v5402
  %v7169 = vpop.f32.mrb[0].mxu0
  %v7170 = vadd.f32 %v6865, %v7169
  %v7171 = vpop.f32.mrb[0].mxu0
  %v7172 = vpop.f32.mrb[0].mxu0
  %v7173 = vadd.f32 %v6868, %v7172
  %v7174 = vpop.f32.mrb[0].mxu0
  %7175 = vmatprep.mubr.bf16.mxu0 %v5659
  %7176 = vmatmul.mubr.bf16.gmra.mrb[0].mxu0 %v5403
  %v7177 = vpop.f32.mrb[0].mxu0
  %v7178 = vadd.f32 %v6873, %v7177
  %v7179 = vpop.f32.mrb[0].mxu0
  %v7180 = vpop.f32.mrb[0].mxu0
  %v7181 = vadd.f32 %v6876, %v7180
  %v7182 = vpop.f32.mrb[0].mxu0
  %7183 = vdwg.mxu0
  %7184 = vmatprep.subr.bf16.mxu0 0
  %7185 = vmatpush1.bf16.msra.mxu0 %v6991
  %7186 = vmatprep.subr.bf16.mxu0 0
  %7187 = vmatpush1.bf16.msra.mxu0 %v6992
  %7188 = vmatprep.subr.bf16.mxu0 0
  %7189 = vmatpush1.bf16.msra.mxu0 %v6993
  %7190 = vmatprep.subr.bf16.mxu0 0
  %7191 = vmatpush1.bf16.msra.mxu0 %v6994
  %7192 = vmatprep.subr.bf16.mxu0 0
  %7193 = vmatpush1.bf16.msra.mxu0 %v6995
  %7194 = vmatprep.subr.bf16.mxu0 0
  %7195 = vmatpush1.bf16.msra.mxu0 %v6996
  %7196 = vmatprep.subr.bf16.mxu0 0
  %7197 = vmatpush1.bf16.msra.mxu0 %v6997
  %7198 = vmatprep.subr.bf16.mxu0 0
  %7199 = vmatpush1.bf16.msra.mxu0 %v6998
  %7200 = vmatprep.subr.bf16.mxu0 0
  %7201 = vmatpush1.bf16.msra.mxu0 0
  %7202 = vmatprep.subr.bf16.mxu0 0
  %7203 = vmatpush1.bf16.msra.mxu0 0
  %7204 = vmatprep.subr.bf16.mxu0 0
  %7205 = vmatpush1.bf16.msra.mxu0 0
  %7206 = vmatprep.subr.bf16.mxu0 0
  %7207 = vmatpush1.bf16.msra.mxu0 0
  %7208 = vmatprep.subr.bf16.mxu0 0
  %7209 = vmatpush1.bf16.msra.mxu0 0
  %7210 = vmatprep.subr.bf16.mxu0 0
  %7211 = vmatpush1.bf16.msra.mxu0 0
  %7212 = vmatprep.subr.bf16.mxu0 0
  %7213 = vmatpush1.bf16.msra.mxu0 0
  %7214 = vmatprep.subr.bf16.mxu0 0
  %7215 = vmatpush1.bf16.msra.mxu0 0
  %7216 = vmatprep.mubr.bf16.mxu0 0
  %7217 = vmatmul.mubr.bf16.gmra.mrb[0].mxu0 %v5726
  %v7218 = vpop.f32.mrb[0].mxu0
  %v7219 = vadd.f32 %v7058, %v7218
  %v7220 = vpop.f32.mrb[0].mxu0
  %v7221 = vpop.f32.mrb[0].mxu0
  %v7222 = vadd.f32 %v7061, %v7221
  %v7223 = vpop.f32.mrb[0].mxu0
  %7224 = vmatprep.mubr.bf16.mxu0 0
  %7225 = vmatmul.mubr.bf16.gmra.mrb[0].mxu0 %v5729
  %v7226 = vpop.f32.mrb[0].mxu0
  %v7227 = vadd.f32 %v7066, %v7226
  %v7228 = vpop.f32.mrb[0].mxu0
  %v7229 = vpop.f32.mrb[0].mxu0
  %v7230 = vadd.f32 %v7069, %v7229
  %v7231 = vpop.f32.mrb[0].mxu0
  %7232 = vmatprep.mubr.bf16.mxu0 0
  %7233 = vmatmul.mubr.bf16.gmra.mrb[0].mxu0 %v5732
  %v7234 = vpop.f32.mrb[0].mxu0
  %v7235 = vadd.f32 %v7074, %v7234
  %v7236 = vpop.f32.mrb[0].mxu0
  %v7237 = vpop.f32.mrb[0].mxu0
  %v7238 = vadd.f32 %v7077, %v7237
  %v7239 = vpop.f32.mrb[0].mxu0
  %7240 = vmatprep.mubr.bf16.mxu0 0
  %7241 = vmatmul.mubr.bf16.gmra.mrb[0].mxu0 %v5735
  %v7242 = vpop.f32.mrb[0].mxu0
  %v7243 = vadd.f32 %v7082, %v7242
  %v7244 = vpop.f32.mrb[0].mxu0
  %v7245 = vpop.f32.mrb[0].mxu0
  %v7246 = vadd.f32 %v7085, %v7245
  %v7247 = vpop.f32.mrb[0].mxu0
  %7248 = vmatprep.mubr.bf16.mxu0 0
  %7249 = vmatmul.mubr.bf16.gmra.mrb[0].mxu0 %v5738
  %v7250 = vpop.f32.mrb[0].mxu0
  %v7251 = vadd.f32 %v7090, %v7250
  %v7252 = vpop.f32.mrb[0].mxu0
  %v7253 = vpop.f32.mrb[0].mxu0
  %v7254 = vadd.f32 %v7093, %v7253
  %v7255 = vpop.f32.mrb[0].mxu0
  %7256 = vmatprep.mubr.bf16.mxu0 0
  %7257 = vmatmul.mubr.bf16.gmra.mrb[0].mxu0 %v5741
  %v7258 = vpop.f32.mrb[0].mxu0
  %v7259 = vadd.f32 %v7098, %v7258
  %v7260 = vpop.f32.mrb[0].mxu0
  %v7261 = vpop.f32.mrb[0].mxu0
  %v7262 = vadd.f32 %v7101, %v7261
  %v7263 = vpop.f32.mrb[0].mxu0
  %7264 = vmatprep.mubr.bf16.mxu0 0
  %7265 = vmatmul.mubr.bf16.gmra.mrb[0].mxu0 %v5744
  %v7266 = vpop.f32.mrb[0].mxu0
  %v7267 = vadd.f32 %v7106, %v7266
  %v7268 = vpop.f32.mrb[0].mxu0
  %v7269 = vpop.f32.mrb[0].mxu0
  %v7270 = vadd.f32 %v7109, %v7269
  %v7271 = vpop.f32.mrb[0].mxu0
  %7272 = vmatprep.mubr.bf16.mxu0 0
  %7273 = vmatmul.mubr.bf16.gmra.mrb[0].mxu0 %v5747
  %v7274 = vpop.f32.mrb[0].mxu0
  %v7275 = vadd.f32 %v7114, %v7274
  %v7276 = vpop.f32.mrb[0].mxu0
  %v7277 = vpop.f32.mrb[0].mxu0
  %v7278 = vadd.f32 %v7117, %v7277
  %v7279 = vpop.f32.mrb[0].mxu0
  %7280 = vmatprep.mubr.bf16.mxu0 0
  %7281 = vmatmul.mubr.bf16.gmra.mrb[0].mxu0 %v5750
  %v7282 = vpop.f32.mrb[0].mxu0
  %v7283 = vadd.f32 %v7122, %v7282
  %v7284 = vpop.f32.mrb[0].mxu0
  %v7285 = vpop.f32.mrb[0].mxu0
  %v7286 = vadd.f32 %v7125, %v7285
  %v7287 = vpop.f32.mrb[0].mxu0
  %7288 = vmatprep.mubr.bf16.mxu0 0
  %7289 = vmatmul.mubr.bf16.gmra.mrb[0].mxu0 %v5753
  %v7290 = vpop.f32.mrb[0].mxu0
  %v7291 = vadd.f32 %v7130, %v7290
  %v7292 = vpop.f32.mrb[0].mxu0
  %v7293 = vpop.f32.mrb[0].mxu0
  %v7294 = vadd.f32 %v7133, %v7293
  %v7295 = vpop.f32.mrb[0].mxu0
  %7296 = vmatprep.mubr.bf16.mxu0 0
  %7297 = vmatmul.mubr.bf16.gmra.mrb[0].mxu0 %v5756
  %v7298 = vpop.f32.mrb[0].mxu0
  %v7299 = vadd.f32 %v7138, %v7298
  %v7300 = vpop.f32.mrb[0].mxu0
  %v7301 = vpop.f32.mrb[0].mxu0
  %v7302 = vadd.f32 %v7141, %v7301
  %v7303 = vpop.f32.mrb[0].mxu0
  %7304 = vmatprep.mubr.bf16.mxu0 0
  %7305 = vmatmul.mubr.bf16.gmra.mrb[0].mxu0 %v5759
  %v7306 = vpop.f32.mrb[0].mxu0
  %v7307 = vadd.f32 %v7146, %v7306
  %v7308 = vpop.f32.mrb[0].mxu0
  %v7309 = vpop.f32.mrb[0].mxu0
  %v7310 = vadd.f32 %v7149, %v7309
  %v7311 = vpop.f32.mrb[0].mxu0
  %7312 = vmatprep.mubr.bf16.mxu0 0
  %7313 = vmatmul.mubr.bf16.gmra.mrb[0].mxu0 %v5762
  %v7314 = vpop.f32.mrb[0].mxu0
  %v7315 = vadd.f32 %v7154, %v7314
  %v7316 = vpop.f32.mrb[0].mxu0
  %v7317 = vpop.f32.mrb[0].mxu0
  %v7318 = vadd.f32 %v7157, %v7317
  %v7319 = vpop.f32.mrb[0].mxu0
  %7320 = vmatprep.mubr.bf16.mxu0 0
  %7321 = vmatmul.mubr.bf16.gmra.mrb[0].mxu0 %v5765
  %v7322 = vpop.f32.mrb[0].mxu0
  %v7323 = vadd.f32 %v7162, %v7322
  %v7324 = vpop.f32.mrb[0].mxu0
  %v7325 = vpop.f32.mrb[0].mxu0
  %v7326 = vadd.f32 %v7165, %v7325
  %v7327 = vpop.f32.mrb[0].mxu0
  %7328 = vmatprep.mubr.bf16.mxu0 0
  %7329 = vmatmul.mubr.bf16.gmra.mrb[0].mxu0 %v5768
  %v7330 = vpop.f32.mrb[0].mxu0
  %v7331 = vadd.f32 %v7170, %v7330
  %v7332 = vpop.f32.mrb[0].mxu0
  %v7333 = vpop.f32.mrb[0].mxu0
  %v7334 = vadd.f32 %v7173, %v7333
  %v7335 = vpop.f32.mrb[0].mxu0
  %7336 = vmatprep.mubr.bf16.mxu0 0
  %7337 = vmatmul.mubr.bf16.gmra.mrb[0].mxu0 %v5771
  %v7338 = vpop.f32.mrb[0].mxu0
  %v7339 = vadd.f32 %v7178, %v7338
  %v7340 = vpop.f32.mrb[0].mxu0
  %v7341 = vpop.f32.mrb[0].mxu0
  %v7342 = vadd.f32 %v7181, %v7341
  %v7343 = vpop.f32.mrb[0].mxu0
  %7344 = vdwg.mxu0
  %v7345 = vld [vmem:[%s3394] sm:$0xf]
  %v7346 = vld [vmem:[%s3394 + $0x4] sm:$0xf]
  %v7347 = vld [vmem:[%s3394 + $0xc] sm:$0xf]
  %v7348 = vld [vmem:[%s3394 + $0x10] sm:$0xf]
  %v7349 = vld [vmem:[%s3394 + $0x18] sm:$0xf]
  %v7350 = vld [vmem:[%s3394 + $0x1c] sm:$0xf]
  %v7351 = vld [vmem:[%s3394 + $0x24] sm:$0xf]
  %v7352 = vld [vmem:[%s3394 + $0x28] sm:$0xf]
  %v7353 = vld [vmem:[%s3394 + $0x30] sm:$0xf]
  %v7354 = vld [vmem:[%s3394 + $0x34] sm:$0xf]
  %v7355 = vld [vmem:[%s3394 + $0x3c] sm:$0xf]
  %v7356 = vld [vmem:[%s3394 + $0x40] sm:$0xf]
  %v7357 = vld [vmem:[%s3394 + $0x48] sm:$0xf]
  %v7358 = vld [vmem:[%s3394 + $0x4c] sm:$0xf]
  %v7359 = vld [vmem:[%s3394 + $0x54] sm:$0xf]
  %v7360 = vld [vmem:[%s3394 + $0x58] sm:$0xf]
  %v7361 = vld [vmem:[%s3394 + $0x60] sm:$0xf]
  %v7362 = vld [vmem:[%s3394 + $0x64] sm:$0xf]
  %v7363 = vld [vmem:[%s3394 + $0x6c] sm:$0xf]
  %v7364 = vld [vmem:[%s3394 + $0x70] sm:$0xf]
  %v7365 = vld [vmem:[%s3394 + $0x78] sm:$0xf]
  %v7366 = vld [vmem:[%s3394 + $0x7c] sm:$0xf]
  %v7367 = vld [vmem:[%s3394 + $0x84] sm:$0xf]
  %v7368 = vld [vmem:[%s3394 + $0x88] sm:$0xf]
  %v7369 = vld [vmem:[%s3394 + $0x90] sm:$0xf]
  %v7370 = vld [vmem:[%s3394 + $0x94] sm:$0xf]
  %v7371 = vld [vmem:[%s3394 + $0x9c] sm:$0xf]
  %v7372 = vld [vmem:[%s3394 + $0xa0] sm:$0xf]
  %v7373 = vld [vmem:[%s3394 + $0xa8] sm:$0xf]
  %v7374 = vld [vmem:[%s3394 + $0xac] sm:$0xf]
  %v7375 = vld [vmem:[%s3394 + $0xb4] sm:$0xf]
  %v7376 = vld [vmem:[%s3394 + $0xb8] sm:$0xf]
  %v7377 = vld [vmem:[%s3394 + $0x8] sm:$0x1]
  %v7378 = vld [vmem:[%s3394 + $0x14] sm:$0x1]
  %v7379 = vld [vmem:[%s3394 + $0x20] sm:$0x1]
  %v7380 = vld [vmem:[%s3394 + $0x2c] sm:$0x1]
  %v7381 = vld [vmem:[%s3394 + $0x38] sm:$0x1]
  %v7382 = vld [vmem:[%s3394 + $0x44] sm:$0x1]
  %v7383 = vld [vmem:[%s3394 + $0x50] sm:$0x1]
  %v7384 = vld [vmem:[%s3394 + $0x5c] sm:$0x1]
  %v7385 = vld [vmem:[%s3394 + $0x68] sm:$0x1]
  %v7386 = vld [vmem:[%s3394 + $0x74] sm:$0x1]
  %v7387 = vld [vmem:[%s3394 + $0x80] sm:$0x1]
  %v7388 = vld [vmem:[%s3394 + $0x8c] sm:$0x1]
  %v7389 = vld [vmem:[%s3394 + $0x98] sm:$0x1]
  %v7390 = vld [vmem:[%s3394 + $0xa4] sm:$0x1]
  %v7391 = vld [vmem:[%s3394 + $0xb0] sm:$0x1]
  %v7392 = vld [vmem:[%s3394 + $0xbc] sm:$0x1]
  %v7393 = vld [vmem:[%s3394] sm:$0xe]
  %v7394 = vld [vmem:[%s3394 + $0xc] sm:$0xe]
  %v7395 = vld [vmem:[%s3394 + $0x18] sm:$0xe]
  %v7396 = vld [vmem:[%s3394 + $0x24] sm:$0xe]
  %v7397 = vld [vmem:[%s3394 + $0x30] sm:$0xe]
  %v7398 = vld [vmem:[%s3394 + $0x3c] sm:$0xe]
  %v7399 = vld [vmem:[%s3394 + $0x48] sm:$0xe]
  %v7400 = vld [vmem:[%s3394 + $0x54] sm:$0xe]
  %v7401 = vld [vmem:[%s3394 + $0x60] sm:$0xe]
  %v7402 = vld [vmem:[%s3394 + $0x6c] sm:$0xe]
  %v7403 = vld [vmem:[%s3394 + $0x78] sm:$0xe]
  %v7404 = vld [vmem:[%s3394 + $0x84] sm:$0xe]
  %v7405 = vld [vmem:[%s3394 + $0x90] sm:$0xe]
  %v7406 = vld [vmem:[%s3394 + $0x9c] sm:$0xe]
  %v7407 = vld [vmem:[%s3394 + $0xa8] sm:$0xe]
  %v7408 = vld [vmem:[%s3394 + $0xb4] sm:$0xe]
  %v7441 = vunpack.c.l.b16 %v7345
  %v7442 = vunpack.c.l.b16 %v7346
  %v7443 = vunpack.c.l.b16 %v7347
  %v7444 = vunpack.c.l.b16 %v7348
  %v7445 = vunpack.c.l.b16 %v7349
  %v7446 = vunpack.c.l.b16 %v7350
  %v7447 = vunpack.c.l.b16 %v7351
  %v7448 = vunpack.c.l.b16 %v7352
  %v7449 = vunpack.c.l.b16 %v7353
  %v7450 = vunpack.c.l.b16 %v7354
  %v7451 = vunpack.c.l.b16 %v7355
  %v7452 = vunpack.c.l.b16 %v7356
  %v7453 = vunpack.c.l.b16 %v7357
  %v7454 = vunpack.c.l.b16 %v7358
  %v7455 = vunpack.c.l.b16 %v7359
  %v7456 = vunpack.c.l.b16 %v7360
  %v7457 = vunpack.c.l.b16 %v7361
  %v7458 = vunpack.c.l.b16 %v7362
  %v7459 = vunpack.c.l.b16 %v7363
  %v7460 = vunpack.c.l.b16 %v7364
  %v7461 = vunpack.c.l.b16 %v7365
  %v7462 = vunpack.c.l.b16 %v7366
  %v7463 = vunpack.c.l.b16 %v7367
  %v7464 = vunpack.c.l.b16 %v7368
  %v7465 = vunpack.c.l.b16 %v7369
  %v7466 = vunpack.c.l.b16 %v7370
  %v7467 = vunpack.c.l.b16 %v7371
  %v7468 = vunpack.c.l.b16 %v7372
  %v7469 = vunpack.c.l.b16 %v7373
  %v7470 = vunpack.c.l.b16 %v7374
  %v7471 = vunpack.c.l.b16 %v7375
  %v7472 = vunpack.c.l.b16 %v7376
  %v7473 = vpack.c.b16 %v7442, %v7441
  %v7474 = vpack.c.b16 %v7444, %v7443
  %v7475 = vpack.c.b16 %v7446, %v7445
  %v7476 = vpack.c.b16 %v7448, %v7447
  %v7477 = vpack.c.b16 %v7450, %v7449
  %v7478 = vpack.c.b16 %v7452, %v7451
  %v7479 = vpack.c.b16 %v7454, %v7453
  %v7480 = vpack.c.b16 %v7456, %v7455
  %v7481 = vpack.c.b16 %v7458, %v7457
  %v7482 = vpack.c.b16 %v7460, %v7459
  %v7483 = vpack.c.b16 %v7462, %v7461
  %v7484 = vpack.c.b16 %v7464, %v7463
  %v7485 = vpack.c.b16 %v7466, %v7465
  %v7486 = vpack.c.b16 %v7468, %v7467
  %v7487 = vpack.c.b16 %v7470, %v7469
  %v7488 = vpack.c.b16 %v7472, %v7471
  %v7521 = vunpack.c.l.b16 %v7377
  %v7522 = vunpack.c.l.b16 %v7378
  %v7523 = vunpack.c.l.b16 %v7379
  %v7524 = vunpack.c.l.b16 %v7380
  %v7525 = vunpack.c.l.b16 %v7381
  %v7526 = vunpack.c.l.b16 %v7382
  %v7527 = vunpack.c.l.b16 %v7383
  %v7528 = vunpack.c.l.b16 %v7384
  %v7529 = vunpack.c.l.b16 %v7385
  %v7530 = vunpack.c.l.b16 %v7386
  %v7531 = vunpack.c.l.b16 %v7387
  %v7532 = vunpack.c.l.b16 %v7388
  %v7533 = vunpack.c.l.b16 %v7389
  %v7534 = vunpack.c.l.b16 %v7390
  %v7535 = vunpack.c.l.b16 %v7391
  %v7536 = vunpack.c.l.b16 %v7392
  %v7537 = vpack.c.b16 %v7521, %v7521
  %v7538 = vpack.c.b16 %v7522, %v7522
  %v7539 = vpack.c.b16 %v7523, %v7523
  %v7540 = vpack.c.b16 %v7524, %v7524
  %v7541 = vpack.c.b16 %v7525, %v7525
  %v7542 = vpack.c.b16 %v7526, %v7526
  %v7543 = vpack.c.b16 %v7527, %v7527
  %v7544 = vpack.c.b16 %v7528, %v7528
  %v7545 = vpack.c.b16 %v7529, %v7529
  %v7546 = vpack.c.b16 %v7530, %v7530
  %v7547 = vpack.c.b16 %v7531, %v7531
  %v7548 = vpack.c.b16 %v7532, %v7532
  %v7549 = vpack.c.b16 %v7533, %v7533
  %v7550 = vpack.c.b16 %v7534, %v7534
  %v7551 = vpack.c.b16 %v7535, %v7535
  %v7552 = vpack.c.b16 %v7536, %v7536
  %v7554 = vshrl.u32 %v7473, 16
  %v7556 = vshll.u32 %v7473, 16
  %v7558 = vrot.slane %v7556, 1
  %v7559 = vor.u32 %v7554, %v7558
  %v7561 = vshll.u32 %v7537, 16
  %v7563 = vrot.slane %v7561, 1
  %v7564 = vsel %vm1515, %v7559, %v7563
  %v7566 = vshrl.u32 %v7474, 16
  %v7568 = vshll.u32 %v7474, 16
  %v7570 = vrot.slane %v7568, 1
  %v7571 = vor.u32 %v7566, %v7570
  %v7573 = vshll.u32 %v7538, 16
  %v7575 = vrot.slane %v7573, 1
  %v7576 = vsel %vm1515, %v7571, %v7575
  %v7578 = vshrl.u32 %v7475, 16
  %v7580 = vshll.u32 %v7475, 16
  %v7582 = vrot.slane %v7580, 1
  %v7583 = vor.u32 %v7578, %v7582
  %v7585 = vshll.u32 %v7539, 16
  %v7587 = vrot.slane %v7585, 1
  %v7588 = vsel %vm1515, %v7583, %v7587
  %v7590 = vshrl.u32 %v7476, 16
  %v7592 = vshll.u32 %v7476, 16
  %v7594 = vrot.slane %v7592, 1
  %v7595 = vor.u32 %v7590, %v7594
  %v7597 = vshll.u32 %v7540, 16
  %v7599 = vrot.slane %v7597, 1
  %v7600 = vsel %vm1515, %v7595, %v7599
  %v7602 = vshrl.u32 %v7477, 16
  %v7604 = vshll.u32 %v7477, 16
  %v7606 = vrot.slane %v7604, 1
  %v7607 = vor.u32 %v7602, %v7606
  %v7609 = vshll.u32 %v7541, 16
  %v7611 = vrot.slane %v7609, 1
  %v7612 = vsel %vm1515, %v7607, %v7611
  %v7614 = vshrl.u32 %v7478, 16
  %v7616 = vshll.u32 %v7478, 16
  %v7618 = vrot.slane %v7616, 1
  %v7619 = vor.u32 %v7614, %v7618
  %v7621 = vshll.u32 %v7542, 16
  %v7623 = vrot.slane %v7621, 1
  %v7624 = vsel %vm1515, %v7619, %v7623
  %v7626 = vshrl.u32 %v7479, 16
  %v7628 = vshll.u32 %v7479, 16
  %v7630 = vrot.slane %v7628, 1
  %v7631 = vor.u32 %v7626, %v7630
  %v7633 = vshll.u32 %v7543, 16
  %v7635 = vrot.slane %v7633, 1
  %v7636 = vsel %vm1515, %v7631, %v7635
  %v7638 = vshrl.u32 %v7480, 16
  %v7640 = vshll.u32 %v7480, 16
  %v7642 = vrot.slane %v7640, 1
  %v7643 = vor.u32 %v7638, %v7642
  %v7645 = vshll.u32 %v7544, 16
  %v7647 = vrot.slane %v7645, 1
  %v7648 = vsel %vm1515, %v7643, %v7647
  %v7650 = vshrl.u32 %v7481, 16
  %v7652 = vshll.u32 %v7481, 16
  %v7654 = vrot.slane %v7652, 1
  %v7655 = vor.u32 %v7650, %v7654
  %v7657 = vshll.u32 %v7545, 16
  %v7659 = vrot.slane %v7657, 1
  %v7660 = vsel %vm1515, %v7655, %v7659
  %v7662 = vshrl.u32 %v7482, 16
  %v7664 = vshll.u32 %v7482, 16
  %v7666 = vrot.slane %v7664, 1
  %v7667 = vor.u32 %v7662, %v7666
  %v7669 = vshll.u32 %v7546, 16
  %v7671 = vrot.slane %v7669, 1
  %v7672 = vsel %vm1515, %v7667, %v7671
  %v7674 = vshrl.u32 %v7483, 16
  %v7676 = vshll.u32 %v7483, 16
  %v7678 = vrot.slane %v7676, 1
  %v7679 = vor.u32 %v7674, %v7678
  %v7681 = vshll.u32 %v7547, 16
  %v7683 = vrot.slane %v7681, 1
  %v7684 = vsel %vm1515, %v7679, %v7683
  %v7686 = vshrl.u32 %v7484, 16
  %v7688 = vshll.u32 %v7484, 16
  %v7690 = vrot.slane %v7688, 1
  %v7691 = vor.u32 %v7686, %v7690
  %v7693 = vshll.u32 %v7548, 16
  %v7695 = vrot.slane %v7693, 1
  %v7696 = vsel %vm1515, %v7691, %v7695
  %v7698 = vshrl.u32 %v7485, 16
  %v7700 = vshll.u32 %v7485, 16
  %v7702 = vrot.slane %v7700, 1
  %v7703 = vor.u32 %v7698, %v7702
  %v7705 = vshll.u32 %v7549, 16
  %v7707 = vrot.slane %v7705, 1
  %v7708 = vsel %vm1515, %v7703, %v7707
  %v7710 = vshrl.u32 %v7486, 16
  %v7712 = vshll.u32 %v7486, 16
  %v7714 = vrot.slane %v7712, 1
  %v7715 = vor.u32 %v7710, %v7714
  %v7717 = vshll.u32 %v7550, 16
  %v7719 = vrot.slane %v7717, 1
  %v7720 = vsel %vm1515, %v7715, %v7719
  %v7722 = vshrl.u32 %v7487, 16
  %v7724 = vshll.u32 %v7487, 16
  %v7726 = vrot.slane %v7724, 1
  %v7727 = vor.u32 %v7722, %v7726
  %v7729 = vshll.u32 %v7551, 16
  %v7731 = vrot.slane %v7729, 1
  %v7732 = vsel %vm1515, %v7727, %v7731
  %v7734 = vshrl.u32 %v7488, 16
  %v7736 = vshll.u32 %v7488, 16
  %v7738 = vrot.slane %v7736, 1
  %v7739 = vor.u32 %v7734, %v7738
  %v7741 = vshll.u32 %v7552, 16
  %v7743 = vrot.slane %v7741, 1
  %v7744 = vsel %vm1515, %v7739, %v7743
  %v7777 = vunpack.c.l.b16 %v7393
  %v7778 = vunpack.c.l.b16 %v7394
  %v7779 = vunpack.c.l.b16 %v7395
  %v7780 = vunpack.c.l.b16 %v7396
  %v7781 = vunpack.c.l.b16 %v7397
  %v7782 = vunpack.c.l.b16 %v7398
  %v7783 = vunpack.c.l.b16 %v7399
  %v7784 = vunpack.c.l.b16 %v7400
  %v7785 = vunpack.c.l.b16 %v7401
  %v7786 = vunpack.c.l.b16 %v7402
  %v7787 = vunpack.c.l.b16 %v7403
  %v7788 = vunpack.c.l.b16 %v7404
  %v7789 = vunpack.c.l.b16 %v7405
  %v7790 = vunpack.c.l.b16 %v7406
  %v7791 = vunpack.c.l.b16 %v7407
  %v7792 = vunpack.c.l.b16 %v7408
  %v7793 = vpack.c.b16 %v7442, %v7777
  %v7794 = vpack.c.b16 %v7444, %v7778
  %v7795 = vpack.c.b16 %v7446, %v7779
  %v7796 = vpack.c.b16 %v7448, %v7780
  %v7797 = vpack.c.b16 %v7450, %v7781
  %v7798 = vpack.c.b16 %v7452, %v7782
  %v7799 = vpack.c.b16 %v7454, %v7783
  %v7800 = vpack.c.b16 %v7456, %v7784
  %v7801 = vpack.c.b16 %v7458, %v7785
  %v7802 = vpack.c.b16 %v7460, %v7786
  %v7803 = vpack.c.b16 %v7462, %v7787
  %v7804 = vpack.c.b16 %v7464, %v7788
  %v7805 = vpack.c.b16 %v7466, %v7789
  %v7806 = vpack.c.b16 %v7468, %v7790
  %v7807 = vpack.c.b16 %v7470, %v7791
  %v7808 = vpack.c.b16 %v7472, %v7792
  %v7809 = vrot.slane %v7793, 1
  %v7810 = vrot.slane %v7537, 1
  %v7811 = vsel %vm1772, %v7809, %v7810
  %v7812 = vrot.slane %v7794, 1
  %v7813 = vrot.slane %v7538, 1
  %v7814 = vsel %vm1772, %v7812, %v7813
  %v7815 = vrot.slane %v7795, 1
  %v7816 = vrot.slane %v7539, 1
  %v7817 = vsel %vm1772, %v7815, %v7816
  %v7818 = vrot.slane %v7796, 1
  %v7819 = vrot.slane %v7540, 1
  %v7820 = vsel %vm1772, %v7818, %v7819
  %v7821 = vrot.slane %v7797, 1
  %v7822 = vrot.slane %v7541, 1
  %v7823 = vsel %vm1772, %v7821, %v7822
  %v7824 = vrot.slane %v7798, 1
  %v7825 = vrot.slane %v7542, 1
  %v7826 = vsel %vm1772, %v7824, %v7825
  %v7827 = vrot.slane %v7799, 1
  %v7828 = vrot.slane %v7543, 1
  %v7829 = vsel %vm1772, %v7827, %v7828
  %v7830 = vrot.slane %v7800, 1
  %v7831 = vrot.slane %v7544, 1
  %v7832 = vsel %vm1772, %v7830, %v7831
  %v7833 = vrot.slane %v7801, 1
  %v7834 = vrot.slane %v7545, 1
  %v7835 = vsel %vm1772, %v7833, %v7834
  %v7836 = vrot.slane %v7802, 1
  %v7837 = vrot.slane %v7546, 1
  %v7838 = vsel %vm1772, %v7836, %v7837
  %v7839 = vrot.slane %v7803, 1
  %v7840 = vrot.slane %v7547, 1
  %v7841 = vsel %vm1772, %v7839, %v7840
  %v7842 = vrot.slane %v7804, 1
  %v7843 = vrot.slane %v7548, 1
  %v7844 = vsel %vm1772, %v7842, %v7843
  %v7845 = vrot.slane %v7805, 1
  %v7846 = vrot.slane %v7549, 1
  %v7847 = vsel %vm1772, %v7845, %v7846
  %v7848 = vrot.slane %v7806, 1
  %v7849 = vrot.slane %v7550, 1
  %v7850 = vsel %vm1772, %v7848, %v7849
  %v7851 = vrot.slane %v7807, 1
  %v7852 = vrot.slane %v7551, 1
  %v7853 = vsel %vm1772, %v7851, %v7852
  %v7854 = vrot.slane %v7808, 1
  %v7855 = vrot.slane %v7552, 1
  %v7856 = vsel %vm1772, %v7854, %v7855
  %s7873 = scalar_lea.vmem %s6, 384
  %v7874 = vld [vmem:[%s7873] sm:$0xf]
  %v7875 = vld [vmem:[%s7873 + $0x4] sm:$0xf]
  %v7876 = vld [vmem:[%s7873 + $0x8] sm:$0xf]
  %v7877 = vld [vmem:[%s7873 + $0xc] sm:$0xf]
  %v7878 = vld [vmem:[%s7873 + $0x10] sm:$0xf]
  %v7879 = vld [vmem:[%s7873 + $0x14] sm:$0xf]
  %v7880 = vld [vmem:[%s7873 + $0x18] sm:$0xf]
  %v7881 = vld [vmem:[%s7873 + $0x1c] sm:$0xf]
  %v7882 = vld [vmem:[%s7873 + $0x20] sm:$0xf]
  %v7883 = vld [vmem:[%s7873 + $0x24] sm:$0xf]
  %v7884 = vld [vmem:[%s7873 + $0x28] sm:$0xf]
  %v7885 = vld [vmem:[%s7873 + $0x2c] sm:$0xf]
  %v7886 = vld [vmem:[%s7873 + $0x30] sm:$0xf]
  %v7887 = vld [vmem:[%s7873 + $0x34] sm:$0xf]
  %v7888 = vld [vmem:[%s7873 + $0x38] sm:$0xf]
  %v7889 = vld [vmem:[%s7873 + $0x3c] sm:$0xf]
  %v7890 = vld [vmem:[%s7873 + $0x40] sm:$0xf]
  %v7891 = vld [vmem:[%s7873 + $0x44] sm:$0xf]
  %v7892 = vld [vmem:[%s7873 + $0x48] sm:$0xf]
  %v7893 = vld [vmem:[%s7873 + $0x4c] sm:$0xf]
  %v7894 = vld [vmem:[%s7873 + $0x50] sm:$0xf]
  %v7895 = vld [vmem:[%s7873 + $0x54] sm:$0xf]
  %v7896 = vld [vmem:[%s7873 + $0x58] sm:$0xf]
  %v7897 = vld [vmem:[%s7873 + $0x5c] sm:$0xf]
  %v7898 = vld [vmem:[%s7873 + $0x60] sm:$0xf]
  %v7899 = vld [vmem:[%s7873 + $0x64] sm:$0xf]
  %v7900 = vld [vmem:[%s7873 + $0x68] sm:$0xf]
  %v7901 = vld [vmem:[%s7873 + $0x6c] sm:$0xf]
  %v7902 = vld [vmem:[%s7873 + $0x70] sm:$0xf]
  %v7903 = vld [vmem:[%s7873 + $0x74] sm:$0xf]
  %v7904 = vld [vmem:[%s7873 + $0x78] sm:$0xf]
  %v7905 = vld [vmem:[%s7873 + $0x7c] sm:$0xf]
  %v7906 = vld [vmem:[%s7873 + $0x80] sm:$0xf]
  %v7907 = vld [vmem:[%s7873 + $0x84] sm:$0xf]
  %v7908 = vld [vmem:[%s7873 + $0x88] sm:$0xf]
  %v7909 = vld [vmem:[%s7873 + $0x8c] sm:$0xf]
  %v7910 = vld [vmem:[%s7873 + $0x90] sm:$0xf]
  %v7911 = vld [vmem:[%s7873 + $0x94] sm:$0xf]
  %v7912 = vld [vmem:[%s7873 + $0x98] sm:$0xf]
  %v7913 = vld [vmem:[%s7873 + $0x9c] sm:$0xf]
  %v7914 = vld [vmem:[%s7873 + $0xa0] sm:$0xf]
  %v7915 = vld [vmem:[%s7873 + $0xa4] sm:$0xf]
  %v7916 = vld [vmem:[%s7873 + $0xa8] sm:$0xf]
  %v7917 = vld [vmem:[%s7873 + $0xac] sm:$0xf]
  %v7918 = vld [vmem:[%s7873 + $0xb0] sm:$0xf]
  %v7919 = vld [vmem:[%s7873 + $0xb4] sm:$0xf]
  %v7920 = vld [vmem:[%s7873 + $0xb8] sm:$0xf]
  %v7921 = vld [vmem:[%s7873 + $0xbc] sm:$0xf]
  %v7970 = vunpack.c.l.b16 %v7874
  %v7971 = vunpack.c.l.b16 %v7875
  %v7972 = vunpack.c.l.b16 %v7876
  %v7973 = vunpack.c.l.b16 %v7877
  %v7974 = vunpack.c.l.b16 %v7878
  %v7975 = vunpack.c.l.b16 %v7879
  %v7976 = vunpack.c.l.b16 %v7880
  %v7977 = vunpack.c.l.b16 %v7881
  %v7978 = vunpack.c.l.b16 %v7882
  %v7979 = vunpack.c.l.b16 %v7883
  %v7980 = vunpack.c.l.b16 %v7884
  %v7981 = vunpack.c.l.b16 %v7885
  %v7982 = vunpack.c.l.b16 %v7886
  %v7983 = vunpack.c.l.b16 %v7887
  %v7984 = vunpack.c.l.b16 %v7888
  %v7985 = vunpack.c.l.b16 %v7889
  %v7986 = vunpack.c.l.b16 %v7890
  %v7987 = vunpack.c.l.b16 %v7891
  %v7988 = vunpack.c.l.b16 %v7892
  %v7989 = vunpack.c.l.b16 %v7893
  %v7990 = vunpack.c.l.b16 %v7894
  %v7991 = vunpack.c.l.b16 %v7895
  %v7992 = vunpack.c.l.b16 %v7896
  %v7993 = vunpack.c.l.b16 %v7897
  %v7994 = vunpack.c.l.b16 %v7898
  %v7995 = vunpack.c.l.b16 %v7899
  %v7996 = vunpack.c.l.b16 %v7900
  %v7997 = vunpack.c.l.b16 %v7901
  %v7998 = vunpack.c.l.b16 %v7902
  %v7999 = vunpack.c.l.b16 %v7903
  %v8000 = vunpack.c.l.b16 %v7904
  %v8001 = vunpack.c.l.b16 %v7905
  %v8002 = vunpack.c.l.b16 %v7906
  %v8003 = vunpack.c.l.b16 %v7907
  %v8004 = vunpack.c.l.b16 %v7908
  %v8005 = vunpack.c.l.b16 %v7909
  %v8006 = vunpack.c.l.b16 %v7910
  %v8007 = vunpack.c.l.b16 %v7911
  %v8008 = vunpack.c.l.b16 %v7912
  %v8009 = vunpack.c.l.b16 %v7913
  %v8010 = vunpack.c.l.b16 %v7914
  %v8011 = vunpack.c.l.b16 %v7915
  %v8012 = vunpack.c.l.b16 %v7916
  %v8013 = vunpack.c.l.b16 %v7917
  %v8014 = vunpack.c.l.b16 %v7918
  %v8015 = vunpack.c.l.b16 %v7919
  %v8016 = vunpack.c.l.b16 %v7920
  %v8017 = vunpack.c.l.b16 %v7921
  %v8018 = vpack.c.b16 %v7971, %v7970
  %v8019 = vpack.c.b16 %v7973, %v7972
  %v8020 = vpack.c.b16 %v7975, %v7974
  %v8021 = vpack.c.b16 %v7977, %v7976
  %v8022 = vpack.c.b16 %v7979, %v7978
  %v8023 = vpack.c.b16 %v7981, %v7980
  %v8024 = vpack.c.b16 %v7983, %v7982
  %v8025 = vpack.c.b16 %v7985, %v7984
  %v8026 = vpack.c.b16 %v7987, %v7986
  %v8027 = vpack.c.b16 %v7989, %v7988
  %v8028 = vpack.c.b16 %v7991, %v7990
  %v8029 = vpack.c.b16 %v7993, %v7992
  %v8030 = vpack.c.b16 %v7995, %v7994
  %v8031 = vpack.c.b16 %v7997, %v7996
  %v8032 = vpack.c.b16 %v7999, %v7998
  %v8033 = vpack.c.b16 %v8001, %v8000
  %v8034 = vpack.c.b16 %v8003, %v8002
  %v8035 = vpack.c.b16 %v8005, %v8004
  %v8036 = vpack.c.b16 %v8007, %v8006
  %v8037 = vpack.c.b16 %v8009, %v8008
  %v8038 = vpack.c.b16 %v8011, %v8010
  %v8039 = vpack.c.b16 %v8013, %v8012
  %v8040 = vpack.c.b16 %v8015, %v8014
  %v8041 = vpack.c.b16 %v8017, %v8016
  %8066 = vmatprep.subr.bf16.mxu0 0
  %8067 = vmatpush1.bf16.msra.mxu0 %v8018
  %8068 = vmatprep.subr.bf16.mxu0 0
  %8069 = vmatpush1.bf16.msra.mxu0 %v8019
  %8070 = vmatprep.subr.bf16.mxu0 0
  %8071 = vmatpush1.bf16.msra.mxu0 %v8020
  %8072 = vmatprep.subr.bf16.mxu0 0
  %8073 = vmatpush1.bf16.msra.mxu0 %v8021
  %8074 = vmatprep.subr.bf16.mxu0 0
  %8075 = vmatpush1.bf16.msra.mxu0 %v8022
  %8076 = vmatprep.subr.bf16.mxu0 0
  %8077 = vmatpush1.bf16.msra.mxu0 %v8023
  %8078 = vmatprep.subr.bf16.mxu0 0
  %8079 = vmatpush1.bf16.msra.mxu0 %v8024
  %8080 = vmatprep.subr.bf16.mxu0 0
  %8081 = vmatpush1.bf16.msra.mxu0 %v8025
  %8082 = vmatprep.subr.bf16.mxu0 0
  %8083 = vmatpush1.bf16.msra.mxu0 %v8026
  %8084 = vmatprep.subr.bf16.mxu0 0
  %8085 = vmatpush1.bf16.msra.mxu0 %v8027
  %8086 = vmatprep.subr.bf16.mxu0 0
  %8087 = vmatpush1.bf16.msra.mxu0 %v8028
  %8088 = vmatprep.subr.bf16.mxu0 0
  %8089 = vmatpush1.bf16.msra.mxu0 %v8029
  %8090 = vmatprep.subr.bf16.mxu0 0
  %8091 = vmatpush1.bf16.msra.mxu0 %v8030
  %8092 = vmatprep.subr.bf16.mxu0 0
  %8093 = vmatpush1.bf16.msra.mxu0 %v8031
  %8094 = vmatprep.subr.bf16.mxu0 0
  %8095 = vmatpush1.bf16.msra.mxu0 %v8032
  %8096 = vmatprep.subr.bf16.mxu0 0
  %8097 = vmatpush1.bf16.msra.mxu0 %v8033
  %8098 = vmatprep.mubr.bf16.mxu0 %v7564
  %8099 = vmatmul.mubr.bf16.gmra.mrb[0].mxu0 %v7473
  %v8100 = vpop.f32.mrb[0].mxu0
  %v8101 = vadd.f32 0.0, %v8100
  %v8102 = vpop.f32.mrb[0].mxu0
  %v8103 = vpop.f32.mrb[0].mxu0
  %v8104 = vadd.f32 0.0, %v8103
  %v8105 = vpop.f32.mrb[0].mxu0
  %8106 = vmatprep.mubr.bf16.mxu0 %v7576
  %8107 = vmatmul.mubr.bf16.gmra.mrb[0].mxu0 %v7474
  %v8108 = vpop.f32.mrb[0].mxu0
  %v8109 = vadd.f32 0.0, %v8108
  %v8110 = vpop.f32.mrb[0].mxu0
  %v8111 = vpop.f32.mrb[0].mxu0
  %v8112 = vadd.f32 0.0, %v8111
  %v8113 = vpop.f32.mrb[0].mxu0
  %8114 = vmatprep.mubr.bf16.mxu0 %v7588
  %8115 = vmatmul.mubr.bf16.gmra.mrb[0].mxu0 %v7475
  %v8116 = vpop.f32.mrb[0].mxu0
  %v8117 = vadd.f32 0.0, %v8116
  %v8118 = vpop.f32.mrb[0].mxu0
  %v8119 = vpop.f32.mrb[0].mxu0
  %v8120 = vadd.f32 0.0, %v8119
  %v8121 = vpop.f32.mrb[0].mxu0
  %8122 = vmatprep.mubr.bf16.mxu0 %v7600
  %8123 = vmatmul.mubr.bf16.gmra.mrb[0].mxu0 %v7476
  %v8124 = vpop.f32.mrb[0].mxu0
  %v8125 = vadd.f32 0.0, %v8124
  %v8126 = vpop.f32.mrb[0].mxu0
  %v8127 = vpop.f32.mrb[0].mxu0
  %v8128 = vadd.f32 0.0, %v8127
  %v8129 = vpop.f32.mrb[0].mxu0
  %8130 = vmatprep.mubr.bf16.mxu0 %v7612
  %8131 = vmatmul.mubr.bf16.gmra.mrb[0].mxu0 %v7477
  %v8132 = vpop.f32.mrb[0].mxu0
  %v8133 = vadd.f32 0.0, %v8132
  %v8134 = vpop.f32.mrb[0].mxu0
  %v8135 = vpop.f32.mrb[0].mxu0
  %v8136 = vadd.f32 0.0, %v8135
  %v8137 = vpop.f32.mrb[0].mxu0
  %8138 = vmatprep.mubr.bf16.mxu0 %v7624
  %8139 = vmatmul.mubr.bf16.gmra.mrb[0].mxu0 %v7478
  %v8140 = vpop.f32.mrb[0].mxu0
  %v8141 = vadd.f32 0.0, %v8140
  %v8142 = vpop.f32.mrb[0].mxu0
  %v8143 = vpop.f32.mrb[0].mxu0
  %v8144 = vadd.f32 0.0, %v8143
  %v8145 = vpop.f32.mrb[0].mxu0
  %8146 = vmatprep.mubr.bf16.mxu0 %v7636
  %8147 = vmatmul.mubr.bf16.gmra.mrb[0].mxu0 %v7479
  %v8148 = vpop.f32.mrb[0].mxu0
  %v8149 = vadd.f32 0.0, %v8148
  %v8150 = vpop.f32.mrb[0].mxu0
  %v8151 = vpop.f32.mrb[0].mxu0
  %v8152 = vadd.f32 0.0, %v8151
  %v8153 = vpop.f32.mrb[0].mxu0
  %8154 = vmatprep.mubr.bf16.mxu0 %v7648
  %8155 = vmatmul.mubr.bf16.gmra.mrb[0].mxu0 %v7480
  %v8156 = vpop.f32.mrb[0].mxu0
  %v8157 = vadd.f32 0.0, %v8156
  %v8158 = vpop.f32.mrb[0].mxu0
  %v8159 = vpop.f32.mrb[0].mxu0
  %v8160 = vadd.f32 0.0, %v8159
  %v8161 = vpop.f32.mrb[0].mxu0
  %8162 = vmatprep.mubr.bf16.mxu0 %v7660
  %8163 = vmatmul.mubr.bf16.gmra.mrb[0].mxu0 %v7481
  %v8164 = vpop.f32.mrb[0].mxu0
  %v8165 = vadd.f32 0.0, %v8164
  %v8166 = vpop.f32.mrb[0].mxu0
  %v8167 = vpop.f32.mrb[0].mxu0
  %v8168 = vadd.f32 0.0, %v8167
  %v8169 = vpop.f32.mrb[0].mxu0
  %8170 = vmatprep.mubr.bf16.mxu0 %v7672
  %8171 = vmatmul.mubr.bf16.gmra.mrb[0].mxu0 %v7482
  %v8172 = vpop.f32.mrb[0].mxu0
  %v8173 = vadd.f32 0.0, %v8172
  %v8174 = vpop.f32.mrb[0].mxu0
  %v8175 = vpop.f32.mrb[0].mxu0
  %v8176 = vadd.f32 0.0, %v8175
  %v8177 = vpop.f32.mrb[0].mxu0
  %8178 = vmatprep.mubr.bf16.mxu0 %v7684
  %8179 = vmatmul.mubr.bf16.gmra.mrb[0].mxu0 %v7483
  %v8180 = vpop.f32.mrb[0].mxu0
  %v8181 = vadd.f32 0.0, %v8180
  %v8182 = vpop.f32.mrb[0].mxu0
  %v8183 = vpop.f32.mrb[0].mxu0
  %v8184 = vadd.f32 0.0, %v8183
  %v8185 = vpop.f32.mrb[0].mxu0
  %8186 = vmatprep.mubr.bf16.mxu0 %v7696
  %8187 = vmatmul.mubr.bf16.gmra.mrb[0].mxu0 %v7484
  %v8188 = vpop.f32.mrb[0].mxu0
  %v8189 = vadd.f32 0.0, %v8188
  %v8190 = vpop.f32.mrb[0].mxu0
  %v8191 = vpop.f32.mrb[0].mxu0
  %v8192 = vadd.f32 0.0, %v8191
  %v8193 = vpop.f32.mrb[0].mxu0
  %8194 = vmatprep.mubr.bf16.mxu0 %v7708
  %8195 = vmatmul.mubr.bf16.gmra.mrb[0].mxu0 %v7485
  %v8196 = vpop.f32.mrb[0].mxu0
  %v8197 = vadd.f32 0.0, %v8196
  %v8198 = vpop.f32.mrb[0].mxu0
  %v8199 = vpop.f32.mrb[0].mxu0
  %v8200 = vadd.f32 0.0, %v8199
  %v8201 = vpop.f32.mrb[0].mxu0
  %8202 = vmatprep.mubr.bf16.mxu0 %v7720
  %8203 = vmatmul.mubr.bf16.gmra.mrb[0].mxu0 %v7486
  %v8204 = vpop.f32.mrb[0].mxu0
  %v8205 = vadd.f32 0.0, %v8204
  %v8206 = vpop.f32.mrb[0].mxu0
  %v8207 = vpop.f32.mrb[0].mxu0
  %v8208 = vadd.f32 0.0, %v8207
  %v8209 = vpop.f32.mrb[0].mxu0
  %8210 = vmatprep.mubr.bf16.mxu0 %v7732
  %8211 = vmatmul.mubr.bf16.gmra.mrb[0].mxu0 %v7487
  %v8212 = vpop.f32.mrb[0].mxu0
  %v8213 = vadd.f32 0.0, %v8212
  %v8214 = vpop.f32.mrb[0].mxu0
  %v8215 = vpop.f32.mrb[0].mxu0
  %v8216 = vadd.f32 0.0, %v8215
  %v8217 = vpop.f32.mrb[0].mxu0
  %8218 = vmatprep.mubr.bf16.mxu0 %v7744
  %8219 = vmatmul.mubr.bf16.gmra.mrb[0].mxu0 %v7488
  %v8220 = vpop.f32.mrb[0].mxu0
  %v8221 = vadd.f32 0.0, %v8220
  %v8222 = vpop.f32.mrb[0].mxu0
  %v8223 = vpop.f32.mrb[0].mxu0
  %v8224 = vadd.f32 0.0, %v8223
  %v8225 = vpop.f32.mrb[0].mxu0
  %8226 = vdwg.mxu0
  %8227 = vmatprep.subr.bf16.mxu0 0
  %8228 = vmatpush1.bf16.msra.mxu0 %v8034
  %8229 = vmatprep.subr.bf16.mxu0 0
  %8230 = vmatpush1.bf16.msra.mxu0 %v8035
  %8231 = vmatprep.subr.bf16.mxu0 0
  %8232 = vmatpush1.bf16.msra.mxu0 %v8036
  %8233 = vmatprep.subr.bf16.mxu0 0
  %8234 = vmatpush1.bf16.msra.mxu0 %v8037
  %8235 = vmatprep.subr.bf16.mxu0 0
  %8236 = vmatpush1.bf16.msra.mxu0 %v8038
  %8237 = vmatprep.subr.bf16.mxu0 0
  %8238 = vmatpush1.bf16.msra.mxu0 %v8039
  %8239 = vmatprep.subr.bf16.mxu0 0
  %8240 = vmatpush1.bf16.msra.mxu0 %v8040
  %8241 = vmatprep.subr.bf16.mxu0 0
  %8242 = vmatpush1.bf16.msra.mxu0 %v8041
  %8243 = vmatprep.subr.bf16.mxu0 0
  %8244 = vmatpush1.bf16.msra.mxu0 0
  %8245 = vmatprep.subr.bf16.mxu0 0
  %8246 = vmatpush1.bf16.msra.mxu0 0
  %8247 = vmatprep.subr.bf16.mxu0 0
  %8248 = vmatpush1.bf16.msra.mxu0 0
  %8249 = vmatprep.subr.bf16.mxu0 0
  %8250 = vmatpush1.bf16.msra.mxu0 0
  %8251 = vmatprep.subr.bf16.mxu0 0
  %8252 = vmatpush1.bf16.msra.mxu0 0
  %8253 = vmatprep.subr.bf16.mxu0 0
  %8254 = vmatpush1.bf16.msra.mxu0 0
  %8255 = vmatprep.subr.bf16.mxu0 0
  %8256 = vmatpush1.bf16.msra.mxu0 0
  %8257 = vmatprep.subr.bf16.mxu0 0
  %8258 = vmatpush1.bf16.msra.mxu0 0
  %8259 = vmatprep.mubr.bf16.mxu0 0
  %8260 = vmatmul.mubr.bf16.gmra.mrb[0].mxu0 %v7811
  %v8261 = vpop.f32.mrb[0].mxu0
  %v8262 = vadd.f32 %v8101, %v8261
  %v8263 = vpop.f32.mrb[0].mxu0
  %v8264 = vpop.f32.mrb[0].mxu0
  %v8265 = vadd.f32 %v8104, %v8264
  %v8266 = vpop.f32.mrb[0].mxu0
  %8267 = vmatprep.mubr.bf16.mxu0 0
  %8268 = vmatmul.mubr.bf16.gmra.mrb[0].mxu0 %v7814
  %v8269 = vpop.f32.mrb[0].mxu0
  %v8270 = vadd.f32 %v8109, %v8269
  %v8271 = vpop.f32.mrb[0].mxu0
  %v8272 = vpop.f32.mrb[0].mxu0
  %v8273 = vadd.f32 %v8112, %v8272
  %v8274 = vpop.f32.mrb[0].mxu0
  %8275 = vmatprep.mubr.bf16.mxu0 0
  %8276 = vmatmul.mubr.bf16.gmra.mrb[0].mxu0 %v7817
  %v8277 = vpop.f32.mrb[0].mxu0
  %v8278 = vadd.f32 %v8117, %v8277
  %v8279 = vpop.f32.mrb[0].mxu0
  %v8280 = vpop.f32.mrb[0].mxu0
  %v8281 = vadd.f32 %v8120, %v8280
  %v8282 = vpop.f32.mrb[0].mxu0
  %8283 = vmatprep.mubr.bf16.mxu0 0
  %8284 = vmatmul.mubr.bf16.gmra.mrb[0].mxu0 %v7820
  %v8285 = vpop.f32.mrb[0].mxu0
  %v8286 = vadd.f32 %v8125, %v8285
  %v8287 = vpop.f32.mrb[0].mxu0
  %v8288 = vpop.f32.mrb[0].mxu0
  %v8289 = vadd.f32 %v8128, %v8288
  %v8290 = vpop.f32.mrb[0].mxu0
  %8291 = vmatprep.mubr.bf16.mxu0 0
  %8292 = vmatmul.mubr.bf16.gmra.mrb[0].mxu0 %v7823
  %v8293 = vpop.f32.mrb[0].mxu0
  %v8294 = vadd.f32 %v8133, %v8293
  %v8295 = vpop.f32.mrb[0].mxu0
  %v8296 = vpop.f32.mrb[0].mxu0
  %v8297 = vadd.f32 %v8136, %v8296
  %v8298 = vpop.f32.mrb[0].mxu0
  %8299 = vmatprep.mubr.bf16.mxu0 0
  %8300 = vmatmul.mubr.bf16.gmra.mrb[0].mxu0 %v7826
  %v8301 = vpop.f32.mrb[0].mxu0
  %v8302 = vadd.f32 %v8141, %v8301
  %v8303 = vpop.f32.mrb[0].mxu0
  %v8304 = vpop.f32.mrb[0].mxu0
  %v8305 = vadd.f32 %v8144, %v8304
  %v8306 = vpop.f32.mrb[0].mxu0
  %8307 = vmatprep.mubr.bf16.mxu0 0
  %8308 = vmatmul.mubr.bf16.gmra.mrb[0].mxu0 %v7829
  %v8309 = vpop.f32.mrb[0].mxu0
  %v8310 = vadd.f32 %v8149, %v8309
  %v8311 = vpop.f32.mrb[0].mxu0
  %v8312 = vpop.f32.mrb[0].mxu0
  %v8313 = vadd.f32 %v8152, %v8312
  %v8314 = vpop.f32.mrb[0].mxu0
  %8315 = vmatprep.mubr.bf16.mxu0 0
  %8316 = vmatmul.mubr.bf16.gmra.mrb[0].mxu0 %v7832
  %v8317 = vpop.f32.mrb[0].mxu0
  %v8318 = vadd.f32 %v8157, %v8317
  %v8319 = vpop.f32.mrb[0].mxu0
  %v8320 = vpop.f32.mrb[0].mxu0
  %v8321 = vadd.f32 %v8160, %v8320
  %v8322 = vpop.f32.mrb[0].mxu0
  %8323 = vmatprep.mubr.bf16.mxu0 0
  %8324 = vmatmul.mubr.bf16.gmra.mrb[0].mxu0 %v7835
  %v8325 = vpop.f32.mrb[0].mxu0
  %v8326 = vadd.f32 %v8165, %v8325
  %v8327 = vpop.f32.mrb[0].mxu0
  %v8328 = vpop.f32.mrb[0].mxu0
  %v8329 = vadd.f32 %v8168, %v8328
  %v8330 = vpop.f32.mrb[0].mxu0
  %8331 = vmatprep.mubr.bf16.mxu0 0
  %8332 = vmatmul.mubr.bf16.gmra.mrb[0].mxu0 %v7838
  %v8333 = vpop.f32.mrb[0].mxu0
  %v8334 = vadd.f32 %v8173, %v8333
  %v8335 = vpop.f32.mrb[0].mxu0
  %v8336 = vpop.f32.mrb[0].mxu0
  %v8337 = vadd.f32 %v8176, %v8336
  %v8338 = vpop.f32.mrb[0].mxu0
  %8339 = vmatprep.mubr.bf16.mxu0 0
  %8340 = vmatmul.mubr.bf16.gmra.mrb[0].mxu0 %v7841
  %v8341 = vpop.f32.mrb[0].mxu0
  %v8342 = vadd.f32 %v8181, %v8341
  %v8343 = vpop.f32.mrb[0].mxu0
  %v8344 = vpop.f32.mrb[0].mxu0
  %v8345 = vadd.f32 %v8184, %v8344
  %v8346 = vpop.f32.mrb[0].mxu0
  %8347 = vmatprep.mubr.bf16.mxu0 0
  %8348 = vmatmul.mubr.bf16.gmra.mrb[0].mxu0 %v7844
  %v8349 = vpop.f32.mrb[0].mxu0
  %v8350 = vadd.f32 %v8189, %v8349
  %v8351 = vpop.f32.mrb[0].mxu0
  %v8352 = vpop.f32.mrb[0].mxu0
  %v8353 = vadd.f32 %v8192, %v8352
  %v8354 = vpop.f32.mrb[0].mxu0
  %8355 = vmatprep.mubr.bf16.mxu0 0
  %8356 = vmatmul.mubr.bf16.gmra.mrb[0].mxu0 %v7847
  %v8357 = vpop.f32.mrb[0].mxu0
  %v8358 = vadd.f32 %v8197, %v8357
  %v8359 = vpop.f32.mrb[0].mxu0
  %v8360 = vpop.f32.mrb[0].mxu0
  %v8361 = vadd.f32 %v8200, %v8360
  %v8362 = vpop.f32.mrb[0].mxu0
  %8363 = vmatprep.mubr.bf16.mxu0 0
  %8364 = vmatmul.mubr.bf16.gmra.mrb[0].mxu0 %v7850
  %v8365 = vpop.f32.mrb[0].mxu0
  %v8366 = vadd.f32 %v8205, %v8365
  %v8367 = vpop.f32.mrb[0].mxu0
  %v8368 = vpop.f32.mrb[0].mxu0
  %v8369 = vadd.f32 %v8208, %v8368
  %v8370 = vpop.f32.mrb[0].mxu0
  %8371 = vmatprep.mubr.bf16.mxu0 0
  %8372 = vmatmul.mubr.bf16.gmra.mrb[0].mxu0 %v7853
  %v8373 = vpop.f32.mrb[0].mxu0
  %v8374 = vadd.f32 %v8213, %v8373
  %v8375 = vpop.f32.mrb[0].mxu0
  %v8376 = vpop.f32.mrb[0].mxu0
  %v8377 = vadd.f32 %v8216, %v8376
  %v8378 = vpop.f32.mrb[0].mxu0
  %8379 = vmatprep.mubr.bf16.mxu0 0
  %8380 = vmatmul.mubr.bf16.gmra.mrb[0].mxu0 %v7856
  %v8381 = vpop.f32.mrb[0].mxu0
  %v8382 = vadd.f32 %v8221, %v8381
  %v8383 = vpop.f32.mrb[0].mxu0
  %v8384 = vpop.f32.mrb[0].mxu0
  %v8385 = vadd.f32 %v8224, %v8384
  %v8386 = vpop.f32.mrb[0].mxu0
  %8387 = vdwg.mxu0
  %v8388 = vadd.f32 %v7219, %v8262
  %v8389 = vadd.f32 %v7222, %v8265
  %v8390 = vadd.f32 %v7227, %v8270
  %v8391 = vadd.f32 %v7230, %v8273
  %v8392 = vadd.f32 %v7235, %v8278
  %v8393 = vadd.f32 %v7238, %v8281
  %v8394 = vadd.f32 %v7243, %v8286
  %v8395 = vadd.f32 %v7246, %v8289
  %v8396 = vadd.f32 %v7251, %v8294
  %v8397 = vadd.f32 %v7254, %v8297
  %v8398 = vadd.f32 %v7259, %v8302
  %v8399 = vadd.f32 %v7262, %v8305
  %v8400 = vadd.f32 %v7267, %v8310
  %v8401 = vadd.f32 %v7270, %v8313
  %v8402 = vadd.f32 %v7275, %v8318
  %v8403 = vadd.f32 %v7278, %v8321
  %v8404 = vadd.f32 %v7283, %v8326
  %v8405 = vadd.f32 %v7286, %v8329
  %v8406 = vadd.f32 %v7291, %v8334
  %v8407 = vadd.f32 %v7294, %v8337
  %v8408 = vadd.f32 %v7299, %v8342
  %v8409 = vadd.f32 %v7302, %v8345
  %v8410 = vadd.f32 %v7307, %v8350
  %v8411 = vadd.f32 %v7310, %v8353
  %v8412 = vadd.f32 %v7315, %v8358
  %v8413 = vadd.f32 %v7318, %v8361
  %v8414 = vadd.f32 %v7323, %v8366
  %v8415 = vadd.f32 %v7326, %v8369
  %v8416 = vadd.f32 %v7331, %v8374
  %v8417 = vadd.f32 %v7334, %v8377
  %v8418 = vadd.f32 %v7339, %v8382
  %v8419 = vadd.f32 %v7342, %v8385
  %v8420 = vld [vmem:[%s7] sm:$0x1]
  %v8422 = vlaneseq
  %v8423 = vshrl.u32 %v8422, 7
  %v8424 = vsub.s32 0, %v8423
  %v8425 = vrot.slane %v8420, %v8424
  %v8427 = vadd.f32 %v8388, %v8425
  %v8428 = vadd.f32 %v8389, %v8425
  %v8429 = vadd.f32 %v8390, %v8425
  %v8430 = vadd.f32 %v8391, %v8425
  %v8431 = vadd.f32 %v8392, %v8425
  %v8432 = vadd.f32 %v8393, %v8425
  %v8433 = vadd.f32 %v8394, %v8425
  %v8434 = vadd.f32 %v8395, %v8425
  %v8435 = vadd.f32 %v8396, %v8425
  %v8436 = vadd.f32 %v8397, %v8425
  %v8437 = vadd.f32 %v8398, %v8425
  %v8438 = vadd.f32 %v8399, %v8425
  %v8439 = vadd.f32 %v8400, %v8425
  %v8440 = vadd.f32 %v8401, %v8425
  %v8441 = vadd.f32 %v8402, %v8425
  %v8442 = vadd.f32 %v8403, %v8425
  %v8443 = vadd.f32 %v8404, %v8425
  %v8444 = vadd.f32 %v8405, %v8425
  %v8445 = vadd.f32 %v8406, %v8425
  %v8446 = vadd.f32 %v8407, %v8425
  %v8447 = vadd.f32 %v8408, %v8425
  %v8448 = vadd.f32 %v8409, %v8425
  %v8449 = vadd.f32 %v8410, %v8425
  %v8450 = vadd.f32 %v8411, %v8425
  %v8451 = vadd.f32 %v8412, %v8425
  %v8452 = vadd.f32 %v8413, %v8425
  %v8453 = vadd.f32 %v8414, %v8425
  %v8454 = vadd.f32 %v8415, %v8425
  %v8455 = vadd.f32 %v8416, %v8425
  %v8456 = vadd.f32 %v8417, %v8425
  %v8457 = vadd.f32 %v8418, %v8425
  %v8458 = vadd.f32 %v8419, %v8425
  %v8459 = vadd.f32 %v8427, %v30
  %v8460 = vadd.f32 %v8428, %v31
  %v8461 = vadd.f32 %v8429, %v32
  %v8462 = vadd.f32 %v8430, %v33
  %v8463 = vadd.f32 %v8431, %v34
  %v8464 = vadd.f32 %v8432, %v35
  %v8465 = vadd.f32 %v8433, %v36
  %v8466 = vadd.f32 %v8434, %v37
  %v8467 = vadd.f32 %v8435, %v38
  %v8468 = vadd.f32 %v8436, %v39
  %v8469 = vadd.f32 %v8437, %v40
  %v8470 = vadd.f32 %v8438, %v41
  %v8471 = vadd.f32 %v8439, %v42
  %v8472 = vadd.f32 %v8440, %v43
  %v8473 = vadd.f32 %v8441, %v44
  %v8474 = vadd.f32 %v8442, %v45
  %v8475 = vadd.f32 %v8443, %v46
  %v8476 = vadd.f32 %v8444, %v47
  %v8477 = vadd.f32 %v8445, %v48
  %v8478 = vadd.f32 %v8446, %v49
  %v8479 = vadd.f32 %v8447, %v50
  %v8480 = vadd.f32 %v8448, %v51
  %v8481 = vadd.f32 %v8449, %v52
  %v8482 = vadd.f32 %v8450, %v53
  %v8483 = vadd.f32 %v8451, %v54
  %v8484 = vadd.f32 %v8452, %v55
  %v8485 = vadd.f32 %v8453, %v56
  %v8486 = vadd.f32 %v8454, %v57
  %v8487 = vadd.f32 %v8455, %v58
  %v8488 = vadd.f32 %v8456, %v59
  %v8489 = vadd.f32 %v8457, %v60
  %v8490 = vadd.f32 %v8458, %v61
  %8491 = vst [vmem:[%s8] sm:$0xff] %v8459
  %8492 = vst [vmem:[%s8 + $0x8] sm:$0xff] %v8460
  %8493 = vst [vmem:[%s8 + $0x10] sm:$0xff] %v8461
  %8494 = vst [vmem:[%s8 + $0x18] sm:$0xff] %v8462
  %8495 = vst [vmem:[%s8 + $0x20] sm:$0xff] %v8463
  %8496 = vst [vmem:[%s8 + $0x28] sm:$0xff] %v8464
  %8497 = vst [vmem:[%s8 + $0x30] sm:$0xff] %v8465
  %8498 = vst [vmem:[%s8 + $0x38] sm:$0xff] %v8466
  %8499 = vst [vmem:[%s8 + $0x40] sm:$0xff] %v8467
  %8500 = vst [vmem:[%s8 + $0x48] sm:$0xff] %v8468
  %8501 = vst [vmem:[%s8 + $0x50] sm:$0xff] %v8469
  %8502 = vst [vmem:[%s8 + $0x58] sm:$0xff] %v8470
  %8503 = vst [vmem:[%s8 + $0x60] sm:$0xff] %v8471
  %8504 = vst [vmem:[%s8 + $0x68] sm:$0xff] %v8472
  %8505 = vst [vmem:[%s8 + $0x70] sm:$0xff] %v8473
  %8506 = vst [vmem:[%s8 + $0x78] sm:$0xff] %v8474
  %8507 = vst [vmem:[%s8 + $0x80] sm:$0xff] %v8475
  %8508 = vst [vmem:[%s8 + $0x88] sm:$0xff] %v8476
  %8509 = vst [vmem:[%s8 + $0x90] sm:$0xff] %v8477
  %8510 = vst [vmem:[%s8 + $0x98] sm:$0xff] %v8478
  %8511 = vst [vmem:[%s8 + $0xa0] sm:$0xff] %v8479
  %8512 = vst [vmem:[%s8 + $0xa8] sm:$0xff] %v8480
  %8513 = vst [vmem:[%s8 + $0xb0] sm:$0xff] %v8481
  %8514 = vst [vmem:[%s8 + $0xb8] sm:$0xff] %v8482
  %8515 = vst [vmem:[%s8 + $0xc0] sm:$0xff] %v8483
  %8516 = vst [vmem:[%s8 + $0xc8] sm:$0xff] %v8484
  %8517 = vst [vmem:[%s8 + $0xd0] sm:$0xff] %v8485
  %8518 = vst [vmem:[%s8 + $0xd8] sm:$0xff] %v8486
  %8519 = vst [vmem:[%s8 + $0xe0] sm:$0xff] %v8487
  %8520 = vst [vmem:[%s8 + $0xe8] sm:$0xff] %v8488
  %8521 = vst [vmem:[%s8 + $0xf0] sm:$0xff] %v8489
  %8522 = vst [vmem:[%s8 + $0xf8] sm:$0xff] %v8490
  // Predicated region
  $region34: #{_lambda_.1} parent=0 // pred_check
    _
  $region35: #{_lambda_.1} parent=0 // pred_check_branch
    %8524 = sbr.rel (0) target = $region37
  $region36: #{_lambda_.1} parent=0 // pred_region
    _
  $region37: #{_lambda_.1} parent=0 // pred_fallthru
    _
  // Predicated region
  $region38: #{_lambda_.1} parent=0 // pred_check
    _
  $region39: #{_lambda_.1} parent=0 // pred_check_branch
    %8526 = sbr.rel (0) target = $region41
  $region40: #{_lambda_.1} parent=0 // pred_region
    _
  $region41: #{_lambda_.1} parent=0 // pred_fallthru
    _

</llo_original>
